<compile_context>
chip_gen: v7x
topology: tpu7x:2x2x1
jax: 0.10.0
libtpu: 0.0.40
codegen_flags: <defaults>
</compile_context>

<pallas_src>
import functools

import jax
import jax.numpy as jnp
from jax import lax
from jax.experimental import pallas as pl
from jax.experimental.pallas import tpu as pltpu

_LANES = 128                    # lane/MXU tile (v5e-native; see TODO re 256 for v6e/v7x)
_COMPUTE_DTYPE = jnp.bfloat16   # MXU input / HBM dtype; all accumulation + epilogue in f32
_ROW_CHUNK = 8                  # output rows processed per in-kernel matmul (bounds vregs)


def _round_up(x, m):
    return (x + m - 1) // m * m


# ----------------------------------------------------------------------------
# Fused kernel: whole residual block for one (batch, row-block) tile.
# ----------------------------------------------------------------------------
def _sexres_block_kernel(x_ref, w1_ref, b1_ref, w2_ref, wid_ref, bout_ref,
                         o_ref, h1_ref, *, th, img_h, img_w, wpad,
                         cp_k1, cp_mid, cp_out):
    """x_ref : (1, H+2, wpad, cp_k1) packed 3x3 patches of the input (bf16)
       h1_ref: (th+2, wpad, cp_mid)  VMEM scratch with conv1 output (bf16)
       o_ref : (1, th, W, cp_out)    output tile (bf16)"""
    r = pl.program_id(1)
    row0 = pl.multiple_of(r * th, th)          # first output row of this block

    w1 = w1_ref[...]                           # (cp_k1, cp_mid) bf16
    wid = wid_ref[...]                         # (cp_k1, cp_out) bf16
    b1 = b1_ref[...]                           # (1, cp_mid) f32
    bout = bout_ref[...]                       # (1, cp_out) f32

    # Channel-width-1 validity mask over the conv1/h1 window: halo/pad
    # positions outside the image must be zero so conv2 sees SAME padding.
    prow = lax.broadcasted_iota(jnp.int32, (th + 2, wpad, 1), 0) + (row0 - 1)
    pcol = lax.broadcasted_iota(jnp.int32, (th + 2, wpad, 1), 1) - 1
    valid = (prow >= 0) & (prow < img_h) & (pcol >= 0) & (pcol < img_w)

    # ---- conv1 (3x3, BN folded, ReLU): one dense-K matmul per row chunk ----
    n1 = th + 2
    for p0 in range(0, n1, _ROW_CHUNK):
        rows = min(_ROW_CHUNK, n1 - p0)
        xw = x_ref[0, pl.ds(row0 + p0, rows), :, :]           # (rows, wpad, cp_k1)
        a = jnp.dot(xw.reshape(rows * wpad, cp_k1), w1,
                    preferred_element_type=jnp.float32)
        a = jnp.maximum(a + b1, 0.0).reshape(rows, wpad, cp_mid)
        a = jnp.where(valid[p0:p0 + rows], a, 0.0)
        h1_ref[p0:p0 + rows, :, :] = a.astype(h1_ref.dtype)

    # ---- conv2 (3x3, BN folded) + 1x1 id-conv + residual add + final ReLU --
    for i0 in range(0, th, _ROW_CHUNK):
        rr = min(_ROW_CHUNK, th - i0)
        # Accumulator starts as the identity branch + combined bias (no zero fill).
        xc = x_ref[0, pl.ds(row0 + 1 + i0, rr), 1:1 + img_w, :]
        acc = jnp.dot(xc.reshape(rr * img_w, cp_k1), wid,
                      preferred_element_type=jnp.float32) + bout
        # TODO(synk): lane-pack these 9 taps into one K=128 matmul when cp_mid
        #             is tiny (needs in-kernel lane compaction); per-tap here.
        for dy in range(3):
            for dx in range(3):
                hs = h1_ref[i0 + dy:i0 + dy + rr, dx:dx + img_w, :]
                acc += jnp.dot(hs.reshape(rr * img_w, cp_mid), w2_ref[dy, dx],
                               preferred_element_type=jnp.float32)
        o_ref[0, i0:i0 + rr, :, :] = jnp.maximum(acc, 0.0).reshape(
            rr, img_w, cp_out).astype(o_ref.dtype)


# ----------------------------------------------------------------------------
# Wrapper: layout / packing plumbing + pallas_call.  NCHW in / NCHW out.
# ----------------------------------------------------------------------------
def sexresnet_block_forward(x_nchw, folded, *, row_block=None,
                            compute_dtype=_COMPUTE_DTYPE,
                            out_dtype=jnp.float32,
                            keep_padded_nhwc=False):
    n, cin, h, w = x_nchw.shape
    ch = folded["w1"].shape[-1]
    cf = folded["w2"].shape[-1]

    if 9 * cin > _LANES:
        # TODO(synk): per-tap conv1 fallback for large input channel counts.
        raise NotImplementedError("packed conv1 path requires 9*Cin <= 128")

    cp_k1 = _round_up(9 * cin, _LANES)
    cp_mid = _round_up(ch, _LANES)
    cp_out = _round_up(cf, _LANES)
    wpad = _round_up(w + 2, 8)            # sublane-aligned compute width

    if row_block is None:
        if h <= 32:
            row_block = h
        else:
            row_block = next((d for d in (32, 16, 8) if h % d == 0), h)
    th = row_block
    assert h % th == 0, (h, th)

    # ---- pack the input: NCHW -> NHWC, 2-halo zero pad, 9 taps -> lanes ----
    xf = jnp.transpose(x_nchw, (0, 2, 3, 1)).astype(jnp.float32)
    xp = jnp.pad(xf, ((0, 0), (2, 2), (2, 2), (0, 0)))          # (N, H+4, W+4, cin)
    taps = [xp[:, dy:dy + h + 2, dx:dx + w + 2, :]
            for dy in range(3) for dx in range(3)]
    x_packed = jnp.concatenate(taps, axis=-1)                   # (N, H+2, W+2, 9cin)
    x_packed = jnp.pad(
        x_packed,
        ((0, 0), (0, 0), (0, wpad - (w + 2)), (0, cp_k1 - 9 * cin)),
    ).astype(compute_dtype)

    # ---- weights / biases (BN already folded into scale+bias) ----
    w1p = jnp.pad(folded["w1"].astype(jnp.float32).reshape(9 * cin, ch),
                  ((0, cp_k1 - 9 * cin), (0, cp_mid - ch))).astype(compute_dtype)
    b1 = jnp.pad(folded["b1"].astype(jnp.float32),
                 (0, cp_mid - ch)).reshape(1, cp_mid)
    w2w = jnp.pad(folded["w2"].astype(jnp.float32),
                  ((0, 0), (0, 0), (0, cp_mid - ch), (0, cp_out - cf))
                  ).astype(compute_dtype)
    # id branch: 1x1 conv weight placed at the center-tap rows of the packed K.
    widp = jnp.zeros((cp_k1, cp_out), jnp.float32)
    widp = widp.at[4 * cin:5 * cin, :cf].set(
        folded["wid"][0, 0].astype(jnp.float32)).astype(compute_dtype)
    bout = jnp.pad((folded["b2"] + folded["bid"]).astype(jnp.float32),
                   (0, cp_out - cf)).reshape(1, cp_out)

    kernel = functools.partial(
        _sexres_block_kernel, th=th, img_h=h, img_w=w, wpad=wpad,
        cp_k1=cp_k1, cp_mid=cp_mid, cp_out=cp_out)

    # VMEM budget from actual buffer sizes (double-buffered inputs/outputs by
    # the auto-pipeliner; weight blocks are small so default double-buffering
    # is accepted here — see TODO re pl.Buffered(1) for v7x), with headroom.
    bpe = 2  # bf16
    vmem = 2 * ((h + 2) * wpad * cp_k1 * bpe                          # packed image
                + (cp_k1 * cp_mid + 9 * cp_mid * cp_out
                   + cp_k1 * cp_out) * bpe + (cp_mid + cp_out) * 4    # weights+bias
                + th * w * cp_out * bpe)                              # output block
    vmem += (th + 2) * wpad * cp_mid * bpe                            # h1 scratch
    vmem_limit = int(min(max(4 * vmem, 16 << 20), 64 << 20))

    grid = (n, h // th)
    out = pl.pallas_call(
        kernel,
        out_shape=jax.ShapeDtypeStruct((n, h, w, cp_out), compute_dtype),
        grid_spec=pltpu.PrefetchScalarGridSpec(
            num_scalar_prefetch=0,
            grid=grid,
            in_specs=[
                # Packed image of one batch element: constant block index along
                # the row-block axis -> stays resident in VMEM across it.
                pl.BlockSpec((1, h + 2, wpad, cp_k1), lambda b, r: (b, 0, 0, 0)),
                pl.BlockSpec((cp_k1, cp_mid), lambda b, r: (0, 0)),
                pl.BlockSpec((1, cp_mid), lambda b, r: (0, 0)),
                pl.BlockSpec((3, 3, cp_mid, cp_out), lambda b, r: (0, 0, 0, 0)),
                pl.BlockSpec((cp_k1, cp_out), lambda b, r: (0, 0)),
                pl.BlockSpec((1, cp_out), lambda b, r: (0, 0)),
            ],
            out_specs=pl.BlockSpec((1, th, w, cp_out), lambda b, r: (b, r, 0, 0)),
            scratch_shapes=[pltpu.VMEM((th + 2, wpad, cp_mid), compute_dtype)],
        ),
        compiler_params=pltpu.CompilerParams(
            dimension_semantics=("parallel", "arbitrary"),
            vmem_limit_bytes=vmem_limit),
    )(x_packed, w1p, b1, w2w, widp, bout)

    if keep_padded_nhwc:
        return out                       # (N, H, W, cp_out) bf16, for fused chaining
    # Strip channel padding; NHWC -> NCHW; cast to the module's dtype.
    return jnp.transpose(out[..., :cf], (0, 3, 1, 2)).astype(out_dtype)


# ----------------------------------------------------------------------------
# BN folding (inference-mode running stats) + synthetic parameters
# ----------------------------------------------------------------------------
def fold_bn(gamma, beta, mean, var, eps=1e-5):
    scale = gamma / jnp.sqrt(var + eps)
    return scale, beta - mean * scale


def fold_block_params(raw):
    """Fold each BN into its conv: f32 HWIO weights (scale folded) + bias."""
    out = {}
    for name in ("1", "2", "id"):
        s, b = fold_bn(raw[f"gamma{name}"], raw[f"beta{name}"],
                       raw[f"mean{name}"], raw[f"var{name}"])
        out[f"w{name}"] = raw[f"w{name}"] * s.reshape(1, 1, 1, -1)
        out[f"b{name}"] = b
    return out


def _make_raw_params(key, cin, ch, cf):
    ks = jax.random.split(key, 6)

    def bn_stats(k, c):
        k0, k1, k2, k3 = jax.random.split(k, 4)
        return dict(gamma=jax.random.normal(k0, (c,)) * 0.2 + 1.0,
                    beta=jax.random.normal(k1, (c,)) * 0.1,
                    mean=jax.random.normal(k2, (c,)) * 0.1,
                    var=jax.random.uniform(k3, (c,), minval=0.5, maxval=1.5))

    raw = dict(w1=jax.random.normal(ks[0], (3, 3, cin, ch)) * 0.1,   # HWIO
               w2=jax.random.normal(ks[1], (3, 3, ch, cf)) * 0.1,
               wid=jax.random.normal(ks[2], (1, 1, cin, cf)) * 0.1)
    for name, k, c in (("1", ks[3], ch), ("2", ks[4], cf), ("id", ks[5], cf)):
        st = bn_stats(k, c)
        raw.update({f"gamma{name}": st["gamma"], f"beta{name}": st["beta"],
                    f"mean{name}": st["mean"], f"var{name}": st["var"]})
    return raw


# ----------------------------------------------------------------------------
# Pure-JAX reference (lax.conv) mirroring the kernel's bf16-in / f32-acc math.
# ----------------------------------------------------------------------------
def _ref_forward(x_nchw, folded):
    x = jnp.transpose(x_nchw, (0, 2, 3, 1))
    dn = ("NHWC", "HWIO", "NHWC")

    def conv(inp, w_hwio, bias, relu):
        y = lax.conv_general_dilated(
            inp.astype(jnp.bfloat16), w_hwio.astype(jnp.bfloat16),
            (1, 1), "SAME", dimension_numbers=dn,
            preferred_element_type=jnp.float32)
        y = y + bias
        return jnp.maximum(y, 0.0) if relu else y

    h1 = conv(x, folded["w1"], folded["b1"], True)
    h2 = conv(h1, folded["w2"], folded["b2"], False)
    idp = conv(x, folded["wid"], folded["bid"], False)
    out = jnp.maximum(h2 + idp, 0.0)
    return jnp.transpose(out, (0, 3, 1, 2))


# ----------------------------------------------------------------------------
if __name__ == "__main__":
    # SEXResNetBlock(expansion=1, n_inputs=4, n_hidden=8, stride=1)
    N, CIN, H, W = 2, 4, 16, 16
    CH, CF = 8, 8

    key = jax.random.PRNGKey(0)
    kx, kp = jax.random.split(key)
    x = jax.random.normal(kx, (N, CIN, H, W), dtype=jnp.float32)   # NCHW input
    raw = _make_raw_params(kp, CIN, CH, CF)
    folded = fold_block_params(raw)

    out = jax.block_until_ready(sexresnet_block_forward(x, folded))
    ref = jax.block_until_ready(_ref_forward(x, folded))

    assert out.shape == (N, CF, H, W), out.shape
    max_err = float(jnp.max(jnp.abs(out - ref)))
    assert jnp.allclose(out, ref, rtol=1e-2, atol=1e-2), max_err
    print("KERNEL_OK")
</pallas_src>

<mosaic_0001>
module attributes {stable_mosaic.version = 11 : i64} {
  func.func @_sexres_block_kernel(%arg0: i32, %arg1: i32, %arg2: memref<1x18x24x128xbf16, #tpu.memory_space<vmem>>, %arg3: memref<128x128xbf16, #tpu.memory_space<vmem>>, %arg4: memref<1x128xf32, #tpu.memory_space<vmem>>, %arg5: memref<3x3x128x128xbf16, #tpu.memory_space<vmem>>, %arg6: memref<128x128xbf16, #tpu.memory_space<vmem>>, %arg7: memref<1x128xf32, #tpu.memory_space<vmem>>, %arg8: memref<1x16x16x128xbf16, #tpu.memory_space<vmem>>, %arg9: memref<18x24x128xbf16, #tpu.memory_space<vmem>>) attributes {dimension_semantics = [#tpu.dimension_semantics<parallel>, #tpu.dimension_semantics<arbitrary>], iteration_bounds = array<i64: 2, 1>, scalar_prefetch = 0 : i64, scratch_operands = 1 : i64, tpu.core_type = #tpu.core_type<tc>, window_params = [{transform_indices = @transform_0, window_bounds = array<i64: 1, 18, 24, 128>}, {pipeline_mode = #tpu.pipeline_mode<synchronous>, transform_indices = @transform_1, window_bounds = array<i64: 128, 128>}, {pipeline_mode = #tpu.pipeline_mode<synchronous>, transform_indices = @transform_2, window_bounds = array<i64: 1, 128>}, {pipeline_mode = #tpu.pipeline_mode<synchronous>, transform_indices = @transform_3, window_bounds = array<i64: 3, 3, 128, 128>}, {pipeline_mode = #tpu.pipeline_mode<synchronous>, transform_indices = @transform_4, window_bounds = array<i64: 128, 128>}, {pipeline_mode = #tpu.pipeline_mode<synchronous>, transform_indices = @transform_5, window_bounds = array<i64: 1, 128>}, {transform_indices = @transform_6, window_bounds = array<i64: 1, 16, 16, 128>}]} {
    %c16_i32 = arith.constant 16 : i32
    %0 = arith.muli %arg1, %c16_i32 : i32
    %1 = tpu.assume_multiple %0, 16 : i32
    %c0 = arith.constant 0 : index
    %c0_0 = arith.constant 0 : index
    %2 = vector.load %arg3[%c0, %c0_0] : memref<128x128xbf16, #tpu.memory_space<vmem>>, vector<128x128xbf16>
    %c0_1 = arith.constant 0 : index
    %c0_2 = arith.constant 0 : index
    %3 = vector.load %arg6[%c0_1, %c0_2] : memref<128x128xbf16, #tpu.memory_space<vmem>>, vector<128x128xbf16>
    %c0_3 = arith.constant 0 : index
    %c0_4 = arith.constant 0 : index
    %4 = vector.load %arg4[%c0_3, %c0_4] : memref<1x128xf32, #tpu.memory_space<vmem>>, vector<1x128xf32>
    %c0_5 = arith.constant 0 : index
    %c0_6 = arith.constant 0 : index
    %5 = vector.load %arg7[%c0_5, %c0_6] : memref<1x128xf32, #tpu.memory_space<vmem>>, vector<1x128xf32>
    %6 = tpu.iota {dimensions = array<i32: 0>} : vector<18x24x1xi32>
    %c1_i32 = arith.constant 1 : i32
    %7 = arith.subi %1, %c1_i32 : i32
    %8 = vector.broadcast %7 : i32 to vector<18x24x1xi32>
    %9 = arith.addi %6, %8 : vector<18x24x1xi32>
    %10 = tpu.iota {dimensions = array<i32: 1>} : vector<18x24x1xi32>
    %c1_i32_7 = arith.constant 1 : i32
    %11 = vector.broadcast %c1_i32_7 : i32 to vector<18x24x1xi32>
    %12 = arith.subi %10, %11 : vector<18x24x1xi32>
    %c0_i32 = arith.constant 0 : i32
    %13 = vector.broadcast %c0_i32 : i32 to vector<18x24x1xi32>
    %14 = arith.cmpi sge, %9, %13 : vector<18x24x1xi32>
    %c16_i32_8 = arith.constant 16 : i32
    %15 = vector.broadcast %c16_i32_8 : i32 to vector<18x24x1xi32>
    %16 = arith.cmpi slt, %9, %15 : vector<18x24x1xi32>
    %17 = arith.andi %14, %16 : vector<18x24x1xi1>
    %c0_i32_9 = arith.constant 0 : i32
    %18 = vector.broadcast %c0_i32_9 : i32 to vector<18x24x1xi32>
    %19 = arith.cmpi sge, %12, %18 : vector<18x24x1xi32>
    %20 = arith.andi %17, %19 : vector<18x24x1xi1>
    %c16_i32_10 = arith.constant 16 : i32
    %21 = vector.broadcast %c16_i32_10 : i32 to vector<18x24x1xi32>
    %22 = arith.cmpi slt, %12, %21 : vector<18x24x1xi32>
    %23 = arith.andi %20, %22 : vector<18x24x1xi1>
    %c0_i32_11 = arith.constant 0 : i32
    %24 = arith.addi %1, %c0_i32_11 : i32
    %c0_12 = arith.constant 0 : index
    %25 = arith.index_cast %24 : i32 to index
    %c0_13 = arith.constant 0 : index
    %c0_14 = arith.constant 0 : index
    %26 = vector.load %arg2[%c0_12, %25, %c0_13, %c0_14] : memref<1x18x24x128xbf16, #tpu.memory_space<vmem>>, vector<1x8x24x128xbf16>
    %27 = vector.shape_cast %26 : vector<1x8x24x128xbf16> to vector<8x24x128xbf16>
    %28 = vector.shape_cast %27 : vector<8x24x128xbf16> to vector<192x128xbf16>
    %cst = arith.constant dense<0.000000e+00> : vector<192x128xf32>
    %29 = tpu.matmul %28, %2, %cst {dimension_numbers = #tpu.dot_dimension_numbers<[1], [0], [0], [1], [0, 0, 1, 1], [], []>} : vector<192x128xbf16>, vector<128x128xbf16>, vector<192x128xf32> -> vector<192x128xf32>
    %30 = vector.broadcast %4 : vector<1x128xf32> to vector<192x128xf32>
    %31 = arith.addf %29, %30 : vector<192x128xf32>
    %cst_15 = arith.constant 0.000000e+00 : f32
    %32 = vector.broadcast %cst_15 : f32 to vector<192x128xf32>
    %33 = arith.maximumf %31, %32 : vector<192x128xf32>
    %34 = vector.shape_cast %33 : vector<192x128xf32> to vector<8x24x128xf32>
    %35 = vector.extract_strided_slice %23 {offsets = [0, 0, 0], sizes = [8, 24, 1], strides = [1, 1, 1]} : vector<18x24x1xi1> to vector<8x24x1xi1>
    %cst_16 = arith.constant 0.000000e+00 : f32
    %36 = vector.shape_cast %35 : vector<8x24x1xi1> to vector<8x24x1xi1>
    %37 = vector.broadcast %36 : vector<8x24x1xi1> to vector<8x24x128xi1>
    %38 = vector.broadcast %cst_16 : f32 to vector<8x24x128xf32>
    %39 = arith.select %37, %34, %38 : vector<8x24x128xi1>, vector<8x24x128xf32>
    %40 = arith.truncf %39 : vector<8x24x128xf32> to vector<8x24x128xbf16>
    %c0_17 = arith.constant 0 : index
    %c0_18 = arith.constant 0 : index
    %c0_19 = arith.constant 0 : index
    %41 = vector.load %arg9[%c0_17, %c0_18, %c0_19] : memref<18x24x128xbf16, #tpu.memory_space<vmem>>, vector<8x24x128xbf16>
    tpu.vector_store %arg9[%c0_17, %c0_18, %c0_19], %40 {strides = array<i32>} : memref<18x24x128xbf16, #tpu.memory_space<vmem>>, vector<8x24x128xbf16>,
    %c8_i32 = arith.constant 8 : i32
    %42 = arith.addi %1, %c8_i32 : i32
    %c0_20 = arith.constant 0 : index
    %43 = arith.index_cast %42 : i32 to index
    %c0_21 = arith.constant 0 : index
    %c0_22 = arith.constant 0 : index
    %44 = vector.load %arg2[%c0_20, %43, %c0_21, %c0_22] : memref<1x18x24x128xbf16, #tpu.memory_space<vmem>>, vector<1x8x24x128xbf16>
    %45 = vector.shape_cast %44 : vector<1x8x24x128xbf16> to vector<8x24x128xbf16>
    %46 = vector.shape_cast %45 : vector<8x24x128xbf16> to vector<192x128xbf16>
    %cst_23 = arith.constant dense<0.000000e+00> : vector<192x128xf32>
    %47 = tpu.matmul %46, %2, %cst_23 {dimension_numbers = #tpu.dot_dimension_numbers<[1], [0], [0], [1], [0, 0, 1, 1], [], []>} : vector<192x128xbf16>, vector<128x128xbf16>, vector<192x128xf32> -> vector<192x128xf32>
    %48 = vector.broadcast %4 : vector<1x128xf32> to vector<192x128xf32>
    %49 = arith.addf %47, %48 : vector<192x128xf32>
    %cst_24 = arith.constant 0.000000e+00 : f32
    %50 = vector.broadcast %cst_24 : f32 to vector<192x128xf32>
    %51 = arith.maximumf %49, %50 : vector<192x128xf32>
    %52 = vector.shape_cast %51 : vector<192x128xf32> to vector<8x24x128xf32>
    %53 = vector.extract_strided_slice %23 {offsets = [8, 0, 0], sizes = [8, 24, 1], strides = [1, 1, 1]} : vector<18x24x1xi1> to vector<8x24x1xi1>
    %cst_25 = arith.constant 0.000000e+00 : f32
    %54 = vector.shape_cast %53 : vector<8x24x1xi1> to vector<8x24x1xi1>
    %55 = vector.broadcast %54 : vector<8x24x1xi1> to vector<8x24x128xi1>
    %56 = vector.broadcast %cst_25 : f32 to vector<8x24x128xf32>
    %57 = arith.select %55, %52, %56 : vector<8x24x128xi1>, vector<8x24x128xf32>
    %58 = arith.truncf %57 : vector<8x24x128xf32> to vector<8x24x128xbf16>
    %c8 = arith.constant 8 : index
    %c0_26 = arith.constant 0 : index
    %c0_27 = arith.constant 0 : index
    %59 = vector.load %arg9[%c8, %c0_26, %c0_27] : memref<18x24x128xbf16, #tpu.memory_space<vmem>>, vector<8x24x128xbf16>
    tpu.vector_store %arg9[%c8, %c0_26, %c0_27], %58 {strides = array<i32>} : memref<18x24x128xbf16, #tpu.memory_space<vmem>>, vector<8x24x128xbf16>,
    %c16_i32_28 = arith.constant 16 : i32
    %60 = arith.addi %1, %c16_i32_28 : i32
    %c0_29 = arith.constant 0 : index
    %61 = arith.index_cast %60 : i32 to index
    %c0_30 = arith.constant 0 : index
    %c0_31 = arith.constant 0 : index
    %62 = vector.load %arg2[%c0_29, %61, %c0_30, %c0_31] : memref<1x18x24x128xbf16, #tpu.memory_space<vmem>>, vector<1x2x24x128xbf16>
    %63 = vector.shape_cast %62 : vector<1x2x24x128xbf16> to vector<2x24x128xbf16>
    %64 = vector.shape_cast %63 : vector<2x24x128xbf16> to vector<48x128xbf16>
    %cst_32 = arith.constant dense<0.000000e+00> : vector<48x128xf32>
    %65 = tpu.matmul %64, %2, %cst_32 {dimension_numbers = #tpu.dot_dimension_numbers<[1], [0], [0], [1], [0, 0, 1, 1], [], []>} : vector<48x128xbf16>, vector<128x128xbf16>, vector<48x128xf32> -> vector<48x128xf32>
    %66 = vector.broadcast %4 : vector<1x128xf32> to vector<48x128xf32>
    %67 = arith.addf %65, %66 : vector<48x128xf32>
    %cst_33 = arith.constant 0.000000e+00 : f32
    %68 = vector.broadcast %cst_33 : f32 to vector<48x128xf32>
    %69 = arith.maximumf %67, %68 : vector<48x128xf32>
    %70 = vector.shape_cast %69 : vector<48x128xf32> to vector<2x24x128xf32>
    %71 = vector.extract_strided_slice %23 {offsets = [16, 0, 0], sizes = [2, 24, 1], strides = [1, 1, 1]} : vector<18x24x1xi1> to vector<2x24x1xi1>
    %cst_34 = arith.constant 0.000000e+00 : f32
    %72 = vector.shape_cast %71 : vector<2x24x1xi1> to vector<2x24x1xi1>
    %73 = vector.broadcast %72 : vector<2x24x1xi1> to vector<2x24x128xi1>
    %74 = vector.broadcast %cst_34 : f32 to vector<2x24x128xf32>
    %75 = arith.select %73, %70, %74 : vector<2x24x128xi1>, vector<2x24x128xf32>
    %76 = arith.truncf %75 : vector<2x24x128xf32> to vector<2x24x128xbf16>
    %c16 = arith.constant 16 : index
    %c0_35 = arith.constant 0 : index
    %c0_36 = arith.constant 0 : index
    %77 = vector.load %arg9[%c16, %c0_35, %c0_36] : memref<18x24x128xbf16, #tpu.memory_space<vmem>>, vector<2x24x128xbf16>
    tpu.vector_store %arg9[%c16, %c0_35, %c0_36], %76 {strides = array<i32>} : memref<18x24x128xbf16, #tpu.memory_space<vmem>>, vector<2x24x128xbf16>,
    %c1_i32_37 = arith.constant 1 : i32
    %78 = arith.addi %1, %c1_i32_37 : i32
    %c0_i32_38 = arith.constant 0 : i32
    %79 = arith.addi %78, %c0_i32_38 : i32
    %c0_39 = arith.constant 0 : index
    %80 = arith.index_cast %79 : i32 to index
    %c1 = arith.constant 1 : index
    %c0_40 = arith.constant 0 : index
    %81 = vector.load %arg2[%c0_39, %80, %c1, %c0_40] : memref<1x18x24x128xbf16, #tpu.memory_space<vmem>>, vector<1x8x16x128xbf16>
    %82 = vector.shape_cast %81 : vector<1x8x16x128xbf16> to vector<8x16x128xbf16>
    %83 = vector.shape_cast %82 : vector<8x16x128xbf16> to vector<128x128xbf16>
    %cst_41 = arith.constant dense<0.000000e+00> : vector<128x128xf32>
    %84 = tpu.matmul %83, %3, %cst_41 {dimension_numbers = #tpu.dot_dimension_numbers<[1], [0], [0], [1], [0, 0, 1, 1], [], []>} : vector<128x128xbf16>, vector<128x128xbf16>, vector<128x128xf32> -> vector<128x128xf32>
    %85 = vector.broadcast %5 : vector<1x128xf32> to vector<128x128xf32>
    %86 = arith.addf %84, %85 : vector<128x128xf32>
    %c0_42 = arith.constant 0 : index
    %c0_43 = arith.constant 0 : index
    %c0_44 = arith.constant 0 : index
    %87 = vector.load %arg9[%c0_42, %c0_43, %c0_44] : memref<18x24x128xbf16, #tpu.memory_space<vmem>>, vector<8x16x128xbf16>
    %88 = vector.shape_cast %87 : vector<8x16x128xbf16> to vector<128x128xbf16>
    %c0_45 = arith.constant 0 : index
    %c0_46 = arith.constant 0 : index
    %c0_47 = arith.constant 0 : index
    %c0_48 = arith.constant 0 : index
    %89 = vector.load %arg5[%c0_45, %c0_46, %c0_47, %c0_48] : memref<3x3x128x128xbf16, #tpu.memory_space<vmem>>, vector<1x1x128x128xbf16>
    %90 = vector.shape_cast %89 : vector<1x1x128x128xbf16> to vector<128x128xbf16>
    %cst_49 = arith.constant dense<0.000000e+00> : vector<128x128xf32>
    %91 = tpu.matmul %88, %90, %cst_49 {dimension_numbers = #tpu.dot_dimension_numbers<[1], [0], [0], [1], [0, 0, 1, 1], [], []>} : vector<128x128xbf16>, vector<128x128xbf16>, vector<128x128xf32> -> vector<128x128xf32>
    %92 = arith.addf %86, %91 : vector<128x128xf32>
    %c0_50 = arith.constant 0 : index
    %c1_51 = arith.constant 1 : index
    %c0_52 = arith.constant 0 : index
    %93 = vector.load %arg9[%c0_50, %c1_51, %c0_52] : memref<18x24x128xbf16, #tpu.memory_space<vmem>>, vector<8x16x128xbf16>
    %94 = vector.shape_cast %93 : vector<8x16x128xbf16> to vector<128x128xbf16>
    %c0_53 = arith.constant 0 : index
    %c1_54 = arith.constant 1 : index
    %c0_55 = arith.constant 0 : index
    %c0_56 = arith.constant 0 : index
    %95 = vector.load %arg5[%c0_53, %c1_54, %c0_55, %c0_56] : memref<3x3x128x128xbf16, #tpu.memory_space<vmem>>, vector<1x1x128x128xbf16>
    %96 = vector.shape_cast %95 : vector<1x1x128x128xbf16> to vector<128x128xbf16>
    %cst_57 = arith.constant dense<0.000000e+00> : vector<128x128xf32>
    %97 = tpu.matmul %94, %96, %cst_57 {dimension_numbers = #tpu.dot_dimension_numbers<[1], [0], [0], [1], [0, 0, 1, 1], [], []>} : vector<128x128xbf16>, vector<128x128xbf16>, vector<128x128xf32> -> vector<128x128xf32>
    %98 = arith.addf %92, %97 : vector<128x128xf32>
    %c0_58 = arith.constant 0 : index
    %c2 = arith.constant 2 : index
    %c0_59 = arith.constant 0 : index
    %99 = vector.load %arg9[%c0_58, %c2, %c0_59] : memref<18x24x128xbf16, #tpu.memory_space<vmem>>, vector<8x16x128xbf16>
    %100 = vector.shape_cast %99 : vector<8x16x128xbf16> to vector<128x128xbf16>
    %c0_60 = arith.constant 0 : index
    %c2_61 = arith.constant 2 : index
    %c0_62 = arith.constant 0 : index
    %c0_63 = arith.constant 0 : index
    %101 = vector.load %arg5[%c0_60, %c2_61, %c0_62, %c0_63] : memref<3x3x128x128xbf16, #tpu.memory_space<vmem>>, vector<1x1x128x128xbf16>
    %102 = vector.shape_cast %101 : vector<1x1x128x128xbf16> to vector<128x128xbf16>
    %cst_64 = arith.constant dense<0.000000e+00> : vector<128x128xf32>
    %103 = tpu.matmul %100, %102, %cst_64 {dimension_numbers = #tpu.dot_dimension_numbers<[1], [0], [0], [1], [0, 0, 1, 1], [], []>} : vector<128x128xbf16>, vector<128x128xbf16>, vector<128x128xf32> -> vector<128x128xf32>
    %104 = arith.addf %98, %103 : vector<128x128xf32>
    %c1_65 = arith.constant 1 : index
    %c0_66 = arith.constant 0 : index
    %c0_67 = arith.constant 0 : index
    %105 = vector.load %arg9[%c1_65, %c0_66, %c0_67] : memref<18x24x128xbf16, #tpu.memory_space<vmem>>, vector<8x16x128xbf16>
    %106 = vector.shape_cast %105 : vector<8x16x128xbf16> to vector<128x128xbf16>
    %c1_68 = arith.constant 1 : index
    %c0_69 = arith.constant 0 : index
    %c0_70 = arith.constant 0 : index
    %c0_71 = arith.constant 0 : index
    %107 = vector.load %arg5[%c1_68, %c0_69, %c0_70, %c0_71] : memref<3x3x128x128xbf16, #tpu.memory_space<vmem>>, vector<1x1x128x128xbf16>
    %108 = vector.shape_cast %107 : vector<1x1x128x128xbf16> to vector<128x128xbf16>
    %cst_72 = arith.constant dense<0.000000e+00> : vector<128x128xf32>
    %109 = tpu.matmul %106, %108, %cst_72 {dimension_numbers = #tpu.dot_dimension_numbers<[1], [0], [0], [1], [0, 0, 1, 1], [], []>} : vector<128x128xbf16>, vector<128x128xbf16>, vector<128x128xf32> -> vector<128x128xf32>
    %110 = arith.addf %104, %109 : vector<128x128xf32>
    %c1_73 = arith.constant 1 : index
    %c1_74 = arith.constant 1 : index
    %c0_75 = arith.constant 0 : index
    %111 = vector.load %arg9[%c1_73, %c1_74, %c0_75] : memref<18x24x128xbf16, #tpu.memory_space<vmem>>, vector<8x16x128xbf16>
    %112 = vector.shape_cast %111 : vector<8x16x128xbf16> to vector<128x128xbf16>
    %c1_76 = arith.constant 1 : index
    %c1_77 = arith.constant 1 : index
    %c0_78 = arith.constant 0 : index
    %c0_79 = arith.constant 0 : index
    %113 = vector.load %arg5[%c1_76, %c1_77, %c0_78, %c0_79] : memref<3x3x128x128xbf16, #tpu.memory_space<vmem>>, vector<1x1x128x128xbf16>
    %114 = vector.shape_cast %113 : vector<1x1x128x128xbf16> to vector<128x128xbf16>
    %cst_80 = arith.constant dense<0.000000e+00> : vector<128x128xf32>
    %115 = tpu.matmul %112, %114, %cst_80 {dimension_numbers = #tpu.dot_dimension_numbers<[1], [0], [0], [1], [0, 0, 1, 1], [], []>} : vector<128x128xbf16>, vector<128x128xbf16>, vector<128x128xf32> -> vector<128x128xf32>
    %116 = arith.addf %110, %115 : vector<128x128xf32>
    %c1_81 = arith.constant 1 : index
    %c2_82 = arith.constant 2 : index
    %c0_83 = arith.constant 0 : index
    %117 = vector.load %arg9[%c1_81, %c2_82, %c0_83] : memref<18x24x128xbf16, #tpu.memory_space<vmem>>, vector<8x16x128xbf16>
    %118 = vector.shape_cast %117 : vector<8x16x128xbf16> to vector<128x128xbf16>
    %c1_84 = arith.constant 1 : index
    %c2_85 = arith.constant 2 : index
    %c0_86 = arith.constant 0 : index
    %c0_87 = arith.constant 0 : index
    %119 = vector.load %arg5[%c1_84, %c2_85, %c0_86, %c0_87] : memref<3x3x128x128xbf16, #tpu.memory_space<vmem>>, vector<1x1x128x128xbf16>
    %120 = vector.shape_cast %119 : vector<1x1x128x128xbf16> to vector<128x128xbf16>
    %cst_88 = arith.constant dense<0.000000e+00> : vector<128x128xf32>
    %121 = tpu.matmul %118, %120, %cst_88 {dimension_numbers = #tpu.dot_dimension_numbers<[1], [0], [0], [1], [0, 0, 1, 1], [], []>} : vector<128x128xbf16>, vector<128x128xbf16>, vector<128x128xf32> -> vector<128x128xf32>
    %122 = arith.addf %116, %121 : vector<128x128xf32>
    %c2_89 = arith.constant 2 : index
    %c0_90 = arith.constant 0 : index
    %c0_91 = arith.constant 0 : index
    %123 = vector.load %arg9[%c2_89, %c0_90, %c0_91] : memref<18x24x128xbf16, #tpu.memory_space<vmem>>, vector<8x16x128xbf16>
    %124 = vector.shape_cast %123 : vector<8x16x128xbf16> to vector<128x128xbf16>
    %c2_92 = arith.constant 2 : index
    %c0_93 = arith.constant 0 : index
    %c0_94 = arith.constant 0 : index
    %c0_95 = arith.constant 0 : index
    %125 = vector.load %arg5[%c2_92, %c0_93, %c0_94, %c0_95] : memref<3x3x128x128xbf16, #tpu.memory_space<vmem>>, vector<1x1x128x128xbf16>
    %126 = vector.shape_cast %125 : vector<1x1x128x128xbf16> to vector<128x128xbf16>
    %cst_96 = arith.constant dense<0.000000e+00> : vector<128x128xf32>
    %127 = tpu.matmul %124, %126, %cst_96 {dimension_numbers = #tpu.dot_dimension_numbers<[1], [0], [0], [1], [0, 0, 1, 1], [], []>} : vector<128x128xbf16>, vector<128x128xbf16>, vector<128x128xf32> -> vector<128x128xf32>
    %128 = arith.addf %122, %127 : vector<128x128xf32>
    %c2_97 = arith.constant 2 : index
    %c1_98 = arith.constant 1 : index
    %c0_99 = arith.constant 0 : index
    %129 = vector.load %arg9[%c2_97, %c1_98, %c0_99] : memref<18x24x128xbf16, #tpu.memory_space<vmem>>, vector<8x16x128xbf16>
    %130 = vector.shape_cast %129 : vector<8x16x128xbf16> to vector<128x128xbf16>
    %c2_100 = arith.constant 2 : index
    %c1_101 = arith.constant 1 : index
    %c0_102 = arith.constant 0 : index
    %c0_103 = arith.constant 0 : index
    %131 = vector.load %arg5[%c2_100, %c1_101, %c0_102, %c0_103] : memref<3x3x128x128xbf16, #tpu.memory_space<vmem>>, vector<1x1x128x128xbf16>
    %132 = vector.shape_cast %131 : vector<1x1x128x128xbf16> to vector<128x128xbf16>
    %cst_104 = arith.constant dense<0.000000e+00> : vector<128x128xf32>
    %133 = tpu.matmul %130, %132, %cst_104 {dimension_numbers = #tpu.dot_dimension_numbers<[1], [0], [0], [1], [0, 0, 1, 1], [], []>} : vector<128x128xbf16>, vector<128x128xbf16>, vector<128x128xf32> -> vector<128x128xf32>
    %134 = arith.addf %128, %133 : vector<128x128xf32>
    %c2_105 = arith.constant 2 : index
    %c2_106 = arith.constant 2 : index
    %c0_107 = arith.constant 0 : index
    %135 = vector.load %arg9[%c2_105, %c2_106, %c0_107] : memref<18x24x128xbf16, #tpu.memory_space<vmem>>, vector<8x16x128xbf16>
    %136 = vector.shape_cast %135 : vector<8x16x128xbf16> to vector<128x128xbf16>
    %c2_108 = arith.constant 2 : index
    %c2_109 = arith.constant 2 : index
    %c0_110 = arith.constant 0 : index
    %c0_111 = arith.constant 0 : index
    %137 = vector.load %arg5[%c2_108, %c2_109, %c0_110, %c0_111] : memref<3x3x128x128xbf16, #tpu.memory_space<vmem>>, vector<1x1x128x128xbf16>
    %138 = vector.shape_cast %137 : vector<1x1x128x128xbf16> to vector<128x128xbf16>
    %cst_112 = arith.constant dense<0.000000e+00> : vector<128x128xf32>
    %139 = tpu.matmul %136, %138, %cst_112 {dimension_numbers = #tpu.dot_dimension_numbers<[1], [0], [0], [1], [0, 0, 1, 1], [], []>} : vector<128x128xbf16>, vector<128x128xbf16>, vector<128x128xf32> -> vector<128x128xf32>
    %140 = arith.addf %134, %139 : vector<128x128xf32>
    %cst_113 = arith.constant 0.000000e+00 : f32
    %141 = vector.broadcast %cst_113 : f32 to vector<128x128xf32>
    %142 = arith.maximumf %140, %141 : vector<128x128xf32>
    %143 = vector.shape_cast %142 : vector<128x128xf32> to vector<8x16x128xf32>
    %144 = arith.truncf %143 : vector<8x16x128xf32> to vector<8x16x128xbf16>
    %c0_114 = arith.constant 0 : index
    %c0_115 = arith.constant 0 : index
    %c0_116 = arith.constant 0 : index
    %c0_117 = arith.constant 0 : index
    %145 = vector.load %arg8[%c0_114, %c0_115, %c0_116, %c0_117] : memref<1x16x16x128xbf16, #tpu.memory_space<vmem>>, vector<1x8x16x128xbf16>
    %146 = vector.shape_cast %145 : vector<1x8x16x128xbf16> to vector<8x16x128xbf16>
    %147 = vector.shape_cast %144 : vector<8x16x128xbf16> to vector<1x8x16x128xbf16>
    tpu.vector_store %arg8[%c0_114, %c0_115, %c0_116, %c0_117], %147 {strides = array<i32>} : memref<1x16x16x128xbf16, #tpu.memory_space<vmem>>, vector<1x8x16x128xbf16>,
    %c1_i32_118 = arith.constant 1 : i32
    %148 = arith.addi %1, %c1_i32_118 : i32
    %c8_i32_119 = arith.constant 8 : i32
    %149 = arith.addi %148, %c8_i32_119 : i32
    %c0_120 = arith.constant 0 : index
    %150 = arith.index_cast %149 : i32 to index
    %c1_121 = arith.constant 1 : index
    %c0_122 = arith.constant 0 : index
    %151 = vector.load %arg2[%c0_120, %150, %c1_121, %c0_122] : memref<1x18x24x128xbf16, #tpu.memory_space<vmem>>, vector<1x8x16x128xbf16>
    %152 = vector.shape_cast %151 : vector<1x8x16x128xbf16> to vector<8x16x128xbf16>
    %153 = vector.shape_cast %152 : vector<8x16x128xbf16> to vector<128x128xbf16>
    %cst_123 = arith.constant dense<0.000000e+00> : vector<128x128xf32>
    %154 = tpu.matmul %153, %3, %cst_123 {dimension_numbers = #tpu.dot_dimension_numbers<[1], [0], [0], [1], [0, 0, 1, 1], [], []>} : vector<128x128xbf16>, vector<128x128xbf16>, vector<128x128xf32> -> vector<128x128xf32>
    %155 = vector.broadcast %5 : vector<1x128xf32> to vector<128x128xf32>
    %156 = arith.addf %154, %155 : vector<128x128xf32>
    %c8_124 = arith.constant 8 : index
    %c0_125 = arith.constant 0 : index
    %c0_126 = arith.constant 0 : index
    %157 = vector.load %arg9[%c8_124, %c0_125, %c0_126] : memref<18x24x128xbf16, #tpu.memory_space<vmem>>, vector<8x16x128xbf16>
    %158 = vector.shape_cast %157 : vector<8x16x128xbf16> to vector<128x128xbf16>
    %c0_127 = arith.constant 0 : index
    %c0_128 = arith.constant 0 : index
    %c0_129 = arith.constant 0 : index
    %c0_130 = arith.constant 0 : index
    %159 = vector.load %arg5[%c0_127, %c0_128, %c0_129, %c0_130] : memref<3x3x128x128xbf16, #tpu.memory_space<vmem>>, vector<1x1x128x128xbf16>
    %160 = vector.shape_cast %159 : vector<1x1x128x128xbf16> to vector<128x128xbf16>
    %cst_131 = arith.constant dense<0.000000e+00> : vector<128x128xf32>
    %161 = tpu.matmul %158, %160, %cst_131 {dimension_numbers = #tpu.dot_dimension_numbers<[1], [0], [0], [1], [0, 0, 1, 1], [], []>} : vector<128x128xbf16>, vector<128x128xbf16>, vector<128x128xf32> -> vector<128x128xf32>
    %162 = arith.addf %156, %161 : vector<128x128xf32>
    %c8_132 = arith.constant 8 : index
    %c1_133 = arith.constant 1 : index
    %c0_134 = arith.constant 0 : index
    %163 = vector.load %arg9[%c8_132, %c1_133, %c0_134] : memref<18x24x128xbf16, #tpu.memory_space<vmem>>, vector<8x16x128xbf16>
    %164 = vector.shape_cast %163 : vector<8x16x128xbf16> to vector<128x128xbf16>
    %c0_135 = arith.constant 0 : index
    %c1_136 = arith.constant 1 : index
    %c0_137 = arith.constant 0 : index
    %c0_138 = arith.constant 0 : index
    %165 = vector.load %arg5[%c0_135, %c1_136, %c0_137, %c0_138] : memref<3x3x128x128xbf16, #tpu.memory_space<vmem>>, vector<1x1x128x128xbf16>
    %166 = vector.shape_cast %165 : vector<1x1x128x128xbf16> to vector<128x128xbf16>
    %cst_139 = arith.constant dense<0.000000e+00> : vector<128x128xf32>
    %167 = tpu.matmul %164, %166, %cst_139 {dimension_numbers = #tpu.dot_dimension_numbers<[1], [0], [0], [1], [0, 0, 1, 1], [], []>} : vector<128x128xbf16>, vector<128x128xbf16>, vector<128x128xf32> -> vector<128x128xf32>
    %168 = arith.addf %162, %167 : vector<128x128xf32>
    %c8_140 = arith.constant 8 : index
    %c2_141 = arith.constant 2 : index
    %c0_142 = arith.constant 0 : index
    %169 = vector.load %arg9[%c8_140, %c2_141, %c0_142] : memref<18x24x128xbf16, #tpu.memory_space<vmem>>, vector<8x16x128xbf16>
    %170 = vector.shape_cast %169 : vector<8x16x128xbf16> to vector<128x128xbf16>
    %c0_143 = arith.constant 0 : index
    %c2_144 = arith.constant 2 : index
    %c0_145 = arith.constant 0 : index
    %c0_146 = arith.constant 0 : index
    %171 = vector.load %arg5[%c0_143, %c2_144, %c0_145, %c0_146] : memref<3x3x128x128xbf16, #tpu.memory_space<vmem>>, vector<1x1x128x128xbf16>
    %172 = vector.shape_cast %171 : vector<1x1x128x128xbf16> to vector<128x128xbf16>
    %cst_147 = arith.constant dense<0.000000e+00> : vector<128x128xf32>
    %173 = tpu.matmul %170, %172, %cst_147 {dimension_numbers = #tpu.dot_dimension_numbers<[1], [0], [0], [1], [0, 0, 1, 1], [], []>} : vector<128x128xbf16>, vector<128x128xbf16>, vector<128x128xf32> -> vector<128x128xf32>
    %174 = arith.addf %168, %173 : vector<128x128xf32>
    %c9 = arith.constant 9 : index
    %c0_148 = arith.constant 0 : index
    %c0_149 = arith.constant 0 : index
    %175 = vector.load %arg9[%c9, %c0_148, %c0_149] : memref<18x24x128xbf16, #tpu.memory_space<vmem>>, vector<8x16x128xbf16>
    %176 = vector.shape_cast %175 : vector<8x16x128xbf16> to vector<128x128xbf16>
    %c1_150 = arith.constant 1 : index
    %c0_151 = arith.constant 0 : index
    %c0_152 = arith.constant 0 : index
    %c0_153 = arith.constant 0 : index
    %177 = vector.load %arg5[%c1_150, %c0_151, %c0_152, %c0_153] : memref<3x3x128x128xbf16, #tpu.memory_space<vmem>>, vector<1x1x128x128xbf16>
    %178 = vector.shape_cast %177 : vector<1x1x128x128xbf16> to vector<128x128xbf16>
    %cst_154 = arith.constant dense<0.000000e+00> : vector<128x128xf32>
    %179 = tpu.matmul %176, %178, %cst_154 {dimension_numbers = #tpu.dot_dimension_numbers<[1], [0], [0], [1], [0, 0, 1, 1], [], []>} : vector<128x128xbf16>, vector<128x128xbf16>, vector<128x128xf32> -> vector<128x128xf32>
    %180 = arith.addf %174, %179 : vector<128x128xf32>
    %c9_155 = arith.constant 9 : index
    %c1_156 = arith.constant 1 : index
    %c0_157 = arith.constant 0 : index
    %181 = vector.load %arg9[%c9_155, %c1_156, %c0_157] : memref<18x24x128xbf16, #tpu.memory_space<vmem>>, vector<8x16x128xbf16>
    %182 = vector.shape_cast %181 : vector<8x16x128xbf16> to vector<128x128xbf16>
    %c1_158 = arith.constant 1 : index
    %c1_159 = arith.constant 1 : index
    %c0_160 = arith.constant 0 : index
    %c0_161 = arith.constant 0 : index
    %183 = vector.load %arg5[%c1_158, %c1_159, %c0_160, %c0_161] : memref<3x3x128x128xbf16, #tpu.memory_space<vmem>>, vector<1x1x128x128xbf16>
    %184 = vector.shape_cast %183 : vector<1x1x128x128xbf16> to vector<128x128xbf16>
    %cst_162 = arith.constant dense<0.000000e+00> : vector<128x128xf32>
    %185 = tpu.matmul %182, %184, %cst_162 {dimension_numbers = #tpu.dot_dimension_numbers<[1], [0], [0], [1], [0, 0, 1, 1], [], []>} : vector<128x128xbf16>, vector<128x128xbf16>, vector<128x128xf32> -> vector<128x128xf32>
    %186 = arith.addf %180, %185 : vector<128x128xf32>
    %c9_163 = arith.constant 9 : index
    %c2_164 = arith.constant 2 : index
    %c0_165 = arith.constant 0 : index
    %187 = vector.load %arg9[%c9_163, %c2_164, %c0_165] : memref<18x24x128xbf16, #tpu.memory_space<vmem>>, vector<8x16x128xbf16>
    %188 = vector.shape_cast %187 : vector<8x16x128xbf16> to vector<128x128xbf16>
    %c1_166 = arith.constant 1 : index
    %c2_167 = arith.constant 2 : index
    %c0_168 = arith.constant 0 : index
    %c0_169 = arith.constant 0 : index
    %189 = vector.load %arg5[%c1_166, %c2_167, %c0_168, %c0_169] : memref<3x3x128x128xbf16, #tpu.memory_space<vmem>>, vector<1x1x128x128xbf16>
    %190 = vector.shape_cast %189 : vector<1x1x128x128xbf16> to vector<128x128xbf16>
    %cst_170 = arith.constant dense<0.000000e+00> : vector<128x128xf32>
    %191 = tpu.matmul %188, %190, %cst_170 {dimension_numbers = #tpu.dot_dimension_numbers<[1], [0], [0], [1], [0, 0, 1, 1], [], []>} : vector<128x128xbf16>, vector<128x128xbf16>, vector<128x128xf32> -> vector<128x128xf32>
    %192 = arith.addf %186, %191 : vector<128x128xf32>
    %c10 = arith.constant 10 : index
    %c0_171 = arith.constant 0 : index
    %c0_172 = arith.constant 0 : index
    %193 = vector.load %arg9[%c10, %c0_171, %c0_172] : memref<18x24x128xbf16, #tpu.memory_space<vmem>>, vector<8x16x128xbf16>
    %194 = vector.shape_cast %193 : vector<8x16x128xbf16> to vector<128x128xbf16>
    %c2_173 = arith.constant 2 : index
    %c0_174 = arith.constant 0 : index
    %c0_175 = arith.constant 0 : index
    %c0_176 = arith.constant 0 : index
    %195 = vector.load %arg5[%c2_173, %c0_174, %c0_175, %c0_176] : memref<3x3x128x128xbf16, #tpu.memory_space<vmem>>, vector<1x1x128x128xbf16>
    %196 = vector.shape_cast %195 : vector<1x1x128x128xbf16> to vector<128x128xbf16>
    %cst_177 = arith.constant dense<0.000000e+00> : vector<128x128xf32>
    %197 = tpu.matmul %194, %196, %cst_177 {dimension_numbers = #tpu.dot_dimension_numbers<[1], [0], [0], [1], [0, 0, 1, 1], [], []>} : vector<128x128xbf16>, vector<128x128xbf16>, vector<128x128xf32> -> vector<128x128xf32>
    %198 = arith.addf %192, %197 : vector<128x128xf32>
    %c10_178 = arith.constant 10 : index
    %c1_179 = arith.constant 1 : index
    %c0_180 = arith.constant 0 : index
    %199 = vector.load %arg9[%c10_178, %c1_179, %c0_180] : memref<18x24x128xbf16, #tpu.memory_space<vmem>>, vector<8x16x128xbf16>
    %200 = vector.shape_cast %199 : vector<8x16x128xbf16> to vector<128x128xbf16>
    %c2_181 = arith.constant 2 : index
    %c1_182 = arith.constant 1 : index
    %c0_183 = arith.constant 0 : index
    %c0_184 = arith.constant 0 : index
    %201 = vector.load %arg5[%c2_181, %c1_182, %c0_183, %c0_184] : memref<3x3x128x128xbf16, #tpu.memory_space<vmem>>, vector<1x1x128x128xbf16>
    %202 = vector.shape_cast %201 : vector<1x1x128x128xbf16> to vector<128x128xbf16>
    %cst_185 = arith.constant dense<0.000000e+00> : vector<128x128xf32>
    %203 = tpu.matmul %200, %202, %cst_185 {dimension_numbers = #tpu.dot_dimension_numbers<[1], [0], [0], [1], [0, 0, 1, 1], [], []>} : vector<128x128xbf16>, vector<128x128xbf16>, vector<128x128xf32> -> vector<128x128xf32>
    %204 = arith.addf %198, %203 : vector<128x128xf32>
    %c10_186 = arith.constant 10 : index
    %c2_187 = arith.constant 2 : index
    %c0_188 = arith.constant 0 : index
    %205 = vector.load %arg9[%c10_186, %c2_187, %c0_188] : memref<18x24x128xbf16, #tpu.memory_space<vmem>>, vector<8x16x128xbf16>
    %206 = vector.shape_cast %205 : vector<8x16x128xbf16> to vector<128x128xbf16>
    %c2_189 = arith.constant 2 : index
    %c2_190 = arith.constant 2 : index
    %c0_191 = arith.constant 0 : index
    %c0_192 = arith.constant 0 : index
    %207 = vector.load %arg5[%c2_189, %c2_190, %c0_191, %c0_192] : memref<3x3x128x128xbf16, #tpu.memory_space<vmem>>, vector<1x1x128x128xbf16>
    %208 = vector.shape_cast %207 : vector<1x1x128x128xbf16> to vector<128x128xbf16>
    %cst_193 = arith.constant dense<0.000000e+00> : vector<128x128xf32>
    %209 = tpu.matmul %206, %208, %cst_193 {dimension_numbers = #tpu.dot_dimension_numbers<[1], [0], [0], [1], [0, 0, 1, 1], [], []>} : vector<128x128xbf16>, vector<128x128xbf16>, vector<128x128xf32> -> vector<128x128xf32>
    %210 = arith.addf %204, %209 : vector<128x128xf32>
    %cst_194 = arith.constant 0.000000e+00 : f32
    %211 = vector.broadcast %cst_194 : f32 to vector<128x128xf32>
    %212 = arith.maximumf %210, %211 : vector<128x128xf32>
    %213 = vector.shape_cast %212 : vector<128x128xf32> to vector<8x16x128xf32>
    %214 = arith.truncf %213 : vector<8x16x128xf32> to vector<8x16x128xbf16>
    %c0_195 = arith.constant 0 : index
    %c8_196 = arith.constant 8 : index
    %c0_197 = arith.constant 0 : index
    %c0_198 = arith.constant 0 : index
    %215 = vector.load %arg8[%c0_195, %c8_196, %c0_197, %c0_198] : memref<1x16x16x128xbf16, #tpu.memory_space<vmem>>, vector<1x8x16x128xbf16>
    %216 = vector.shape_cast %215 : vector<1x8x16x128xbf16> to vector<8x16x128xbf16>
    %217 = vector.shape_cast %214 : vector<8x16x128xbf16> to vector<1x8x16x128xbf16>
    tpu.vector_store %arg8[%c0_195, %c8_196, %c0_197, %c0_198], %217 {strides = array<i32>} : memref<1x16x16x128xbf16, #tpu.memory_space<vmem>>, vector<1x8x16x128xbf16>,
    return
  }
  func.func @transform_0(%arg0: i32, %arg1: i32) -> (i32, i32, i32, i32) {
    %c0_i32 = arith.constant 0 : i32
    %c0_i32_0 = arith.constant 0 : i32
    %c0_i32_1 = arith.constant 0 : i32
    %c0_i32_2 = arith.constant 0 : i32
    return %arg0, %c0_i32, %c0_i32_0, %c0_i32_1 : i32, i32, i32, i32
  }
  func.func @transform_1(%arg0: i32, %arg1: i32) -> (i32, i32) {
    %c0_i32 = arith.constant 0 : i32
    %c0_i32_0 = arith.constant 0 : i32
    %c0_i32_1 = arith.constant 0 : i32
    return %c0_i32, %c0_i32_0 : i32, i32
  }
  func.func @transform_2(%arg0: i32, %arg1: i32) -> (i32, i32) {
    %c0_i32 = arith.constant 0 : i32
    %c0_i32_0 = arith.constant 0 : i32
    %c0_i32_1 = arith.constant 0 : i32
    return %c0_i32, %c0_i32_0 : i32, i32
  }
  func.func @transform_3(%arg0: i32, %arg1: i32) -> (i32, i32, i32, i32) {
    %c0_i32 = arith.constant 0 : i32
    %c0_i32_0 = arith.constant 0 : i32
    %c0_i32_1 = arith.constant 0 : i32
    %c0_i32_2 = arith.constant 0 : i32
    %c0_i32_3 = arith.constant 0 : i32
    return %c0_i32, %c0_i32_0, %c0_i32_1, %c0_i32_2 : i32, i32, i32, i32
  }
  func.func @transform_4(%arg0: i32, %arg1: i32) -> (i32, i32) {
    %c0_i32 = arith.constant 0 : i32
    %c0_i32_0 = arith.constant 0 : i32
    %c0_i32_1 = arith.constant 0 : i32
    return %c0_i32, %c0_i32_0 : i32, i32
  }
  func.func @transform_5(%arg0: i32, %arg1: i32) -> (i32, i32) {
    %c0_i32 = arith.constant 0 : i32
    %c0_i32_0 = arith.constant 0 : i32
    %c0_i32_1 = arith.constant 0 : i32
    return %c0_i32, %c0_i32_0 : i32, i32
  }
  func.func @transform_6(%arg0: i32, %arg1: i32) -> (i32, i32, i32, i32) {
    %c0_i32 = arith.constant 0 : i32
    %c0_i32_0 = arith.constant 0 : i32
    %c0_i32_1 = arith.constant 0 : i32
    return %arg0, %arg1, %c0_i32, %c0_i32_0 : i32, i32, i32, i32
  }
}

</mosaic_0001>

<llo_original>
// kernel: tpu_custom_call.1
$region0: #{tpu_custom_call.1}
  #allocation0 [shape = 'u32[]', space=smem, size = 0x4, offset = 0x4, fixed_abs, tag = 'smem constant byte address 0x4 - core index']
  #allocation1 [shape = 'u32[144,128]{1,0:T(1,128)}', space=vmem, size = 0x12000, scoped, tag = 'internal scratch']
  #allocation2 [shape = 'bf16[18,24,128]{2,1,0:T(8,128)(2,1)}', space=vmem, size = 0x1b000, scoped, tag = 'scratch operand']
  %s0 = inlined_call_operand.hbm [shape: bf16[2,18,24,128], index: 0, kind: input, shape index: {}]
  %s1 = inlined_call_operand.hbm [shape: bf16[128,128], index: 1, kind: input, shape index: {}]
  %s2 = inlined_call_operand.vmem [shape: f32[1,128], index: 2, kind: input, shape index: {}]
  %s3 = inlined_call_operand.hbm [shape: bf16[3,3,128,128], index: 3, kind: input, shape index: {}]
  %s4 = inlined_call_operand.hbm [shape: bf16[128,128], index: 4, kind: input, shape index: {}]
  %s5 = inlined_call_operand.vmem [shape: f32[1,128], index: 5, kind: input, shape index: {}]
  %s6 = inlined_call_operand.hbm [shape: bf16[2,16,16,128], index: 6, kind: output, shape index: {}]
  %s7 = sld [smem:[#allocation0]]
  $region73: #{tpu_custom_call.1} parent=0
    _
  %s9 = ssub.s32 1, %s7
  %s10 = scalar_select 0, %s9, %s7
  $region1: #{tpu_custom_call.1} parent=0
    #allocation3 [shape = 'u8[221184]{0}', space=vmem, size = 0x36000, scoped, tag = 'input window, operand 0']
    #allocation4 [shape = 's32[2]{0}', space=sflag, size = 0x8, scoped, tag = 'scoped memory for tpu_custom_call.1']
    #allocation5 [shape = 's32[2]{0}', space=sflag, size = 0x8, scoped, tag = 'scoped memory for tpu_custom_call.1']
    #allocation6 [shape = 'u8[32768]{0}', space=vmem, size = 0x8000, scoped, tag = 'input window, operand 1, single buffered']
    #allocation7 [shape = 's32[1]{0}', space=sflag, size = 0x4, scoped, tag = 'scoped memory for tpu_custom_call.1']
    #allocation8 [shape = 'u8[294912]{0}', space=vmem, size = 0x48000, scoped, tag = 'input window, operand 3, single buffered']
    #allocation9 [shape = 'u8[32768]{0}', space=vmem, size = 0x8000, scoped, tag = 'input window, operand 4, single buffered']
    #allocation10 [shape = 's32[1]{0}', space=sflag, size = 0x4, scoped, tag = 'scoped memory for tpu_custom_call.1']
    #allocation11 [shape = 'u8[131072]{0}', space=vmem, size = 0x20000, scoped, tag = 'output window, operand 0']
    %11 = vsyncpa [#allocation4], 0
    %s12 = scalar_lea.sflag [#allocation4], 1
    %13 = vsyncpa %s12, 0
    %14 = vsyncpa [#allocation7], 0
    %15 = vsyncpa [#allocation10], 0
    %16 = vsyncpa [#allocation5], 0
    %s17 = scalar_lea.sflag [#allocation5], 1
    %18 = vsyncpa %s17, 0
    loop: start=0, step=1, limit=4
    $region2: #{tpu_custom_call.1} parent=1 // loop_pre_header
      _
    $region3: #{tpu_custom_call.1} parent=1 // loop_header
      %s20 = sphi 0, %s24
      %p21 = scmp.ge.s32.totalorder %s20, 4
      %s27 = sphi 0, %s39
      %s28 = sphi 0, %s35
      %s29 = sphi 0, %s27
      %s30 = sphi 0, %s28
      %s31 = sphi 0, %s29
      %s32 = sphi 0, %s30
      %s42 = sphi 0, %s44
      %s45 = sphi 0, %s42
      %s46 = sphi 0, %s45
      %s62 = sphi 0, %s46
      %s66 = sphi 0, %s66
      %s68 = sphi 0, %s66
      %s69 = sphi 0, %s68
      %s83 = sphi 0, %s69
      %s87 = sphi 0, %s87
      %s89 = sphi 0, %s87
      %s90 = sphi 0, %s89
      %s104 = sphi 0, %s90
      %s108 = sphi 0, %s108
      %s110 = sphi 0, %s108
      %s111 = sphi 0, %s110
      %s125 = sphi 0, %s111
      %s129 = sphi 0, %s129
      %s131 = sphi 0, %s129
      %s132 = sphi 0, %s131
      %s146 = sphi 0, %s132
      %s150 = sphi 0, %s150
      %s152 = sphi 0, %s150
      %s153 = sphi 0, %s152
      %s167 = sphi 0, %s153
      %s175 = sphi 0, %s177
      %s178 = sphi 0, %s175
      %s179 = sphi 0, %s178
      %s195 = sphi 0, %s179
    $region4: #{tpu_custom_call.1} parent=1 // loop_header_branch
      %23 = sbr.rel (%p21) target = $region8
    $region5: #{tpu_custom_call.1} parent=1 // loop_body
      %s25 = ssub.s32 %s20, 1
      %s26 = ssub.s32 %s20, 2
      %s33 = sadd.s32 1, %s28
      %p34 = scmp.ge.s32.totalorder %s33, 1
      %s35 = scalar_select %p34, 0, %s33
      %s36 = sadd.s32 1, %s27
      %s37 = scalar_select %p34, %s36, %s27
      %p38 = scmp.ge.s32.totalorder %s37, 2
      %s39 = scalar_select %p38, 0, %s37
      %s40 = ssub.s32 %s27, %s39
      %p41 = scmp.eq.s32.totalorder %s40, 0
      %s43 = sadd.s32 %s42, 1
      %s44 = scalar_select %p41, %s42, %s43
      %p47 = pneg %p41
      %p48 = scmp.eq.s32.totalorder %s20, 1
      %p49 = por %p47, %p48
      %p50 = scmp.ne.s32.totalorder %s42, %s45
      %p51 = scmp.eq.s32.totalorder %s20, 0
      %p52 = por %p50, %p51
      %p53 = scmp.ne.s32.totalorder %s42, %s45
      %p54 = scmp.eq.s32.totalorder %s25, 1
      %p55 = por %p53, %p54
      %p56 = scmp.ne.s32.totalorder %s45, %s46
      %p57 = scmp.eq.s32.totalorder %s25, 0
      %p58 = por %p56, %p57
      %p59 = scmp.ne.s32.totalorder %s45, %s46
      %p60 = scmp.eq.s32.totalorder %s26, 1
      %p61 = por %p59, %p60
      %p63 = scmp.ne.s32.totalorder %s46, %s62
      %p64 = scmp.eq.s32.totalorder %s26, 0
      %p65 = por %p63, %p64
      %s67 = sadd.s32 %s66, 1
      %p70 = scmp.eq.s32.totalorder %s20, 1
      %p71 = scmp.ne.s32.totalorder %s66, %s68
      %p72 = scmp.eq.s32.totalorder %s20, 0
      %p73 = por %p71, %p72
      %p74 = scmp.ne.s32.totalorder %s66, %s68
      %p75 = scmp.eq.s32.totalorder %s25, 1
      %p76 = por %p74, %p75
      %p77 = scmp.ne.s32.totalorder %s68, %s69
      %p78 = scmp.eq.s32.totalorder %s25, 0
      %p79 = por %p77, %p78
      %p80 = scmp.ne.s32.totalorder %s68, %s69
      %p81 = scmp.eq.s32.totalorder %s26, 1
      %p82 = por %p80, %p81
      %p84 = scmp.ne.s32.totalorder %s69, %s83
      %p85 = scmp.eq.s32.totalorder %s26, 0
      %p86 = por %p84, %p85
      %s88 = sadd.s32 %s87, 1
      %p91 = scmp.eq.s32.totalorder %s20, 1
      %p92 = scmp.ne.s32.totalorder %s87, %s89
      %p93 = scmp.eq.s32.totalorder %s20, 0
      %p94 = por %p92, %p93
      %p95 = scmp.ne.s32.totalorder %s87, %s89
      %p96 = scmp.eq.s32.totalorder %s25, 1
      %p97 = por %p95, %p96
      %p98 = scmp.ne.s32.totalorder %s89, %s90
      %p99 = scmp.eq.s32.totalorder %s25, 0
      %p100 = por %p98, %p99
      %p101 = scmp.ne.s32.totalorder %s89, %s90
      %p102 = scmp.eq.s32.totalorder %s26, 1
      %p103 = por %p101, %p102
      %p105 = scmp.ne.s32.totalorder %s90, %s104
      %p106 = scmp.eq.s32.totalorder %s26, 0
      %p107 = por %p105, %p106
      %s109 = sadd.s32 %s108, 1
      %p112 = scmp.eq.s32.totalorder %s20, 1
      %p113 = scmp.ne.s32.totalorder %s108, %s110
      %p114 = scmp.eq.s32.totalorder %s20, 0
      %p115 = por %p113, %p114
      %p116 = scmp.ne.s32.totalorder %s108, %s110
      %p117 = scmp.eq.s32.totalorder %s25, 1
      %p118 = por %p116, %p117
      %p119 = scmp.ne.s32.totalorder %s110, %s111
      %p120 = scmp.eq.s32.totalorder %s25, 0
      %p121 = por %p119, %p120
      %p122 = scmp.ne.s32.totalorder %s110, %s111
      %p123 = scmp.eq.s32.totalorder %s26, 1
      %p124 = por %p122, %p123
      %p126 = scmp.ne.s32.totalorder %s111, %s125
      %p127 = scmp.eq.s32.totalorder %s26, 0
      %p128 = por %p126, %p127
      %s130 = sadd.s32 %s129, 1
      %p133 = scmp.eq.s32.totalorder %s20, 1
      %p134 = scmp.ne.s32.totalorder %s129, %s131
      %p135 = scmp.eq.s32.totalorder %s20, 0
      %p136 = por %p134, %p135
      %p137 = scmp.ne.s32.totalorder %s129, %s131
      %p138 = scmp.eq.s32.totalorder %s25, 1
      %p139 = por %p137, %p138
      %p140 = scmp.ne.s32.totalorder %s131, %s132
      %p141 = scmp.eq.s32.totalorder %s25, 0
      %p142 = por %p140, %p141
      %p143 = scmp.ne.s32.totalorder %s131, %s132
      %p144 = scmp.eq.s32.totalorder %s26, 1
      %p145 = por %p143, %p144
      %p147 = scmp.ne.s32.totalorder %s132, %s146
      %p148 = scmp.eq.s32.totalorder %s26, 0
      %p149 = por %p147, %p148
      %s151 = sadd.s32 %s150, 1
      %p154 = scmp.eq.s32.totalorder %s20, 1
      %p155 = scmp.ne.s32.totalorder %s150, %s152
      %p156 = scmp.eq.s32.totalorder %s20, 0
      %p157 = por %p155, %p156
      %p158 = scmp.ne.s32.totalorder %s150, %s152
      %p159 = scmp.eq.s32.totalorder %s25, 1
      %p160 = por %p158, %p159
      %p161 = scmp.ne.s32.totalorder %s152, %s153
      %p162 = scmp.eq.s32.totalorder %s25, 0
      %p163 = por %p161, %p162
      %p164 = scmp.ne.s32.totalorder %s152, %s153
      %p165 = scmp.eq.s32.totalorder %s26, 1
      %p166 = por %p164, %p165
      %p168 = scmp.ne.s32.totalorder %s153, %s167
      %p169 = scmp.eq.s32.totalorder %s26, 0
      %p170 = por %p168, %p169
      %s171 = ssub.s32 %s27, %s39
      %s172 = ssub.s32 %s28, %s35
      %s173 = sor.u32 %s171, %s172
      %p174 = scmp.eq.s32.totalorder %s173, 0
      %s176 = sadd.s32 %s175, 1
      %s177 = scalar_select %p174, %s175, %s176
      %p180 = pneg %p174
      %p181 = scmp.eq.s32.totalorder %s20, 1
      %p182 = por %p180, %p181
      %p183 = scmp.ne.s32.totalorder %s175, %s178
      %p184 = scmp.eq.s32.totalorder %s20, 0
      %p185 = por %p183, %p184
      %p186 = scmp.ne.s32.totalorder %s175, %s178
      %p187 = scmp.eq.s32.totalorder %s25, 1
      %p188 = por %p186, %p187
      %p189 = scmp.ne.s32.totalorder %s178, %s179
      %p190 = scmp.eq.s32.totalorder %s25, 0
      %p191 = por %p189, %p190
      %p192 = scmp.ne.s32.totalorder %s178, %s179
      %p193 = scmp.eq.s32.totalorder %s26, 1
      %p194 = por %p192, %p193
      %p196 = scmp.ne.s32.totalorder %s179, %s195
      %p197 = scmp.eq.s32.totalorder %s26, 0
      %p198 = por %p196, %p197
      %p199 = scmp.le.s32.totalorder 1, %s20
      %p200 = scmp.lt.s32.totalorder %s20, 3
      %p201 = pnand %p199, %p200
      %p202 = pneg %p201
      // Predicated region
      $region9: #{tpu_custom_call.1} parent=5 // pred_check
        _
      $region10: #{tpu_custom_call.1} parent=5 // pred_check_branch
        %204 = sbr.rel (%p201) target = $region12
      $region11: #{tpu_custom_call.1} parent=5 // pred_region
        %s205 = ssub.s32 %s20, 1
        // Predicated region
        $region13: #{tpu_custom_call.1} parent=11 // pred_check
          %p206 = pneg %p79
        $region14: #{tpu_custom_call.1} parent=11 // pred_check_branch
          %208 = sbr.rel (%p206) target = $region16
        $region15: #{tpu_custom_call.1} parent=11 // pred_region
          %s210 = ssub.s32 1024, 1024
          %211 = vsyncadd [#allocation7], %s210
          %s212 = sshll.u32 [#allocation6], 4
          %s213 = int_to_ptr.vmem [resolvable:$true] %s212
          %218 = dma.hbm_to_vmem [thread:$0]  %s1, 1024, %s213, [#allocation7], 64, 64, 4
        $region16: #{tpu_custom_call.1} parent=11 // pred_fallthru
          _
        // Predicated region
        $region17: #{tpu_custom_call.1} parent=11 // pred_check
          %p219 = pneg %p100
        $region18: #{tpu_custom_call.1} parent=11 // pred_check_branch
          %221 = sbr.rel (%p219) target = $region20
        $region19: #{tpu_custom_call.1} parent=11 // pred_region
          _
        $region20: #{tpu_custom_call.1} parent=11 // pred_fallthru
          _
        // Predicated region
        $region21: #{tpu_custom_call.1} parent=11 // pred_check
          %p222 = pneg %p121
        $region22: #{tpu_custom_call.1} parent=11 // pred_check_branch
          %224 = sbr.rel (%p222) target = $region24
        $region23: #{tpu_custom_call.1} parent=11 // pred_region
          %s226 = ssub.s32 9216, 9216
          %227 = vsyncadd [#allocation7], %s226
          %s228 = sshll.u32 [#allocation8], 4
          %s229 = int_to_ptr.vmem [resolvable:$true] %s228
          %234 = dma.hbm_to_vmem [thread:$0]  %s3, 9216, %s229, [#allocation7], 64, 64, 4
        $region24: #{tpu_custom_call.1} parent=11 // pred_fallthru
          _
        // Predicated region
        $region25: #{tpu_custom_call.1} parent=11 // pred_check
          %p235 = pneg %p142
        $region26: #{tpu_custom_call.1} parent=11 // pred_check_branch
          %237 = sbr.rel (%p235) target = $region28
        $region27: #{tpu_custom_call.1} parent=11 // pred_region
          %s239 = ssub.s32 1024, 1024
          %240 = vsyncadd [#allocation10], %s239
          %s241 = sshll.u32 [#allocation9], 4
          %s242 = int_to_ptr.vmem [resolvable:$true] %s241
          %247 = dma.hbm_to_vmem [thread:$0]  %s4, 1024, %s242, [#allocation10], 64, 64, 4
        $region28: #{tpu_custom_call.1} parent=11 // pred_fallthru
          _
        // Predicated region
        $region29: #{tpu_custom_call.1} parent=11 // pred_check
          %p248 = pneg %p163
        $region30: #{tpu_custom_call.1} parent=11 // pred_check_branch
          %250 = sbr.rel (%p248) target = $region32
        $region31: #{tpu_custom_call.1} parent=11 // pred_region
          _
        $region32: #{tpu_custom_call.1} parent=11 // pred_fallthru
          _
      $region12: #{tpu_custom_call.1} parent=5 // pred_fallthru
        _
      %p251 = scmp.lt.s32.totalorder %s20, 2
      // Predicated region
      $region33: #{tpu_custom_call.1} parent=5 // pred_check
        %p252 = pneg %p251
      $region34: #{tpu_custom_call.1} parent=5 // pred_check_branch
        %254 = sbr.rel (%p252) target = $region36
      $region35: #{tpu_custom_call.1} parent=5 // pred_region
        // Predicated region
        $region37: #{tpu_custom_call.1} parent=35 // pred_check
          %p255 = pneg %p52
        $region38: #{tpu_custom_call.1} parent=35 // pred_check_branch
          %257 = sbr.rel (%p255) target = $region40
        $region39: #{tpu_custom_call.1} parent=35 // pred_region
          %s258 = sand.u32 %s42, 1
          %s259 = scalar_lea.sflag [#allocation4], %s258
          %s260 = sand.u32 %s42, 1
          %s261 = smul.addr %s260, 216
          %s262 = scalar_lea.vmem [#allocation3], %s261
          %s264 = ssub.s32 3456, 3456
          %265 = vsyncadd %s259, %s264
          %s266 = smul.addr %s27, 54
          %s267 = smul.addr %s266, 64
          %s268 = scalar_lea.hbm %s0, %s267
          %s269 = sshll.u32 %s262, 4
          %s270 = int_to_ptr.vmem [resolvable:$true] %s269
          %275 = dma.hbm_to_vmem [thread:$0]  %s268, 3456, %s270, %s259, 64, 64, 4
        $region40: #{tpu_custom_call.1} parent=35 // pred_fallthru
          _
      $region36: #{tpu_custom_call.1} parent=5 // pred_fallthru
        _
      %p276 = scmp.le.s32.totalorder 1, %s20
      %p277 = scmp.lt.s32.totalorder %s20, 3
      %p278 = pnand %p276, %p277
      %p279 = pneg %p278
      // Predicated region
      $region41: #{tpu_custom_call.1} parent=5 // pred_check
        _
      $region42: #{tpu_custom_call.1} parent=5 // pred_check_branch
        %281 = sbr.rel (%p278) target = $region44
      $region43: #{tpu_custom_call.1} parent=5 // pred_region
        %s282 = ssub.s32 %s20, 1
        %s283 = sand.u32 %s45, 1
        %s284 = scalar_lea.sflag [#allocation4], %s283
        %s285 = sand.u32 %s45, 1
        %s286 = smul.addr %s285, 216
        %s287 = scalar_lea.vmem [#allocation3], %s286
        // Predicated region
        $region45: #{tpu_custom_call.1} parent=43 // pred_check
          %p288 = pneg %p58
        $region46: #{tpu_custom_call.1} parent=43 // pred_check_branch
          %290 = sbr.rel (%p288) target = $region48
        $region47: #{tpu_custom_call.1} parent=43 // pred_region
          %291 = dma.done %s284, 3456
        $region48: #{tpu_custom_call.1} parent=43 // pred_fallthru
          _
        // Predicated region
        $region49: #{tpu_custom_call.1} parent=43 // pred_check
          %p292 = pneg %p79
        $region50: #{tpu_custom_call.1} parent=43 // pred_check_branch
          %294 = sbr.rel (%p292) target = $region52
        $region51: #{tpu_custom_call.1} parent=43 // pred_region
          %295 = dma.done [#allocation7], 1024
        $region52: #{tpu_custom_call.1} parent=43 // pred_fallthru
          _
        // Predicated region
        $region53: #{tpu_custom_call.1} parent=43 // pred_check
          %p296 = pneg %p121
        $region54: #{tpu_custom_call.1} parent=43 // pred_check_branch
          %298 = sbr.rel (%p296) target = $region56
        $region55: #{tpu_custom_call.1} parent=43 // pred_region
          %299 = dma.done [#allocation7], 9216
        $region56: #{tpu_custom_call.1} parent=43 // pred_fallthru
          _
        // Predicated region
        $region57: #{tpu_custom_call.1} parent=43 // pred_check
          %p300 = pneg %p142
        $region58: #{tpu_custom_call.1} parent=43 // pred_check_branch
          %302 = sbr.rel (%p300) target = $region60
        $region59: #{tpu_custom_call.1} parent=43 // pred_region
          %303 = dma.done [#allocation10], 1024
        $region60: #{tpu_custom_call.1} parent=43 // pred_fallthru
          _
        %s304 = sand.u32 %s45, 1
        %s305 = scalar_lea.sflag [#allocation4], %s304
        %s306 = sand.u32 %s45, 1
        %s307 = smul.addr %s306, 216
        %s308 = scalar_lea.vmem [#allocation3], %s307
        %p309 = pneg %p58
        %p310 = pneg %p55
        %p311 = pneg %p79
        %p312 = pneg %p76
        %p313 = pneg %p100
        %p314 = pneg %p97
        %p315 = pneg %p121
        %p316 = pneg %p118
        %p317 = pneg %p142
        %p318 = pneg %p139
        %p319 = pneg %p163
        %p320 = pneg %p160
        %p321 = pneg %p191
        %p322 = pneg %p188
        %s323 = sand.u32 %s178, 1
        %s324 = scalar_lea.sflag [#allocation5], %s323
        %s325 = sand.u32 %s178, 1
        %s326 = smul.addr %s325, 128
        %s327 = scalar_lea.vmem [#allocation11], %s326
        %s328 = smul.u32 16, %s30
        %s330 = smul.u32 %s30, 16
        %v331 = vld [vmem:[#allocation6] sm:$0xf]
        %v332 = vld [vmem:[#allocation6 + $0x4] sm:$0xf]
        %v333 = vld [vmem:[#allocation6 + $0x8] sm:$0xf]
        %v334 = vld [vmem:[#allocation6 + $0xc] sm:$0xf]
        %v335 = vld [vmem:[#allocation6 + $0x10] sm:$0xf]
        %v336 = vld [vmem:[#allocation6 + $0x14] sm:$0xf]
        %v337 = vld [vmem:[#allocation6 + $0x18] sm:$0xf]
        %v338 = vld [vmem:[#allocation6 + $0x1c] sm:$0xf]
        %v339 = vld [vmem:[#allocation6 + $0x20] sm:$0xf]
        %v340 = vld [vmem:[#allocation6 + $0x24] sm:$0xf]
        %v341 = vld [vmem:[#allocation6 + $0x28] sm:$0xf]
        %v342 = vld [vmem:[#allocation6 + $0x2c] sm:$0xf]
        %v343 = vld [vmem:[#allocation6 + $0x30] sm:$0xf]
        %v344 = vld [vmem:[#allocation6 + $0x34] sm:$0xf]
        %v345 = vld [vmem:[#allocation6 + $0x38] sm:$0xf]
        %v346 = vld [vmem:[#allocation6 + $0x3c] sm:$0xf]
        %v347 = vld [vmem:[#allocation9] sm:$0xf]
        %v348 = vld [vmem:[#allocation9 + $0x4] sm:$0xf]
        %v349 = vld [vmem:[#allocation9 + $0x8] sm:$0xf]
        %v350 = vld [vmem:[#allocation9 + $0xc] sm:$0xf]
        %v351 = vld [vmem:[#allocation9 + $0x10] sm:$0xf]
        %v352 = vld [vmem:[#allocation9 + $0x14] sm:$0xf]
        %v353 = vld [vmem:[#allocation9 + $0x18] sm:$0xf]
        %v354 = vld [vmem:[#allocation9 + $0x1c] sm:$0xf]
        %v355 = vld [vmem:[#allocation9 + $0x20] sm:$0xf]
        %v356 = vld [vmem:[#allocation9 + $0x24] sm:$0xf]
        %v357 = vld [vmem:[#allocation9 + $0x28] sm:$0xf]
        %v358 = vld [vmem:[#allocation9 + $0x2c] sm:$0xf]
        %v359 = vld [vmem:[#allocation9 + $0x30] sm:$0xf]
        %v360 = vld [vmem:[#allocation9 + $0x34] sm:$0xf]
        %v361 = vld [vmem:[#allocation9 + $0x38] sm:$0xf]
        %v362 = vld [vmem:[#allocation9 + $0x3c] sm:$0xf]
        %v363 = vld [vmem:[%s2] sm:$0x1]
        %v364 = vld [vmem:[%s5] sm:$0x1]
        %s365 = ssub.s32 %s330, 1
        %v366 = vstv %s365
        %v367 = vadd.s32 %v366, 1
        %v368 = vadd.s32 %v366, 2
        %v369 = vadd.s32 %v366, 3
        %v370 = vadd.s32 %v366, 4
        %v371 = vadd.s32 %v366, 5
        %v372 = vadd.s32 %v366, 6
        %v373 = vadd.s32 %v366, 7
        %v374 = vadd.s32 %v366, 8
        %v375 = vadd.s32 %v366, 9
        %v376 = vadd.s32 %v366, 10
        %v377 = vadd.s32 %v366, 11
        %v378 = vadd.s32 %v366, 12
        %v379 = vadd.s32 %v366, 13
        %v380 = vadd.s32 %v366, 14
        %v381 = vadd.s32 %v366, 15
        %v382 = vadd.s32 %v366, 16
        %v383 = vadd.s32 %v366, 17
        %v384 = vlaneseq
        %v385 = vshrl.u32 %v384, 7
        %v386 = vadd.s32 %v385, 8
        %v387 = vadd.s32 %v385, 16
        %v388 = vsub.s32 %v385, 1
        %v389 = vsub.s32 %v386, 1
        %v390 = vsub.s32 %v387, 1
        %vm391 = vcmp.ge.s32.totalorder %v366, 0
        %vm392 = vcmp.ge.s32.totalorder %v367, 0
        %vm393 = vcmp.ge.s32.totalorder %v368, 0
        %vm394 = vcmp.ge.s32.totalorder %v369, 0
        %vm395 = vcmp.ge.s32.totalorder %v370, 0
        %vm396 = vcmp.ge.s32.totalorder %v371, 0
        %vm397 = vcmp.ge.s32.totalorder %v372, 0
        %vm398 = vcmp.ge.s32.totalorder %v373, 0
        %vm399 = vcmp.ge.s32.totalorder %v374, 0
        %vm400 = vcmp.ge.s32.totalorder %v375, 0
        %vm401 = vcmp.ge.s32.totalorder %v376, 0
        %vm402 = vcmp.ge.s32.totalorder %v377, 0
        %vm403 = vcmp.ge.s32.totalorder %v378, 0
        %vm404 = vcmp.ge.s32.totalorder %v379, 0
        %vm405 = vcmp.ge.s32.totalorder %v380, 0
        %vm406 = vcmp.ge.s32.totalorder %v381, 0
        %vm407 = vcmp.ge.s32.totalorder %v382, 0
        %vm408 = vcmp.ge.s32.totalorder %v383, 0
        %vm409 = vcmp.lt.s32.totalorder %v366, 16
        %vm410 = vcmp.lt.s32.totalorder %v367, 16
        %vm411 = vcmp.lt.s32.totalorder %v368, 16
        %vm412 = vcmp.lt.s32.totalorder %v369, 16
        %vm413 = vcmp.lt.s32.totalorder %v370, 16
        %vm414 = vcmp.lt.s32.totalorder %v371, 16
        %vm415 = vcmp.lt.s32.totalorder %v372, 16
        %vm416 = vcmp.lt.s32.totalorder %v373, 16
        %vm417 = vcmp.lt.s32.totalorder %v374, 16
        %vm418 = vcmp.lt.s32.totalorder %v375, 16
        %vm419 = vcmp.lt.s32.totalorder %v376, 16
        %vm420 = vcmp.lt.s32.totalorder %v377, 16
        %vm421 = vcmp.lt.s32.totalorder %v378, 16
        %vm422 = vcmp.lt.s32.totalorder %v379, 16
        %vm423 = vcmp.lt.s32.totalorder %v380, 16
        %vm424 = vcmp.lt.s32.totalorder %v381, 16
        %vm425 = vcmp.lt.s32.totalorder %v382, 16
        %vm426 = vcmp.lt.s32.totalorder %v383, 16
        %vm427 = vmand %vm391, %vm409
        %vm428 = vmand %vm392, %vm410
        %vm429 = vmand %vm393, %vm411
        %vm430 = vmand %vm394, %vm412
        %vm431 = vmand %vm395, %vm413
        %vm432 = vmand %vm396, %vm414
        %vm433 = vmand %vm397, %vm415
        %vm434 = vmand %vm398, %vm416
        %vm435 = vmand %vm399, %vm417
        %vm436 = vmand %vm400, %vm418
        %vm437 = vmand %vm401, %vm419
        %vm438 = vmand %vm402, %vm420
        %vm439 = vmand %vm403, %vm421
        %vm440 = vmand %vm404, %vm422
        %vm441 = vmand %vm405, %vm423
        %vm442 = vmand %vm406, %vm424
        %vm443 = vmand %vm407, %vm425
        %vm444 = vmand %vm408, %vm426
        %vm445 = vcmp.ge.s32.totalorder %v388, 0
        %vm446 = vcmp.ge.s32.totalorder %v389, 0
        %vm447 = vcmp.ge.s32.totalorder %v390, 0
        %vm448 = vmand %vm427, %vm445
        %vm449 = vmand %vm427, %vm446
        %vm450 = vmand %vm427, %vm447
        %vm451 = vmand %vm428, %vm445
        %vm452 = vmand %vm428, %vm446
        %vm453 = vmand %vm428, %vm447
        %vm454 = vmand %vm429, %vm445
        %vm455 = vmand %vm429, %vm446
        %vm456 = vmand %vm429, %vm447
        %vm457 = vmand %vm430, %vm445
        %vm458 = vmand %vm430, %vm446
        %vm459 = vmand %vm430, %vm447
        %vm460 = vmand %vm431, %vm445
        %vm461 = vmand %vm431, %vm446
        %vm462 = vmand %vm431, %vm447
        %vm463 = vmand %vm432, %vm445
        %vm464 = vmand %vm432, %vm446
        %vm465 = vmand %vm432, %vm447
        %vm466 = vmand %vm433, %vm445
        %vm467 = vmand %vm433, %vm446
        %vm468 = vmand %vm433, %vm447
        %vm469 = vmand %vm434, %vm445
        %vm470 = vmand %vm434, %vm446
        %vm471 = vmand %vm434, %vm447
        %vm472 = vmand %vm435, %vm445
        %vm473 = vmand %vm435, %vm446
        %vm474 = vmand %vm435, %vm447
        %vm475 = vmand %vm436, %vm445
        %vm476 = vmand %vm436, %vm446
        %vm477 = vmand %vm436, %vm447
        %vm478 = vmand %vm437, %vm445
        %vm479 = vmand %vm437, %vm446
        %vm480 = vmand %vm437, %vm447
        %vm481 = vmand %vm438, %vm445
        %vm482 = vmand %vm438, %vm446
        %vm483 = vmand %vm438, %vm447
        %vm484 = vmand %vm439, %vm445
        %vm485 = vmand %vm439, %vm446
        %vm486 = vmand %vm439, %vm447
        %vm487 = vmand %vm440, %vm445
        %vm488 = vmand %vm440, %vm446
        %vm489 = vmand %vm440, %vm447
        %vm490 = vmand %vm441, %vm445
        %vm491 = vmand %vm441, %vm446
        %vm492 = vmand %vm441, %vm447
        %vm493 = vmand %vm442, %vm445
        %vm494 = vmand %vm442, %vm446
        %vm495 = vmand %vm442, %vm447
        %vm496 = vmand %vm443, %vm445
        %vm497 = vmand %vm443, %vm446
        %vm498 = vmand %vm443, %vm447
        %vm499 = vmand %vm444, %vm445
        %vm500 = vmand %vm444, %vm446
        %vm501 = vmand %vm444, %vm447
        %vm502 = vcmp.lt.s32.totalorder %v388, 16
        %vm503 = vcmp.lt.s32.totalorder %v389, 16
        %vm504 = vcmp.lt.s32.totalorder %v390, 16
        %vm505 = vmand %vm448, %vm502
        %vm506 = vmand %vm449, %vm503
        %vm507 = vmand %vm450, %vm504
        %vm508 = vmand %vm451, %vm502
        %vm509 = vmand %vm452, %vm503
        %vm510 = vmand %vm453, %vm504
        %vm511 = vmand %vm454, %vm502
        %vm512 = vmand %vm455, %vm503
        %vm513 = vmand %vm456, %vm504
        %vm514 = vmand %vm457, %vm502
        %vm515 = vmand %vm458, %vm503
        %vm516 = vmand %vm459, %vm504
        %vm517 = vmand %vm460, %vm502
        %vm518 = vmand %vm461, %vm503
        %vm519 = vmand %vm462, %vm504
        %vm520 = vmand %vm463, %vm502
        %vm521 = vmand %vm464, %vm503
        %vm522 = vmand %vm465, %vm504
        %vm523 = vmand %vm466, %vm502
        %vm524 = vmand %vm467, %vm503
        %vm525 = vmand %vm468, %vm504
        %vm526 = vmand %vm469, %vm502
        %vm527 = vmand %vm470, %vm503
        %vm528 = vmand %vm471, %vm504
        %vm529 = vmand %vm472, %vm502
        %vm530 = vmand %vm473, %vm503
        %vm531 = vmand %vm474, %vm504
        %vm532 = vmand %vm475, %vm502
        %vm533 = vmand %vm476, %vm503
        %vm534 = vmand %vm477, %vm504
        %vm535 = vmand %vm478, %vm502
        %vm536 = vmand %vm479, %vm503
        %vm537 = vmand %vm480, %vm504
        %vm538 = vmand %vm481, %vm502
        %vm539 = vmand %vm482, %vm503
        %vm540 = vmand %vm483, %vm504
        %vm541 = vmand %vm484, %vm502
        %vm542 = vmand %vm485, %vm503
        %vm543 = vmand %vm486, %vm504
        %vm544 = vmand %vm487, %vm502
        %vm545 = vmand %vm488, %vm503
        %vm546 = vmand %vm489, %vm504
        %vm547 = vmand %vm490, %vm502
        %vm548 = vmand %vm491, %vm503
        %vm549 = vmand %vm492, %vm504
        %vm550 = vmand %vm493, %vm502
        %vm551 = vmand %vm494, %vm503
        %vm552 = vmand %vm495, %vm504
        %vm553 = vmand %vm496, %vm502
        %vm554 = vmand %vm497, %vm503
        %vm555 = vmand %vm498, %vm504
        %vm556 = vmand %vm499, %vm502
        %vm557 = vmand %vm500, %vm503
        %vm558 = vmand %vm501, %vm504
        %s559 = smul.u32 %s330, 3
        %s560 = smul.addr %s559, 4
        %s561 = scalar_lea.vmem %s287, %s560 [#allocation3]
        %v562 = vld [vmem:[%s561] sm:$0xf]
        %v563 = vld [vmem:[%s561 + $0x4] sm:$0xf]
        %v564 = vld [vmem:[%s561 + $0x8] sm:$0xf]
        %v565 = vld [vmem:[%s561 + $0xc] sm:$0xf]
        %v566 = vld [vmem:[%s561 + $0x10] sm:$0xf]
        %v567 = vld [vmem:[%s561 + $0x14] sm:$0xf]
        %v568 = vld [vmem:[%s561 + $0x18] sm:$0xf]
        %v569 = vld [vmem:[%s561 + $0x1c] sm:$0xf]
        %v570 = vld [vmem:[%s561 + $0x20] sm:$0xf]
        %v571 = vld [vmem:[%s561 + $0x24] sm:$0xf]
        %v572 = vld [vmem:[%s561 + $0x28] sm:$0xf]
        %v573 = vld [vmem:[%s561 + $0x2c] sm:$0xf]
        %v574 = vld [vmem:[%s561 + $0x30] sm:$0xf]
        %v575 = vld [vmem:[%s561 + $0x34] sm:$0xf]
        %v576 = vld [vmem:[%s561 + $0x38] sm:$0xf]
        %v577 = vld [vmem:[%s561 + $0x3c] sm:$0xf]
        %v578 = vld [vmem:[%s561 + $0x40] sm:$0xf]
        %v579 = vld [vmem:[%s561 + $0x44] sm:$0xf]
        %v580 = vld [vmem:[%s561 + $0x48] sm:$0xf]
        %v581 = vld [vmem:[%s561 + $0x4c] sm:$0xf]
        %v582 = vld [vmem:[%s561 + $0x50] sm:$0xf]
        %v583 = vld [vmem:[%s561 + $0x54] sm:$0xf]
        %v584 = vld [vmem:[%s561 + $0x58] sm:$0xf]
        %v585 = vld [vmem:[%s561 + $0x5c] sm:$0xf]
        %v587 = vlaneseq
        %v588 = vshrl.u32 %v587, 7
        %v589 = vsub.s32 0, %v588
        %v590 = vrot.slane %v363, %v589
        %v616 = vunpack.c.l.b16 %v562
        %v617 = vunpack.c.l.b16 %v563
        %v618 = vunpack.c.l.b16 %v564
        %v619 = vunpack.c.l.b16 %v565
        %v620 = vunpack.c.l.b16 %v566
        %v621 = vunpack.c.l.b16 %v567
        %v622 = vunpack.c.l.b16 %v568
        %v623 = vunpack.c.l.b16 %v569
        %v624 = vunpack.c.l.b16 %v570
        %v625 = vunpack.c.l.b16 %v571
        %v626 = vunpack.c.l.b16 %v572
        %v627 = vunpack.c.l.b16 %v573
        %v628 = vunpack.c.l.b16 %v574
        %v629 = vunpack.c.l.b16 %v575
        %v630 = vunpack.c.l.b16 %v576
        %v631 = vunpack.c.l.b16 %v577
        %v632 = vunpack.c.l.b16 %v578
        %v633 = vunpack.c.l.b16 %v579
        %v634 = vunpack.c.l.b16 %v580
        %v635 = vunpack.c.l.b16 %v581
        %v636 = vunpack.c.l.b16 %v582
        %v637 = vunpack.c.l.b16 %v583
        %v638 = vunpack.c.l.b16 %v584
        %v639 = vunpack.c.l.b16 %v585
        %v640 = vpack.c.b16 %v617, %v616
        %v641 = vpack.c.b16 %v619, %v618
        %v642 = vpack.c.b16 %v621, %v620
        %v643 = vpack.c.b16 %v623, %v622
        %v644 = vpack.c.b16 %v625, %v624
        %v645 = vpack.c.b16 %v627, %v626
        %v646 = vpack.c.b16 %v629, %v628
        %v647 = vpack.c.b16 %v631, %v630
        %v648 = vpack.c.b16 %v633, %v632
        %v649 = vpack.c.b16 %v635, %v634
        %v650 = vpack.c.b16 %v637, %v636
        %v651 = vpack.c.b16 %v639, %v638
        %v680 = vunpack.c.l.b16 %v331
        %v681 = vunpack.c.l.b16 %v332
        %v682 = vunpack.c.l.b16 %v333
        %v683 = vunpack.c.l.b16 %v334
        %v684 = vunpack.c.l.b16 %v335
        %v685 = vunpack.c.l.b16 %v336
        %v686 = vunpack.c.l.b16 %v337
        %v687 = vunpack.c.l.b16 %v338
        %v688 = vunpack.c.l.b16 %v339
        %v689 = vunpack.c.l.b16 %v340
        %v690 = vunpack.c.l.b16 %v341
        %v691 = vunpack.c.l.b16 %v342
        %v692 = vunpack.c.l.b16 %v343
        %v693 = vunpack.c.l.b16 %v344
        %v694 = vunpack.c.l.b16 %v345
        %v695 = vunpack.c.l.b16 %v346
        %v696 = vpack.c.b16 %v681, %v680
        %v697 = vpack.c.b16 %v683, %v682
        %v698 = vpack.c.b16 %v685, %v684
        %v699 = vpack.c.b16 %v687, %v686
        %v700 = vpack.c.b16 %v689, %v688
        %v701 = vpack.c.b16 %v691, %v690
        %v702 = vpack.c.b16 %v693, %v692
        %v703 = vpack.c.b16 %v695, %v694
        %712 = vmatprep.subr.bf16.mxu0 0
        %713 = vmatpush1.bf16.msra.mxu0 %v696
        %714 = vmatprep.subr.bf16.mxu0 0
        %715 = vmatpush1.bf16.msra.mxu0 %v697
        %716 = vmatprep.subr.bf16.mxu0 0
        %717 = vmatpush1.bf16.msra.mxu0 %v698
        %718 = vmatprep.subr.bf16.mxu0 0
        %719 = vmatpush1.bf16.msra.mxu0 %v699
        %720 = vmatprep.subr.bf16.mxu0 0
        %721 = vmatpush1.bf16.msra.mxu0 %v700
        %722 = vmatprep.subr.bf16.mxu0 0
        %723 = vmatpush1.bf16.msra.mxu0 %v701
        %724 = vmatprep.subr.bf16.mxu0 0
        %725 = vmatpush1.bf16.msra.mxu0 %v702
        %726 = vmatprep.subr.bf16.mxu0 0
        %727 = vmatpush1.bf16.msra.mxu0 %v703
        %728 = vmatprep.subr.bf16.mxu0 0
        %729 = vmatpush1.bf16.msra.mxu0 0
        %730 = vmatprep.subr.bf16.mxu0 0
        %731 = vmatpush1.bf16.msra.mxu0 0
        %732 = vmatprep.subr.bf16.mxu0 0
        %733 = vmatpush1.bf16.msra.mxu0 0
        %734 = vmatprep.subr.bf16.mxu0 0
        %735 = vmatpush1.bf16.msra.mxu0 0
        %736 = vmatprep.subr.bf16.mxu0 0
        %737 = vmatpush1.bf16.msra.mxu0 0
        %738 = vmatprep.subr.bf16.mxu0 0
        %739 = vmatpush1.bf16.msra.mxu0 0
        %740 = vmatprep.subr.bf16.mxu0 0
        %741 = vmatpush1.bf16.msra.mxu0 0
        %742 = vmatprep.subr.bf16.mxu0 0
        %743 = vmatpush1.bf16.msra.mxu0 0
        %744 = vmatprep.mubr.bf16.mxu0 0
        %745 = vmatmul.mubr.bf16.gmra.mrb[0].mxu0 %v640
        %v746 = vpop.f32.mrb[0].mxu0
        %v747 = vadd.f32 %v590, %v746
        %v748 = vpop.f32.mrb[0].mxu0
        %v749 = vpop.f32.mrb[0].mxu0
        %v750 = vadd.f32 %v590, %v749
        %v751 = vpop.f32.mrb[0].mxu0
        %752 = vmatprep.mubr.bf16.mxu0 0
        %753 = vmatmul.mubr.bf16.gmra.mrb[0].mxu0 %v641
        %v754 = vpop.f32.mrb[0].mxu0
        %v755 = vadd.f32 %v590, %v754
        %v756 = vpop.f32.mrb[0].mxu0
        %v757 = vpop.f32.mrb[0].mxu0
        %v758 = vadd.f32 %v590, %v757
        %v759 = vpop.f32.mrb[0].mxu0
        %760 = vmatprep.mubr.bf16.mxu0 0
        %761 = vmatmul.mubr.bf16.gmra.mrb[0].mxu0 %v642
        %v762 = vpop.f32.mrb[0].mxu0
        %v763 = vadd.f32 %v590, %v762
        %v764 = vpop.f32.mrb[0].mxu0
        %v765 = vpop.f32.mrb[0].mxu0
        %v766 = vadd.f32 %v590, %v765
        %v767 = vpop.f32.mrb[0].mxu0
        %768 = vmatprep.mubr.bf16.mxu0 0
        %769 = vmatmul.mubr.bf16.gmra.mrb[0].mxu0 %v643
        %v770 = vpop.f32.mrb[0].mxu0
        %v771 = vadd.f32 %v590, %v770
        %v772 = vpop.f32.mrb[0].mxu0
        %v773 = vpop.f32.mrb[0].mxu0
        %v774 = vadd.f32 %v590, %v773
        %v775 = vpop.f32.mrb[0].mxu0
        %776 = vmatprep.mubr.bf16.mxu0 0
        %777 = vmatmul.mubr.bf16.gmra.mrb[0].mxu0 %v644
        %v778 = vpop.f32.mrb[0].mxu0
        %v779 = vadd.f32 %v590, %v778
        %v780 = vpop.f32.mrb[0].mxu0
        %v781 = vpop.f32.mrb[0].mxu0
        %v782 = vadd.f32 %v590, %v781
        %v783 = vpop.f32.mrb[0].mxu0
        %784 = vmatprep.mubr.bf16.mxu0 0
        %785 = vmatmul.mubr.bf16.gmra.mrb[0].mxu0 %v645
        %v786 = vpop.f32.mrb[0].mxu0
        %v787 = vadd.f32 %v590, %v786
        %v788 = vpop.f32.mrb[0].mxu0
        %v789 = vpop.f32.mrb[0].mxu0
        %v790 = vadd.f32 %v590, %v789
        %v791 = vpop.f32.mrb[0].mxu0
        %792 = vmatprep.mubr.bf16.mxu0 0
        %793 = vmatmul.mubr.bf16.gmra.mrb[0].mxu0 %v646
        %v794 = vpop.f32.mrb[0].mxu0
        %v795 = vadd.f32 %v590, %v794
        %v796 = vpop.f32.mrb[0].mxu0
        %v797 = vpop.f32.mrb[0].mxu0
        %v798 = vadd.f32 %v590, %v797
        %v799 = vpop.f32.mrb[0].mxu0
        %800 = vmatprep.mubr.bf16.mxu0 0
        %801 = vmatmul.mubr.bf16.gmra.mrb[0].mxu0 %v647
        %v802 = vpop.f32.mrb[0].mxu0
        %v803 = vadd.f32 %v590, %v802
        %v804 = vpop.f32.mrb[0].mxu0
        %v805 = vpop.f32.mrb[0].mxu0
        %v806 = vadd.f32 %v590, %v805
        %v807 = vpop.f32.mrb[0].mxu0
        %808 = vmatprep.mubr.bf16.mxu0 0
        %809 = vmatmul.mubr.bf16.gmra.mrb[0].mxu0 %v648
        %v810 = vpop.f32.mrb[0].mxu0
        %v811 = vadd.f32 %v590, %v810
        %v812 = vpop.f32.mrb[0].mxu0
        %v813 = vpop.f32.mrb[0].mxu0
        %v814 = vadd.f32 %v590, %v813
        %v815 = vpop.f32.mrb[0].mxu0
        %816 = vmatprep.mubr.bf16.mxu0 0
        %817 = vmatmul.mubr.bf16.gmra.mrb[0].mxu0 %v649
        %v818 = vpop.f32.mrb[0].mxu0
        %v819 = vadd.f32 %v590, %v818
        %v820 = vpop.f32.mrb[0].mxu0
        %v821 = vpop.f32.mrb[0].mxu0
        %v822 = vadd.f32 %v590, %v821
        %v823 = vpop.f32.mrb[0].mxu0
        %824 = vmatprep.mubr.bf16.mxu0 0
        %825 = vmatmul.mubr.bf16.gmra.mrb[0].mxu0 %v650
        %v826 = vpop.f32.mrb[0].mxu0
        %v827 = vadd.f32 %v590, %v826
        %v828 = vpop.f32.mrb[0].mxu0
        %v829 = vpop.f32.mrb[0].mxu0
        %v830 = vadd.f32 %v590, %v829
        %v831 = vpop.f32.mrb[0].mxu0
        %832 = vmatprep.mubr.bf16.mxu0 0
        %833 = vmatmul.mubr.bf16.gmra.mrb[0].mxu0 %v651
        %v834 = vpop.f32.mrb[0].mxu0
        %v835 = vadd.f32 %v590, %v834
        %v836 = vpop.f32.mrb[0].mxu0
        %v837 = vpop.f32.mrb[0].mxu0
        %v838 = vadd.f32 %v590, %v837
        %v839 = vpop.f32.mrb[0].mxu0
        %840 = vdwg.mxu0
        %v841 = vmax.f32 %v747, 0.0
        %v842 = vmax.f32 %v750, 0.0
        %v843 = vmax.f32 %v755, 0.0
        %v844 = vmax.f32 %v758, 0.0
        %v845 = vmax.f32 %v763, 0.0
        %v846 = vmax.f32 %v766, 0.0
        %v847 = vmax.f32 %v771, 0.0
        %v848 = vmax.f32 %v774, 0.0
        %v849 = vmax.f32 %v779, 0.0
        %v850 = vmax.f32 %v782, 0.0
        %v851 = vmax.f32 %v787, 0.0
        %v852 = vmax.f32 %v790, 0.0
        %v853 = vmax.f32 %v795, 0.0
        %v854 = vmax.f32 %v798, 0.0
        %v855 = vmax.f32 %v803, 0.0
        %v856 = vmax.f32 %v806, 0.0
        %v857 = vmax.f32 %v811, 0.0
        %v858 = vmax.f32 %v814, 0.0
        %v859 = vmax.f32 %v819, 0.0
        %v860 = vmax.f32 %v822, 0.0
        %v861 = vmax.f32 %v827, 0.0
        %v862 = vmax.f32 %v830, 0.0
        %v863 = vmax.f32 %v835, 0.0
        %v864 = vmax.f32 %v838, 0.0
        %v865 = vsel %vm505, 1, 0
        %v866 = vsel %vm506, 1, 0
        %v867 = vsel %vm507, 1, 0
        %v868 = vsel %vm508, 1, 0
        %v869 = vsel %vm509, 1, 0
        %v870 = vsel %vm510, 1, 0
        %v871 = vsel %vm511, 1, 0
        %v872 = vsel %vm512, 1, 0
        %v873 = vsel %vm513, 1, 0
        %v874 = vsel %vm514, 1, 0
        %v875 = vsel %vm515, 1, 0
        %v876 = vsel %vm516, 1, 0
        %v877 = vsel %vm517, 1, 0
        %v878 = vsel %vm518, 1, 0
        %v879 = vsel %vm519, 1, 0
        %v880 = vsel %vm520, 1, 0
        %v881 = vsel %vm521, 1, 0
        %v882 = vsel %vm522, 1, 0
        %v883 = vsel %vm523, 1, 0
        %v884 = vsel %vm524, 1, 0
        %v885 = vsel %vm525, 1, 0
        %v886 = vsel %vm526, 1, 0
        %v887 = vsel %vm527, 1, 0
        %v888 = vsel %vm528, 1, 0
        %vm889 = vcmp.eq.s32.totalorder %v865, 1
        %vm890 = vcmp.eq.s32.totalorder %v866, 1
        %vm891 = vcmp.eq.s32.totalorder %v867, 1
        %vm892 = vcmp.eq.s32.totalorder %v868, 1
        %vm893 = vcmp.eq.s32.totalorder %v869, 1
        %vm894 = vcmp.eq.s32.totalorder %v870, 1
        %vm895 = vcmp.eq.s32.totalorder %v871, 1
        %vm896 = vcmp.eq.s32.totalorder %v872, 1
        %vm897 = vcmp.eq.s32.totalorder %v873, 1
        %vm898 = vcmp.eq.s32.totalorder %v874, 1
        %vm899 = vcmp.eq.s32.totalorder %v875, 1
        %vm900 = vcmp.eq.s32.totalorder %v876, 1
        %vm901 = vcmp.eq.s32.totalorder %v877, 1
        %vm902 = vcmp.eq.s32.totalorder %v878, 1
        %vm903 = vcmp.eq.s32.totalorder %v879, 1
        %vm904 = vcmp.eq.s32.totalorder %v880, 1
        %vm905 = vcmp.eq.s32.totalorder %v881, 1
        %vm906 = vcmp.eq.s32.totalorder %v882, 1
        %vm907 = vcmp.eq.s32.totalorder %v883, 1
        %vm908 = vcmp.eq.s32.totalorder %v884, 1
        %vm909 = vcmp.eq.s32.totalorder %v885, 1
        %vm910 = vcmp.eq.s32.totalorder %v886, 1
        %vm911 = vcmp.eq.s32.totalorder %v887, 1
        %vm912 = vcmp.eq.s32.totalorder %v888, 1
        %v913 = vsel %vm889, %v841, 0.0
        %v914 = vsel %vm890, %v842, 0.0
        %v915 = vsel %vm891, %v843, 0.0
        %v916 = vsel %vm892, %v844, 0.0
        %v917 = vsel %vm893, %v845, 0.0
        %v918 = vsel %vm894, %v846, 0.0
        %v919 = vsel %vm895, %v847, 0.0
        %v920 = vsel %vm896, %v848, 0.0
        %v921 = vsel %vm897, %v849, 0.0
        %v922 = vsel %vm898, %v850, 0.0
        %v923 = vsel %vm899, %v851, 0.0
        %v924 = vsel %vm900, %v852, 0.0
        %v925 = vsel %vm901, %v853, 0.0
        %v926 = vsel %vm902, %v854, 0.0
        %v927 = vsel %vm903, %v855, 0.0
        %v928 = vsel %vm904, %v856, 0.0
        %v929 = vsel %vm905, %v857, 0.0
        %v930 = vsel %vm906, %v858, 0.0
        %v931 = vsel %vm907, %v859, 0.0
        %v932 = vsel %vm908, %v860, 0.0
        %v933 = vsel %vm909, %v861, 0.0
        %v934 = vsel %vm910, %v862, 0.0
        %v935 = vsel %vm911, %v863, 0.0
        %v936 = vsel %vm912, %v864, 0.0
        %v937 = vpack.c.bf16 %v914, %v913
        %v938 = vpack.c.bf16 %v915, %v915
        %v939 = vpack.c.bf16 %v917, %v916
        %v940 = vpack.c.bf16 %v918, %v918
        %v941 = vpack.c.bf16 %v920, %v919
        %v942 = vpack.c.bf16 %v921, %v921
        %v943 = vpack.c.bf16 %v923, %v922
        %v944 = vpack.c.bf16 %v924, %v924
        %v945 = vpack.c.bf16 %v926, %v925
        %v946 = vpack.c.bf16 %v927, %v927
        %v947 = vpack.c.bf16 %v929, %v928
        %v948 = vpack.c.bf16 %v930, %v930
        %v949 = vpack.c.bf16 %v932, %v931
        %v950 = vpack.c.bf16 %v933, %v933
        %v951 = vpack.c.bf16 %v935, %v934
        %v952 = vpack.c.bf16 %v936, %v936
        %v969 = vunpack.c.l.b16 %v937
        %v970 = vunpack.c.h.b16 %v937
        %v971 = vunpack.c.l.b16 %v938
        %v972 = vunpack.c.l.b16 %v939
        %v973 = vunpack.c.h.b16 %v939
        %v974 = vunpack.c.l.b16 %v940
        %v975 = vunpack.c.l.b16 %v941
        %v976 = vunpack.c.h.b16 %v941
        %v977 = vunpack.c.l.b16 %v942
        %v978 = vunpack.c.l.b16 %v943
        %v979 = vunpack.c.h.b16 %v943
        %v980 = vunpack.c.l.b16 %v944
        %v981 = vunpack.c.l.b16 %v945
        %v982 = vunpack.c.h.b16 %v945
        %v983 = vunpack.c.l.b16 %v946
        %v984 = vunpack.c.l.b16 %v947
        %v985 = vunpack.c.h.b16 %v947
        %v986 = vunpack.c.l.b16 %v948
        %v987 = vunpack.c.l.b16 %v949
        %v988 = vunpack.c.h.b16 %v949
        %v989 = vunpack.c.l.b16 %v950
        %v990 = vunpack.c.l.b16 %v951
        %v991 = vunpack.c.h.b16 %v951
        %v992 = vunpack.c.l.b16 %v952
        %v993 = vpack.c.b16 %v969, %v969
        %v994 = vpack.c.b16 %v970, %v970
        %v995 = vpack.c.b16 %v971, %v971
        %v996 = vpack.c.b16 %v972, %v972
        %v997 = vpack.c.b16 %v973, %v973
        %v998 = vpack.c.b16 %v974, %v974
        %v999 = vpack.c.b16 %v975, %v975
        %v1000 = vpack.c.b16 %v976, %v976
        %v1001 = vpack.c.b16 %v977, %v977
        %v1002 = vpack.c.b16 %v978, %v978
        %v1003 = vpack.c.b16 %v979, %v979
        %v1004 = vpack.c.b16 %v980, %v980
        %v1005 = vpack.c.b16 %v981, %v981
        %v1006 = vpack.c.b16 %v982, %v982
        %v1007 = vpack.c.b16 %v983, %v983
        %v1008 = vpack.c.b16 %v984, %v984
        %v1009 = vpack.c.b16 %v985, %v985
        %v1010 = vpack.c.b16 %v986, %v986
        %v1011 = vpack.c.b16 %v987, %v987
        %v1012 = vpack.c.b16 %v988, %v988
        %v1013 = vpack.c.b16 %v989, %v989
        %v1014 = vpack.c.b16 %v990, %v990
        %v1015 = vpack.c.b16 %v991, %v991
        %v1016 = vpack.c.b16 %v992, %v992
        %1041 = vst [vmem:[#allocation2] sm:$0xf] %v993
        %1042 = vst [vmem:[#allocation2 + $0x4] sm:$0xf] %v994
        %1043 = vst [vmem:[#allocation2 + $0x8] sm:$0xf] %v995
        %1044 = vst [vmem:[#allocation2 + $0xc] sm:$0xf] %v996
        %1045 = vst [vmem:[#allocation2 + $0x10] sm:$0xf] %v997
        %1046 = vst [vmem:[#allocation2 + $0x14] sm:$0xf] %v998
        %1047 = vst [vmem:[#allocation2 + $0x18] sm:$0xf] %v999
        %1048 = vst [vmem:[#allocation2 + $0x1c] sm:$0xf] %v1000
        %1049 = vst [vmem:[#allocation2 + $0x20] sm:$0xf] %v1001
        %1050 = vst [vmem:[#allocation2 + $0x24] sm:$0xf] %v1002
        %1051 = vst [vmem:[#allocation2 + $0x28] sm:$0xf] %v1003
        %1052 = vst [vmem:[#allocation2 + $0x2c] sm:$0xf] %v1004
        %1053 = vst [vmem:[#allocation2 + $0x30] sm:$0xf] %v1005
        %1054 = vst [vmem:[#allocation2 + $0x34] sm:$0xf] %v1006
        %1055 = vst [vmem:[#allocation2 + $0x38] sm:$0xf] %v1007
        %1056 = vst [vmem:[#allocation2 + $0x3c] sm:$0xf] %v1008
        %1057 = vst [vmem:[#allocation2 + $0x40] sm:$0xf] %v1009
        %1058 = vst [vmem:[#allocation2 + $0x44] sm:$0xf] %v1010
        %1059 = vst [vmem:[#allocation2 + $0x48] sm:$0xf] %v1011
        %1060 = vst [vmem:[#allocation2 + $0x4c] sm:$0xf] %v1012
        %1061 = vst [vmem:[#allocation2 + $0x50] sm:$0xf] %v1013
        %1062 = vst [vmem:[#allocation2 + $0x54] sm:$0xf] %v1014
        %1063 = vst [vmem:[#allocation2 + $0x58] sm:$0xf] %v1015
        %1064 = vst [vmem:[#allocation2 + $0x5c] sm:$0xf] %v1016
        %s1065 = sadd.s32 %s330, 8
        %s1066 = smul.u32 %s1065, 3
        %s1067 = smul.addr %s1066, 4
        %s1068 = scalar_lea.vmem %s287, %s1067 [#allocation3]
        %v1069 = vld [vmem:[%s1068] sm:$0xf]
        %v1070 = vld [vmem:[%s1068 + $0x4] sm:$0xf]
        %v1071 = vld [vmem:[%s1068 + $0x8] sm:$0xf]
        %v1072 = vld [vmem:[%s1068 + $0xc] sm:$0xf]
        %v1073 = vld [vmem:[%s1068 + $0x10] sm:$0xf]
        %v1074 = vld [vmem:[%s1068 + $0x14] sm:$0xf]
        %v1075 = vld [vmem:[%s1068 + $0x18] sm:$0xf]
        %v1076 = vld [vmem:[%s1068 + $0x1c] sm:$0xf]
        %v1077 = vld [vmem:[%s1068 + $0x20] sm:$0xf]
        %v1078 = vld [vmem:[%s1068 + $0x24] sm:$0xf]
        %v1079 = vld [vmem:[%s1068 + $0x28] sm:$0xf]
        %v1080 = vld [vmem:[%s1068 + $0x2c] sm:$0xf]
        %v1081 = vld [vmem:[%s1068 + $0x30] sm:$0xf]
        %v1082 = vld [vmem:[%s1068 + $0x34] sm:$0xf]
        %v1083 = vld [vmem:[%s1068 + $0x38] sm:$0xf]
        %v1084 = vld [vmem:[%s1068 + $0x3c] sm:$0xf]
        %v1085 = vld [vmem:[%s1068 + $0x40] sm:$0xf]
        %v1086 = vld [vmem:[%s1068 + $0x44] sm:$0xf]
        %v1087 = vld [vmem:[%s1068 + $0x48] sm:$0xf]
        %v1088 = vld [vmem:[%s1068 + $0x4c] sm:$0xf]
        %v1089 = vld [vmem:[%s1068 + $0x50] sm:$0xf]
        %v1090 = vld [vmem:[%s1068 + $0x54] sm:$0xf]
        %v1091 = vld [vmem:[%s1068 + $0x58] sm:$0xf]
        %v1092 = vld [vmem:[%s1068 + $0x5c] sm:$0xf]
        %v1117 = vunpack.c.l.b16 %v1069
        %v1118 = vunpack.c.l.b16 %v1070
        %v1119 = vunpack.c.l.b16 %v1071
        %v1120 = vunpack.c.l.b16 %v1072
        %v1121 = vunpack.c.l.b16 %v1073
        %v1122 = vunpack.c.l.b16 %v1074
        %v1123 = vunpack.c.l.b16 %v1075
        %v1124 = vunpack.c.l.b16 %v1076
        %v1125 = vunpack.c.l.b16 %v1077
        %v1126 = vunpack.c.l.b16 %v1078
        %v1127 = vunpack.c.l.b16 %v1079
        %v1128 = vunpack.c.l.b16 %v1080
        %v1129 = vunpack.c.l.b16 %v1081
        %v1130 = vunpack.c.l.b16 %v1082
        %v1131 = vunpack.c.l.b16 %v1083
        %v1132 = vunpack.c.l.b16 %v1084
        %v1133 = vunpack.c.l.b16 %v1085
        %v1134 = vunpack.c.l.b16 %v1086
        %v1135 = vunpack.c.l.b16 %v1087
        %v1136 = vunpack.c.l.b16 %v1088
        %v1137 = vunpack.c.l.b16 %v1089
        %v1138 = vunpack.c.l.b16 %v1090
        %v1139 = vunpack.c.l.b16 %v1091
        %v1140 = vunpack.c.l.b16 %v1092
        %v1141 = vpack.c.b16 %v1118, %v1117
        %v1142 = vpack.c.b16 %v1120, %v1119
        %v1143 = vpack.c.b16 %v1122, %v1121
        %v1144 = vpack.c.b16 %v1124, %v1123
        %v1145 = vpack.c.b16 %v1126, %v1125
        %v1146 = vpack.c.b16 %v1128, %v1127
        %v1147 = vpack.c.b16 %v1130, %v1129
        %v1148 = vpack.c.b16 %v1132, %v1131
        %v1149 = vpack.c.b16 %v1134, %v1133
        %v1150 = vpack.c.b16 %v1136, %v1135
        %v1151 = vpack.c.b16 %v1138, %v1137
        %v1152 = vpack.c.b16 %v1140, %v1139
        %1165 = vmatprep.subr.bf16.mxu0 0
        %1166 = vmatpush1.bf16.msra.mxu0 %v696
        %1167 = vmatprep.subr.bf16.mxu0 0
        %1168 = vmatpush1.bf16.msra.mxu0 %v697
        %1169 = vmatprep.subr.bf16.mxu0 0
        %1170 = vmatpush1.bf16.msra.mxu0 %v698
        %1171 = vmatprep.subr.bf16.mxu0 0
        %1172 = vmatpush1.bf16.msra.mxu0 %v699
        %1173 = vmatprep.subr.bf16.mxu0 0
        %1174 = vmatpush1.bf16.msra.mxu0 %v700
        %1175 = vmatprep.subr.bf16.mxu0 0
        %1176 = vmatpush1.bf16.msra.mxu0 %v701
        %1177 = vmatprep.subr.bf16.mxu0 0
        %1178 = vmatpush1.bf16.msra.mxu0 %v702
        %1179 = vmatprep.subr.bf16.mxu0 0
        %1180 = vmatpush1.bf16.msra.mxu0 %v703
        %1181 = vmatprep.subr.bf16.mxu0 0
        %1182 = vmatpush1.bf16.msra.mxu0 0
        %1183 = vmatprep.subr.bf16.mxu0 0
        %1184 = vmatpush1.bf16.msra.mxu0 0
        %1185 = vmatprep.subr.bf16.mxu0 0
        %1186 = vmatpush1.bf16.msra.mxu0 0
        %1187 = vmatprep.subr.bf16.mxu0 0
        %1188 = vmatpush1.bf16.msra.mxu0 0
        %1189 = vmatprep.subr.bf16.mxu0 0
        %1190 = vmatpush1.bf16.msra.mxu0 0
        %1191 = vmatprep.subr.bf16.mxu0 0
        %1192 = vmatpush1.bf16.msra.mxu0 0
        %1193 = vmatprep.subr.bf16.mxu0 0
        %1194 = vmatpush1.bf16.msra.mxu0 0
        %1195 = vmatprep.subr.bf16.mxu0 0
        %1196 = vmatpush1.bf16.msra.mxu0 0
        %1197 = vmatprep.mubr.bf16.mxu0 0
        %1198 = vmatmul.mubr.bf16.gmra.mrb[0].mxu0 %v1141
        %v1199 = vpop.f32.mrb[0].mxu0
        %v1200 = vadd.f32 %v590, %v1199
        %v1201 = vpop.f32.mrb[0].mxu0
        %v1202 = vpop.f32.mrb[0].mxu0
        %v1203 = vadd.f32 %v590, %v1202
        %v1204 = vpop.f32.mrb[0].mxu0
        %1205 = vmatprep.mubr.bf16.mxu0 0
        %1206 = vmatmul.mubr.bf16.gmra.mrb[0].mxu0 %v1142
        %v1207 = vpop.f32.mrb[0].mxu0
        %v1208 = vadd.f32 %v590, %v1207
        %v1209 = vpop.f32.mrb[0].mxu0
        %v1210 = vpop.f32.mrb[0].mxu0
        %v1211 = vadd.f32 %v590, %v1210
        %v1212 = vpop.f32.mrb[0].mxu0
        %1213 = vmatprep.mubr.bf16.mxu0 0
        %1214 = vmatmul.mubr.bf16.gmra.mrb[0].mxu0 %v1143
        %v1215 = vpop.f32.mrb[0].mxu0
        %v1216 = vadd.f32 %v590, %v1215
        %v1217 = vpop.f32.mrb[0].mxu0
        %v1218 = vpop.f32.mrb[0].mxu0
        %v1219 = vadd.f32 %v590, %v1218
        %v1220 = vpop.f32.mrb[0].mxu0
        %1221 = vmatprep.mubr.bf16.mxu0 0
        %1222 = vmatmul.mubr.bf16.gmra.mrb[0].mxu0 %v1144
        %v1223 = vpop.f32.mrb[0].mxu0
        %v1224 = vadd.f32 %v590, %v1223
        %v1225 = vpop.f32.mrb[0].mxu0
        %v1226 = vpop.f32.mrb[0].mxu0
        %v1227 = vadd.f32 %v590, %v1226
        %v1228 = vpop.f32.mrb[0].mxu0
        %1229 = vmatprep.mubr.bf16.mxu0 0
        %1230 = vmatmul.mubr.bf16.gmra.mrb[0].mxu0 %v1145
        %v1231 = vpop.f32.mrb[0].mxu0
        %v1232 = vadd.f32 %v590, %v1231
        %v1233 = vpop.f32.mrb[0].mxu0
        %v1234 = vpop.f32.mrb[0].mxu0
        %v1235 = vadd.f32 %v590, %v1234
        %v1236 = vpop.f32.mrb[0].mxu0
        %1237 = vmatprep.mubr.bf16.mxu0 0
        %1238 = vmatmul.mubr.bf16.gmra.mrb[0].mxu0 %v1146
        %v1239 = vpop.f32.mrb[0].mxu0
        %v1240 = vadd.f32 %v590, %v1239
        %v1241 = vpop.f32.mrb[0].mxu0
        %v1242 = vpop.f32.mrb[0].mxu0
        %v1243 = vadd.f32 %v590, %v1242
        %v1244 = vpop.f32.mrb[0].mxu0
        %1245 = vmatprep.mubr.bf16.mxu0 0
        %1246 = vmatmul.mubr.bf16.gmra.mrb[0].mxu0 %v1147
        %v1247 = vpop.f32.mrb[0].mxu0
        %v1248 = vadd.f32 %v590, %v1247
        %v1249 = vpop.f32.mrb[0].mxu0
        %v1250 = vpop.f32.mrb[0].mxu0
        %v1251 = vadd.f32 %v590, %v1250
        %v1252 = vpop.f32.mrb[0].mxu0
        %1253 = vmatprep.mubr.bf16.mxu0 0
        %1254 = vmatmul.mubr.bf16.gmra.mrb[0].mxu0 %v1148
        %v1255 = vpop.f32.mrb[0].mxu0
        %v1256 = vadd.f32 %v590, %v1255
        %v1257 = vpop.f32.mrb[0].mxu0
        %v1258 = vpop.f32.mrb[0].mxu0
        %v1259 = vadd.f32 %v590, %v1258
        %v1260 = vpop.f32.mrb[0].mxu0
        %1261 = vmatprep.mubr.bf16.mxu0 0
        %1262 = vmatmul.mubr.bf16.gmra.mrb[0].mxu0 %v1149
        %v1263 = vpop.f32.mrb[0].mxu0
        %v1264 = vadd.f32 %v590, %v1263
        %v1265 = vpop.f32.mrb[0].mxu0
        %v1266 = vpop.f32.mrb[0].mxu0
        %v1267 = vadd.f32 %v590, %v1266
        %v1268 = vpop.f32.mrb[0].mxu0
        %1269 = vmatprep.mubr.bf16.mxu0 0
        %1270 = vmatmul.mubr.bf16.gmra.mrb[0].mxu0 %v1150
        %v1271 = vpop.f32.mrb[0].mxu0
        %v1272 = vadd.f32 %v590, %v1271
        %v1273 = vpop.f32.mrb[0].mxu0
        %v1274 = vpop.f32.mrb[0].mxu0
        %v1275 = vadd.f32 %v590, %v1274
        %v1276 = vpop.f32.mrb[0].mxu0
        %1277 = vmatprep.mubr.bf16.mxu0 0
        %1278 = vmatmul.mubr.bf16.gmra.mrb[0].mxu0 %v1151
        %v1279 = vpop.f32.mrb[0].mxu0
        %v1280 = vadd.f32 %v590, %v1279
        %v1281 = vpop.f32.mrb[0].mxu0
        %v1282 = vpop.f32.mrb[0].mxu0
        %v1283 = vadd.f32 %v590, %v1282
        %v1284 = vpop.f32.mrb[0].mxu0
        %1285 = vmatprep.mubr.bf16.mxu0 0
        %1286 = vmatmul.mubr.bf16.gmra.mrb[0].mxu0 %v1152
        %v1287 = vpop.f32.mrb[0].mxu0
        %v1288 = vadd.f32 %v590, %v1287
        %v1289 = vpop.f32.mrb[0].mxu0
        %v1290 = vpop.f32.mrb[0].mxu0
        %v1291 = vadd.f32 %v590, %v1290
        %v1292 = vpop.f32.mrb[0].mxu0
        %1293 = vdwg.mxu0
        %v1294 = vmax.f32 %v1200, 0.0
        %v1295 = vmax.f32 %v1203, 0.0
        %v1296 = vmax.f32 %v1208, 0.0
        %v1297 = vmax.f32 %v1211, 0.0
        %v1298 = vmax.f32 %v1216, 0.0
        %v1299 = vmax.f32 %v1219, 0.0
        %v1300 = vmax.f32 %v1224, 0.0
        %v1301 = vmax.f32 %v1227, 0.0
        %v1302 = vmax.f32 %v1232, 0.0
        %v1303 = vmax.f32 %v1235, 0.0
        %v1304 = vmax.f32 %v1240, 0.0
        %v1305 = vmax.f32 %v1243, 0.0
        %v1306 = vmax.f32 %v1248, 0.0
        %v1307 = vmax.f32 %v1251, 0.0
        %v1308 = vmax.f32 %v1256, 0.0
        %v1309 = vmax.f32 %v1259, 0.0
        %v1310 = vmax.f32 %v1264, 0.0
        %v1311 = vmax.f32 %v1267, 0.0
        %v1312 = vmax.f32 %v1272, 0.0
        %v1313 = vmax.f32 %v1275, 0.0
        %v1314 = vmax.f32 %v1280, 0.0
        %v1315 = vmax.f32 %v1283, 0.0
        %v1316 = vmax.f32 %v1288, 0.0
        %v1317 = vmax.f32 %v1291, 0.0
        %v1318 = vsel %vm529, 1, 0
        %v1319 = vsel %vm530, 1, 0
        %v1320 = vsel %vm531, 1, 0
        %v1321 = vsel %vm532, 1, 0
        %v1322 = vsel %vm533, 1, 0
        %v1323 = vsel %vm534, 1, 0
        %v1324 = vsel %vm535, 1, 0
        %v1325 = vsel %vm536, 1, 0
        %v1326 = vsel %vm537, 1, 0
        %v1327 = vsel %vm538, 1, 0
        %v1328 = vsel %vm539, 1, 0
        %v1329 = vsel %vm540, 1, 0
        %v1330 = vsel %vm541, 1, 0
        %v1331 = vsel %vm542, 1, 0
        %v1332 = vsel %vm543, 1, 0
        %v1333 = vsel %vm544, 1, 0
        %v1334 = vsel %vm545, 1, 0
        %v1335 = vsel %vm546, 1, 0
        %v1336 = vsel %vm547, 1, 0
        %v1337 = vsel %vm548, 1, 0
        %v1338 = vsel %vm549, 1, 0
        %v1339 = vsel %vm550, 1, 0
        %v1340 = vsel %vm551, 1, 0
        %v1341 = vsel %vm552, 1, 0
        %vm1342 = vcmp.eq.s32.totalorder %v1318, 1
        %vm1343 = vcmp.eq.s32.totalorder %v1319, 1
        %vm1344 = vcmp.eq.s32.totalorder %v1320, 1
        %vm1345 = vcmp.eq.s32.totalorder %v1321, 1
        %vm1346 = vcmp.eq.s32.totalorder %v1322, 1
        %vm1347 = vcmp.eq.s32.totalorder %v1323, 1
        %vm1348 = vcmp.eq.s32.totalorder %v1324, 1
        %vm1349 = vcmp.eq.s32.totalorder %v1325, 1
        %vm1350 = vcmp.eq.s32.totalorder %v1326, 1
        %vm1351 = vcmp.eq.s32.totalorder %v1327, 1
        %vm1352 = vcmp.eq.s32.totalorder %v1328, 1
        %vm1353 = vcmp.eq.s32.totalorder %v1329, 1
        %vm1354 = vcmp.eq.s32.totalorder %v1330, 1
        %vm1355 = vcmp.eq.s32.totalorder %v1331, 1
        %vm1356 = vcmp.eq.s32.totalorder %v1332, 1
        %vm1357 = vcmp.eq.s32.totalorder %v1333, 1
        %vm1358 = vcmp.eq.s32.totalorder %v1334, 1
        %vm1359 = vcmp.eq.s32.totalorder %v1335, 1
        %vm1360 = vcmp.eq.s32.totalorder %v1336, 1
        %vm1361 = vcmp.eq.s32.totalorder %v1337, 1
        %vm1362 = vcmp.eq.s32.totalorder %v1338, 1
        %vm1363 = vcmp.eq.s32.totalorder %v1339, 1
        %vm1364 = vcmp.eq.s32.totalorder %v1340, 1
        %vm1365 = vcmp.eq.s32.totalorder %v1341, 1
        %v1366 = vsel %vm1342, %v1294, 0.0
        %v1367 = vsel %vm1343, %v1295, 0.0
        %v1368 = vsel %vm1344, %v1296, 0.0
        %v1369 = vsel %vm1345, %v1297, 0.0
        %v1370 = vsel %vm1346, %v1298, 0.0
        %v1371 = vsel %vm1347, %v1299, 0.0
        %v1372 = vsel %vm1348, %v1300, 0.0
        %v1373 = vsel %vm1349, %v1301, 0.0
        %v1374 = vsel %vm1350, %v1302, 0.0
        %v1375 = vsel %vm1351, %v1303, 0.0
        %v1376 = vsel %vm1352, %v1304, 0.0
        %v1377 = vsel %vm1353, %v1305, 0.0
        %v1378 = vsel %vm1354, %v1306, 0.0
        %v1379 = vsel %vm1355, %v1307, 0.0
        %v1380 = vsel %vm1356, %v1308, 0.0
        %v1381 = vsel %vm1357, %v1309, 0.0
        %v1382 = vsel %vm1358, %v1310, 0.0
        %v1383 = vsel %vm1359, %v1311, 0.0
        %v1384 = vsel %vm1360, %v1312, 0.0
        %v1385 = vsel %vm1361, %v1313, 0.0
        %v1386 = vsel %vm1362, %v1314, 0.0
        %v1387 = vsel %vm1363, %v1315, 0.0
        %v1388 = vsel %vm1364, %v1316, 0.0
        %v1389 = vsel %vm1365, %v1317, 0.0
        %v1390 = vpack.c.bf16 %v1367, %v1366
        %v1391 = vpack.c.bf16 %v1368, %v1368
        %v1392 = vpack.c.bf16 %v1370, %v1369
        %v1393 = vpack.c.bf16 %v1371, %v1371
        %v1394 = vpack.c.bf16 %v1373, %v1372
        %v1395 = vpack.c.bf16 %v1374, %v1374
        %v1396 = vpack.c.bf16 %v1376, %v1375
        %v1397 = vpack.c.bf16 %v1377, %v1377
        %v1398 = vpack.c.bf16 %v1379, %v1378
        %v1399 = vpack.c.bf16 %v1380, %v1380
        %v1400 = vpack.c.bf16 %v1382, %v1381
        %v1401 = vpack.c.bf16 %v1383, %v1383
        %v1402 = vpack.c.bf16 %v1385, %v1384
        %v1403 = vpack.c.bf16 %v1386, %v1386
        %v1404 = vpack.c.bf16 %v1388, %v1387
        %v1405 = vpack.c.bf16 %v1389, %v1389
        %v1422 = vunpack.c.l.b16 %v1390
        %v1423 = vunpack.c.h.b16 %v1390
        %v1424 = vunpack.c.l.b16 %v1391
        %v1425 = vunpack.c.l.b16 %v1392
        %v1426 = vunpack.c.h.b16 %v1392
        %v1427 = vunpack.c.l.b16 %v1393
        %v1428 = vunpack.c.l.b16 %v1394
        %v1429 = vunpack.c.h.b16 %v1394
        %v1430 = vunpack.c.l.b16 %v1395
        %v1431 = vunpack.c.l.b16 %v1396
        %v1432 = vunpack.c.h.b16 %v1396
        %v1433 = vunpack.c.l.b16 %v1397
        %v1434 = vunpack.c.l.b16 %v1398
        %v1435 = vunpack.c.h.b16 %v1398
        %v1436 = vunpack.c.l.b16 %v1399
        %v1437 = vunpack.c.l.b16 %v1400
        %v1438 = vunpack.c.h.b16 %v1400
        %v1439 = vunpack.c.l.b16 %v1401
        %v1440 = vunpack.c.l.b16 %v1402
        %v1441 = vunpack.c.h.b16 %v1402
        %v1442 = vunpack.c.l.b16 %v1403
        %v1443 = vunpack.c.l.b16 %v1404
        %v1444 = vunpack.c.h.b16 %v1404
        %v1445 = vunpack.c.l.b16 %v1405
        %v1446 = vpack.c.b16 %v1422, %v1422
        %v1447 = vpack.c.b16 %v1423, %v1423
        %v1448 = vpack.c.b16 %v1424, %v1424
        %v1449 = vpack.c.b16 %v1425, %v1425
        %v1450 = vpack.c.b16 %v1426, %v1426
        %v1451 = vpack.c.b16 %v1427, %v1427
        %v1452 = vpack.c.b16 %v1428, %v1428
        %v1453 = vpack.c.b16 %v1429, %v1429
        %v1454 = vpack.c.b16 %v1430, %v1430
        %v1455 = vpack.c.b16 %v1431, %v1431
        %v1456 = vpack.c.b16 %v1432, %v1432
        %v1457 = vpack.c.b16 %v1433, %v1433
        %v1458 = vpack.c.b16 %v1434, %v1434
        %v1459 = vpack.c.b16 %v1435, %v1435
        %v1460 = vpack.c.b16 %v1436, %v1436
        %v1461 = vpack.c.b16 %v1437, %v1437
        %v1462 = vpack.c.b16 %v1438, %v1438
        %v1463 = vpack.c.b16 %v1439, %v1439
        %v1464 = vpack.c.b16 %v1440, %v1440
        %v1465 = vpack.c.b16 %v1441, %v1441
        %v1466 = vpack.c.b16 %v1442, %v1442
        %v1467 = vpack.c.b16 %v1443, %v1443
        %v1468 = vpack.c.b16 %v1444, %v1444
        %v1469 = vpack.c.b16 %v1445, %v1445
        %s1494 = scalar_lea.vmem [#allocation2], 96
        %1495 = vst [vmem:[%s1494] sm:$0xf] %v1446
        %1496 = vst [vmem:[%s1494 + $0x4] sm:$0xf] %v1447
        %1497 = vst [vmem:[%s1494 + $0x8] sm:$0xf] %v1448
        %1498 = vst [vmem:[%s1494 + $0xc] sm:$0xf] %v1449
        %1499 = vst [vmem:[%s1494 + $0x10] sm:$0xf] %v1450
        %1500 = vst [vmem:[%s1494 + $0x14] sm:$0xf] %v1451
        %1501 = vst [vmem:[%s1494 + $0x18] sm:$0xf] %v1452
        %1502 = vst [vmem:[%s1494 + $0x1c] sm:$0xf] %v1453
        %1503 = vst [vmem:[%s1494 + $0x20] sm:$0xf] %v1454
        %1504 = vst [vmem:[%s1494 + $0x24] sm:$0xf] %v1455
        %1505 = vst [vmem:[%s1494 + $0x28] sm:$0xf] %v1456
        %1506 = vst [vmem:[%s1494 + $0x2c] sm:$0xf] %v1457
        %1507 = vst [vmem:[%s1494 + $0x30] sm:$0xf] %v1458
        %1508 = vst [vmem:[%s1494 + $0x34] sm:$0xf] %v1459
        %1509 = vst [vmem:[%s1494 + $0x38] sm:$0xf] %v1460
        %1510 = vst [vmem:[%s1494 + $0x3c] sm:$0xf] %v1461
        %1511 = vst [vmem:[%s1494 + $0x40] sm:$0xf] %v1462
        %1512 = vst [vmem:[%s1494 + $0x44] sm:$0xf] %v1463
        %1513 = vst [vmem:[%s1494 + $0x48] sm:$0xf] %v1464
        %1514 = vst [vmem:[%s1494 + $0x4c] sm:$0xf] %v1465
        %1515 = vst [vmem:[%s1494 + $0x50] sm:$0xf] %v1466
        %1516 = vst [vmem:[%s1494 + $0x54] sm:$0xf] %v1467
        %1517 = vst [vmem:[%s1494 + $0x58] sm:$0xf] %v1468
        %1518 = vst [vmem:[%s1494 + $0x5c] sm:$0xf] %v1469
        %s1519 = sadd.s32 %s330, 16
        %s1520 = smul.u32 %s1519, 3
        %s1521 = smul.addr %s1520, 4
        %s1522 = scalar_lea.vmem %s287, %s1521 [#allocation3]
        %v1523 = vld [vmem:[%s1522] sm:$0xf]
        %v1524 = vld [vmem:[%s1522 + $0x4] sm:$0xf]
        %v1525 = vld [vmem:[%s1522 + $0x8] sm:$0xf]
        %v1526 = vld [vmem:[%s1522 + $0xc] sm:$0xf]
        %v1527 = vld [vmem:[%s1522 + $0x10] sm:$0xf]
        %v1528 = vld [vmem:[%s1522 + $0x14] sm:$0xf]
        %v1535 = vunpack.c.l.b16 %v1523
        %v1536 = vunpack.c.l.b16 %v1524
        %v1537 = vunpack.c.l.b16 %v1525
        %v1538 = vunpack.c.l.b16 %v1526
        %v1539 = vunpack.c.l.b16 %v1527
        %v1540 = vunpack.c.l.b16 %v1528
        %v1541 = vpack.c.b16 %v1536, %v1535
        %v1542 = vpack.c.b16 %v1538, %v1537
        %v1543 = vpack.c.b16 %v1540, %v1539
        %1547 = vmatprep.subr.bf16.mxu0 0
        %1548 = vmatpush1.bf16.msra.mxu0 %v696
        %1549 = vmatprep.subr.bf16.mxu0 0
        %1550 = vmatpush1.bf16.msra.mxu0 %v697
        %1551 = vmatprep.subr.bf16.mxu0 0
        %1552 = vmatpush1.bf16.msra.mxu0 %v698
        %1553 = vmatprep.subr.bf16.mxu0 0
        %1554 = vmatpush1.bf16.msra.mxu0 %v699
        %1555 = vmatprep.subr.bf16.mxu0 0
        %1556 = vmatpush1.bf16.msra.mxu0 %v700
        %1557 = vmatprep.subr.bf16.mxu0 0
        %1558 = vmatpush1.bf16.msra.mxu0 %v701
        %1559 = vmatprep.subr.bf16.mxu0 0
        %1560 = vmatpush1.bf16.msra.mxu0 %v702
        %1561 = vmatprep.subr.bf16.mxu0 0
        %1562 = vmatpush1.bf16.msra.mxu0 %v703
        %1563 = vmatprep.subr.bf16.mxu0 0
        %1564 = vmatpush1.bf16.msra.mxu0 0
        %1565 = vmatprep.subr.bf16.mxu0 0
        %1566 = vmatpush1.bf16.msra.mxu0 0
        %1567 = vmatprep.subr.bf16.mxu0 0
        %1568 = vmatpush1.bf16.msra.mxu0 0
        %1569 = vmatprep.subr.bf16.mxu0 0
        %1570 = vmatpush1.bf16.msra.mxu0 0
        %1571 = vmatprep.subr.bf16.mxu0 0
        %1572 = vmatpush1.bf16.msra.mxu0 0
        %1573 = vmatprep.subr.bf16.mxu0 0
        %1574 = vmatpush1.bf16.msra.mxu0 0
        %1575 = vmatprep.subr.bf16.mxu0 0
        %1576 = vmatpush1.bf16.msra.mxu0 0
        %1577 = vmatprep.subr.bf16.mxu0 0
        %1578 = vmatpush1.bf16.msra.mxu0 0
        %1579 = vmatprep.mubr.bf16.mxu0 0
        %1580 = vmatmul.mubr.bf16.gmra.mrb[0].mxu0 %v1541
        %v1581 = vpop.f32.mrb[0].mxu0
        %v1582 = vadd.f32 %v590, %v1581
        %v1583 = vpop.f32.mrb[0].mxu0
        %v1584 = vpop.f32.mrb[0].mxu0
        %v1585 = vadd.f32 %v590, %v1584
        %v1586 = vpop.f32.mrb[0].mxu0
        %1587 = vmatprep.mubr.bf16.mxu0 0
        %1588 = vmatmul.mubr.bf16.gmra.mrb[0].mxu0 %v1542
        %v1589 = vpop.f32.mrb[0].mxu0
        %v1590 = vadd.f32 %v590, %v1589
        %v1591 = vpop.f32.mrb[0].mxu0
        %v1592 = vpop.f32.mrb[0].mxu0
        %v1593 = vadd.f32 %v590, %v1592
        %v1594 = vpop.f32.mrb[0].mxu0
        %1595 = vmatprep.mubr.bf16.mxu0 0
        %1596 = vmatmul.mubr.bf16.gmra.mrb[0].mxu0 %v1543
        %v1597 = vpop.f32.mrb[0].mxu0
        %v1598 = vadd.f32 %v590, %v1597
        %v1599 = vpop.f32.mrb[0].mxu0
        %v1600 = vpop.f32.mrb[0].mxu0
        %v1601 = vadd.f32 %v590, %v1600
        %v1602 = vpop.f32.mrb[0].mxu0
        %1603 = vdwg.mxu0
        %v1604 = vmax.f32 %v1582, 0.0
        %v1605 = vmax.f32 %v1585, 0.0
        %v1606 = vmax.f32 %v1590, 0.0
        %v1607 = vmax.f32 %v1593, 0.0
        %v1608 = vmax.f32 %v1598, 0.0
        %v1609 = vmax.f32 %v1601, 0.0
        %v1610 = vsel %vm553, 1, 0
        %v1611 = vsel %vm554, 1, 0
        %v1612 = vsel %vm555, 1, 0
        %v1613 = vsel %vm556, 1, 0
        %v1614 = vsel %vm557, 1, 0
        %v1615 = vsel %vm558, 1, 0
        %vm1616 = vcmp.eq.s32.totalorder %v1610, 1
        %vm1617 = vcmp.eq.s32.totalorder %v1611, 1
        %vm1618 = vcmp.eq.s32.totalorder %v1612, 1
        %vm1619 = vcmp.eq.s32.totalorder %v1613, 1
        %vm1620 = vcmp.eq.s32.totalorder %v1614, 1
        %vm1621 = vcmp.eq.s32.totalorder %v1615, 1
        %v1622 = vsel %vm1616, %v1604, 0.0
        %v1623 = vsel %vm1617, %v1605, 0.0
        %v1624 = vsel %vm1618, %v1606, 0.0
        %v1625 = vsel %vm1619, %v1607, 0.0
        %v1626 = vsel %vm1620, %v1608, 0.0
        %v1627 = vsel %vm1621, %v1609, 0.0
        %v1628 = vpack.c.bf16 %v1623, %v1622
        %v1629 = vpack.c.bf16 %v1624, %v1624
        %v1630 = vpack.c.bf16 %v1626, %v1625
        %v1631 = vpack.c.bf16 %v1627, %v1627
        %v1636 = vunpack.c.l.b16 %v1628
        %v1637 = vunpack.c.h.b16 %v1628
        %v1638 = vunpack.c.l.b16 %v1629
        %v1639 = vunpack.c.l.b16 %v1630
        %v1640 = vunpack.c.h.b16 %v1630
        %v1641 = vunpack.c.l.b16 %v1631
        %v1642 = vpack.c.b16 %v1636, %v1636
        %v1643 = vpack.c.b16 %v1637, %v1637
        %v1644 = vpack.c.b16 %v1638, %v1638
        %v1645 = vpack.c.b16 %v1639, %v1639
        %v1646 = vpack.c.b16 %v1640, %v1640
        %v1647 = vpack.c.b16 %v1641, %v1641
        %s1654 = scalar_lea.vmem [#allocation2], 192
        %1655 = vst [vmem:[%s1654] sm:$0xf] %v1642
        %1656 = vst [vmem:[%s1654 + $0x4] sm:$0xf] %v1643
        %1657 = vst [vmem:[%s1654 + $0x8] sm:$0xf] %v1644
        %1658 = vst [vmem:[%s1654 + $0xc] sm:$0xf] %v1645
        %1659 = vst [vmem:[%s1654 + $0x10] sm:$0xf] %v1646
        %1660 = vst [vmem:[%s1654 + $0x14] sm:$0xf] %v1647
        %s1661 = sadd.s32 %s330, 1
        %s1662 = smul.u32 %s1661, 3
        %s1663 = smul.addr %s1662, 4
        %s1664 = scalar_lea.vmem %s287, %s1663 [#allocation3]
        %v1665 = vld [vmem:[%s1664] sm:$0xf]
        %v1666 = vld [vmem:[%s1664 + $0x4] sm:$0xf]
        %v1667 = vld [vmem:[%s1664 + $0x8] sm:$0x1]
        %v1668 = vld [vmem:[%s1664 + $0xc] sm:$0xf]
        %v1669 = vld [vmem:[%s1664 + $0x10] sm:$0xf]
        %v1670 = vld [vmem:[%s1664 + $0x14] sm:$0x1]
        %v1671 = vld [vmem:[%s1664 + $0x18] sm:$0xf]
        %v1672 = vld [vmem:[%s1664 + $0x1c] sm:$0xf]
        %v1673 = vld [vmem:[%s1664 + $0x20] sm:$0x1]
        %v1674 = vld [vmem:[%s1664 + $0x24] sm:$0xf]
        %v1675 = vld [vmem:[%s1664 + $0x28] sm:$0xf]
        %v1676 = vld [vmem:[%s1664 + $0x2c] sm:$0x1]
        %v1677 = vld [vmem:[%s1664 + $0x30] sm:$0xf]
        %v1678 = vld [vmem:[%s1664 + $0x34] sm:$0xf]
        %v1679 = vld [vmem:[%s1664 + $0x38] sm:$0x1]
        %v1680 = vld [vmem:[%s1664 + $0x3c] sm:$0xf]
        %v1681 = vld [vmem:[%s1664 + $0x40] sm:$0xf]
        %v1682 = vld [vmem:[%s1664 + $0x44] sm:$0x1]
        %v1683 = vld [vmem:[%s1664 + $0x48] sm:$0xf]
        %v1684 = vld [vmem:[%s1664 + $0x4c] sm:$0xf]
        %v1685 = vld [vmem:[%s1664 + $0x50] sm:$0x1]
        %v1686 = vld [vmem:[%s1664 + $0x54] sm:$0xf]
        %v1687 = vld [vmem:[%s1664 + $0x58] sm:$0xf]
        %v1688 = vld [vmem:[%s1664 + $0x5c] sm:$0x1]
        %vm1689 = vsmask.f32 3328
        %vm1690 = vsmask.f32 7440
        %vm1691 = vmor %vm1689, %vm1690
        %v1693 = vshrl.u32 %v1665, 16
        %v1695 = vrot.slane %v1693, 4
        %v1696 = vshll.u32 %v1665, 16
        %v1698 = vrot.slane %v1696, 5
        %v1699 = vor.u32 %v1695, %v1698
        %v1700 = vrot.slane %v1699, 4
        %v1702 = vshll.u32 %v1666, 16
        %v1704 = vrot.slane %v1702, 5
        %v1705 = vsel %vm1691, %v1700, %v1704
        %v1706 = vshrl.u32 %v1666, 16
        %v1708 = vrot.slane %v1706, 4
        %v1709 = vor.u32 %v1708, %v1704
        %v1710 = vrot.slane %v1709, 4
        %v1712 = vshll.u32 %v1667, 16
        %v1714 = vrot.slane %v1712, 5
        %v1715 = vsel %vm1691, %v1710, %v1714
        %v1717 = vshrl.u32 %v1668, 16
        %v1719 = vrot.slane %v1717, 4
        %v1720 = vshll.u32 %v1668, 16
        %v1722 = vrot.slane %v1720, 5
        %v1723 = vor.u32 %v1719, %v1722
        %v1724 = vrot.slane %v1723, 4
        %v1726 = vshll.u32 %v1669, 16
        %v1728 = vrot.slane %v1726, 5
        %v1729 = vsel %vm1691, %v1724, %v1728
        %v1730 = vshrl.u32 %v1669, 16
        %v1732 = vrot.slane %v1730, 4
        %v1733 = vor.u32 %v1732, %v1728
        %v1734 = vrot.slane %v1733, 4
        %v1736 = vshll.u32 %v1670, 16
        %v1738 = vrot.slane %v1736, 5
        %v1739 = vsel %vm1691, %v1734, %v1738
        %v1741 = vshrl.u32 %v1671, 16
        %v1743 = vrot.slane %v1741, 4
        %v1744 = vshll.u32 %v1671, 16
        %v1746 = vrot.slane %v1744, 5
        %v1747 = vor.u32 %v1743, %v1746
        %v1748 = vrot.slane %v1747, 4
        %v1750 = vshll.u32 %v1672, 16
        %v1752 = vrot.slane %v1750, 5
        %v1753 = vsel %vm1691, %v1748, %v1752
        %v1754 = vshrl.u32 %v1672, 16
        %v1756 = vrot.slane %v1754, 4
        %v1757 = vor.u32 %v1756, %v1752
        %v1758 = vrot.slane %v1757, 4
        %v1760 = vshll.u32 %v1673, 16
        %v1762 = vrot.slane %v1760, 5
        %v1763 = vsel %vm1691, %v1758, %v1762
        %v1765 = vshrl.u32 %v1674, 16
        %v1767 = vrot.slane %v1765, 4
        %v1768 = vshll.u32 %v1674, 16
        %v1770 = vrot.slane %v1768, 5
        %v1771 = vor.u32 %v1767, %v1770
        %v1772 = vrot.slane %v1771, 4
        %v1774 = vshll.u32 %v1675, 16
        %v1776 = vrot.slane %v1774, 5
        %v1777 = vsel %vm1691, %v1772, %v1776
        %v1778 = vshrl.u32 %v1675, 16
        %v1780 = vrot.slane %v1778, 4
        %v1781 = vor.u32 %v1780, %v1776
        %v1782 = vrot.slane %v1781, 4
        %v1784 = vshll.u32 %v1676, 16
        %v1786 = vrot.slane %v1784, 5
        %v1787 = vsel %vm1691, %v1782, %v1786
        %v1789 = vshrl.u32 %v1677, 16
        %v1791 = vrot.slane %v1789, 4
        %v1792 = vshll.u32 %v1677, 16
        %v1794 = vrot.slane %v1792, 5
        %v1795 = vor.u32 %v1791, %v1794
        %v1796 = vrot.slane %v1795, 4
        %v1798 = vshll.u32 %v1678, 16
        %v1800 = vrot.slane %v1798, 5
        %v1801 = vsel %vm1691, %v1796, %v1800
        %v1802 = vshrl.u32 %v1678, 16
        %v1804 = vrot.slane %v1802, 4
        %v1805 = vor.u32 %v1804, %v1800
        %v1806 = vrot.slane %v1805, 4
        %v1808 = vshll.u32 %v1679, 16
        %v1810 = vrot.slane %v1808, 5
        %v1811 = vsel %vm1691, %v1806, %v1810
        %v1813 = vshrl.u32 %v1680, 16
        %v1815 = vrot.slane %v1813, 4
        %v1816 = vshll.u32 %v1680, 16
        %v1818 = vrot.slane %v1816, 5
        %v1819 = vor.u32 %v1815, %v1818
        %v1820 = vrot.slane %v1819, 4
        %v1822 = vshll.u32 %v1681, 16
        %v1824 = vrot.slane %v1822, 5
        %v1825 = vsel %vm1691, %v1820, %v1824
        %v1826 = vshrl.u32 %v1681, 16
        %v1828 = vrot.slane %v1826, 4
        %v1829 = vor.u32 %v1828, %v1824
        %v1830 = vrot.slane %v1829, 4
        %v1832 = vshll.u32 %v1682, 16
        %v1834 = vrot.slane %v1832, 5
        %v1835 = vsel %vm1691, %v1830, %v1834
        %v1837 = vshrl.u32 %v1683, 16
        %v1839 = vrot.slane %v1837, 4
        %v1840 = vshll.u32 %v1683, 16
        %v1842 = vrot.slane %v1840, 5
        %v1843 = vor.u32 %v1839, %v1842
        %v1844 = vrot.slane %v1843, 4
        %v1846 = vshll.u32 %v1684, 16
        %v1848 = vrot.slane %v1846, 5
        %v1849 = vsel %vm1691, %v1844, %v1848
        %v1850 = vshrl.u32 %v1684, 16
        %v1852 = vrot.slane %v1850, 4
        %v1853 = vor.u32 %v1852, %v1848
        %v1854 = vrot.slane %v1853, 4
        %v1856 = vshll.u32 %v1685, 16
        %v1858 = vrot.slane %v1856, 5
        %v1859 = vsel %vm1691, %v1854, %v1858
        %v1861 = vshrl.u32 %v1686, 16
        %v1863 = vrot.slane %v1861, 4
        %v1864 = vshll.u32 %v1686, 16
        %v1866 = vrot.slane %v1864, 5
        %v1867 = vor.u32 %v1863, %v1866
        %v1868 = vrot.slane %v1867, 4
        %v1870 = vshll.u32 %v1687, 16
        %v1872 = vrot.slane %v1870, 5
        %v1873 = vsel %vm1691, %v1868, %v1872
        %v1874 = vshrl.u32 %v1687, 16
        %v1876 = vrot.slane %v1874, 4
        %v1877 = vor.u32 %v1876, %v1872
        %v1878 = vrot.slane %v1877, 4
        %v1880 = vshll.u32 %v1688, 16
        %v1882 = vrot.slane %v1880, 5
        %v1883 = vsel %vm1691, %v1878, %v1882
        %v1885 = vlaneseq
        %v1886 = vshrl.u32 %v1885, 7
        %v1887 = vsub.s32 0, %v1886
        %v1888 = vrot.slane %v364, %v1887
        %v1890 = vunpack.c.l.b16 %v1705
        %v1891 = vunpack.c.l.b16 %v1715
        %v1892 = vunpack.c.l.b16 %v1729
        %v1893 = vunpack.c.l.b16 %v1739
        %v1894 = vunpack.c.l.b16 %v1753
        %v1895 = vunpack.c.l.b16 %v1763
        %v1896 = vunpack.c.l.b16 %v1777
        %v1897 = vunpack.c.l.b16 %v1787
        %v1898 = vunpack.c.l.b16 %v1801
        %v1899 = vunpack.c.l.b16 %v1811
        %v1900 = vunpack.c.l.b16 %v1825
        %v1901 = vunpack.c.l.b16 %v1835
        %v1902 = vunpack.c.l.b16 %v1849
        %v1903 = vunpack.c.l.b16 %v1859
        %v1904 = vunpack.c.l.b16 %v1873
        %v1905 = vunpack.c.l.b16 %v1883
        %v1906 = vpack.c.b16 %v1891, %v1890
        %v1907 = vpack.c.b16 %v1893, %v1892
        %v1908 = vpack.c.b16 %v1895, %v1894
        %v1909 = vpack.c.b16 %v1897, %v1896
        %v1910 = vpack.c.b16 %v1899, %v1898
        %v1911 = vpack.c.b16 %v1901, %v1900
        %v1912 = vpack.c.b16 %v1903, %v1902
        %v1913 = vpack.c.b16 %v1905, %v1904
        %v1938 = vunpack.c.l.b16 %v347
        %v1939 = vunpack.c.l.b16 %v348
        %v1940 = vunpack.c.l.b16 %v349
        %v1941 = vunpack.c.l.b16 %v350
        %v1942 = vunpack.c.l.b16 %v351
        %v1943 = vunpack.c.l.b16 %v352
        %v1944 = vunpack.c.l.b16 %v353
        %v1945 = vunpack.c.l.b16 %v354
        %v1946 = vunpack.c.l.b16 %v355
        %v1947 = vunpack.c.l.b16 %v356
        %v1948 = vunpack.c.l.b16 %v357
        %v1949 = vunpack.c.l.b16 %v358
        %v1950 = vunpack.c.l.b16 %v359
        %v1951 = vunpack.c.l.b16 %v360
        %v1952 = vunpack.c.l.b16 %v361
        %v1953 = vunpack.c.l.b16 %v362
        %v1954 = vpack.c.b16 %v1939, %v1938
        %v1955 = vpack.c.b16 %v1941, %v1940
        %v1956 = vpack.c.b16 %v1943, %v1942
        %v1957 = vpack.c.b16 %v1945, %v1944
        %v1958 = vpack.c.b16 %v1947, %v1946
        %v1959 = vpack.c.b16 %v1949, %v1948
        %v1960 = vpack.c.b16 %v1951, %v1950
        %v1961 = vpack.c.b16 %v1953, %v1952
        %1970 = vmatprep.subr.bf16.mxu0 0
        %1971 = vmatpush1.bf16.msra.mxu0 %v1954
        %1972 = vmatprep.subr.bf16.mxu0 0
        %1973 = vmatpush1.bf16.msra.mxu0 %v1955
        %1974 = vmatprep.subr.bf16.mxu0 0
        %1975 = vmatpush1.bf16.msra.mxu0 %v1956
        %1976 = vmatprep.subr.bf16.mxu0 0
        %1977 = vmatpush1.bf16.msra.mxu0 %v1957
        %1978 = vmatprep.subr.bf16.mxu0 0
        %1979 = vmatpush1.bf16.msra.mxu0 %v1958
        %1980 = vmatprep.subr.bf16.mxu0 0
        %1981 = vmatpush1.bf16.msra.mxu0 %v1959
        %1982 = vmatprep.subr.bf16.mxu0 0
        %1983 = vmatpush1.bf16.msra.mxu0 %v1960
        %1984 = vmatprep.subr.bf16.mxu0 0
        %1985 = vmatpush1.bf16.msra.mxu0 %v1961
        %1986 = vmatprep.subr.bf16.mxu0 0
        %1987 = vmatpush1.bf16.msra.mxu0 0
        %1988 = vmatprep.subr.bf16.mxu0 0
        %1989 = vmatpush1.bf16.msra.mxu0 0
        %1990 = vmatprep.subr.bf16.mxu0 0
        %1991 = vmatpush1.bf16.msra.mxu0 0
        %1992 = vmatprep.subr.bf16.mxu0 0
        %1993 = vmatpush1.bf16.msra.mxu0 0
        %1994 = vmatprep.subr.bf16.mxu0 0
        %1995 = vmatpush1.bf16.msra.mxu0 0
        %1996 = vmatprep.subr.bf16.mxu0 0
        %1997 = vmatpush1.bf16.msra.mxu0 0
        %1998 = vmatprep.subr.bf16.mxu0 0
        %1999 = vmatpush1.bf16.msra.mxu0 0
        %2000 = vmatprep.subr.bf16.mxu0 0
        %2001 = vmatpush1.bf16.msra.mxu0 0
        %2002 = vmatprep.mubr.bf16.mxu0 0
        %2003 = vmatmul.mubr.bf16.gmra.mrb[0].mxu0 %v1906
        %v2004 = vpop.f32.mrb[0].mxu0
        %v2005 = vadd.f32 %v1888, %v2004
        %v2006 = vpop.f32.mrb[0].mxu0
        %v2007 = vpop.f32.mrb[0].mxu0
        %v2008 = vadd.f32 %v1888, %v2007
        %v2009 = vpop.f32.mrb[0].mxu0
        %2010 = vmatprep.mubr.bf16.mxu0 0
        %2011 = vmatmul.mubr.bf16.gmra.mrb[0].mxu0 %v1907
        %v2012 = vpop.f32.mrb[0].mxu0
        %v2013 = vadd.f32 %v1888, %v2012
        %v2014 = vpop.f32.mrb[0].mxu0
        %v2015 = vpop.f32.mrb[0].mxu0
        %v2016 = vadd.f32 %v1888, %v2015
        %v2017 = vpop.f32.mrb[0].mxu0
        %2018 = vmatprep.mubr.bf16.mxu0 0
        %2019 = vmatmul.mubr.bf16.gmra.mrb[0].mxu0 %v1908
        %v2020 = vpop.f32.mrb[0].mxu0
        %v2021 = vadd.f32 %v1888, %v2020
        %v2022 = vpop.f32.mrb[0].mxu0
        %v2023 = vpop.f32.mrb[0].mxu0
        %v2024 = vadd.f32 %v1888, %v2023
        %v2025 = vpop.f32.mrb[0].mxu0
        %2026 = vmatprep.mubr.bf16.mxu0 0
        %2027 = vmatmul.mubr.bf16.gmra.mrb[0].mxu0 %v1909
        %v2028 = vpop.f32.mrb[0].mxu0
        %v2029 = vadd.f32 %v1888, %v2028
        %v2030 = vpop.f32.mrb[0].mxu0
        %v2031 = vpop.f32.mrb[0].mxu0
        %v2032 = vadd.f32 %v1888, %v2031
        %v2033 = vpop.f32.mrb[0].mxu0
        %2034 = vmatprep.mubr.bf16.mxu0 0
        %2035 = vmatmul.mubr.bf16.gmra.mrb[0].mxu0 %v1910
        %v2036 = vpop.f32.mrb[0].mxu0
        %v2037 = vadd.f32 %v1888, %v2036
        %v2038 = vpop.f32.mrb[0].mxu0
        %v2039 = vpop.f32.mrb[0].mxu0
        %v2040 = vadd.f32 %v1888, %v2039
        %v2041 = vpop.f32.mrb[0].mxu0
        %2042 = vmatprep.mubr.bf16.mxu0 0
        %2043 = vmatmul.mubr.bf16.gmra.mrb[0].mxu0 %v1911
        %v2044 = vpop.f32.mrb[0].mxu0
        %v2045 = vadd.f32 %v1888, %v2044
        %v2046 = vpop.f32.mrb[0].mxu0
        %v2047 = vpop.f32.mrb[0].mxu0
        %v2048 = vadd.f32 %v1888, %v2047
        %v2049 = vpop.f32.mrb[0].mxu0
        %2050 = vmatprep.mubr.bf16.mxu0 0
        %2051 = vmatmul.mubr.bf16.gmra.mrb[0].mxu0 %v1912
        %v2052 = vpop.f32.mrb[0].mxu0
        %v2053 = vadd.f32 %v1888, %v2052
        %v2054 = vpop.f32.mrb[0].mxu0
        %v2055 = vpop.f32.mrb[0].mxu0
        %v2056 = vadd.f32 %v1888, %v2055
        %v2057 = vpop.f32.mrb[0].mxu0
        %2058 = vmatprep.mubr.bf16.mxu0 0
        %2059 = vmatmul.mubr.bf16.gmra.mrb[0].mxu0 %v1913
        %v2060 = vpop.f32.mrb[0].mxu0
        %v2061 = vadd.f32 %v1888, %v2060
        %v2062 = vpop.f32.mrb[0].mxu0
        %v2063 = vpop.f32.mrb[0].mxu0
        %v2064 = vadd.f32 %v1888, %v2063
        %v2065 = vpop.f32.mrb[0].mxu0
        %2066 = vdwg.mxu0
        %v2067 = vld [vmem:[#allocation2] sm:$0xf]
        %v2068 = vld [vmem:[#allocation2 + $0x4] sm:$0xf]
        %v2069 = vld [vmem:[#allocation2 + $0xc] sm:$0xf]
        %v2070 = vld [vmem:[#allocation2 + $0x10] sm:$0xf]
        %v2071 = vld [vmem:[#allocation2 + $0x18] sm:$0xf]
        %v2072 = vld [vmem:[#allocation2 + $0x1c] sm:$0xf]
        %v2073 = vld [vmem:[#allocation2 + $0x24] sm:$0xf]
        %v2074 = vld [vmem:[#allocation2 + $0x28] sm:$0xf]
        %v2075 = vld [vmem:[#allocation2 + $0x30] sm:$0xf]
        %v2076 = vld [vmem:[#allocation2 + $0x34] sm:$0xf]
        %v2077 = vld [vmem:[#allocation2 + $0x3c] sm:$0xf]
        %v2078 = vld [vmem:[#allocation2 + $0x40] sm:$0xf]
        %v2079 = vld [vmem:[#allocation2 + $0x48] sm:$0xf]
        %v2080 = vld [vmem:[#allocation2 + $0x4c] sm:$0xf]
        %v2081 = vld [vmem:[#allocation2 + $0x54] sm:$0xf]
        %v2082 = vld [vmem:[#allocation2 + $0x58] sm:$0xf]
        %v2083 = vld [vmem:[#allocation8] sm:$0xf]
        %v2084 = vld [vmem:[#allocation8 + $0x4] sm:$0xf]
        %v2085 = vld [vmem:[#allocation8 + $0x8] sm:$0xf]
        %v2086 = vld [vmem:[#allocation8 + $0xc] sm:$0xf]
        %v2087 = vld [vmem:[#allocation8 + $0x10] sm:$0xf]
        %v2088 = vld [vmem:[#allocation8 + $0x14] sm:$0xf]
        %v2089 = vld [vmem:[#allocation8 + $0x18] sm:$0xf]
        %v2090 = vld [vmem:[#allocation8 + $0x1c] sm:$0xf]
        %v2091 = vld [vmem:[#allocation8 + $0x20] sm:$0xf]
        %v2092 = vld [vmem:[#allocation8 + $0x24] sm:$0xf]
        %v2093 = vld [vmem:[#allocation8 + $0x28] sm:$0xf]
        %v2094 = vld [vmem:[#allocation8 + $0x2c] sm:$0xf]
        %v2095 = vld [vmem:[#allocation8 + $0x30] sm:$0xf]
        %v2096 = vld [vmem:[#allocation8 + $0x34] sm:$0xf]
        %v2097 = vld [vmem:[#allocation8 + $0x38] sm:$0xf]
        %v2098 = vld [vmem:[#allocation8 + $0x3c] sm:$0xf]
        %v2115 = vunpack.c.l.b16 %v2067
        %v2116 = vunpack.c.l.b16 %v2068
        %v2117 = vunpack.c.l.b16 %v2069
        %v2118 = vunpack.c.l.b16 %v2070
        %v2119 = vunpack.c.l.b16 %v2071
        %v2120 = vunpack.c.l.b16 %v2072
        %v2121 = vunpack.c.l.b16 %v2073
        %v2122 = vunpack.c.l.b16 %v2074
        %v2123 = vunpack.c.l.b16 %v2075
        %v2124 = vunpack.c.l.b16 %v2076
        %v2125 = vunpack.c.l.b16 %v2077
        %v2126 = vunpack.c.l.b16 %v2078
        %v2127 = vunpack.c.l.b16 %v2079
        %v2128 = vunpack.c.l.b16 %v2080
        %v2129 = vunpack.c.l.b16 %v2081
        %v2130 = vunpack.c.l.b16 %v2082
        %v2131 = vpack.c.b16 %v2116, %v2115
        %v2132 = vpack.c.b16 %v2118, %v2117
        %v2133 = vpack.c.b16 %v2120, %v2119
        %v2134 = vpack.c.b16 %v2122, %v2121
        %v2135 = vpack.c.b16 %v2124, %v2123
        %v2136 = vpack.c.b16 %v2126, %v2125
        %v2137 = vpack.c.b16 %v2128, %v2127
        %v2138 = vpack.c.b16 %v2130, %v2129
        %v2163 = vunpack.c.l.b16 %v2083
        %v2164 = vunpack.c.l.b16 %v2084
        %v2165 = vunpack.c.l.b16 %v2085
        %v2166 = vunpack.c.l.b16 %v2086
        %v2167 = vunpack.c.l.b16 %v2087
        %v2168 = vunpack.c.l.b16 %v2088
        %v2169 = vunpack.c.l.b16 %v2089
        %v2170 = vunpack.c.l.b16 %v2090
        %v2171 = vunpack.c.l.b16 %v2091
        %v2172 = vunpack.c.l.b16 %v2092
        %v2173 = vunpack.c.l.b16 %v2093
        %v2174 = vunpack.c.l.b16 %v2094
        %v2175 = vunpack.c.l.b16 %v2095
        %v2176 = vunpack.c.l.b16 %v2096
        %v2177 = vunpack.c.l.b16 %v2097
        %v2178 = vunpack.c.l.b16 %v2098
        %v2179 = vpack.c.b16 %v2164, %v2163
        %v2180 = vpack.c.b16 %v2166, %v2165
        %v2181 = vpack.c.b16 %v2168, %v2167
        %v2182 = vpack.c.b16 %v2170, %v2169
        %v2183 = vpack.c.b16 %v2172, %v2171
        %v2184 = vpack.c.b16 %v2174, %v2173
        %v2185 = vpack.c.b16 %v2176, %v2175
        %v2186 = vpack.c.b16 %v2178, %v2177
        %2195 = vmatprep.subr.bf16.mxu0 0
        %2196 = vmatpush1.bf16.msra.mxu0 %v2179
        %2197 = vmatprep.subr.bf16.mxu0 0
        %2198 = vmatpush1.bf16.msra.mxu0 %v2180
        %2199 = vmatprep.subr.bf16.mxu0 0
        %2200 = vmatpush1.bf16.msra.mxu0 %v2181
        %2201 = vmatprep.subr.bf16.mxu0 0
        %2202 = vmatpush1.bf16.msra.mxu0 %v2182
        %2203 = vmatprep.subr.bf16.mxu0 0
        %2204 = vmatpush1.bf16.msra.mxu0 %v2183
        %2205 = vmatprep.subr.bf16.mxu0 0
        %2206 = vmatpush1.bf16.msra.mxu0 %v2184
        %2207 = vmatprep.subr.bf16.mxu0 0
        %2208 = vmatpush1.bf16.msra.mxu0 %v2185
        %2209 = vmatprep.subr.bf16.mxu0 0
        %2210 = vmatpush1.bf16.msra.mxu0 %v2186
        %2211 = vmatprep.subr.bf16.mxu0 0
        %2212 = vmatpush1.bf16.msra.mxu0 0
        %2213 = vmatprep.subr.bf16.mxu0 0
        %2214 = vmatpush1.bf16.msra.mxu0 0
        %2215 = vmatprep.subr.bf16.mxu0 0
        %2216 = vmatpush1.bf16.msra.mxu0 0
        %2217 = vmatprep.subr.bf16.mxu0 0
        %2218 = vmatpush1.bf16.msra.mxu0 0
        %2219 = vmatprep.subr.bf16.mxu0 0
        %2220 = vmatpush1.bf16.msra.mxu0 0
        %2221 = vmatprep.subr.bf16.mxu0 0
        %2222 = vmatpush1.bf16.msra.mxu0 0
        %2223 = vmatprep.subr.bf16.mxu0 0
        %2224 = vmatpush1.bf16.msra.mxu0 0
        %2225 = vmatprep.subr.bf16.mxu0 0
        %2226 = vmatpush1.bf16.msra.mxu0 0
        %2227 = vmatprep.mubr.bf16.mxu0 0
        %2228 = vmatmul.mubr.bf16.gmra.mrb[0].mxu0 %v2131
        %v2229 = vpop.f32.mrb[0].mxu0
        %v2230 = vadd.f32 0.0, %v2229
        %v2231 = vpop.f32.mrb[0].mxu0
        %v2232 = vpop.f32.mrb[0].mxu0
        %v2233 = vadd.f32 0.0, %v2232
        %v2234 = vpop.f32.mrb[0].mxu0
        %2235 = vmatprep.mubr.bf16.mxu0 0
        %2236 = vmatmul.mubr.bf16.gmra.mrb[0].mxu0 %v2132
        %v2237 = vpop.f32.mrb[0].mxu0
        %v2238 = vadd.f32 0.0, %v2237
        %v2239 = vpop.f32.mrb[0].mxu0
        %v2240 = vpop.f32.mrb[0].mxu0
        %v2241 = vadd.f32 0.0, %v2240
        %v2242 = vpop.f32.mrb[0].mxu0
        %2243 = vmatprep.mubr.bf16.mxu0 0
        %2244 = vmatmul.mubr.bf16.gmra.mrb[0].mxu0 %v2133
        %v2245 = vpop.f32.mrb[0].mxu0
        %v2246 = vadd.f32 0.0, %v2245
        %v2247 = vpop.f32.mrb[0].mxu0
        %v2248 = vpop.f32.mrb[0].mxu0
        %v2249 = vadd.f32 0.0, %v2248
        %v2250 = vpop.f32.mrb[0].mxu0
        %2251 = vmatprep.mubr.bf16.mxu0 0
        %2252 = vmatmul.mubr.bf16.gmra.mrb[0].mxu0 %v2134
        %v2253 = vpop.f32.mrb[0].mxu0
        %v2254 = vadd.f32 0.0, %v2253
        %v2255 = vpop.f32.mrb[0].mxu0
        %v2256 = vpop.f32.mrb[0].mxu0
        %v2257 = vadd.f32 0.0, %v2256
        %v2258 = vpop.f32.mrb[0].mxu0
        %2259 = vmatprep.mubr.bf16.mxu0 0
        %2260 = vmatmul.mubr.bf16.gmra.mrb[0].mxu0 %v2135
        %v2261 = vpop.f32.mrb[0].mxu0
        %v2262 = vadd.f32 0.0, %v2261
        %v2263 = vpop.f32.mrb[0].mxu0
        %v2264 = vpop.f32.mrb[0].mxu0
        %v2265 = vadd.f32 0.0, %v2264
        %v2266 = vpop.f32.mrb[0].mxu0
        %2267 = vmatprep.mubr.bf16.mxu0 0
        %2268 = vmatmul.mubr.bf16.gmra.mrb[0].mxu0 %v2136
        %v2269 = vpop.f32.mrb[0].mxu0
        %v2270 = vadd.f32 0.0, %v2269
        %v2271 = vpop.f32.mrb[0].mxu0
        %v2272 = vpop.f32.mrb[0].mxu0
        %v2273 = vadd.f32 0.0, %v2272
        %v2274 = vpop.f32.mrb[0].mxu0
        %2275 = vmatprep.mubr.bf16.mxu0 0
        %2276 = vmatmul.mubr.bf16.gmra.mrb[0].mxu0 %v2137
        %v2277 = vpop.f32.mrb[0].mxu0
        %v2278 = vadd.f32 0.0, %v2277
        %v2279 = vpop.f32.mrb[0].mxu0
        %v2280 = vpop.f32.mrb[0].mxu0
        %v2281 = vadd.f32 0.0, %v2280
        %v2282 = vpop.f32.mrb[0].mxu0
        %2283 = vmatprep.mubr.bf16.mxu0 0
        %2284 = vmatmul.mubr.bf16.gmra.mrb[0].mxu0 %v2138
        %v2285 = vpop.f32.mrb[0].mxu0
        %v2286 = vadd.f32 0.0, %v2285
        %v2287 = vpop.f32.mrb[0].mxu0
        %v2288 = vpop.f32.mrb[0].mxu0
        %v2289 = vadd.f32 0.0, %v2288
        %v2290 = vpop.f32.mrb[0].mxu0
        %2291 = vdwg.mxu0
        %v2292 = vadd.f32 %v2005, %v2230
        %v2293 = vadd.f32 %v2008, %v2233
        %v2294 = vadd.f32 %v2013, %v2238
        %v2295 = vadd.f32 %v2016, %v2241
        %v2296 = vadd.f32 %v2021, %v2246
        %v2297 = vadd.f32 %v2024, %v2249
        %v2298 = vadd.f32 %v2029, %v2254
        %v2299 = vadd.f32 %v2032, %v2257
        %v2300 = vadd.f32 %v2037, %v2262
        %v2301 = vadd.f32 %v2040, %v2265
        %v2302 = vadd.f32 %v2045, %v2270
        %v2303 = vadd.f32 %v2048, %v2273
        %v2304 = vadd.f32 %v2053, %v2278
        %v2305 = vadd.f32 %v2056, %v2281
        %v2306 = vadd.f32 %v2061, %v2286
        %v2307 = vadd.f32 %v2064, %v2289
        %v2308 = vld [vmem:[#allocation2] sm:$0xf]
        %v2309 = vld [vmem:[#allocation2 + $0x4] sm:$0xf]
        %v2310 = vld [vmem:[#allocation2 + $0x8] sm:$0x1]
        %v2311 = vld [vmem:[#allocation2 + $0xc] sm:$0xf]
        %v2312 = vld [vmem:[#allocation2 + $0x10] sm:$0xf]
        %v2313 = vld [vmem:[#allocation2 + $0x14] sm:$0x1]
        %v2314 = vld [vmem:[#allocation2 + $0x18] sm:$0xf]
        %v2315 = vld [vmem:[#allocation2 + $0x1c] sm:$0xf]
        %v2316 = vld [vmem:[#allocation2 + $0x20] sm:$0x1]
        %v2317 = vld [vmem:[#allocation2 + $0x24] sm:$0xf]
        %v2318 = vld [vmem:[#allocation2 + $0x28] sm:$0xf]
        %v2319 = vld [vmem:[#allocation2 + $0x2c] sm:$0x1]
        %v2320 = vld [vmem:[#allocation2 + $0x30] sm:$0xf]
        %v2321 = vld [vmem:[#allocation2 + $0x34] sm:$0xf]
        %v2322 = vld [vmem:[#allocation2 + $0x38] sm:$0x1]
        %v2323 = vld [vmem:[#allocation2 + $0x3c] sm:$0xf]
        %v2324 = vld [vmem:[#allocation2 + $0x40] sm:$0xf]
        %v2325 = vld [vmem:[#allocation2 + $0x44] sm:$0x1]
        %v2326 = vld [vmem:[#allocation2 + $0x48] sm:$0xf]
        %v2327 = vld [vmem:[#allocation2 + $0x4c] sm:$0xf]
        %v2328 = vld [vmem:[#allocation2 + $0x50] sm:$0x1]
        %v2329 = vld [vmem:[#allocation2 + $0x54] sm:$0xf]
        %v2330 = vld [vmem:[#allocation2 + $0x58] sm:$0xf]
        %v2331 = vld [vmem:[#allocation2 + $0x5c] sm:$0x1]
        %v2333 = vshrl.u32 %v2308, 16
        %v2335 = vrot.slane %v2333, 4
        %v2336 = vshll.u32 %v2308, 16
        %v2338 = vrot.slane %v2336, 5
        %v2339 = vor.u32 %v2335, %v2338
        %v2340 = vrot.slane %v2339, 4
        %v2342 = vshll.u32 %v2309, 16
        %v2344 = vrot.slane %v2342, 5
        %v2345 = vsel %vm1691, %v2340, %v2344
        %v2346 = vshrl.u32 %v2309, 16
        %v2348 = vrot.slane %v2346, 4
        %v2349 = vor.u32 %v2348, %v2344
        %v2350 = vrot.slane %v2349, 4
        %v2352 = vshll.u32 %v2310, 16
        %v2354 = vrot.slane %v2352, 5
        %v2355 = vsel %vm1691, %v2350, %v2354
        %v2357 = vshrl.u32 %v2311, 16
        %v2359 = vrot.slane %v2357, 4
        %v2360 = vshll.u32 %v2311, 16
        %v2362 = vrot.slane %v2360, 5
        %v2363 = vor.u32 %v2359, %v2362
        %v2364 = vrot.slane %v2363, 4
        %v2366 = vshll.u32 %v2312, 16
        %v2368 = vrot.slane %v2366, 5
        %v2369 = vsel %vm1691, %v2364, %v2368
        %v2370 = vshrl.u32 %v2312, 16
        %v2372 = vrot.slane %v2370, 4
        %v2373 = vor.u32 %v2372, %v2368
        %v2374 = vrot.slane %v2373, 4
        %v2376 = vshll.u32 %v2313, 16
        %v2378 = vrot.slane %v2376, 5
        %v2379 = vsel %vm1691, %v2374, %v2378
        %v2381 = vshrl.u32 %v2314, 16
        %v2383 = vrot.slane %v2381, 4
        %v2384 = vshll.u32 %v2314, 16
        %v2386 = vrot.slane %v2384, 5
        %v2387 = vor.u32 %v2383, %v2386
        %v2388 = vrot.slane %v2387, 4
        %v2390 = vshll.u32 %v2315, 16
        %v2392 = vrot.slane %v2390, 5
        %v2393 = vsel %vm1691, %v2388, %v2392
        %v2394 = vshrl.u32 %v2315, 16
        %v2396 = vrot.slane %v2394, 4
        %v2397 = vor.u32 %v2396, %v2392
        %v2398 = vrot.slane %v2397, 4
        %v2400 = vshll.u32 %v2316, 16
        %v2402 = vrot.slane %v2400, 5
        %v2403 = vsel %vm1691, %v2398, %v2402
        %v2405 = vshrl.u32 %v2317, 16
        %v2407 = vrot.slane %v2405, 4
        %v2408 = vshll.u32 %v2317, 16
        %v2410 = vrot.slane %v2408, 5
        %v2411 = vor.u32 %v2407, %v2410
        %v2412 = vrot.slane %v2411, 4
        %v2414 = vshll.u32 %v2318, 16
        %v2416 = vrot.slane %v2414, 5
        %v2417 = vsel %vm1691, %v2412, %v2416
        %v2418 = vshrl.u32 %v2318, 16
        %v2420 = vrot.slane %v2418, 4
        %v2421 = vor.u32 %v2420, %v2416
        %v2422 = vrot.slane %v2421, 4
        %v2424 = vshll.u32 %v2319, 16
        %v2426 = vrot.slane %v2424, 5
        %v2427 = vsel %vm1691, %v2422, %v2426
        %v2429 = vshrl.u32 %v2320, 16
        %v2431 = vrot.slane %v2429, 4
        %v2432 = vshll.u32 %v2320, 16
        %v2434 = vrot.slane %v2432, 5
        %v2435 = vor.u32 %v2431, %v2434
        %v2436 = vrot.slane %v2435, 4
        %v2438 = vshll.u32 %v2321, 16
        %v2440 = vrot.slane %v2438, 5
        %v2441 = vsel %vm1691, %v2436, %v2440
        %v2442 = vshrl.u32 %v2321, 16
        %v2444 = vrot.slane %v2442, 4
        %v2445 = vor.u32 %v2444, %v2440
        %v2446 = vrot.slane %v2445, 4
        %v2448 = vshll.u32 %v2322, 16
        %v2450 = vrot.slane %v2448, 5
        %v2451 = vsel %vm1691, %v2446, %v2450
        %v2453 = vshrl.u32 %v2323, 16
        %v2455 = vrot.slane %v2453, 4
        %v2456 = vshll.u32 %v2323, 16
        %v2458 = vrot.slane %v2456, 5
        %v2459 = vor.u32 %v2455, %v2458
        %v2460 = vrot.slane %v2459, 4
        %v2462 = vshll.u32 %v2324, 16
        %v2464 = vrot.slane %v2462, 5
        %v2465 = vsel %vm1691, %v2460, %v2464
        %v2466 = vshrl.u32 %v2324, 16
        %v2468 = vrot.slane %v2466, 4
        %v2469 = vor.u32 %v2468, %v2464
        %v2470 = vrot.slane %v2469, 4
        %v2472 = vshll.u32 %v2325, 16
        %v2474 = vrot.slane %v2472, 5
        %v2475 = vsel %vm1691, %v2470, %v2474
        %v2477 = vshrl.u32 %v2326, 16
        %v2479 = vrot.slane %v2477, 4
        %v2480 = vshll.u32 %v2326, 16
        %v2482 = vrot.slane %v2480, 5
        %v2483 = vor.u32 %v2479, %v2482
        %v2484 = vrot.slane %v2483, 4
        %v2486 = vshll.u32 %v2327, 16
        %v2488 = vrot.slane %v2486, 5
        %v2489 = vsel %vm1691, %v2484, %v2488
        %v2490 = vshrl.u32 %v2327, 16
        %v2492 = vrot.slane %v2490, 4
        %v2493 = vor.u32 %v2492, %v2488
        %v2494 = vrot.slane %v2493, 4
        %v2496 = vshll.u32 %v2328, 16
        %v2498 = vrot.slane %v2496, 5
        %v2499 = vsel %vm1691, %v2494, %v2498
        %v2501 = vshrl.u32 %v2329, 16
        %v2503 = vrot.slane %v2501, 4
        %v2504 = vshll.u32 %v2329, 16
        %v2506 = vrot.slane %v2504, 5
        %v2507 = vor.u32 %v2503, %v2506
        %v2508 = vrot.slane %v2507, 4
        %v2510 = vshll.u32 %v2330, 16
        %v2512 = vrot.slane %v2510, 5
        %v2513 = vsel %vm1691, %v2508, %v2512
        %v2514 = vshrl.u32 %v2330, 16
        %v2516 = vrot.slane %v2514, 4
        %v2517 = vor.u32 %v2516, %v2512
        %v2518 = vrot.slane %v2517, 4
        %v2520 = vshll.u32 %v2331, 16
        %v2522 = vrot.slane %v2520, 5
        %v2523 = vsel %vm1691, %v2518, %v2522
        %s2524 = scalar_lea.vmem [#allocation8], 64
        %v2525 = vld [vmem:[%s2524] sm:$0xf]
        %v2526 = vld [vmem:[%s2524 + $0x4] sm:$0xf]
        %v2527 = vld [vmem:[%s2524 + $0x8] sm:$0xf]
        %v2528 = vld [vmem:[%s2524 + $0xc] sm:$0xf]
        %v2529 = vld [vmem:[%s2524 + $0x10] sm:$0xf]
        %v2530 = vld [vmem:[%s2524 + $0x14] sm:$0xf]
        %v2531 = vld [vmem:[%s2524 + $0x18] sm:$0xf]
        %v2532 = vld [vmem:[%s2524 + $0x1c] sm:$0xf]
        %v2533 = vld [vmem:[%s2524 + $0x20] sm:$0xf]
        %v2534 = vld [vmem:[%s2524 + $0x24] sm:$0xf]
        %v2535 = vld [vmem:[%s2524 + $0x28] sm:$0xf]
        %v2536 = vld [vmem:[%s2524 + $0x2c] sm:$0xf]
        %v2537 = vld [vmem:[%s2524 + $0x30] sm:$0xf]
        %v2538 = vld [vmem:[%s2524 + $0x34] sm:$0xf]
        %v2539 = vld [vmem:[%s2524 + $0x38] sm:$0xf]
        %v2540 = vld [vmem:[%s2524 + $0x3c] sm:$0xf]
        %v2541 = vunpack.c.l.b16 %v2345
        %v2542 = vunpack.c.l.b16 %v2355
        %v2543 = vunpack.c.l.b16 %v2369
        %v2544 = vunpack.c.l.b16 %v2379
        %v2545 = vunpack.c.l.b16 %v2393
        %v2546 = vunpack.c.l.b16 %v2403
        %v2547 = vunpack.c.l.b16 %v2417
        %v2548 = vunpack.c.l.b16 %v2427
        %v2549 = vunpack.c.l.b16 %v2441
        %v2550 = vunpack.c.l.b16 %v2451
        %v2551 = vunpack.c.l.b16 %v2465
        %v2552 = vunpack.c.l.b16 %v2475
        %v2553 = vunpack.c.l.b16 %v2489
        %v2554 = vunpack.c.l.b16 %v2499
        %v2555 = vunpack.c.l.b16 %v2513
        %v2556 = vunpack.c.l.b16 %v2523
        %v2557 = vpack.c.b16 %v2542, %v2541
        %v2558 = vpack.c.b16 %v2544, %v2543
        %v2559 = vpack.c.b16 %v2546, %v2545
        %v2560 = vpack.c.b16 %v2548, %v2547
        %v2561 = vpack.c.b16 %v2550, %v2549
        %v2562 = vpack.c.b16 %v2552, %v2551
        %v2563 = vpack.c.b16 %v2554, %v2553
        %v2564 = vpack.c.b16 %v2556, %v2555
        %v2589 = vunpack.c.l.b16 %v2525
        %v2590 = vunpack.c.l.b16 %v2526
        %v2591 = vunpack.c.l.b16 %v2527
        %v2592 = vunpack.c.l.b16 %v2528
        %v2593 = vunpack.c.l.b16 %v2529
        %v2594 = vunpack.c.l.b16 %v2530
        %v2595 = vunpack.c.l.b16 %v2531
        %v2596 = vunpack.c.l.b16 %v2532
        %v2597 = vunpack.c.l.b16 %v2533
        %v2598 = vunpack.c.l.b16 %v2534
        %v2599 = vunpack.c.l.b16 %v2535
        %v2600 = vunpack.c.l.b16 %v2536
        %v2601 = vunpack.c.l.b16 %v2537
        %v2602 = vunpack.c.l.b16 %v2538
        %v2603 = vunpack.c.l.b16 %v2539
        %v2604 = vunpack.c.l.b16 %v2540
        %v2605 = vpack.c.b16 %v2590, %v2589
        %v2606 = vpack.c.b16 %v2592, %v2591
        %v2607 = vpack.c.b16 %v2594, %v2593
        %v2608 = vpack.c.b16 %v2596, %v2595
        %v2609 = vpack.c.b16 %v2598, %v2597
        %v2610 = vpack.c.b16 %v2600, %v2599
        %v2611 = vpack.c.b16 %v2602, %v2601
        %v2612 = vpack.c.b16 %v2604, %v2603
        %2621 = vmatprep.subr.bf16.mxu0 0
        %2622 = vmatpush1.bf16.msra.mxu0 %v2605
        %2623 = vmatprep.subr.bf16.mxu0 0
        %2624 = vmatpush1.bf16.msra.mxu0 %v2606
        %2625 = vmatprep.subr.bf16.mxu0 0
        %2626 = vmatpush1.bf16.msra.mxu0 %v2607
        %2627 = vmatprep.subr.bf16.mxu0 0
        %2628 = vmatpush1.bf16.msra.mxu0 %v2608
        %2629 = vmatprep.subr.bf16.mxu0 0
        %2630 = vmatpush1.bf16.msra.mxu0 %v2609
        %2631 = vmatprep.subr.bf16.mxu0 0
        %2632 = vmatpush1.bf16.msra.mxu0 %v2610
        %2633 = vmatprep.subr.bf16.mxu0 0
        %2634 = vmatpush1.bf16.msra.mxu0 %v2611
        %2635 = vmatprep.subr.bf16.mxu0 0
        %2636 = vmatpush1.bf16.msra.mxu0 %v2612
        %2637 = vmatprep.subr.bf16.mxu0 0
        %2638 = vmatpush1.bf16.msra.mxu0 0
        %2639 = vmatprep.subr.bf16.mxu0 0
        %2640 = vmatpush1.bf16.msra.mxu0 0
        %2641 = vmatprep.subr.bf16.mxu0 0
        %2642 = vmatpush1.bf16.msra.mxu0 0
        %2643 = vmatprep.subr.bf16.mxu0 0
        %2644 = vmatpush1.bf16.msra.mxu0 0
        %2645 = vmatprep.subr.bf16.mxu0 0
        %2646 = vmatpush1.bf16.msra.mxu0 0
        %2647 = vmatprep.subr.bf16.mxu0 0
        %2648 = vmatpush1.bf16.msra.mxu0 0
        %2649 = vmatprep.subr.bf16.mxu0 0
        %2650 = vmatpush1.bf16.msra.mxu0 0
        %2651 = vmatprep.subr.bf16.mxu0 0
        %2652 = vmatpush1.bf16.msra.mxu0 0
        %2653 = vmatprep.mubr.bf16.mxu0 0
        %2654 = vmatmul.mubr.bf16.gmra.mrb[0].mxu0 %v2557
        %v2655 = vpop.f32.mrb[0].mxu0
        %v2656 = vadd.f32 0.0, %v2655
        %v2657 = vpop.f32.mrb[0].mxu0
        %v2658 = vpop.f32.mrb[0].mxu0
        %v2659 = vadd.f32 0.0, %v2658
        %v2660 = vpop.f32.mrb[0].mxu0
        %2661 = vmatprep.mubr.bf16.mxu0 0
        %2662 = vmatmul.mubr.bf16.gmra.mrb[0].mxu0 %v2558
        %v2663 = vpop.f32.mrb[0].mxu0
        %v2664 = vadd.f32 0.0, %v2663
        %v2665 = vpop.f32.mrb[0].mxu0
        %v2666 = vpop.f32.mrb[0].mxu0
        %v2667 = vadd.f32 0.0, %v2666
        %v2668 = vpop.f32.mrb[0].mxu0
        %2669 = vmatprep.mubr.bf16.mxu0 0
        %2670 = vmatmul.mubr.bf16.gmra.mrb[0].mxu0 %v2559
        %v2671 = vpop.f32.mrb[0].mxu0
        %v2672 = vadd.f32 0.0, %v2671
        %v2673 = vpop.f32.mrb[0].mxu0
        %v2674 = vpop.f32.mrb[0].mxu0
        %v2675 = vadd.f32 0.0, %v2674
        %v2676 = vpop.f32.mrb[0].mxu0
        %2677 = vmatprep.mubr.bf16.mxu0 0
        %2678 = vmatmul.mubr.bf16.gmra.mrb[0].mxu0 %v2560
        %v2679 = vpop.f32.mrb[0].mxu0
        %v2680 = vadd.f32 0.0, %v2679
        %v2681 = vpop.f32.mrb[0].mxu0
        %v2682 = vpop.f32.mrb[0].mxu0
        %v2683 = vadd.f32 0.0, %v2682
        %v2684 = vpop.f32.mrb[0].mxu0
        %2685 = vmatprep.mubr.bf16.mxu0 0
        %2686 = vmatmul.mubr.bf16.gmra.mrb[0].mxu0 %v2561
        %v2687 = vpop.f32.mrb[0].mxu0
        %v2688 = vadd.f32 0.0, %v2687
        %v2689 = vpop.f32.mrb[0].mxu0
        %v2690 = vpop.f32.mrb[0].mxu0
        %v2691 = vadd.f32 0.0, %v2690
        %v2692 = vpop.f32.mrb[0].mxu0
        %2693 = vmatprep.mubr.bf16.mxu0 0
        %2694 = vmatmul.mubr.bf16.gmra.mrb[0].mxu0 %v2562
        %v2695 = vpop.f32.mrb[0].mxu0
        %v2696 = vadd.f32 0.0, %v2695
        %v2697 = vpop.f32.mrb[0].mxu0
        %v2698 = vpop.f32.mrb[0].mxu0
        %v2699 = vadd.f32 0.0, %v2698
        %v2700 = vpop.f32.mrb[0].mxu0
        %2701 = vmatprep.mubr.bf16.mxu0 0
        %2702 = vmatmul.mubr.bf16.gmra.mrb[0].mxu0 %v2563
        %v2703 = vpop.f32.mrb[0].mxu0
        %v2704 = vadd.f32 0.0, %v2703
        %v2705 = vpop.f32.mrb[0].mxu0
        %v2706 = vpop.f32.mrb[0].mxu0
        %v2707 = vadd.f32 0.0, %v2706
        %v2708 = vpop.f32.mrb[0].mxu0
        %2709 = vmatprep.mubr.bf16.mxu0 0
        %2710 = vmatmul.mubr.bf16.gmra.mrb[0].mxu0 %v2564
        %v2711 = vpop.f32.mrb[0].mxu0
        %v2712 = vadd.f32 0.0, %v2711
        %v2713 = vpop.f32.mrb[0].mxu0
        %v2714 = vpop.f32.mrb[0].mxu0
        %v2715 = vadd.f32 0.0, %v2714
        %v2716 = vpop.f32.mrb[0].mxu0
        %2717 = vdwg.mxu0
        %v2718 = vadd.f32 %v2292, %v2656
        %v2719 = vadd.f32 %v2293, %v2659
        %v2720 = vadd.f32 %v2294, %v2664
        %v2721 = vadd.f32 %v2295, %v2667
        %v2722 = vadd.f32 %v2296, %v2672
        %v2723 = vadd.f32 %v2297, %v2675
        %v2724 = vadd.f32 %v2298, %v2680
        %v2725 = vadd.f32 %v2299, %v2683
        %v2726 = vadd.f32 %v2300, %v2688
        %v2727 = vadd.f32 %v2301, %v2691
        %v2728 = vadd.f32 %v2302, %v2696
        %v2729 = vadd.f32 %v2303, %v2699
        %v2730 = vadd.f32 %v2304, %v2704
        %v2731 = vadd.f32 %v2305, %v2707
        %v2732 = vadd.f32 %v2306, %v2712
        %v2733 = vadd.f32 %v2307, %v2715
        %v2734 = vld [vmem:[#allocation2] sm:$0xe]
        %v2735 = vld [vmem:[#allocation2 + $0xc] sm:$0xe]
        %v2736 = vld [vmem:[#allocation2 + $0x18] sm:$0xe]
        %v2737 = vld [vmem:[#allocation2 + $0x24] sm:$0xe]
        %v2738 = vld [vmem:[#allocation2 + $0x30] sm:$0xe]
        %v2739 = vld [vmem:[#allocation2 + $0x3c] sm:$0xe]
        %v2740 = vld [vmem:[#allocation2 + $0x48] sm:$0xe]
        %v2741 = vld [vmem:[#allocation2 + $0x54] sm:$0xe]
        %vm2766 = vcmask 1042432
        %vm2767 = vcmask 1046532
        %vm2768 = vmor %vm2766, %vm2767
        %v2769 = vrot.slane %v2734, 5
        %v2770 = vrot.slane %v2769, 4
        %v2771 = vrot.slane %v2309, 5
        %v2772 = vsel %vm2768, %v2770, %v2771
        %v2773 = vrot.slane %v2771, 4
        %v2774 = vrot.slane %v2310, 5
        %v2775 = vsel %vm2768, %v2773, %v2774
        %v2776 = vrot.slane %v2735, 5
        %v2777 = vrot.slane %v2776, 4
        %v2778 = vrot.slane %v2312, 5
        %v2779 = vsel %vm2768, %v2777, %v2778
        %v2780 = vrot.slane %v2778, 4
        %v2781 = vrot.slane %v2313, 5
        %v2782 = vsel %vm2768, %v2780, %v2781
        %v2783 = vrot.slane %v2736, 5
        %v2784 = vrot.slane %v2783, 4
        %v2785 = vrot.slane %v2315, 5
        %v2786 = vsel %vm2768, %v2784, %v2785
        %v2787 = vrot.slane %v2785, 4
        %v2788 = vrot.slane %v2316, 5
        %v2789 = vsel %vm2768, %v2787, %v2788
        %v2790 = vrot.slane %v2737, 5
        %v2791 = vrot.slane %v2790, 4
        %v2792 = vrot.slane %v2318, 5
        %v2793 = vsel %vm2768, %v2791, %v2792
        %v2794 = vrot.slane %v2792, 4
        %v2795 = vrot.slane %v2319, 5
        %v2796 = vsel %vm2768, %v2794, %v2795
        %v2797 = vrot.slane %v2738, 5
        %v2798 = vrot.slane %v2797, 4
        %v2799 = vrot.slane %v2321, 5
        %v2800 = vsel %vm2768, %v2798, %v2799
        %v2801 = vrot.slane %v2799, 4
        %v2802 = vrot.slane %v2322, 5
        %v2803 = vsel %vm2768, %v2801, %v2802
        %v2804 = vrot.slane %v2739, 5
        %v2805 = vrot.slane %v2804, 4
        %v2806 = vrot.slane %v2324, 5
        %v2807 = vsel %vm2768, %v2805, %v2806
        %v2808 = vrot.slane %v2806, 4
        %v2809 = vrot.slane %v2325, 5
        %v2810 = vsel %vm2768, %v2808, %v2809
        %v2811 = vrot.slane %v2740, 5
        %v2812 = vrot.slane %v2811, 4
        %v2813 = vrot.slane %v2327, 5
        %v2814 = vsel %vm2768, %v2812, %v2813
        %v2815 = vrot.slane %v2813, 4
        %v2816 = vrot.slane %v2328, 5
        %v2817 = vsel %vm2768, %v2815, %v2816
        %v2818 = vrot.slane %v2741, 5
        %v2819 = vrot.slane %v2818, 4
        %v2820 = vrot.slane %v2330, 5
        %v2821 = vsel %vm2768, %v2819, %v2820
        %v2822 = vrot.slane %v2820, 4
        %v2823 = vrot.slane %v2331, 5
        %v2824 = vsel %vm2768, %v2822, %v2823
        %s2825 = scalar_lea.vmem [#allocation8], 128
        %v2826 = vld [vmem:[%s2825] sm:$0xf]
        %v2827 = vld [vmem:[%s2825 + $0x4] sm:$0xf]
        %v2828 = vld [vmem:[%s2825 + $0x8] sm:$0xf]
        %v2829 = vld [vmem:[%s2825 + $0xc] sm:$0xf]
        %v2830 = vld [vmem:[%s2825 + $0x10] sm:$0xf]
        %v2831 = vld [vmem:[%s2825 + $0x14] sm:$0xf]
        %v2832 = vld [vmem:[%s2825 + $0x18] sm:$0xf]
        %v2833 = vld [vmem:[%s2825 + $0x1c] sm:$0xf]
        %v2834 = vld [vmem:[%s2825 + $0x20] sm:$0xf]
        %v2835 = vld [vmem:[%s2825 + $0x24] sm:$0xf]
        %v2836 = vld [vmem:[%s2825 + $0x28] sm:$0xf]
        %v2837 = vld [vmem:[%s2825 + $0x2c] sm:$0xf]
        %v2838 = vld [vmem:[%s2825 + $0x30] sm:$0xf]
        %v2839 = vld [vmem:[%s2825 + $0x34] sm:$0xf]
        %v2840 = vld [vmem:[%s2825 + $0x38] sm:$0xf]
        %v2841 = vld [vmem:[%s2825 + $0x3c] sm:$0xf]
        %v2842 = vunpack.c.l.b16 %v2772
        %v2843 = vunpack.c.l.b16 %v2775
        %v2844 = vunpack.c.l.b16 %v2779
        %v2845 = vunpack.c.l.b16 %v2782
        %v2846 = vunpack.c.l.b16 %v2786
        %v2847 = vunpack.c.l.b16 %v2789
        %v2848 = vunpack.c.l.b16 %v2793
        %v2849 = vunpack.c.l.b16 %v2796
        %v2850 = vunpack.c.l.b16 %v2800
        %v2851 = vunpack.c.l.b16 %v2803
        %v2852 = vunpack.c.l.b16 %v2807
        %v2853 = vunpack.c.l.b16 %v2810
        %v2854 = vunpack.c.l.b16 %v2814
        %v2855 = vunpack.c.l.b16 %v2817
        %v2856 = vunpack.c.l.b16 %v2821
        %v2857 = vunpack.c.l.b16 %v2824
        %v2858 = vpack.c.b16 %v2843, %v2842
        %v2859 = vpack.c.b16 %v2845, %v2844
        %v2860 = vpack.c.b16 %v2847, %v2846
        %v2861 = vpack.c.b16 %v2849, %v2848
        %v2862 = vpack.c.b16 %v2851, %v2850
        %v2863 = vpack.c.b16 %v2853, %v2852
        %v2864 = vpack.c.b16 %v2855, %v2854
        %v2865 = vpack.c.b16 %v2857, %v2856
        %v2890 = vunpack.c.l.b16 %v2826
        %v2891 = vunpack.c.l.b16 %v2827
        %v2892 = vunpack.c.l.b16 %v2828
        %v2893 = vunpack.c.l.b16 %v2829
        %v2894 = vunpack.c.l.b16 %v2830
        %v2895 = vunpack.c.l.b16 %v2831
        %v2896 = vunpack.c.l.b16 %v2832
        %v2897 = vunpack.c.l.b16 %v2833
        %v2898 = vunpack.c.l.b16 %v2834
        %v2899 = vunpack.c.l.b16 %v2835
        %v2900 = vunpack.c.l.b16 %v2836
        %v2901 = vunpack.c.l.b16 %v2837
        %v2902 = vunpack.c.l.b16 %v2838
        %v2903 = vunpack.c.l.b16 %v2839
        %v2904 = vunpack.c.l.b16 %v2840
        %v2905 = vunpack.c.l.b16 %v2841
        %v2906 = vpack.c.b16 %v2891, %v2890
        %v2907 = vpack.c.b16 %v2893, %v2892
        %v2908 = vpack.c.b16 %v2895, %v2894
        %v2909 = vpack.c.b16 %v2897, %v2896
        %v2910 = vpack.c.b16 %v2899, %v2898
        %v2911 = vpack.c.b16 %v2901, %v2900
        %v2912 = vpack.c.b16 %v2903, %v2902
        %v2913 = vpack.c.b16 %v2905, %v2904
        %2922 = vmatprep.subr.bf16.mxu0 0
        %2923 = vmatpush1.bf16.msra.mxu0 %v2906
        %2924 = vmatprep.subr.bf16.mxu0 0
        %2925 = vmatpush1.bf16.msra.mxu0 %v2907
        %2926 = vmatprep.subr.bf16.mxu0 0
        %2927 = vmatpush1.bf16.msra.mxu0 %v2908
        %2928 = vmatprep.subr.bf16.mxu0 0
        %2929 = vmatpush1.bf16.msra.mxu0 %v2909
        %2930 = vmatprep.subr.bf16.mxu0 0
        %2931 = vmatpush1.bf16.msra.mxu0 %v2910
        %2932 = vmatprep.subr.bf16.mxu0 0
        %2933 = vmatpush1.bf16.msra.mxu0 %v2911
        %2934 = vmatprep.subr.bf16.mxu0 0
        %2935 = vmatpush1.bf16.msra.mxu0 %v2912
        %2936 = vmatprep.subr.bf16.mxu0 0
        %2937 = vmatpush1.bf16.msra.mxu0 %v2913
        %2938 = vmatprep.subr.bf16.mxu0 0
        %2939 = vmatpush1.bf16.msra.mxu0 0
        %2940 = vmatprep.subr.bf16.mxu0 0
        %2941 = vmatpush1.bf16.msra.mxu0 0
        %2942 = vmatprep.subr.bf16.mxu0 0
        %2943 = vmatpush1.bf16.msra.mxu0 0
        %2944 = vmatprep.subr.bf16.mxu0 0
        %2945 = vmatpush1.bf16.msra.mxu0 0
        %2946 = vmatprep.subr.bf16.mxu0 0
        %2947 = vmatpush1.bf16.msra.mxu0 0
        %2948 = vmatprep.subr.bf16.mxu0 0
        %2949 = vmatpush1.bf16.msra.mxu0 0
        %2950 = vmatprep.subr.bf16.mxu0 0
        %2951 = vmatpush1.bf16.msra.mxu0 0
        %2952 = vmatprep.subr.bf16.mxu0 0
        %2953 = vmatpush1.bf16.msra.mxu0 0
        %2954 = vmatprep.mubr.bf16.mxu0 0
        %2955 = vmatmul.mubr.bf16.gmra.mrb[0].mxu0 %v2858
        %v2956 = vpop.f32.mrb[0].mxu0
        %v2957 = vadd.f32 0.0, %v2956
        %v2958 = vpop.f32.mrb[0].mxu0
        %v2959 = vpop.f32.mrb[0].mxu0
        %v2960 = vadd.f32 0.0, %v2959
        %v2961 = vpop.f32.mrb[0].mxu0
        %2962 = vmatprep.mubr.bf16.mxu0 0
        %2963 = vmatmul.mubr.bf16.gmra.mrb[0].mxu0 %v2859
        %v2964 = vpop.f32.mrb[0].mxu0
        %v2965 = vadd.f32 0.0, %v2964
        %v2966 = vpop.f32.mrb[0].mxu0
        %v2967 = vpop.f32.mrb[0].mxu0
        %v2968 = vadd.f32 0.0, %v2967
        %v2969 = vpop.f32.mrb[0].mxu0
        %2970 = vmatprep.mubr.bf16.mxu0 0
        %2971 = vmatmul.mubr.bf16.gmra.mrb[0].mxu0 %v2860
        %v2972 = vpop.f32.mrb[0].mxu0
        %v2973 = vadd.f32 0.0, %v2972
        %v2974 = vpop.f32.mrb[0].mxu0
        %v2975 = vpop.f32.mrb[0].mxu0
        %v2976 = vadd.f32 0.0, %v2975
        %v2977 = vpop.f32.mrb[0].mxu0
        %2978 = vmatprep.mubr.bf16.mxu0 0
        %2979 = vmatmul.mubr.bf16.gmra.mrb[0].mxu0 %v2861
        %v2980 = vpop.f32.mrb[0].mxu0
        %v2981 = vadd.f32 0.0, %v2980
        %v2982 = vpop.f32.mrb[0].mxu0
        %v2983 = vpop.f32.mrb[0].mxu0
        %v2984 = vadd.f32 0.0, %v2983
        %v2985 = vpop.f32.mrb[0].mxu0
        %2986 = vmatprep.mubr.bf16.mxu0 0
        %2987 = vmatmul.mubr.bf16.gmra.mrb[0].mxu0 %v2862
        %v2988 = vpop.f32.mrb[0].mxu0
        %v2989 = vadd.f32 0.0, %v2988
        %v2990 = vpop.f32.mrb[0].mxu0
        %v2991 = vpop.f32.mrb[0].mxu0
        %v2992 = vadd.f32 0.0, %v2991
        %v2993 = vpop.f32.mrb[0].mxu0
        %2994 = vmatprep.mubr.bf16.mxu0 0
        %2995 = vmatmul.mubr.bf16.gmra.mrb[0].mxu0 %v2863
        %v2996 = vpop.f32.mrb[0].mxu0
        %v2997 = vadd.f32 0.0, %v2996
        %v2998 = vpop.f32.mrb[0].mxu0
        %v2999 = vpop.f32.mrb[0].mxu0
        %v3000 = vadd.f32 0.0, %v2999
        %v3001 = vpop.f32.mrb[0].mxu0
        %3002 = vmatprep.mubr.bf16.mxu0 0
        %3003 = vmatmul.mubr.bf16.gmra.mrb[0].mxu0 %v2864
        %v3004 = vpop.f32.mrb[0].mxu0
        %v3005 = vadd.f32 0.0, %v3004
        %v3006 = vpop.f32.mrb[0].mxu0
        %v3007 = vpop.f32.mrb[0].mxu0
        %v3008 = vadd.f32 0.0, %v3007
        %v3009 = vpop.f32.mrb[0].mxu0
        %3010 = vmatprep.mubr.bf16.mxu0 0
        %3011 = vmatmul.mubr.bf16.gmra.mrb[0].mxu0 %v2865
        %v3012 = vpop.f32.mrb[0].mxu0
        %v3013 = vadd.f32 0.0, %v3012
        %v3014 = vpop.f32.mrb[0].mxu0
        %v3015 = vpop.f32.mrb[0].mxu0
        %v3016 = vadd.f32 0.0, %v3015
        %v3017 = vpop.f32.mrb[0].mxu0
        %3018 = vdwg.mxu0
        %v3019 = vadd.f32 %v2718, %v2957
        %v3020 = vadd.f32 %v2719, %v2960
        %v3021 = vadd.f32 %v2720, %v2965
        %v3022 = vadd.f32 %v2721, %v2968
        %v3023 = vadd.f32 %v2722, %v2973
        %v3024 = vadd.f32 %v2723, %v2976
        %v3025 = vadd.f32 %v2724, %v2981
        %v3026 = vadd.f32 %v2725, %v2984
        %v3027 = vadd.f32 %v2726, %v2989
        %v3028 = vadd.f32 %v2727, %v2992
        %v3029 = vadd.f32 %v2728, %v2997
        %v3030 = vadd.f32 %v2729, %v3000
        %v3031 = vadd.f32 %v2730, %v3005
        %v3032 = vadd.f32 %v2731, %v3008
        %v3033 = vadd.f32 %v2732, %v3013
        %v3034 = vadd.f32 %v2733, %v3016
        %s3035 = scalar_lea.vmem [#allocation2], 12
        %v3036 = vld [vmem:[%s3035] sm:$0xf]
        %v3037 = vld [vmem:[%s3035 + $0x4] sm:$0xf]
        %v3038 = vld [vmem:[%s3035 + $0xc] sm:$0xf]
        %v3039 = vld [vmem:[%s3035 + $0x10] sm:$0xf]
        %v3040 = vld [vmem:[%s3035 + $0x18] sm:$0xf]
        %v3041 = vld [vmem:[%s3035 + $0x1c] sm:$0xf]
        %v3042 = vld [vmem:[%s3035 + $0x24] sm:$0xf]
        %v3043 = vld [vmem:[%s3035 + $0x28] sm:$0xf]
        %v3044 = vld [vmem:[%s3035 + $0x30] sm:$0xf]
        %v3045 = vld [vmem:[%s3035 + $0x34] sm:$0xf]
        %v3046 = vld [vmem:[%s3035 + $0x3c] sm:$0xf]
        %v3047 = vld [vmem:[%s3035 + $0x40] sm:$0xf]
        %v3048 = vld [vmem:[%s3035 + $0x48] sm:$0xf]
        %v3049 = vld [vmem:[%s3035 + $0x4c] sm:$0xf]
        %v3050 = vld [vmem:[%s3035 + $0x54] sm:$0xf]
        %v3051 = vld [vmem:[%s3035 + $0x58] sm:$0xf]
        %s3052 = scalar_lea.vmem [#allocation8], 192
        %v3053 = vld [vmem:[%s3052] sm:$0xf]
        %v3054 = vld [vmem:[%s3052 + $0x4] sm:$0xf]
        %v3055 = vld [vmem:[%s3052 + $0x8] sm:$0xf]
        %v3056 = vld [vmem:[%s3052 + $0xc] sm:$0xf]
        %v3057 = vld [vmem:[%s3052 + $0x10] sm:$0xf]
        %v3058 = vld [vmem:[%s3052 + $0x14] sm:$0xf]
        %v3059 = vld [vmem:[%s3052 + $0x18] sm:$0xf]
        %v3060 = vld [vmem:[%s3052 + $0x1c] sm:$0xf]
        %v3061 = vld [vmem:[%s3052 + $0x20] sm:$0xf]
        %v3062 = vld [vmem:[%s3052 + $0x24] sm:$0xf]
        %v3063 = vld [vmem:[%s3052 + $0x28] sm:$0xf]
        %v3064 = vld [vmem:[%s3052 + $0x2c] sm:$0xf]
        %v3065 = vld [vmem:[%s3052 + $0x30] sm:$0xf]
        %v3066 = vld [vmem:[%s3052 + $0x34] sm:$0xf]
        %v3067 = vld [vmem:[%s3052 + $0x38] sm:$0xf]
        %v3068 = vld [vmem:[%s3052 + $0x3c] sm:$0xf]
        %v3085 = vunpack.c.l.b16 %v3036
        %v3086 = vunpack.c.l.b16 %v3037
        %v3087 = vunpack.c.l.b16 %v3038
        %v3088 = vunpack.c.l.b16 %v3039
        %v3089 = vunpack.c.l.b16 %v3040
        %v3090 = vunpack.c.l.b16 %v3041
        %v3091 = vunpack.c.l.b16 %v3042
        %v3092 = vunpack.c.l.b16 %v3043
        %v3093 = vunpack.c.l.b16 %v3044
        %v3094 = vunpack.c.l.b16 %v3045
        %v3095 = vunpack.c.l.b16 %v3046
        %v3096 = vunpack.c.l.b16 %v3047
        %v3097 = vunpack.c.l.b16 %v3048
        %v3098 = vunpack.c.l.b16 %v3049
        %v3099 = vunpack.c.l.b16 %v3050
        %v3100 = vunpack.c.l.b16 %v3051
        %v3101 = vpack.c.b16 %v3086, %v3085
        %v3102 = vpack.c.b16 %v3088, %v3087
        %v3103 = vpack.c.b16 %v3090, %v3089
        %v3104 = vpack.c.b16 %v3092, %v3091
        %v3105 = vpack.c.b16 %v3094, %v3093
        %v3106 = vpack.c.b16 %v3096, %v3095
        %v3107 = vpack.c.b16 %v3098, %v3097
        %v3108 = vpack.c.b16 %v3100, %v3099
        %v3133 = vunpack.c.l.b16 %v3053
        %v3134 = vunpack.c.l.b16 %v3054
        %v3135 = vunpack.c.l.b16 %v3055
        %v3136 = vunpack.c.l.b16 %v3056
        %v3137 = vunpack.c.l.b16 %v3057
        %v3138 = vunpack.c.l.b16 %v3058
        %v3139 = vunpack.c.l.b16 %v3059
        %v3140 = vunpack.c.l.b16 %v3060
        %v3141 = vunpack.c.l.b16 %v3061
        %v3142 = vunpack.c.l.b16 %v3062
        %v3143 = vunpack.c.l.b16 %v3063
        %v3144 = vunpack.c.l.b16 %v3064
        %v3145 = vunpack.c.l.b16 %v3065
        %v3146 = vunpack.c.l.b16 %v3066
        %v3147 = vunpack.c.l.b16 %v3067
        %v3148 = vunpack.c.l.b16 %v3068
        %v3149 = vpack.c.b16 %v3134, %v3133
        %v3150 = vpack.c.b16 %v3136, %v3135
        %v3151 = vpack.c.b16 %v3138, %v3137
        %v3152 = vpack.c.b16 %v3140, %v3139
        %v3153 = vpack.c.b16 %v3142, %v3141
        %v3154 = vpack.c.b16 %v3144, %v3143
        %v3155 = vpack.c.b16 %v3146, %v3145
        %v3156 = vpack.c.b16 %v3148, %v3147
        %3165 = vmatprep.subr.bf16.mxu0 0
        %3166 = vmatpush1.bf16.msra.mxu0 %v3149
        %3167 = vmatprep.subr.bf16.mxu0 0
        %3168 = vmatpush1.bf16.msra.mxu0 %v3150
        %3169 = vmatprep.subr.bf16.mxu0 0
        %3170 = vmatpush1.bf16.msra.mxu0 %v3151
        %3171 = vmatprep.subr.bf16.mxu0 0
        %3172 = vmatpush1.bf16.msra.mxu0 %v3152
        %3173 = vmatprep.subr.bf16.mxu0 0
        %3174 = vmatpush1.bf16.msra.mxu0 %v3153
        %3175 = vmatprep.subr.bf16.mxu0 0
        %3176 = vmatpush1.bf16.msra.mxu0 %v3154
        %3177 = vmatprep.subr.bf16.mxu0 0
        %3178 = vmatpush1.bf16.msra.mxu0 %v3155
        %3179 = vmatprep.subr.bf16.mxu0 0
        %3180 = vmatpush1.bf16.msra.mxu0 %v3156
        %3181 = vmatprep.subr.bf16.mxu0 0
        %3182 = vmatpush1.bf16.msra.mxu0 0
        %3183 = vmatprep.subr.bf16.mxu0 0
        %3184 = vmatpush1.bf16.msra.mxu0 0
        %3185 = vmatprep.subr.bf16.mxu0 0
        %3186 = vmatpush1.bf16.msra.mxu0 0
        %3187 = vmatprep.subr.bf16.mxu0 0
        %3188 = vmatpush1.bf16.msra.mxu0 0
        %3189 = vmatprep.subr.bf16.mxu0 0
        %3190 = vmatpush1.bf16.msra.mxu0 0
        %3191 = vmatprep.subr.bf16.mxu0 0
        %3192 = vmatpush1.bf16.msra.mxu0 0
        %3193 = vmatprep.subr.bf16.mxu0 0
        %3194 = vmatpush1.bf16.msra.mxu0 0
        %3195 = vmatprep.subr.bf16.mxu0 0
        %3196 = vmatpush1.bf16.msra.mxu0 0
        %3197 = vmatprep.mubr.bf16.mxu0 0
        %3198 = vmatmul.mubr.bf16.gmra.mrb[0].mxu0 %v3101
        %v3199 = vpop.f32.mrb[0].mxu0
        %v3200 = vadd.f32 0.0, %v3199
        %v3201 = vpop.f32.mrb[0].mxu0
        %v3202 = vpop.f32.mrb[0].mxu0
        %v3203 = vadd.f32 0.0, %v3202
        %v3204 = vpop.f32.mrb[0].mxu0
        %3205 = vmatprep.mubr.bf16.mxu0 0
        %3206 = vmatmul.mubr.bf16.gmra.mrb[0].mxu0 %v3102
        %v3207 = vpop.f32.mrb[0].mxu0
        %v3208 = vadd.f32 0.0, %v3207
        %v3209 = vpop.f32.mrb[0].mxu0
        %v3210 = vpop.f32.mrb[0].mxu0
        %v3211 = vadd.f32 0.0, %v3210
        %v3212 = vpop.f32.mrb[0].mxu0
        %3213 = vmatprep.mubr.bf16.mxu0 0
        %3214 = vmatmul.mubr.bf16.gmra.mrb[0].mxu0 %v3103
        %v3215 = vpop.f32.mrb[0].mxu0
        %v3216 = vadd.f32 0.0, %v3215
        %v3217 = vpop.f32.mrb[0].mxu0
        %v3218 = vpop.f32.mrb[0].mxu0
        %v3219 = vadd.f32 0.0, %v3218
        %v3220 = vpop.f32.mrb[0].mxu0
        %3221 = vmatprep.mubr.bf16.mxu0 0
        %3222 = vmatmul.mubr.bf16.gmra.mrb[0].mxu0 %v3104
        %v3223 = vpop.f32.mrb[0].mxu0
        %v3224 = vadd.f32 0.0, %v3223
        %v3225 = vpop.f32.mrb[0].mxu0
        %v3226 = vpop.f32.mrb[0].mxu0
        %v3227 = vadd.f32 0.0, %v3226
        %v3228 = vpop.f32.mrb[0].mxu0
        %3229 = vmatprep.mubr.bf16.mxu0 0
        %3230 = vmatmul.mubr.bf16.gmra.mrb[0].mxu0 %v3105
        %v3231 = vpop.f32.mrb[0].mxu0
        %v3232 = vadd.f32 0.0, %v3231
        %v3233 = vpop.f32.mrb[0].mxu0
        %v3234 = vpop.f32.mrb[0].mxu0
        %v3235 = vadd.f32 0.0, %v3234
        %v3236 = vpop.f32.mrb[0].mxu0
        %3237 = vmatprep.mubr.bf16.mxu0 0
        %3238 = vmatmul.mubr.bf16.gmra.mrb[0].mxu0 %v3106
        %v3239 = vpop.f32.mrb[0].mxu0
        %v3240 = vadd.f32 0.0, %v3239
        %v3241 = vpop.f32.mrb[0].mxu0
        %v3242 = vpop.f32.mrb[0].mxu0
        %v3243 = vadd.f32 0.0, %v3242
        %v3244 = vpop.f32.mrb[0].mxu0
        %3245 = vmatprep.mubr.bf16.mxu0 0
        %3246 = vmatmul.mubr.bf16.gmra.mrb[0].mxu0 %v3107
        %v3247 = vpop.f32.mrb[0].mxu0
        %v3248 = vadd.f32 0.0, %v3247
        %v3249 = vpop.f32.mrb[0].mxu0
        %v3250 = vpop.f32.mrb[0].mxu0
        %v3251 = vadd.f32 0.0, %v3250
        %v3252 = vpop.f32.mrb[0].mxu0
        %3253 = vmatprep.mubr.bf16.mxu0 0
        %3254 = vmatmul.mubr.bf16.gmra.mrb[0].mxu0 %v3108
        %v3255 = vpop.f32.mrb[0].mxu0
        %v3256 = vadd.f32 0.0, %v3255
        %v3257 = vpop.f32.mrb[0].mxu0
        %v3258 = vpop.f32.mrb[0].mxu0
        %v3259 = vadd.f32 0.0, %v3258
        %v3260 = vpop.f32.mrb[0].mxu0
        %3261 = vdwg.mxu0
        %v3262 = vadd.f32 %v3019, %v3200
        %v3263 = vadd.f32 %v3020, %v3203
        %v3264 = vadd.f32 %v3021, %v3208
        %v3265 = vadd.f32 %v3022, %v3211
        %v3266 = vadd.f32 %v3023, %v3216
        %v3267 = vadd.f32 %v3024, %v3219
        %v3268 = vadd.f32 %v3025, %v3224
        %v3269 = vadd.f32 %v3026, %v3227
        %v3270 = vadd.f32 %v3027, %v3232
        %v3271 = vadd.f32 %v3028, %v3235
        %v3272 = vadd.f32 %v3029, %v3240
        %v3273 = vadd.f32 %v3030, %v3243
        %v3274 = vadd.f32 %v3031, %v3248
        %v3275 = vadd.f32 %v3032, %v3251
        %v3276 = vadd.f32 %v3033, %v3256
        %v3277 = vadd.f32 %v3034, %v3259
        %v3278 = vld [vmem:[%s3035] sm:$0xf]
        %v3279 = vld [vmem:[%s3035 + $0x4] sm:$0xf]
        %v3280 = vld [vmem:[%s3035 + $0x8] sm:$0x1]
        %v3281 = vld [vmem:[%s3035 + $0xc] sm:$0xf]
        %v3282 = vld [vmem:[%s3035 + $0x10] sm:$0xf]
        %v3283 = vld [vmem:[%s3035 + $0x14] sm:$0x1]
        %v3284 = vld [vmem:[%s3035 + $0x18] sm:$0xf]
        %v3285 = vld [vmem:[%s3035 + $0x1c] sm:$0xf]
        %v3286 = vld [vmem:[%s3035 + $0x20] sm:$0x1]
        %v3287 = vld [vmem:[%s3035 + $0x24] sm:$0xf]
        %v3288 = vld [vmem:[%s3035 + $0x28] sm:$0xf]
        %v3289 = vld [vmem:[%s3035 + $0x2c] sm:$0x1]
        %v3290 = vld [vmem:[%s3035 + $0x30] sm:$0xf]
        %v3291 = vld [vmem:[%s3035 + $0x34] sm:$0xf]
        %v3292 = vld [vmem:[%s3035 + $0x38] sm:$0x1]
        %v3293 = vld [vmem:[%s3035 + $0x3c] sm:$0xf]
        %v3294 = vld [vmem:[%s3035 + $0x40] sm:$0xf]
        %v3295 = vld [vmem:[%s3035 + $0x44] sm:$0x1]
        %v3296 = vld [vmem:[%s3035 + $0x48] sm:$0xf]
        %v3297 = vld [vmem:[%s3035 + $0x4c] sm:$0xf]
        %v3298 = vld [vmem:[%s3035 + $0x50] sm:$0x1]
        %v3299 = vld [vmem:[%s3035 + $0x54] sm:$0xf]
        %v3300 = vld [vmem:[%s3035 + $0x58] sm:$0xf]
        %v3301 = vld [vmem:[%s3035 + $0x5c] sm:$0x1]
        %v3303 = vshrl.u32 %v3278, 16
        %v3305 = vrot.slane %v3303, 4
        %v3306 = vshll.u32 %v3278, 16
        %v3308 = vrot.slane %v3306, 5
        %v3309 = vor.u32 %v3305, %v3308
        %v3310 = vrot.slane %v3309, 4
        %v3312 = vshll.u32 %v3279, 16
        %v3314 = vrot.slane %v3312, 5
        %v3315 = vsel %vm1691, %v3310, %v3314
        %v3316 = vshrl.u32 %v3279, 16
        %v3318 = vrot.slane %v3316, 4
        %v3319 = vor.u32 %v3318, %v3314
        %v3320 = vrot.slane %v3319, 4
        %v3322 = vshll.u32 %v3280, 16
        %v3324 = vrot.slane %v3322, 5
        %v3325 = vsel %vm1691, %v3320, %v3324
        %v3327 = vshrl.u32 %v3281, 16
        %v3329 = vrot.slane %v3327, 4
        %v3330 = vshll.u32 %v3281, 16
        %v3332 = vrot.slane %v3330, 5
        %v3333 = vor.u32 %v3329, %v3332
        %v3334 = vrot.slane %v3333, 4
        %v3336 = vshll.u32 %v3282, 16
        %v3338 = vrot.slane %v3336, 5
        %v3339 = vsel %vm1691, %v3334, %v3338
        %v3340 = vshrl.u32 %v3282, 16
        %v3342 = vrot.slane %v3340, 4
        %v3343 = vor.u32 %v3342, %v3338
        %v3344 = vrot.slane %v3343, 4
        %v3346 = vshll.u32 %v3283, 16
        %v3348 = vrot.slane %v3346, 5
        %v3349 = vsel %vm1691, %v3344, %v3348
        %v3351 = vshrl.u32 %v3284, 16
        %v3353 = vrot.slane %v3351, 4
        %v3354 = vshll.u32 %v3284, 16
        %v3356 = vrot.slane %v3354, 5
        %v3357 = vor.u32 %v3353, %v3356
        %v3358 = vrot.slane %v3357, 4
        %v3360 = vshll.u32 %v3285, 16
        %v3362 = vrot.slane %v3360, 5
        %v3363 = vsel %vm1691, %v3358, %v3362
        %v3364 = vshrl.u32 %v3285, 16
        %v3366 = vrot.slane %v3364, 4
        %v3367 = vor.u32 %v3366, %v3362
        %v3368 = vrot.slane %v3367, 4
        %v3370 = vshll.u32 %v3286, 16
        %v3372 = vrot.slane %v3370, 5
        %v3373 = vsel %vm1691, %v3368, %v3372
        %v3375 = vshrl.u32 %v3287, 16
        %v3377 = vrot.slane %v3375, 4
        %v3378 = vshll.u32 %v3287, 16
        %v3380 = vrot.slane %v3378, 5
        %v3381 = vor.u32 %v3377, %v3380
        %v3382 = vrot.slane %v3381, 4
        %v3384 = vshll.u32 %v3288, 16
        %v3386 = vrot.slane %v3384, 5
        %v3387 = vsel %vm1691, %v3382, %v3386
        %v3388 = vshrl.u32 %v3288, 16
        %v3390 = vrot.slane %v3388, 4
        %v3391 = vor.u32 %v3390, %v3386
        %v3392 = vrot.slane %v3391, 4
        %v3394 = vshll.u32 %v3289, 16
        %v3396 = vrot.slane %v3394, 5
        %v3397 = vsel %vm1691, %v3392, %v3396
        %v3399 = vshrl.u32 %v3290, 16
        %v3401 = vrot.slane %v3399, 4
        %v3402 = vshll.u32 %v3290, 16
        %v3404 = vrot.slane %v3402, 5
        %v3405 = vor.u32 %v3401, %v3404
        %v3406 = vrot.slane %v3405, 4
        %v3408 = vshll.u32 %v3291, 16
        %v3410 = vrot.slane %v3408, 5
        %v3411 = vsel %vm1691, %v3406, %v3410
        %v3412 = vshrl.u32 %v3291, 16
        %v3414 = vrot.slane %v3412, 4
        %v3415 = vor.u32 %v3414, %v3410
        %v3416 = vrot.slane %v3415, 4
        %v3418 = vshll.u32 %v3292, 16
        %v3420 = vrot.slane %v3418, 5
        %v3421 = vsel %vm1691, %v3416, %v3420
        %v3423 = vshrl.u32 %v3293, 16
        %v3425 = vrot.slane %v3423, 4
        %v3426 = vshll.u32 %v3293, 16
        %v3428 = vrot.slane %v3426, 5
        %v3429 = vor.u32 %v3425, %v3428
        %v3430 = vrot.slane %v3429, 4
        %v3432 = vshll.u32 %v3294, 16
        %v3434 = vrot.slane %v3432, 5
        %v3435 = vsel %vm1691, %v3430, %v3434
        %v3436 = vshrl.u32 %v3294, 16
        %v3438 = vrot.slane %v3436, 4
        %v3439 = vor.u32 %v3438, %v3434
        %v3440 = vrot.slane %v3439, 4
        %v3442 = vshll.u32 %v3295, 16
        %v3444 = vrot.slane %v3442, 5
        %v3445 = vsel %vm1691, %v3440, %v3444
        %v3447 = vshrl.u32 %v3296, 16
        %v3449 = vrot.slane %v3447, 4
        %v3450 = vshll.u32 %v3296, 16
        %v3452 = vrot.slane %v3450, 5
        %v3453 = vor.u32 %v3449, %v3452
        %v3454 = vrot.slane %v3453, 4
        %v3456 = vshll.u32 %v3297, 16
        %v3458 = vrot.slane %v3456, 5
        %v3459 = vsel %vm1691, %v3454, %v3458
        %v3460 = vshrl.u32 %v3297, 16
        %v3462 = vrot.slane %v3460, 4
        %v3463 = vor.u32 %v3462, %v3458
        %v3464 = vrot.slane %v3463, 4
        %v3466 = vshll.u32 %v3298, 16
        %v3468 = vrot.slane %v3466, 5
        %v3469 = vsel %vm1691, %v3464, %v3468
        %v3471 = vshrl.u32 %v3299, 16
        %v3473 = vrot.slane %v3471, 4
        %v3474 = vshll.u32 %v3299, 16
        %v3476 = vrot.slane %v3474, 5
        %v3477 = vor.u32 %v3473, %v3476
        %v3478 = vrot.slane %v3477, 4
        %v3480 = vshll.u32 %v3300, 16
        %v3482 = vrot.slane %v3480, 5
        %v3483 = vsel %vm1691, %v3478, %v3482
        %v3484 = vshrl.u32 %v3300, 16
        %v3486 = vrot.slane %v3484, 4
        %v3487 = vor.u32 %v3486, %v3482
        %v3488 = vrot.slane %v3487, 4
        %v3490 = vshll.u32 %v3301, 16
        %v3492 = vrot.slane %v3490, 5
        %v3493 = vsel %vm1691, %v3488, %v3492
        %s3494 = scalar_lea.vmem [#allocation8], 256
        %v3495 = vld [vmem:[%s3494] sm:$0xf]
        %v3496 = vld [vmem:[%s3494 + $0x4] sm:$0xf]
        %v3497 = vld [vmem:[%s3494 + $0x8] sm:$0xf]
        %v3498 = vld [vmem:[%s3494 + $0xc] sm:$0xf]
        %v3499 = vld [vmem:[%s3494 + $0x10] sm:$0xf]
        %v3500 = vld [vmem:[%s3494 + $0x14] sm:$0xf]
        %v3501 = vld [vmem:[%s3494 + $0x18] sm:$0xf]
        %v3502 = vld [vmem:[%s3494 + $0x1c] sm:$0xf]
        %v3503 = vld [vmem:[%s3494 + $0x20] sm:$0xf]
        %v3504 = vld [vmem:[%s3494 + $0x24] sm:$0xf]
        %v3505 = vld [vmem:[%s3494 + $0x28] sm:$0xf]
        %v3506 = vld [vmem:[%s3494 + $0x2c] sm:$0xf]
        %v3507 = vld [vmem:[%s3494 + $0x30] sm:$0xf]
        %v3508 = vld [vmem:[%s3494 + $0x34] sm:$0xf]
        %v3509 = vld [vmem:[%s3494 + $0x38] sm:$0xf]
        %v3510 = vld [vmem:[%s3494 + $0x3c] sm:$0xf]
        %v3511 = vunpack.c.l.b16 %v3315
        %v3512 = vunpack.c.l.b16 %v3325
        %v3513 = vunpack.c.l.b16 %v3339
        %v3514 = vunpack.c.l.b16 %v3349
        %v3515 = vunpack.c.l.b16 %v3363
        %v3516 = vunpack.c.l.b16 %v3373
        %v3517 = vunpack.c.l.b16 %v3387
        %v3518 = vunpack.c.l.b16 %v3397
        %v3519 = vunpack.c.l.b16 %v3411
        %v3520 = vunpack.c.l.b16 %v3421
        %v3521 = vunpack.c.l.b16 %v3435
        %v3522 = vunpack.c.l.b16 %v3445
        %v3523 = vunpack.c.l.b16 %v3459
        %v3524 = vunpack.c.l.b16 %v3469
        %v3525 = vunpack.c.l.b16 %v3483
        %v3526 = vunpack.c.l.b16 %v3493
        %v3527 = vpack.c.b16 %v3512, %v3511
        %v3528 = vpack.c.b16 %v3514, %v3513
        %v3529 = vpack.c.b16 %v3516, %v3515
        %v3530 = vpack.c.b16 %v3518, %v3517
        %v3531 = vpack.c.b16 %v3520, %v3519
        %v3532 = vpack.c.b16 %v3522, %v3521
        %v3533 = vpack.c.b16 %v3524, %v3523
        %v3534 = vpack.c.b16 %v3526, %v3525
        %v3559 = vunpack.c.l.b16 %v3495
        %v3560 = vunpack.c.l.b16 %v3496
        %v3561 = vunpack.c.l.b16 %v3497
        %v3562 = vunpack.c.l.b16 %v3498
        %v3563 = vunpack.c.l.b16 %v3499
        %v3564 = vunpack.c.l.b16 %v3500
        %v3565 = vunpack.c.l.b16 %v3501
        %v3566 = vunpack.c.l.b16 %v3502
        %v3567 = vunpack.c.l.b16 %v3503
        %v3568 = vunpack.c.l.b16 %v3504
        %v3569 = vunpack.c.l.b16 %v3505
        %v3570 = vunpack.c.l.b16 %v3506
        %v3571 = vunpack.c.l.b16 %v3507
        %v3572 = vunpack.c.l.b16 %v3508
        %v3573 = vunpack.c.l.b16 %v3509
        %v3574 = vunpack.c.l.b16 %v3510
        %v3575 = vpack.c.b16 %v3560, %v3559
        %v3576 = vpack.c.b16 %v3562, %v3561
        %v3577 = vpack.c.b16 %v3564, %v3563
        %v3578 = vpack.c.b16 %v3566, %v3565
        %v3579 = vpack.c.b16 %v3568, %v3567
        %v3580 = vpack.c.b16 %v3570, %v3569
        %v3581 = vpack.c.b16 %v3572, %v3571
        %v3582 = vpack.c.b16 %v3574, %v3573
        %3591 = vmatprep.subr.bf16.mxu0 0
        %3592 = vmatpush1.bf16.msra.mxu0 %v3575
        %3593 = vmatprep.subr.bf16.mxu0 0
        %3594 = vmatpush1.bf16.msra.mxu0 %v3576
        %3595 = vmatprep.subr.bf16.mxu0 0
        %3596 = vmatpush1.bf16.msra.mxu0 %v3577
        %3597 = vmatprep.subr.bf16.mxu0 0
        %3598 = vmatpush1.bf16.msra.mxu0 %v3578
        %3599 = vmatprep.subr.bf16.mxu0 0
        %3600 = vmatpush1.bf16.msra.mxu0 %v3579
        %3601 = vmatprep.subr.bf16.mxu0 0
        %3602 = vmatpush1.bf16.msra.mxu0 %v3580
        %3603 = vmatprep.subr.bf16.mxu0 0
        %3604 = vmatpush1.bf16.msra.mxu0 %v3581
        %3605 = vmatprep.subr.bf16.mxu0 0
        %3606 = vmatpush1.bf16.msra.mxu0 %v3582
        %3607 = vmatprep.subr.bf16.mxu0 0
        %3608 = vmatpush1.bf16.msra.mxu0 0
        %3609 = vmatprep.subr.bf16.mxu0 0
        %3610 = vmatpush1.bf16.msra.mxu0 0
        %3611 = vmatprep.subr.bf16.mxu0 0
        %3612 = vmatpush1.bf16.msra.mxu0 0
        %3613 = vmatprep.subr.bf16.mxu0 0
        %3614 = vmatpush1.bf16.msra.mxu0 0
        %3615 = vmatprep.subr.bf16.mxu0 0
        %3616 = vmatpush1.bf16.msra.mxu0 0
        %3617 = vmatprep.subr.bf16.mxu0 0
        %3618 = vmatpush1.bf16.msra.mxu0 0
        %3619 = vmatprep.subr.bf16.mxu0 0
        %3620 = vmatpush1.bf16.msra.mxu0 0
        %3621 = vmatprep.subr.bf16.mxu0 0
        %3622 = vmatpush1.bf16.msra.mxu0 0
        %3623 = vmatprep.mubr.bf16.mxu0 0
        %3624 = vmatmul.mubr.bf16.gmra.mrb[0].mxu0 %v3527
        %v3625 = vpop.f32.mrb[0].mxu0
        %v3626 = vadd.f32 0.0, %v3625
        %v3627 = vpop.f32.mrb[0].mxu0
        %v3628 = vpop.f32.mrb[0].mxu0
        %v3629 = vadd.f32 0.0, %v3628
        %v3630 = vpop.f32.mrb[0].mxu0
        %3631 = vmatprep.mubr.bf16.mxu0 0
        %3632 = vmatmul.mubr.bf16.gmra.mrb[0].mxu0 %v3528
        %v3633 = vpop.f32.mrb[0].mxu0
        %v3634 = vadd.f32 0.0, %v3633
        %v3635 = vpop.f32.mrb[0].mxu0
        %v3636 = vpop.f32.mrb[0].mxu0
        %v3637 = vadd.f32 0.0, %v3636
        %v3638 = vpop.f32.mrb[0].mxu0
        %3639 = vmatprep.mubr.bf16.mxu0 0
        %3640 = vmatmul.mubr.bf16.gmra.mrb[0].mxu0 %v3529
        %v3641 = vpop.f32.mrb[0].mxu0
        %v3642 = vadd.f32 0.0, %v3641
        %v3643 = vpop.f32.mrb[0].mxu0
        %v3644 = vpop.f32.mrb[0].mxu0
        %v3645 = vadd.f32 0.0, %v3644
        %v3646 = vpop.f32.mrb[0].mxu0
        %3647 = vmatprep.mubr.bf16.mxu0 0
        %3648 = vmatmul.mubr.bf16.gmra.mrb[0].mxu0 %v3530
        %v3649 = vpop.f32.mrb[0].mxu0
        %v3650 = vadd.f32 0.0, %v3649
        %v3651 = vpop.f32.mrb[0].mxu0
        %v3652 = vpop.f32.mrb[0].mxu0
        %v3653 = vadd.f32 0.0, %v3652
        %v3654 = vpop.f32.mrb[0].mxu0
        %3655 = vmatprep.mubr.bf16.mxu0 0
        %3656 = vmatmul.mubr.bf16.gmra.mrb[0].mxu0 %v3531
        %v3657 = vpop.f32.mrb[0].mxu0
        %v3658 = vadd.f32 0.0, %v3657
        %v3659 = vpop.f32.mrb[0].mxu0
        %v3660 = vpop.f32.mrb[0].mxu0
        %v3661 = vadd.f32 0.0, %v3660
        %v3662 = vpop.f32.mrb[0].mxu0
        %3663 = vmatprep.mubr.bf16.mxu0 0
        %3664 = vmatmul.mubr.bf16.gmra.mrb[0].mxu0 %v3532
        %v3665 = vpop.f32.mrb[0].mxu0
        %v3666 = vadd.f32 0.0, %v3665
        %v3667 = vpop.f32.mrb[0].mxu0
        %v3668 = vpop.f32.mrb[0].mxu0
        %v3669 = vadd.f32 0.0, %v3668
        %v3670 = vpop.f32.mrb[0].mxu0
        %3671 = vmatprep.mubr.bf16.mxu0 0
        %3672 = vmatmul.mubr.bf16.gmra.mrb[0].mxu0 %v3533
        %v3673 = vpop.f32.mrb[0].mxu0
        %v3674 = vadd.f32 0.0, %v3673
        %v3675 = vpop.f32.mrb[0].mxu0
        %v3676 = vpop.f32.mrb[0].mxu0
        %v3677 = vadd.f32 0.0, %v3676
        %v3678 = vpop.f32.mrb[0].mxu0
        %3679 = vmatprep.mubr.bf16.mxu0 0
        %3680 = vmatmul.mubr.bf16.gmra.mrb[0].mxu0 %v3534
        %v3681 = vpop.f32.mrb[0].mxu0
        %v3682 = vadd.f32 0.0, %v3681
        %v3683 = vpop.f32.mrb[0].mxu0
        %v3684 = vpop.f32.mrb[0].mxu0
        %v3685 = vadd.f32 0.0, %v3684
        %v3686 = vpop.f32.mrb[0].mxu0
        %3687 = vdwg.mxu0
        %v3688 = vadd.f32 %v3262, %v3626
        %v3689 = vadd.f32 %v3263, %v3629
        %v3690 = vadd.f32 %v3264, %v3634
        %v3691 = vadd.f32 %v3265, %v3637
        %v3692 = vadd.f32 %v3266, %v3642
        %v3693 = vadd.f32 %v3267, %v3645
        %v3694 = vadd.f32 %v3268, %v3650
        %v3695 = vadd.f32 %v3269, %v3653
        %v3696 = vadd.f32 %v3270, %v3658
        %v3697 = vadd.f32 %v3271, %v3661
        %v3698 = vadd.f32 %v3272, %v3666
        %v3699 = vadd.f32 %v3273, %v3669
        %v3700 = vadd.f32 %v3274, %v3674
        %v3701 = vadd.f32 %v3275, %v3677
        %v3702 = vadd.f32 %v3276, %v3682
        %v3703 = vadd.f32 %v3277, %v3685
        %v3704 = vld [vmem:[%s3035] sm:$0xe]
        %v3705 = vld [vmem:[%s3035 + $0xc] sm:$0xe]
        %v3706 = vld [vmem:[%s3035 + $0x18] sm:$0xe]
        %v3707 = vld [vmem:[%s3035 + $0x24] sm:$0xe]
        %v3708 = vld [vmem:[%s3035 + $0x30] sm:$0xe]
        %v3709 = vld [vmem:[%s3035 + $0x3c] sm:$0xe]
        %v3710 = vld [vmem:[%s3035 + $0x48] sm:$0xe]
        %v3711 = vld [vmem:[%s3035 + $0x54] sm:$0xe]
        %v3736 = vrot.slane %v3704, 5
        %v3737 = vrot.slane %v3736, 4
        %v3738 = vrot.slane %v3279, 5
        %v3739 = vsel %vm2768, %v3737, %v3738
        %v3740 = vrot.slane %v3738, 4
        %v3741 = vrot.slane %v3280, 5
        %v3742 = vsel %vm2768, %v3740, %v3741
        %v3743 = vrot.slane %v3705, 5
        %v3744 = vrot.slane %v3743, 4
        %v3745 = vrot.slane %v3282, 5
        %v3746 = vsel %vm2768, %v3744, %v3745
        %v3747 = vrot.slane %v3745, 4
        %v3748 = vrot.slane %v3283, 5
        %v3749 = vsel %vm2768, %v3747, %v3748
        %v3750 = vrot.slane %v3706, 5
        %v3751 = vrot.slane %v3750, 4
        %v3752 = vrot.slane %v3285, 5
        %v3753 = vsel %vm2768, %v3751, %v3752
        %v3754 = vrot.slane %v3752, 4
        %v3755 = vrot.slane %v3286, 5
        %v3756 = vsel %vm2768, %v3754, %v3755
        %v3757 = vrot.slane %v3707, 5
        %v3758 = vrot.slane %v3757, 4
        %v3759 = vrot.slane %v3288, 5
        %v3760 = vsel %vm2768, %v3758, %v3759
        %v3761 = vrot.slane %v3759, 4
        %v3762 = vrot.slane %v3289, 5
        %v3763 = vsel %vm2768, %v3761, %v3762
        %v3764 = vrot.slane %v3708, 5
        %v3765 = vrot.slane %v3764, 4
        %v3766 = vrot.slane %v3291, 5
        %v3767 = vsel %vm2768, %v3765, %v3766
        %v3768 = vrot.slane %v3766, 4
        %v3769 = vrot.slane %v3292, 5
        %v3770 = vsel %vm2768, %v3768, %v3769
        %v3771 = vrot.slane %v3709, 5
        %v3772 = vrot.slane %v3771, 4
        %v3773 = vrot.slane %v3294, 5
        %v3774 = vsel %vm2768, %v3772, %v3773
        %v3775 = vrot.slane %v3773, 4
        %v3776 = vrot.slane %v3295, 5
        %v3777 = vsel %vm2768, %v3775, %v3776
        %v3778 = vrot.slane %v3710, 5
        %v3779 = vrot.slane %v3778, 4
        %v3780 = vrot.slane %v3297, 5
        %v3781 = vsel %vm2768, %v3779, %v3780
        %v3782 = vrot.slane %v3780, 4
        %v3783 = vrot.slane %v3298, 5
        %v3784 = vsel %vm2768, %v3782, %v3783
        %v3785 = vrot.slane %v3711, 5
        %v3786 = vrot.slane %v3785, 4
        %v3787 = vrot.slane %v3300, 5
        %v3788 = vsel %vm2768, %v3786, %v3787
        %v3789 = vrot.slane %v3787, 4
        %v3790 = vrot.slane %v3301, 5
        %v3791 = vsel %vm2768, %v3789, %v3790
        %s3792 = scalar_lea.vmem [#allocation8], 320
        %v3793 = vld [vmem:[%s3792] sm:$0xf]
        %v3794 = vld [vmem:[%s3792 + $0x4] sm:$0xf]
        %v3795 = vld [vmem:[%s3792 + $0x8] sm:$0xf]
        %v3796 = vld [vmem:[%s3792 + $0xc] sm:$0xf]
        %v3797 = vld [vmem:[%s3792 + $0x10] sm:$0xf]
        %v3798 = vld [vmem:[%s3792 + $0x14] sm:$0xf]
        %v3799 = vld [vmem:[%s3792 + $0x18] sm:$0xf]
        %v3800 = vld [vmem:[%s3792 + $0x1c] sm:$0xf]
        %v3801 = vld [vmem:[%s3792 + $0x20] sm:$0xf]
        %v3802 = vld [vmem:[%s3792 + $0x24] sm:$0xf]
        %v3803 = vld [vmem:[%s3792 + $0x28] sm:$0xf]
        %v3804 = vld [vmem:[%s3792 + $0x2c] sm:$0xf]
        %v3805 = vld [vmem:[%s3792 + $0x30] sm:$0xf]
        %v3806 = vld [vmem:[%s3792 + $0x34] sm:$0xf]
        %v3807 = vld [vmem:[%s3792 + $0x38] sm:$0xf]
        %v3808 = vld [vmem:[%s3792 + $0x3c] sm:$0xf]
        %v3809 = vunpack.c.l.b16 %v3739
        %v3810 = vunpack.c.l.b16 %v3742
        %v3811 = vunpack.c.l.b16 %v3746
        %v3812 = vunpack.c.l.b16 %v3749
        %v3813 = vunpack.c.l.b16 %v3753
        %v3814 = vunpack.c.l.b16 %v3756
        %v3815 = vunpack.c.l.b16 %v3760
        %v3816 = vunpack.c.l.b16 %v3763
        %v3817 = vunpack.c.l.b16 %v3767
        %v3818 = vunpack.c.l.b16 %v3770
        %v3819 = vunpack.c.l.b16 %v3774
        %v3820 = vunpack.c.l.b16 %v3777
        %v3821 = vunpack.c.l.b16 %v3781
        %v3822 = vunpack.c.l.b16 %v3784
        %v3823 = vunpack.c.l.b16 %v3788
        %v3824 = vunpack.c.l.b16 %v3791
        %v3825 = vpack.c.b16 %v3810, %v3809
        %v3826 = vpack.c.b16 %v3812, %v3811
        %v3827 = vpack.c.b16 %v3814, %v3813
        %v3828 = vpack.c.b16 %v3816, %v3815
        %v3829 = vpack.c.b16 %v3818, %v3817
        %v3830 = vpack.c.b16 %v3820, %v3819
        %v3831 = vpack.c.b16 %v3822, %v3821
        %v3832 = vpack.c.b16 %v3824, %v3823
        %v3857 = vunpack.c.l.b16 %v3793
        %v3858 = vunpack.c.l.b16 %v3794
        %v3859 = vunpack.c.l.b16 %v3795
        %v3860 = vunpack.c.l.b16 %v3796
        %v3861 = vunpack.c.l.b16 %v3797
        %v3862 = vunpack.c.l.b16 %v3798
        %v3863 = vunpack.c.l.b16 %v3799
        %v3864 = vunpack.c.l.b16 %v3800
        %v3865 = vunpack.c.l.b16 %v3801
        %v3866 = vunpack.c.l.b16 %v3802
        %v3867 = vunpack.c.l.b16 %v3803
        %v3868 = vunpack.c.l.b16 %v3804
        %v3869 = vunpack.c.l.b16 %v3805
        %v3870 = vunpack.c.l.b16 %v3806
        %v3871 = vunpack.c.l.b16 %v3807
        %v3872 = vunpack.c.l.b16 %v3808
        %v3873 = vpack.c.b16 %v3858, %v3857
        %v3874 = vpack.c.b16 %v3860, %v3859
        %v3875 = vpack.c.b16 %v3862, %v3861
        %v3876 = vpack.c.b16 %v3864, %v3863
        %v3877 = vpack.c.b16 %v3866, %v3865
        %v3878 = vpack.c.b16 %v3868, %v3867
        %v3879 = vpack.c.b16 %v3870, %v3869
        %v3880 = vpack.c.b16 %v3872, %v3871
        %3889 = vmatprep.subr.bf16.mxu0 0
        %3890 = vmatpush1.bf16.msra.mxu0 %v3873
        %3891 = vmatprep.subr.bf16.mxu0 0
        %3892 = vmatpush1.bf16.msra.mxu0 %v3874
        %3893 = vmatprep.subr.bf16.mxu0 0
        %3894 = vmatpush1.bf16.msra.mxu0 %v3875
        %3895 = vmatprep.subr.bf16.mxu0 0
        %3896 = vmatpush1.bf16.msra.mxu0 %v3876
        %3897 = vmatprep.subr.bf16.mxu0 0
        %3898 = vmatpush1.bf16.msra.mxu0 %v3877
        %3899 = vmatprep.subr.bf16.mxu0 0
        %3900 = vmatpush1.bf16.msra.mxu0 %v3878
        %3901 = vmatprep.subr.bf16.mxu0 0
        %3902 = vmatpush1.bf16.msra.mxu0 %v3879
        %3903 = vmatprep.subr.bf16.mxu0 0
        %3904 = vmatpush1.bf16.msra.mxu0 %v3880
        %3905 = vmatprep.subr.bf16.mxu0 0
        %3906 = vmatpush1.bf16.msra.mxu0 0
        %3907 = vmatprep.subr.bf16.mxu0 0
        %3908 = vmatpush1.bf16.msra.mxu0 0
        %3909 = vmatprep.subr.bf16.mxu0 0
        %3910 = vmatpush1.bf16.msra.mxu0 0
        %3911 = vmatprep.subr.bf16.mxu0 0
        %3912 = vmatpush1.bf16.msra.mxu0 0
        %3913 = vmatprep.subr.bf16.mxu0 0
        %3914 = vmatpush1.bf16.msra.mxu0 0
        %3915 = vmatprep.subr.bf16.mxu0 0
        %3916 = vmatpush1.bf16.msra.mxu0 0
        %3917 = vmatprep.subr.bf16.mxu0 0
        %3918 = vmatpush1.bf16.msra.mxu0 0
        %3919 = vmatprep.subr.bf16.mxu0 0
        %3920 = vmatpush1.bf16.msra.mxu0 0
        %3921 = vmatprep.mubr.bf16.mxu0 0
        %3922 = vmatmul.mubr.bf16.gmra.mrb[0].mxu0 %v3825
        %v3923 = vpop.f32.mrb[0].mxu0
        %v3924 = vadd.f32 0.0, %v3923
        %v3925 = vpop.f32.mrb[0].mxu0
        %v3926 = vpop.f32.mrb[0].mxu0
        %v3927 = vadd.f32 0.0, %v3926
        %v3928 = vpop.f32.mrb[0].mxu0
        %3929 = vmatprep.mubr.bf16.mxu0 0
        %3930 = vmatmul.mubr.bf16.gmra.mrb[0].mxu0 %v3826
        %v3931 = vpop.f32.mrb[0].mxu0
        %v3932 = vadd.f32 0.0, %v3931
        %v3933 = vpop.f32.mrb[0].mxu0
        %v3934 = vpop.f32.mrb[0].mxu0
        %v3935 = vadd.f32 0.0, %v3934
        %v3936 = vpop.f32.mrb[0].mxu0
        %3937 = vmatprep.mubr.bf16.mxu0 0
        %3938 = vmatmul.mubr.bf16.gmra.mrb[0].mxu0 %v3827
        %v3939 = vpop.f32.mrb[0].mxu0
        %v3940 = vadd.f32 0.0, %v3939
        %v3941 = vpop.f32.mrb[0].mxu0
        %v3942 = vpop.f32.mrb[0].mxu0
        %v3943 = vadd.f32 0.0, %v3942
        %v3944 = vpop.f32.mrb[0].mxu0
        %3945 = vmatprep.mubr.bf16.mxu0 0
        %3946 = vmatmul.mubr.bf16.gmra.mrb[0].mxu0 %v3828
        %v3947 = vpop.f32.mrb[0].mxu0
        %v3948 = vadd.f32 0.0, %v3947
        %v3949 = vpop.f32.mrb[0].mxu0
        %v3950 = vpop.f32.mrb[0].mxu0
        %v3951 = vadd.f32 0.0, %v3950
        %v3952 = vpop.f32.mrb[0].mxu0
        %3953 = vmatprep.mubr.bf16.mxu0 0
        %3954 = vmatmul.mubr.bf16.gmra.mrb[0].mxu0 %v3829
        %v3955 = vpop.f32.mrb[0].mxu0
        %v3956 = vadd.f32 0.0, %v3955
        %v3957 = vpop.f32.mrb[0].mxu0
        %v3958 = vpop.f32.mrb[0].mxu0
        %v3959 = vadd.f32 0.0, %v3958
        %v3960 = vpop.f32.mrb[0].mxu0
        %3961 = vmatprep.mubr.bf16.mxu0 0
        %3962 = vmatmul.mubr.bf16.gmra.mrb[0].mxu0 %v3830
        %v3963 = vpop.f32.mrb[0].mxu0
        %v3964 = vadd.f32 0.0, %v3963
        %v3965 = vpop.f32.mrb[0].mxu0
        %v3966 = vpop.f32.mrb[0].mxu0
        %v3967 = vadd.f32 0.0, %v3966
        %v3968 = vpop.f32.mrb[0].mxu0
        %3969 = vmatprep.mubr.bf16.mxu0 0
        %3970 = vmatmul.mubr.bf16.gmra.mrb[0].mxu0 %v3831
        %v3971 = vpop.f32.mrb[0].mxu0
        %v3972 = vadd.f32 0.0, %v3971
        %v3973 = vpop.f32.mrb[0].mxu0
        %v3974 = vpop.f32.mrb[0].mxu0
        %v3975 = vadd.f32 0.0, %v3974
        %v3976 = vpop.f32.mrb[0].mxu0
        %3977 = vmatprep.mubr.bf16.mxu0 0
        %3978 = vmatmul.mubr.bf16.gmra.mrb[0].mxu0 %v3832
        %v3979 = vpop.f32.mrb[0].mxu0
        %v3980 = vadd.f32 0.0, %v3979
        %v3981 = vpop.f32.mrb[0].mxu0
        %v3982 = vpop.f32.mrb[0].mxu0
        %v3983 = vadd.f32 0.0, %v3982
        %v3984 = vpop.f32.mrb[0].mxu0
        %3985 = vdwg.mxu0
        %v3986 = vadd.f32 %v3688, %v3924
        %v3987 = vadd.f32 %v3689, %v3927
        %v3988 = vadd.f32 %v3690, %v3932
        %v3989 = vadd.f32 %v3691, %v3935
        %v3990 = vadd.f32 %v3692, %v3940
        %v3991 = vadd.f32 %v3693, %v3943
        %v3992 = vadd.f32 %v3694, %v3948
        %v3993 = vadd.f32 %v3695, %v3951
        %v3994 = vadd.f32 %v3696, %v3956
        %v3995 = vadd.f32 %v3697, %v3959
        %v3996 = vadd.f32 %v3698, %v3964
        %v3997 = vadd.f32 %v3699, %v3967
        %v3998 = vadd.f32 %v3700, %v3972
        %v3999 = vadd.f32 %v3701, %v3975
        %v4000 = vadd.f32 %v3702, %v3980
        %v4001 = vadd.f32 %v3703, %v3983
        %s4002 = scalar_lea.vmem [#allocation2], 24
        %v4003 = vld [vmem:[%s4002] sm:$0xf]
        %v4004 = vld [vmem:[%s4002 + $0x4] sm:$0xf]
        %v4005 = vld [vmem:[%s4002 + $0xc] sm:$0xf]
        %v4006 = vld [vmem:[%s4002 + $0x10] sm:$0xf]
        %v4007 = vld [vmem:[%s4002 + $0x18] sm:$0xf]
        %v4008 = vld [vmem:[%s4002 + $0x1c] sm:$0xf]
        %v4009 = vld [vmem:[%s4002 + $0x24] sm:$0xf]
        %v4010 = vld [vmem:[%s4002 + $0x28] sm:$0xf]
        %v4011 = vld [vmem:[%s4002 + $0x30] sm:$0xf]
        %v4012 = vld [vmem:[%s4002 + $0x34] sm:$0xf]
        %v4013 = vld [vmem:[%s4002 + $0x3c] sm:$0xf]
        %v4014 = vld [vmem:[%s4002 + $0x40] sm:$0xf]
        %v4015 = vld [vmem:[%s4002 + $0x48] sm:$0xf]
        %v4016 = vld [vmem:[%s4002 + $0x4c] sm:$0xf]
        %v4017 = vld [vmem:[%s4002 + $0x54] sm:$0xf]
        %v4018 = vld [vmem:[%s4002 + $0x58] sm:$0xf]
        %s4019 = scalar_lea.vmem [#allocation8], 384
        %v4020 = vld [vmem:[%s4019] sm:$0xf]
        %v4021 = vld [vmem:[%s4019 + $0x4] sm:$0xf]
        %v4022 = vld [vmem:[%s4019 + $0x8] sm:$0xf]
        %v4023 = vld [vmem:[%s4019 + $0xc] sm:$0xf]
        %v4024 = vld [vmem:[%s4019 + $0x10] sm:$0xf]
        %v4025 = vld [vmem:[%s4019 + $0x14] sm:$0xf]
        %v4026 = vld [vmem:[%s4019 + $0x18] sm:$0xf]
        %v4027 = vld [vmem:[%s4019 + $0x1c] sm:$0xf]
        %v4028 = vld [vmem:[%s4019 + $0x20] sm:$0xf]
        %v4029 = vld [vmem:[%s4019 + $0x24] sm:$0xf]
        %v4030 = vld [vmem:[%s4019 + $0x28] sm:$0xf]
        %v4031 = vld [vmem:[%s4019 + $0x2c] sm:$0xf]
        %v4032 = vld [vmem:[%s4019 + $0x30] sm:$0xf]
        %v4033 = vld [vmem:[%s4019 + $0x34] sm:$0xf]
        %v4034 = vld [vmem:[%s4019 + $0x38] sm:$0xf]
        %v4035 = vld [vmem:[%s4019 + $0x3c] sm:$0xf]
        %v4052 = vunpack.c.l.b16 %v4003
        %v4053 = vunpack.c.l.b16 %v4004
        %v4054 = vunpack.c.l.b16 %v4005
        %v4055 = vunpack.c.l.b16 %v4006
        %v4056 = vunpack.c.l.b16 %v4007
        %v4057 = vunpack.c.l.b16 %v4008
        %v4058 = vunpack.c.l.b16 %v4009
        %v4059 = vunpack.c.l.b16 %v4010
        %v4060 = vunpack.c.l.b16 %v4011
        %v4061 = vunpack.c.l.b16 %v4012
        %v4062 = vunpack.c.l.b16 %v4013
        %v4063 = vunpack.c.l.b16 %v4014
        %v4064 = vunpack.c.l.b16 %v4015
        %v4065 = vunpack.c.l.b16 %v4016
        %v4066 = vunpack.c.l.b16 %v4017
        %v4067 = vunpack.c.l.b16 %v4018
        %v4068 = vpack.c.b16 %v4053, %v4052
        %v4069 = vpack.c.b16 %v4055, %v4054
        %v4070 = vpack.c.b16 %v4057, %v4056
        %v4071 = vpack.c.b16 %v4059, %v4058
        %v4072 = vpack.c.b16 %v4061, %v4060
        %v4073 = vpack.c.b16 %v4063, %v4062
        %v4074 = vpack.c.b16 %v4065, %v4064
        %v4075 = vpack.c.b16 %v4067, %v4066
        %v4100 = vunpack.c.l.b16 %v4020
        %v4101 = vunpack.c.l.b16 %v4021
        %v4102 = vunpack.c.l.b16 %v4022
        %v4103 = vunpack.c.l.b16 %v4023
        %v4104 = vunpack.c.l.b16 %v4024
        %v4105 = vunpack.c.l.b16 %v4025
        %v4106 = vunpack.c.l.b16 %v4026
        %v4107 = vunpack.c.l.b16 %v4027
        %v4108 = vunpack.c.l.b16 %v4028
        %v4109 = vunpack.c.l.b16 %v4029
        %v4110 = vunpack.c.l.b16 %v4030
        %v4111 = vunpack.c.l.b16 %v4031
        %v4112 = vunpack.c.l.b16 %v4032
        %v4113 = vunpack.c.l.b16 %v4033
        %v4114 = vunpack.c.l.b16 %v4034
        %v4115 = vunpack.c.l.b16 %v4035
        %v4116 = vpack.c.b16 %v4101, %v4100
        %v4117 = vpack.c.b16 %v4103, %v4102
        %v4118 = vpack.c.b16 %v4105, %v4104
        %v4119 = vpack.c.b16 %v4107, %v4106
        %v4120 = vpack.c.b16 %v4109, %v4108
        %v4121 = vpack.c.b16 %v4111, %v4110
        %v4122 = vpack.c.b16 %v4113, %v4112
        %v4123 = vpack.c.b16 %v4115, %v4114
        %4132 = vmatprep.subr.bf16.mxu0 0
        %4133 = vmatpush1.bf16.msra.mxu0 %v4116
        %4134 = vmatprep.subr.bf16.mxu0 0
        %4135 = vmatpush1.bf16.msra.mxu0 %v4117
        %4136 = vmatprep.subr.bf16.mxu0 0
        %4137 = vmatpush1.bf16.msra.mxu0 %v4118
        %4138 = vmatprep.subr.bf16.mxu0 0
        %4139 = vmatpush1.bf16.msra.mxu0 %v4119
        %4140 = vmatprep.subr.bf16.mxu0 0
        %4141 = vmatpush1.bf16.msra.mxu0 %v4120
        %4142 = vmatprep.subr.bf16.mxu0 0
        %4143 = vmatpush1.bf16.msra.mxu0 %v4121
        %4144 = vmatprep.subr.bf16.mxu0 0
        %4145 = vmatpush1.bf16.msra.mxu0 %v4122
        %4146 = vmatprep.subr.bf16.mxu0 0
        %4147 = vmatpush1.bf16.msra.mxu0 %v4123
        %4148 = vmatprep.subr.bf16.mxu0 0
        %4149 = vmatpush1.bf16.msra.mxu0 0
        %4150 = vmatprep.subr.bf16.mxu0 0
        %4151 = vmatpush1.bf16.msra.mxu0 0
        %4152 = vmatprep.subr.bf16.mxu0 0
        %4153 = vmatpush1.bf16.msra.mxu0 0
        %4154 = vmatprep.subr.bf16.mxu0 0
        %4155 = vmatpush1.bf16.msra.mxu0 0
        %4156 = vmatprep.subr.bf16.mxu0 0
        %4157 = vmatpush1.bf16.msra.mxu0 0
        %4158 = vmatprep.subr.bf16.mxu0 0
        %4159 = vmatpush1.bf16.msra.mxu0 0
        %4160 = vmatprep.subr.bf16.mxu0 0
        %4161 = vmatpush1.bf16.msra.mxu0 0
        %4162 = vmatprep.subr.bf16.mxu0 0
        %4163 = vmatpush1.bf16.msra.mxu0 0
        %4164 = vmatprep.mubr.bf16.mxu0 0
        %4165 = vmatmul.mubr.bf16.gmra.mrb[0].mxu0 %v4068
        %v4166 = vpop.f32.mrb[0].mxu0
        %v4167 = vadd.f32 0.0, %v4166
        %v4168 = vpop.f32.mrb[0].mxu0
        %v4169 = vpop.f32.mrb[0].mxu0
        %v4170 = vadd.f32 0.0, %v4169
        %v4171 = vpop.f32.mrb[0].mxu0
        %4172 = vmatprep.mubr.bf16.mxu0 0
        %4173 = vmatmul.mubr.bf16.gmra.mrb[0].mxu0 %v4069
        %v4174 = vpop.f32.mrb[0].mxu0
        %v4175 = vadd.f32 0.0, %v4174
        %v4176 = vpop.f32.mrb[0].mxu0
        %v4177 = vpop.f32.mrb[0].mxu0
        %v4178 = vadd.f32 0.0, %v4177
        %v4179 = vpop.f32.mrb[0].mxu0
        %4180 = vmatprep.mubr.bf16.mxu0 0
        %4181 = vmatmul.mubr.bf16.gmra.mrb[0].mxu0 %v4070
        %v4182 = vpop.f32.mrb[0].mxu0
        %v4183 = vadd.f32 0.0, %v4182
        %v4184 = vpop.f32.mrb[0].mxu0
        %v4185 = vpop.f32.mrb[0].mxu0
        %v4186 = vadd.f32 0.0, %v4185
        %v4187 = vpop.f32.mrb[0].mxu0
        %4188 = vmatprep.mubr.bf16.mxu0 0
        %4189 = vmatmul.mubr.bf16.gmra.mrb[0].mxu0 %v4071
        %v4190 = vpop.f32.mrb[0].mxu0
        %v4191 = vadd.f32 0.0, %v4190
        %v4192 = vpop.f32.mrb[0].mxu0
        %v4193 = vpop.f32.mrb[0].mxu0
        %v4194 = vadd.f32 0.0, %v4193
        %v4195 = vpop.f32.mrb[0].mxu0
        %4196 = vmatprep.mubr.bf16.mxu0 0
        %4197 = vmatmul.mubr.bf16.gmra.mrb[0].mxu0 %v4072
        %v4198 = vpop.f32.mrb[0].mxu0
        %v4199 = vadd.f32 0.0, %v4198
        %v4200 = vpop.f32.mrb[0].mxu0
        %v4201 = vpop.f32.mrb[0].mxu0
        %v4202 = vadd.f32 0.0, %v4201
        %v4203 = vpop.f32.mrb[0].mxu0
        %4204 = vmatprep.mubr.bf16.mxu0 0
        %4205 = vmatmul.mubr.bf16.gmra.mrb[0].mxu0 %v4073
        %v4206 = vpop.f32.mrb[0].mxu0
        %v4207 = vadd.f32 0.0, %v4206
        %v4208 = vpop.f32.mrb[0].mxu0
        %v4209 = vpop.f32.mrb[0].mxu0
        %v4210 = vadd.f32 0.0, %v4209
        %v4211 = vpop.f32.mrb[0].mxu0
        %4212 = vmatprep.mubr.bf16.mxu0 0
        %4213 = vmatmul.mubr.bf16.gmra.mrb[0].mxu0 %v4074
        %v4214 = vpop.f32.mrb[0].mxu0
        %v4215 = vadd.f32 0.0, %v4214
        %v4216 = vpop.f32.mrb[0].mxu0
        %v4217 = vpop.f32.mrb[0].mxu0
        %v4218 = vadd.f32 0.0, %v4217
        %v4219 = vpop.f32.mrb[0].mxu0
        %4220 = vmatprep.mubr.bf16.mxu0 0
        %4221 = vmatmul.mubr.bf16.gmra.mrb[0].mxu0 %v4075
        %v4222 = vpop.f32.mrb[0].mxu0
        %v4223 = vadd.f32 0.0, %v4222
        %v4224 = vpop.f32.mrb[0].mxu0
        %v4225 = vpop.f32.mrb[0].mxu0
        %v4226 = vadd.f32 0.0, %v4225
        %v4227 = vpop.f32.mrb[0].mxu0
        %4228 = vdwg.mxu0
        %v4229 = vadd.f32 %v3986, %v4167
        %v4230 = vadd.f32 %v3987, %v4170
        %v4231 = vadd.f32 %v3988, %v4175
        %v4232 = vadd.f32 %v3989, %v4178
        %v4233 = vadd.f32 %v3990, %v4183
        %v4234 = vadd.f32 %v3991, %v4186
        %v4235 = vadd.f32 %v3992, %v4191
        %v4236 = vadd.f32 %v3993, %v4194
        %v4237 = vadd.f32 %v3994, %v4199
        %v4238 = vadd.f32 %v3995, %v4202
        %v4239 = vadd.f32 %v3996, %v4207
        %v4240 = vadd.f32 %v3997, %v4210
        %v4241 = vadd.f32 %v3998, %v4215
        %v4242 = vadd.f32 %v3999, %v4218
        %v4243 = vadd.f32 %v4000, %v4223
        %v4244 = vadd.f32 %v4001, %v4226
        %v4245 = vld [vmem:[%s4002] sm:$0xf]
        %v4246 = vld [vmem:[%s4002 + $0x4] sm:$0xf]
        %v4247 = vld [vmem:[%s4002 + $0x8] sm:$0x1]
        %v4248 = vld [vmem:[%s4002 + $0xc] sm:$0xf]
        %v4249 = vld [vmem:[%s4002 + $0x10] sm:$0xf]
        %v4250 = vld [vmem:[%s4002 + $0x14] sm:$0x1]
        %v4251 = vld [vmem:[%s4002 + $0x18] sm:$0xf]
        %v4252 = vld [vmem:[%s4002 + $0x1c] sm:$0xf]
        %v4253 = vld [vmem:[%s4002 + $0x20] sm:$0x1]
        %v4254 = vld [vmem:[%s4002 + $0x24] sm:$0xf]
        %v4255 = vld [vmem:[%s4002 + $0x28] sm:$0xf]
        %v4256 = vld [vmem:[%s4002 + $0x2c] sm:$0x1]
        %v4257 = vld [vmem:[%s4002 + $0x30] sm:$0xf]
        %v4258 = vld [vmem:[%s4002 + $0x34] sm:$0xf]
        %v4259 = vld [vmem:[%s4002 + $0x38] sm:$0x1]
        %v4260 = vld [vmem:[%s4002 + $0x3c] sm:$0xf]
        %v4261 = vld [vmem:[%s4002 + $0x40] sm:$0xf]
        %v4262 = vld [vmem:[%s4002 + $0x44] sm:$0x1]
        %v4263 = vld [vmem:[%s4002 + $0x48] sm:$0xf]
        %v4264 = vld [vmem:[%s4002 + $0x4c] sm:$0xf]
        %v4265 = vld [vmem:[%s4002 + $0x50] sm:$0x1]
        %v4266 = vld [vmem:[%s4002 + $0x54] sm:$0xf]
        %v4267 = vld [vmem:[%s4002 + $0x58] sm:$0xf]
        %v4268 = vld [vmem:[%s4002 + $0x5c] sm:$0x1]
        %v4270 = vshrl.u32 %v4245, 16
        %v4272 = vrot.slane %v4270, 4
        %v4273 = vshll.u32 %v4245, 16
        %v4275 = vrot.slane %v4273, 5
        %v4276 = vor.u32 %v4272, %v4275
        %v4277 = vrot.slane %v4276, 4
        %v4279 = vshll.u32 %v4246, 16
        %v4281 = vrot.slane %v4279, 5
        %v4282 = vsel %vm1691, %v4277, %v4281
        %v4283 = vshrl.u32 %v4246, 16
        %v4285 = vrot.slane %v4283, 4
        %v4286 = vor.u32 %v4285, %v4281
        %v4287 = vrot.slane %v4286, 4
        %v4289 = vshll.u32 %v4247, 16
        %v4291 = vrot.slane %v4289, 5
        %v4292 = vsel %vm1691, %v4287, %v4291
        %v4294 = vshrl.u32 %v4248, 16
        %v4296 = vrot.slane %v4294, 4
        %v4297 = vshll.u32 %v4248, 16
        %v4299 = vrot.slane %v4297, 5
        %v4300 = vor.u32 %v4296, %v4299
        %v4301 = vrot.slane %v4300, 4
        %v4303 = vshll.u32 %v4249, 16
        %v4305 = vrot.slane %v4303, 5
        %v4306 = vsel %vm1691, %v4301, %v4305
        %v4307 = vshrl.u32 %v4249, 16
        %v4309 = vrot.slane %v4307, 4
        %v4310 = vor.u32 %v4309, %v4305
        %v4311 = vrot.slane %v4310, 4
        %v4313 = vshll.u32 %v4250, 16
        %v4315 = vrot.slane %v4313, 5
        %v4316 = vsel %vm1691, %v4311, %v4315
        %v4318 = vshrl.u32 %v4251, 16
        %v4320 = vrot.slane %v4318, 4
        %v4321 = vshll.u32 %v4251, 16
        %v4323 = vrot.slane %v4321, 5
        %v4324 = vor.u32 %v4320, %v4323
        %v4325 = vrot.slane %v4324, 4
        %v4327 = vshll.u32 %v4252, 16
        %v4329 = vrot.slane %v4327, 5
        %v4330 = vsel %vm1691, %v4325, %v4329
        %v4331 = vshrl.u32 %v4252, 16
        %v4333 = vrot.slane %v4331, 4
        %v4334 = vor.u32 %v4333, %v4329
        %v4335 = vrot.slane %v4334, 4
        %v4337 = vshll.u32 %v4253, 16
        %v4339 = vrot.slane %v4337, 5
        %v4340 = vsel %vm1691, %v4335, %v4339
        %v4342 = vshrl.u32 %v4254, 16
        %v4344 = vrot.slane %v4342, 4
        %v4345 = vshll.u32 %v4254, 16
        %v4347 = vrot.slane %v4345, 5
        %v4348 = vor.u32 %v4344, %v4347
        %v4349 = vrot.slane %v4348, 4
        %v4351 = vshll.u32 %v4255, 16
        %v4353 = vrot.slane %v4351, 5
        %v4354 = vsel %vm1691, %v4349, %v4353
        %v4355 = vshrl.u32 %v4255, 16
        %v4357 = vrot.slane %v4355, 4
        %v4358 = vor.u32 %v4357, %v4353
        %v4359 = vrot.slane %v4358, 4
        %v4361 = vshll.u32 %v4256, 16
        %v4363 = vrot.slane %v4361, 5
        %v4364 = vsel %vm1691, %v4359, %v4363
        %v4366 = vshrl.u32 %v4257, 16
        %v4368 = vrot.slane %v4366, 4
        %v4369 = vshll.u32 %v4257, 16
        %v4371 = vrot.slane %v4369, 5
        %v4372 = vor.u32 %v4368, %v4371
        %v4373 = vrot.slane %v4372, 4
        %v4375 = vshll.u32 %v4258, 16
        %v4377 = vrot.slane %v4375, 5
        %v4378 = vsel %vm1691, %v4373, %v4377
        %v4379 = vshrl.u32 %v4258, 16
        %v4381 = vrot.slane %v4379, 4
        %v4382 = vor.u32 %v4381, %v4377
        %v4383 = vrot.slane %v4382, 4
        %v4385 = vshll.u32 %v4259, 16
        %v4387 = vrot.slane %v4385, 5
        %v4388 = vsel %vm1691, %v4383, %v4387
        %v4390 = vshrl.u32 %v4260, 16
        %v4392 = vrot.slane %v4390, 4
        %v4393 = vshll.u32 %v4260, 16
        %v4395 = vrot.slane %v4393, 5
        %v4396 = vor.u32 %v4392, %v4395
        %v4397 = vrot.slane %v4396, 4
        %v4399 = vshll.u32 %v4261, 16
        %v4401 = vrot.slane %v4399, 5
        %v4402 = vsel %vm1691, %v4397, %v4401
        %v4403 = vshrl.u32 %v4261, 16
        %v4405 = vrot.slane %v4403, 4
        %v4406 = vor.u32 %v4405, %v4401
        %v4407 = vrot.slane %v4406, 4
        %v4409 = vshll.u32 %v4262, 16
        %v4411 = vrot.slane %v4409, 5
        %v4412 = vsel %vm1691, %v4407, %v4411
        %v4414 = vshrl.u32 %v4263, 16
        %v4416 = vrot.slane %v4414, 4
        %v4417 = vshll.u32 %v4263, 16
        %v4419 = vrot.slane %v4417, 5
        %v4420 = vor.u32 %v4416, %v4419
        %v4421 = vrot.slane %v4420, 4
        %v4423 = vshll.u32 %v4264, 16
        %v4425 = vrot.slane %v4423, 5
        %v4426 = vsel %vm1691, %v4421, %v4425
        %v4427 = vshrl.u32 %v4264, 16
        %v4429 = vrot.slane %v4427, 4
        %v4430 = vor.u32 %v4429, %v4425
        %v4431 = vrot.slane %v4430, 4
        %v4433 = vshll.u32 %v4265, 16
        %v4435 = vrot.slane %v4433, 5
        %v4436 = vsel %vm1691, %v4431, %v4435
        %v4438 = vshrl.u32 %v4266, 16
        %v4440 = vrot.slane %v4438, 4
        %v4441 = vshll.u32 %v4266, 16
        %v4443 = vrot.slane %v4441, 5
        %v4444 = vor.u32 %v4440, %v4443
        %v4445 = vrot.slane %v4444, 4
        %v4447 = vshll.u32 %v4267, 16
        %v4449 = vrot.slane %v4447, 5
        %v4450 = vsel %vm1691, %v4445, %v4449
        %v4451 = vshrl.u32 %v4267, 16
        %v4453 = vrot.slane %v4451, 4
        %v4454 = vor.u32 %v4453, %v4449
        %v4455 = vrot.slane %v4454, 4
        %v4457 = vshll.u32 %v4268, 16
        %v4459 = vrot.slane %v4457, 5
        %v4460 = vsel %vm1691, %v4455, %v4459
        %s4461 = scalar_lea.vmem [#allocation8], 448
        %v4462 = vld [vmem:[%s4461] sm:$0xf]
        %v4463 = vld [vmem:[%s4461 + $0x4] sm:$0xf]
        %v4464 = vld [vmem:[%s4461 + $0x8] sm:$0xf]
        %v4465 = vld [vmem:[%s4461 + $0xc] sm:$0xf]
        %v4466 = vld [vmem:[%s4461 + $0x10] sm:$0xf]
        %v4467 = vld [vmem:[%s4461 + $0x14] sm:$0xf]
        %v4468 = vld [vmem:[%s4461 + $0x18] sm:$0xf]
        %v4469 = vld [vmem:[%s4461 + $0x1c] sm:$0xf]
        %v4470 = vld [vmem:[%s4461 + $0x20] sm:$0xf]
        %v4471 = vld [vmem:[%s4461 + $0x24] sm:$0xf]
        %v4472 = vld [vmem:[%s4461 + $0x28] sm:$0xf]
        %v4473 = vld [vmem:[%s4461 + $0x2c] sm:$0xf]
        %v4474 = vld [vmem:[%s4461 + $0x30] sm:$0xf]
        %v4475 = vld [vmem:[%s4461 + $0x34] sm:$0xf]
        %v4476 = vld [vmem:[%s4461 + $0x38] sm:$0xf]
        %v4477 = vld [vmem:[%s4461 + $0x3c] sm:$0xf]
        %v4478 = vunpack.c.l.b16 %v4282
        %v4479 = vunpack.c.l.b16 %v4292
        %v4480 = vunpack.c.l.b16 %v4306
        %v4481 = vunpack.c.l.b16 %v4316
        %v4482 = vunpack.c.l.b16 %v4330
        %v4483 = vunpack.c.l.b16 %v4340
        %v4484 = vunpack.c.l.b16 %v4354
        %v4485 = vunpack.c.l.b16 %v4364
        %v4486 = vunpack.c.l.b16 %v4378
        %v4487 = vunpack.c.l.b16 %v4388
        %v4488 = vunpack.c.l.b16 %v4402
        %v4489 = vunpack.c.l.b16 %v4412
        %v4490 = vunpack.c.l.b16 %v4426
        %v4491 = vunpack.c.l.b16 %v4436
        %v4492 = vunpack.c.l.b16 %v4450
        %v4493 = vunpack.c.l.b16 %v4460
        %v4494 = vpack.c.b16 %v4479, %v4478
        %v4495 = vpack.c.b16 %v4481, %v4480
        %v4496 = vpack.c.b16 %v4483, %v4482
        %v4497 = vpack.c.b16 %v4485, %v4484
        %v4498 = vpack.c.b16 %v4487, %v4486
        %v4499 = vpack.c.b16 %v4489, %v4488
        %v4500 = vpack.c.b16 %v4491, %v4490
        %v4501 = vpack.c.b16 %v4493, %v4492
        %v4526 = vunpack.c.l.b16 %v4462
        %v4527 = vunpack.c.l.b16 %v4463
        %v4528 = vunpack.c.l.b16 %v4464
        %v4529 = vunpack.c.l.b16 %v4465
        %v4530 = vunpack.c.l.b16 %v4466
        %v4531 = vunpack.c.l.b16 %v4467
        %v4532 = vunpack.c.l.b16 %v4468
        %v4533 = vunpack.c.l.b16 %v4469
        %v4534 = vunpack.c.l.b16 %v4470
        %v4535 = vunpack.c.l.b16 %v4471
        %v4536 = vunpack.c.l.b16 %v4472
        %v4537 = vunpack.c.l.b16 %v4473
        %v4538 = vunpack.c.l.b16 %v4474
        %v4539 = vunpack.c.l.b16 %v4475
        %v4540 = vunpack.c.l.b16 %v4476
        %v4541 = vunpack.c.l.b16 %v4477
        %v4542 = vpack.c.b16 %v4527, %v4526
        %v4543 = vpack.c.b16 %v4529, %v4528
        %v4544 = vpack.c.b16 %v4531, %v4530
        %v4545 = vpack.c.b16 %v4533, %v4532
        %v4546 = vpack.c.b16 %v4535, %v4534
        %v4547 = vpack.c.b16 %v4537, %v4536
        %v4548 = vpack.c.b16 %v4539, %v4538
        %v4549 = vpack.c.b16 %v4541, %v4540
        %4558 = vmatprep.subr.bf16.mxu0 0
        %4559 = vmatpush1.bf16.msra.mxu0 %v4542
        %4560 = vmatprep.subr.bf16.mxu0 0
        %4561 = vmatpush1.bf16.msra.mxu0 %v4543
        %4562 = vmatprep.subr.bf16.mxu0 0
        %4563 = vmatpush1.bf16.msra.mxu0 %v4544
        %4564 = vmatprep.subr.bf16.mxu0 0
        %4565 = vmatpush1.bf16.msra.mxu0 %v4545
        %4566 = vmatprep.subr.bf16.mxu0 0
        %4567 = vmatpush1.bf16.msra.mxu0 %v4546
        %4568 = vmatprep.subr.bf16.mxu0 0
        %4569 = vmatpush1.bf16.msra.mxu0 %v4547
        %4570 = vmatprep.subr.bf16.mxu0 0
        %4571 = vmatpush1.bf16.msra.mxu0 %v4548
        %4572 = vmatprep.subr.bf16.mxu0 0
        %4573 = vmatpush1.bf16.msra.mxu0 %v4549
        %4574 = vmatprep.subr.bf16.mxu0 0
        %4575 = vmatpush1.bf16.msra.mxu0 0
        %4576 = vmatprep.subr.bf16.mxu0 0
        %4577 = vmatpush1.bf16.msra.mxu0 0
        %4578 = vmatprep.subr.bf16.mxu0 0
        %4579 = vmatpush1.bf16.msra.mxu0 0
        %4580 = vmatprep.subr.bf16.mxu0 0
        %4581 = vmatpush1.bf16.msra.mxu0 0
        %4582 = vmatprep.subr.bf16.mxu0 0
        %4583 = vmatpush1.bf16.msra.mxu0 0
        %4584 = vmatprep.subr.bf16.mxu0 0
        %4585 = vmatpush1.bf16.msra.mxu0 0
        %4586 = vmatprep.subr.bf16.mxu0 0
        %4587 = vmatpush1.bf16.msra.mxu0 0
        %4588 = vmatprep.subr.bf16.mxu0 0
        %4589 = vmatpush1.bf16.msra.mxu0 0
        %4590 = vmatprep.mubr.bf16.mxu0 0
        %4591 = vmatmul.mubr.bf16.gmra.mrb[0].mxu0 %v4494
        %v4592 = vpop.f32.mrb[0].mxu0
        %v4593 = vadd.f32 0.0, %v4592
        %v4594 = vpop.f32.mrb[0].mxu0
        %v4595 = vpop.f32.mrb[0].mxu0
        %v4596 = vadd.f32 0.0, %v4595
        %v4597 = vpop.f32.mrb[0].mxu0
        %4598 = vmatprep.mubr.bf16.mxu0 0
        %4599 = vmatmul.mubr.bf16.gmra.mrb[0].mxu0 %v4495
        %v4600 = vpop.f32.mrb[0].mxu0
        %v4601 = vadd.f32 0.0, %v4600
        %v4602 = vpop.f32.mrb[0].mxu0
        %v4603 = vpop.f32.mrb[0].mxu0
        %v4604 = vadd.f32 0.0, %v4603
        %v4605 = vpop.f32.mrb[0].mxu0
        %4606 = vmatprep.mubr.bf16.mxu0 0
        %4607 = vmatmul.mubr.bf16.gmra.mrb[0].mxu0 %v4496
        %v4608 = vpop.f32.mrb[0].mxu0
        %v4609 = vadd.f32 0.0, %v4608
        %v4610 = vpop.f32.mrb[0].mxu0
        %v4611 = vpop.f32.mrb[0].mxu0
        %v4612 = vadd.f32 0.0, %v4611
        %v4613 = vpop.f32.mrb[0].mxu0
        %4614 = vmatprep.mubr.bf16.mxu0 0
        %4615 = vmatmul.mubr.bf16.gmra.mrb[0].mxu0 %v4497
        %v4616 = vpop.f32.mrb[0].mxu0
        %v4617 = vadd.f32 0.0, %v4616
        %v4618 = vpop.f32.mrb[0].mxu0
        %v4619 = vpop.f32.mrb[0].mxu0
        %v4620 = vadd.f32 0.0, %v4619
        %v4621 = vpop.f32.mrb[0].mxu0
        %4622 = vmatprep.mubr.bf16.mxu0 0
        %4623 = vmatmul.mubr.bf16.gmra.mrb[0].mxu0 %v4498
        %v4624 = vpop.f32.mrb[0].mxu0
        %v4625 = vadd.f32 0.0, %v4624
        %v4626 = vpop.f32.mrb[0].mxu0
        %v4627 = vpop.f32.mrb[0].mxu0
        %v4628 = vadd.f32 0.0, %v4627
        %v4629 = vpop.f32.mrb[0].mxu0
        %4630 = vmatprep.mubr.bf16.mxu0 0
        %4631 = vmatmul.mubr.bf16.gmra.mrb[0].mxu0 %v4499
        %v4632 = vpop.f32.mrb[0].mxu0
        %v4633 = vadd.f32 0.0, %v4632
        %v4634 = vpop.f32.mrb[0].mxu0
        %v4635 = vpop.f32.mrb[0].mxu0
        %v4636 = vadd.f32 0.0, %v4635
        %v4637 = vpop.f32.mrb[0].mxu0
        %4638 = vmatprep.mubr.bf16.mxu0 0
        %4639 = vmatmul.mubr.bf16.gmra.mrb[0].mxu0 %v4500
        %v4640 = vpop.f32.mrb[0].mxu0
        %v4641 = vadd.f32 0.0, %v4640
        %v4642 = vpop.f32.mrb[0].mxu0
        %v4643 = vpop.f32.mrb[0].mxu0
        %v4644 = vadd.f32 0.0, %v4643
        %v4645 = vpop.f32.mrb[0].mxu0
        %4646 = vmatprep.mubr.bf16.mxu0 0
        %4647 = vmatmul.mubr.bf16.gmra.mrb[0].mxu0 %v4501
        %v4648 = vpop.f32.mrb[0].mxu0
        %v4649 = vadd.f32 0.0, %v4648
        %v4650 = vpop.f32.mrb[0].mxu0
        %v4651 = vpop.f32.mrb[0].mxu0
        %v4652 = vadd.f32 0.0, %v4651
        %v4653 = vpop.f32.mrb[0].mxu0
        %4654 = vdwg.mxu0
        %v4655 = vadd.f32 %v4229, %v4593
        %v4656 = vadd.f32 %v4230, %v4596
        %v4657 = vadd.f32 %v4231, %v4601
        %v4658 = vadd.f32 %v4232, %v4604
        %v4659 = vadd.f32 %v4233, %v4609
        %v4660 = vadd.f32 %v4234, %v4612
        %v4661 = vadd.f32 %v4235, %v4617
        %v4662 = vadd.f32 %v4236, %v4620
        %v4663 = vadd.f32 %v4237, %v4625
        %v4664 = vadd.f32 %v4238, %v4628
        %v4665 = vadd.f32 %v4239, %v4633
        %v4666 = vadd.f32 %v4240, %v4636
        %v4667 = vadd.f32 %v4241, %v4641
        %v4668 = vadd.f32 %v4242, %v4644
        %v4669 = vadd.f32 %v4243, %v4649
        %v4670 = vadd.f32 %v4244, %v4652
        %v4671 = vld [vmem:[%s4002] sm:$0xe]
        %v4672 = vld [vmem:[%s4002 + $0xc] sm:$0xe]
        %v4673 = vld [vmem:[%s4002 + $0x18] sm:$0xe]
        %v4674 = vld [vmem:[%s4002 + $0x24] sm:$0xe]
        %v4675 = vld [vmem:[%s4002 + $0x30] sm:$0xe]
        %v4676 = vld [vmem:[%s4002 + $0x3c] sm:$0xe]
        %v4677 = vld [vmem:[%s4002 + $0x48] sm:$0xe]
        %v4678 = vld [vmem:[%s4002 + $0x54] sm:$0xe]
        %v4703 = vrot.slane %v4671, 5
        %v4704 = vrot.slane %v4703, 4
        %v4705 = vrot.slane %v4246, 5
        %v4706 = vsel %vm2768, %v4704, %v4705
        %v4707 = vrot.slane %v4705, 4
        %v4708 = vrot.slane %v4247, 5
        %v4709 = vsel %vm2768, %v4707, %v4708
        %v4710 = vrot.slane %v4672, 5
        %v4711 = vrot.slane %v4710, 4
        %v4712 = vrot.slane %v4249, 5
        %v4713 = vsel %vm2768, %v4711, %v4712
        %v4714 = vrot.slane %v4712, 4
        %v4715 = vrot.slane %v4250, 5
        %v4716 = vsel %vm2768, %v4714, %v4715
        %v4717 = vrot.slane %v4673, 5
        %v4718 = vrot.slane %v4717, 4
        %v4719 = vrot.slane %v4252, 5
        %v4720 = vsel %vm2768, %v4718, %v4719
        %v4721 = vrot.slane %v4719, 4
        %v4722 = vrot.slane %v4253, 5
        %v4723 = vsel %vm2768, %v4721, %v4722
        %v4724 = vrot.slane %v4674, 5
        %v4725 = vrot.slane %v4724, 4
        %v4726 = vrot.slane %v4255, 5
        %v4727 = vsel %vm2768, %v4725, %v4726
        %v4728 = vrot.slane %v4726, 4
        %v4729 = vrot.slane %v4256, 5
        %v4730 = vsel %vm2768, %v4728, %v4729
        %v4731 = vrot.slane %v4675, 5
        %v4732 = vrot.slane %v4731, 4
        %v4733 = vrot.slane %v4258, 5
        %v4734 = vsel %vm2768, %v4732, %v4733
        %v4735 = vrot.slane %v4733, 4
        %v4736 = vrot.slane %v4259, 5
        %v4737 = vsel %vm2768, %v4735, %v4736
        %v4738 = vrot.slane %v4676, 5
        %v4739 = vrot.slane %v4738, 4
        %v4740 = vrot.slane %v4261, 5
        %v4741 = vsel %vm2768, %v4739, %v4740
        %v4742 = vrot.slane %v4740, 4
        %v4743 = vrot.slane %v4262, 5
        %v4744 = vsel %vm2768, %v4742, %v4743
        %v4745 = vrot.slane %v4677, 5
        %v4746 = vrot.slane %v4745, 4
        %v4747 = vrot.slane %v4264, 5
        %v4748 = vsel %vm2768, %v4746, %v4747
        %v4749 = vrot.slane %v4747, 4
        %v4750 = vrot.slane %v4265, 5
        %v4751 = vsel %vm2768, %v4749, %v4750
        %v4752 = vrot.slane %v4678, 5
        %v4753 = vrot.slane %v4752, 4
        %v4754 = vrot.slane %v4267, 5
        %v4755 = vsel %vm2768, %v4753, %v4754
        %v4756 = vrot.slane %v4754, 4
        %v4757 = vrot.slane %v4268, 5
        %v4758 = vsel %vm2768, %v4756, %v4757
        %s4759 = scalar_lea.vmem [#allocation8], 512
        %v4760 = vld [vmem:[%s4759] sm:$0xf]
        %v4761 = vld [vmem:[%s4759 + $0x4] sm:$0xf]
        %v4762 = vld [vmem:[%s4759 + $0x8] sm:$0xf]
        %v4763 = vld [vmem:[%s4759 + $0xc] sm:$0xf]
        %v4764 = vld [vmem:[%s4759 + $0x10] sm:$0xf]
        %v4765 = vld [vmem:[%s4759 + $0x14] sm:$0xf]
        %v4766 = vld [vmem:[%s4759 + $0x18] sm:$0xf]
        %v4767 = vld [vmem:[%s4759 + $0x1c] sm:$0xf]
        %v4768 = vld [vmem:[%s4759 + $0x20] sm:$0xf]
        %v4769 = vld [vmem:[%s4759 + $0x24] sm:$0xf]
        %v4770 = vld [vmem:[%s4759 + $0x28] sm:$0xf]
        %v4771 = vld [vmem:[%s4759 + $0x2c] sm:$0xf]
        %v4772 = vld [vmem:[%s4759 + $0x30] sm:$0xf]
        %v4773 = vld [vmem:[%s4759 + $0x34] sm:$0xf]
        %v4774 = vld [vmem:[%s4759 + $0x38] sm:$0xf]
        %v4775 = vld [vmem:[%s4759 + $0x3c] sm:$0xf]
        %v4776 = vunpack.c.l.b16 %v4706
        %v4777 = vunpack.c.l.b16 %v4709
        %v4778 = vunpack.c.l.b16 %v4713
        %v4779 = vunpack.c.l.b16 %v4716
        %v4780 = vunpack.c.l.b16 %v4720
        %v4781 = vunpack.c.l.b16 %v4723
        %v4782 = vunpack.c.l.b16 %v4727
        %v4783 = vunpack.c.l.b16 %v4730
        %v4784 = vunpack.c.l.b16 %v4734
        %v4785 = vunpack.c.l.b16 %v4737
        %v4786 = vunpack.c.l.b16 %v4741
        %v4787 = vunpack.c.l.b16 %v4744
        %v4788 = vunpack.c.l.b16 %v4748
        %v4789 = vunpack.c.l.b16 %v4751
        %v4790 = vunpack.c.l.b16 %v4755
        %v4791 = vunpack.c.l.b16 %v4758
        %v4792 = vpack.c.b16 %v4777, %v4776
        %v4793 = vpack.c.b16 %v4779, %v4778
        %v4794 = vpack.c.b16 %v4781, %v4780
        %v4795 = vpack.c.b16 %v4783, %v4782
        %v4796 = vpack.c.b16 %v4785, %v4784
        %v4797 = vpack.c.b16 %v4787, %v4786
        %v4798 = vpack.c.b16 %v4789, %v4788
        %v4799 = vpack.c.b16 %v4791, %v4790
        %v4824 = vunpack.c.l.b16 %v4760
        %v4825 = vunpack.c.l.b16 %v4761
        %v4826 = vunpack.c.l.b16 %v4762
        %v4827 = vunpack.c.l.b16 %v4763
        %v4828 = vunpack.c.l.b16 %v4764
        %v4829 = vunpack.c.l.b16 %v4765
        %v4830 = vunpack.c.l.b16 %v4766
        %v4831 = vunpack.c.l.b16 %v4767
        %v4832 = vunpack.c.l.b16 %v4768
        %v4833 = vunpack.c.l.b16 %v4769
        %v4834 = vunpack.c.l.b16 %v4770
        %v4835 = vunpack.c.l.b16 %v4771
        %v4836 = vunpack.c.l.b16 %v4772
        %v4837 = vunpack.c.l.b16 %v4773
        %v4838 = vunpack.c.l.b16 %v4774
        %v4839 = vunpack.c.l.b16 %v4775
        %v4840 = vpack.c.b16 %v4825, %v4824
        %v4841 = vpack.c.b16 %v4827, %v4826
        %v4842 = vpack.c.b16 %v4829, %v4828
        %v4843 = vpack.c.b16 %v4831, %v4830
        %v4844 = vpack.c.b16 %v4833, %v4832
        %v4845 = vpack.c.b16 %v4835, %v4834
        %v4846 = vpack.c.b16 %v4837, %v4836
        %v4847 = vpack.c.b16 %v4839, %v4838
        %4856 = vmatprep.subr.bf16.mxu0 0
        %4857 = vmatpush1.bf16.msra.mxu0 %v4840
        %4858 = vmatprep.subr.bf16.mxu0 0
        %4859 = vmatpush1.bf16.msra.mxu0 %v4841
        %4860 = vmatprep.subr.bf16.mxu0 0
        %4861 = vmatpush1.bf16.msra.mxu0 %v4842
        %4862 = vmatprep.subr.bf16.mxu0 0
        %4863 = vmatpush1.bf16.msra.mxu0 %v4843
        %4864 = vmatprep.subr.bf16.mxu0 0
        %4865 = vmatpush1.bf16.msra.mxu0 %v4844
        %4866 = vmatprep.subr.bf16.mxu0 0
        %4867 = vmatpush1.bf16.msra.mxu0 %v4845
        %4868 = vmatprep.subr.bf16.mxu0 0
        %4869 = vmatpush1.bf16.msra.mxu0 %v4846
        %4870 = vmatprep.subr.bf16.mxu0 0
        %4871 = vmatpush1.bf16.msra.mxu0 %v4847
        %4872 = vmatprep.subr.bf16.mxu0 0
        %4873 = vmatpush1.bf16.msra.mxu0 0
        %4874 = vmatprep.subr.bf16.mxu0 0
        %4875 = vmatpush1.bf16.msra.mxu0 0
        %4876 = vmatprep.subr.bf16.mxu0 0
        %4877 = vmatpush1.bf16.msra.mxu0 0
        %4878 = vmatprep.subr.bf16.mxu0 0
        %4879 = vmatpush1.bf16.msra.mxu0 0
        %4880 = vmatprep.subr.bf16.mxu0 0
        %4881 = vmatpush1.bf16.msra.mxu0 0
        %4882 = vmatprep.subr.bf16.mxu0 0
        %4883 = vmatpush1.bf16.msra.mxu0 0
        %4884 = vmatprep.subr.bf16.mxu0 0
        %4885 = vmatpush1.bf16.msra.mxu0 0
        %4886 = vmatprep.subr.bf16.mxu0 0
        %4887 = vmatpush1.bf16.msra.mxu0 0
        %4888 = vmatprep.mubr.bf16.mxu0 0
        %4889 = vmatmul.mubr.bf16.gmra.mrb[0].mxu0 %v4792
        %v4890 = vpop.f32.mrb[0].mxu0
        %v4891 = vadd.f32 0.0, %v4890
        %v4892 = vpop.f32.mrb[0].mxu0
        %v4893 = vpop.f32.mrb[0].mxu0
        %v4894 = vadd.f32 0.0, %v4893
        %v4895 = vpop.f32.mrb[0].mxu0
        %4896 = vmatprep.mubr.bf16.mxu0 0
        %4897 = vmatmul.mubr.bf16.gmra.mrb[0].mxu0 %v4793
        %v4898 = vpop.f32.mrb[0].mxu0
        %v4899 = vadd.f32 0.0, %v4898
        %v4900 = vpop.f32.mrb[0].mxu0
        %v4901 = vpop.f32.mrb[0].mxu0
        %v4902 = vadd.f32 0.0, %v4901
        %v4903 = vpop.f32.mrb[0].mxu0
        %4904 = vmatprep.mubr.bf16.mxu0 0
        %4905 = vmatmul.mubr.bf16.gmra.mrb[0].mxu0 %v4794
        %v4906 = vpop.f32.mrb[0].mxu0
        %v4907 = vadd.f32 0.0, %v4906
        %v4908 = vpop.f32.mrb[0].mxu0
        %v4909 = vpop.f32.mrb[0].mxu0
        %v4910 = vadd.f32 0.0, %v4909
        %v4911 = vpop.f32.mrb[0].mxu0
        %4912 = vmatprep.mubr.bf16.mxu0 0
        %4913 = vmatmul.mubr.bf16.gmra.mrb[0].mxu0 %v4795
        %v4914 = vpop.f32.mrb[0].mxu0
        %v4915 = vadd.f32 0.0, %v4914
        %v4916 = vpop.f32.mrb[0].mxu0
        %v4917 = vpop.f32.mrb[0].mxu0
        %v4918 = vadd.f32 0.0, %v4917
        %v4919 = vpop.f32.mrb[0].mxu0
        %4920 = vmatprep.mubr.bf16.mxu0 0
        %4921 = vmatmul.mubr.bf16.gmra.mrb[0].mxu0 %v4796
        %v4922 = vpop.f32.mrb[0].mxu0
        %v4923 = vadd.f32 0.0, %v4922
        %v4924 = vpop.f32.mrb[0].mxu0
        %v4925 = vpop.f32.mrb[0].mxu0
        %v4926 = vadd.f32 0.0, %v4925
        %v4927 = vpop.f32.mrb[0].mxu0
        %4928 = vmatprep.mubr.bf16.mxu0 0
        %4929 = vmatmul.mubr.bf16.gmra.mrb[0].mxu0 %v4797
        %v4930 = vpop.f32.mrb[0].mxu0
        %v4931 = vadd.f32 0.0, %v4930
        %v4932 = vpop.f32.mrb[0].mxu0
        %v4933 = vpop.f32.mrb[0].mxu0
        %v4934 = vadd.f32 0.0, %v4933
        %v4935 = vpop.f32.mrb[0].mxu0
        %4936 = vmatprep.mubr.bf16.mxu0 0
        %4937 = vmatmul.mubr.bf16.gmra.mrb[0].mxu0 %v4798
        %v4938 = vpop.f32.mrb[0].mxu0
        %v4939 = vadd.f32 0.0, %v4938
        %v4940 = vpop.f32.mrb[0].mxu0
        %v4941 = vpop.f32.mrb[0].mxu0
        %v4942 = vadd.f32 0.0, %v4941
        %v4943 = vpop.f32.mrb[0].mxu0
        %4944 = vmatprep.mubr.bf16.mxu0 0
        %4945 = vmatmul.mubr.bf16.gmra.mrb[0].mxu0 %v4799
        %v4946 = vpop.f32.mrb[0].mxu0
        %v4947 = vadd.f32 0.0, %v4946
        %v4948 = vpop.f32.mrb[0].mxu0
        %v4949 = vpop.f32.mrb[0].mxu0
        %v4950 = vadd.f32 0.0, %v4949
        %v4951 = vpop.f32.mrb[0].mxu0
        %4952 = vdwg.mxu0
        %v4953 = vadd.f32 %v4655, %v4891
        %v4954 = vadd.f32 %v4656, %v4894
        %v4955 = vadd.f32 %v4657, %v4899
        %v4956 = vadd.f32 %v4658, %v4902
        %v4957 = vadd.f32 %v4659, %v4907
        %v4958 = vadd.f32 %v4660, %v4910
        %v4959 = vadd.f32 %v4661, %v4915
        %v4960 = vadd.f32 %v4662, %v4918
        %v4961 = vadd.f32 %v4663, %v4923
        %v4962 = vadd.f32 %v4664, %v4926
        %v4963 = vadd.f32 %v4665, %v4931
        %v4964 = vadd.f32 %v4666, %v4934
        %v4965 = vadd.f32 %v4667, %v4939
        %v4966 = vadd.f32 %v4668, %v4942
        %v4967 = vadd.f32 %v4669, %v4947
        %v4968 = vadd.f32 %v4670, %v4950
        %v4969 = vmax.f32 %v4953, 0.0
        %v4970 = vmax.f32 %v4954, 0.0
        %v4971 = vmax.f32 %v4955, 0.0
        %v4972 = vmax.f32 %v4956, 0.0
        %v4973 = vmax.f32 %v4957, 0.0
        %v4974 = vmax.f32 %v4958, 0.0
        %v4975 = vmax.f32 %v4959, 0.0
        %v4976 = vmax.f32 %v4960, 0.0
        %v4977 = vmax.f32 %v4961, 0.0
        %v4978 = vmax.f32 %v4962, 0.0
        %v4979 = vmax.f32 %v4963, 0.0
        %v4980 = vmax.f32 %v4964, 0.0
        %v4981 = vmax.f32 %v4965, 0.0
        %v4982 = vmax.f32 %v4966, 0.0
        %v4983 = vmax.f32 %v4967, 0.0
        %v4984 = vmax.f32 %v4968, 0.0
        %v4985 = vpack.c.bf16 %v4970, %v4969
        %v4986 = vpack.c.bf16 %v4972, %v4971
        %v4987 = vpack.c.bf16 %v4974, %v4973
        %v4988 = vpack.c.bf16 %v4976, %v4975
        %v4989 = vpack.c.bf16 %v4978, %v4977
        %v4990 = vpack.c.bf16 %v4980, %v4979
        %v4991 = vpack.c.bf16 %v4982, %v4981
        %v4992 = vpack.c.bf16 %v4984, %v4983
        %v5001 = vunpack.c.l.b16 %v4985
        %v5002 = vunpack.c.h.b16 %v4985
        %v5003 = vunpack.c.l.b16 %v4986
        %v5004 = vunpack.c.h.b16 %v4986
        %v5005 = vunpack.c.l.b16 %v4987
        %v5006 = vunpack.c.h.b16 %v4987
        %v5007 = vunpack.c.l.b16 %v4988
        %v5008 = vunpack.c.h.b16 %v4988
        %v5009 = vunpack.c.l.b16 %v4989
        %v5010 = vunpack.c.h.b16 %v4989
        %v5011 = vunpack.c.l.b16 %v4990
        %v5012 = vunpack.c.h.b16 %v4990
        %v5013 = vunpack.c.l.b16 %v4991
        %v5014 = vunpack.c.h.b16 %v4991
        %v5015 = vunpack.c.l.b16 %v4992
        %v5016 = vunpack.c.h.b16 %v4992
        %v5017 = vpack.c.b16 %v5001, %v5001
        %v5018 = vpack.c.b16 %v5002, %v5002
        %v5019 = vpack.c.b16 %v5003, %v5003
        %v5020 = vpack.c.b16 %v5004, %v5004
        %v5021 = vpack.c.b16 %v5005, %v5005
        %v5022 = vpack.c.b16 %v5006, %v5006
        %v5023 = vpack.c.b16 %v5007, %v5007
        %v5024 = vpack.c.b16 %v5008, %v5008
        %v5025 = vpack.c.b16 %v5009, %v5009
        %v5026 = vpack.c.b16 %v5010, %v5010
        %v5027 = vpack.c.b16 %v5011, %v5011
        %v5028 = vpack.c.b16 %v5012, %v5012
        %v5029 = vpack.c.b16 %v5013, %v5013
        %v5030 = vpack.c.b16 %v5014, %v5014
        %v5031 = vpack.c.b16 %v5015, %v5015
        %v5032 = vpack.c.b16 %v5016, %v5016
        %5049 = vst [vmem:[%s327] sm:$0xf] %v5017
        %5050 = vst [vmem:[%s327 + $0x4] sm:$0xf] %v5018
        %5051 = vst [vmem:[%s327 + $0x8] sm:$0xf] %v5019
        %5052 = vst [vmem:[%s327 + $0xc] sm:$0xf] %v5020
        %5053 = vst [vmem:[%s327 + $0x10] sm:$0xf] %v5021
        %5054 = vst [vmem:[%s327 + $0x14] sm:$0xf] %v5022
        %5055 = vst [vmem:[%s327 + $0x18] sm:$0xf] %v5023
        %5056 = vst [vmem:[%s327 + $0x1c] sm:$0xf] %v5024
        %5057 = vst [vmem:[%s327 + $0x20] sm:$0xf] %v5025
        %5058 = vst [vmem:[%s327 + $0x24] sm:$0xf] %v5026
        %5059 = vst [vmem:[%s327 + $0x28] sm:$0xf] %v5027
        %5060 = vst [vmem:[%s327 + $0x2c] sm:$0xf] %v5028
        %5061 = vst [vmem:[%s327 + $0x30] sm:$0xf] %v5029
        %5062 = vst [vmem:[%s327 + $0x34] sm:$0xf] %v5030
        %5063 = vst [vmem:[%s327 + $0x38] sm:$0xf] %v5031
        %5064 = vst [vmem:[%s327 + $0x3c] sm:$0xf] %v5032
        %s5065 = sadd.s32 %s330, 9
        %s5066 = smul.u32 %s5065, 3
        %s5067 = smul.addr %s5066, 4
        %s5068 = scalar_lea.vmem %s287, %s5067 [#allocation3]
        %v5069 = vld [vmem:[%s5068] sm:$0xf]
        %v5070 = vld [vmem:[%s5068 + $0x4] sm:$0xf]
        %v5071 = vld [vmem:[%s5068 + $0x8] sm:$0x1]
        %v5072 = vld [vmem:[%s5068 + $0xc] sm:$0xf]
        %v5073 = vld [vmem:[%s5068 + $0x10] sm:$0xf]
        %v5074 = vld [vmem:[%s5068 + $0x14] sm:$0x1]
        %v5075 = vld [vmem:[%s5068 + $0x18] sm:$0xf]
        %v5076 = vld [vmem:[%s5068 + $0x1c] sm:$0xf]
        %v5077 = vld [vmem:[%s5068 + $0x20] sm:$0x1]
        %v5078 = vld [vmem:[%s5068 + $0x24] sm:$0xf]
        %v5079 = vld [vmem:[%s5068 + $0x28] sm:$0xf]
        %v5080 = vld [vmem:[%s5068 + $0x2c] sm:$0x1]
        %v5081 = vld [vmem:[%s5068 + $0x30] sm:$0xf]
        %v5082 = vld [vmem:[%s5068 + $0x34] sm:$0xf]
        %v5083 = vld [vmem:[%s5068 + $0x38] sm:$0x1]
        %v5084 = vld [vmem:[%s5068 + $0x3c] sm:$0xf]
        %v5085 = vld [vmem:[%s5068 + $0x40] sm:$0xf]
        %v5086 = vld [vmem:[%s5068 + $0x44] sm:$0x1]
        %v5087 = vld [vmem:[%s5068 + $0x48] sm:$0xf]
        %v5088 = vld [vmem:[%s5068 + $0x4c] sm:$0xf]
        %v5089 = vld [vmem:[%s5068 + $0x50] sm:$0x1]
        %v5090 = vld [vmem:[%s5068 + $0x54] sm:$0xf]
        %v5091 = vld [vmem:[%s5068 + $0x58] sm:$0xf]
        %v5092 = vld [vmem:[%s5068 + $0x5c] sm:$0x1]
        %v5094 = vshrl.u32 %v5069, 16
        %v5096 = vrot.slane %v5094, 4
        %v5097 = vshll.u32 %v5069, 16
        %v5099 = vrot.slane %v5097, 5
        %v5100 = vor.u32 %v5096, %v5099
        %v5101 = vrot.slane %v5100, 4
        %v5103 = vshll.u32 %v5070, 16
        %v5105 = vrot.slane %v5103, 5
        %v5106 = vsel %vm1691, %v5101, %v5105
        %v5107 = vshrl.u32 %v5070, 16
        %v5109 = vrot.slane %v5107, 4
        %v5110 = vor.u32 %v5109, %v5105
        %v5111 = vrot.slane %v5110, 4
        %v5113 = vshll.u32 %v5071, 16
        %v5115 = vrot.slane %v5113, 5
        %v5116 = vsel %vm1691, %v5111, %v5115
        %v5118 = vshrl.u32 %v5072, 16
        %v5120 = vrot.slane %v5118, 4
        %v5121 = vshll.u32 %v5072, 16
        %v5123 = vrot.slane %v5121, 5
        %v5124 = vor.u32 %v5120, %v5123
        %v5125 = vrot.slane %v5124, 4
        %v5127 = vshll.u32 %v5073, 16
        %v5129 = vrot.slane %v5127, 5
        %v5130 = vsel %vm1691, %v5125, %v5129
        %v5131 = vshrl.u32 %v5073, 16
        %v5133 = vrot.slane %v5131, 4
        %v5134 = vor.u32 %v5133, %v5129
        %v5135 = vrot.slane %v5134, 4
        %v5137 = vshll.u32 %v5074, 16
        %v5139 = vrot.slane %v5137, 5
        %v5140 = vsel %vm1691, %v5135, %v5139
        %v5142 = vshrl.u32 %v5075, 16
        %v5144 = vrot.slane %v5142, 4
        %v5145 = vshll.u32 %v5075, 16
        %v5147 = vrot.slane %v5145, 5
        %v5148 = vor.u32 %v5144, %v5147
        %v5149 = vrot.slane %v5148, 4
        %v5151 = vshll.u32 %v5076, 16
        %v5153 = vrot.slane %v5151, 5
        %v5154 = vsel %vm1691, %v5149, %v5153
        %v5155 = vshrl.u32 %v5076, 16
        %v5157 = vrot.slane %v5155, 4
        %v5158 = vor.u32 %v5157, %v5153
        %v5159 = vrot.slane %v5158, 4
        %v5161 = vshll.u32 %v5077, 16
        %v5163 = vrot.slane %v5161, 5
        %v5164 = vsel %vm1691, %v5159, %v5163
        %v5166 = vshrl.u32 %v5078, 16
        %v5168 = vrot.slane %v5166, 4
        %v5169 = vshll.u32 %v5078, 16
        %v5171 = vrot.slane %v5169, 5
        %v5172 = vor.u32 %v5168, %v5171
        %v5173 = vrot.slane %v5172, 4
        %v5175 = vshll.u32 %v5079, 16
        %v5177 = vrot.slane %v5175, 5
        %v5178 = vsel %vm1691, %v5173, %v5177
        %v5179 = vshrl.u32 %v5079, 16
        %v5181 = vrot.slane %v5179, 4
        %v5182 = vor.u32 %v5181, %v5177
        %v5183 = vrot.slane %v5182, 4
        %v5185 = vshll.u32 %v5080, 16
        %v5187 = vrot.slane %v5185, 5
        %v5188 = vsel %vm1691, %v5183, %v5187
        %v5190 = vshrl.u32 %v5081, 16
        %v5192 = vrot.slane %v5190, 4
        %v5193 = vshll.u32 %v5081, 16
        %v5195 = vrot.slane %v5193, 5
        %v5196 = vor.u32 %v5192, %v5195
        %v5197 = vrot.slane %v5196, 4
        %v5199 = vshll.u32 %v5082, 16
        %v5201 = vrot.slane %v5199, 5
        %v5202 = vsel %vm1691, %v5197, %v5201
        %v5203 = vshrl.u32 %v5082, 16
        %v5205 = vrot.slane %v5203, 4
        %v5206 = vor.u32 %v5205, %v5201
        %v5207 = vrot.slane %v5206, 4
        %v5209 = vshll.u32 %v5083, 16
        %v5211 = vrot.slane %v5209, 5
        %v5212 = vsel %vm1691, %v5207, %v5211
        %v5214 = vshrl.u32 %v5084, 16
        %v5216 = vrot.slane %v5214, 4
        %v5217 = vshll.u32 %v5084, 16
        %v5219 = vrot.slane %v5217, 5
        %v5220 = vor.u32 %v5216, %v5219
        %v5221 = vrot.slane %v5220, 4
        %v5223 = vshll.u32 %v5085, 16
        %v5225 = vrot.slane %v5223, 5
        %v5226 = vsel %vm1691, %v5221, %v5225
        %v5227 = vshrl.u32 %v5085, 16
        %v5229 = vrot.slane %v5227, 4
        %v5230 = vor.u32 %v5229, %v5225
        %v5231 = vrot.slane %v5230, 4
        %v5233 = vshll.u32 %v5086, 16
        %v5235 = vrot.slane %v5233, 5
        %v5236 = vsel %vm1691, %v5231, %v5235
        %v5238 = vshrl.u32 %v5087, 16
        %v5240 = vrot.slane %v5238, 4
        %v5241 = vshll.u32 %v5087, 16
        %v5243 = vrot.slane %v5241, 5
        %v5244 = vor.u32 %v5240, %v5243
        %v5245 = vrot.slane %v5244, 4
        %v5247 = vshll.u32 %v5088, 16
        %v5249 = vrot.slane %v5247, 5
        %v5250 = vsel %vm1691, %v5245, %v5249
        %v5251 = vshrl.u32 %v5088, 16
        %v5253 = vrot.slane %v5251, 4
        %v5254 = vor.u32 %v5253, %v5249
        %v5255 = vrot.slane %v5254, 4
        %v5257 = vshll.u32 %v5089, 16
        %v5259 = vrot.slane %v5257, 5
        %v5260 = vsel %vm1691, %v5255, %v5259
        %v5262 = vshrl.u32 %v5090, 16
        %v5264 = vrot.slane %v5262, 4
        %v5265 = vshll.u32 %v5090, 16
        %v5267 = vrot.slane %v5265, 5
        %v5268 = vor.u32 %v5264, %v5267
        %v5269 = vrot.slane %v5268, 4
        %v5271 = vshll.u32 %v5091, 16
        %v5273 = vrot.slane %v5271, 5
        %v5274 = vsel %vm1691, %v5269, %v5273
        %v5275 = vshrl.u32 %v5091, 16
        %v5277 = vrot.slane %v5275, 4
        %v5278 = vor.u32 %v5277, %v5273
        %v5279 = vrot.slane %v5278, 4
        %v5281 = vshll.u32 %v5092, 16
        %v5283 = vrot.slane %v5281, 5
        %v5284 = vsel %vm1691, %v5279, %v5283
        %v5285 = vunpack.c.l.b16 %v5106
        %v5286 = vunpack.c.l.b16 %v5116
        %v5287 = vunpack.c.l.b16 %v5130
        %v5288 = vunpack.c.l.b16 %v5140
        %v5289 = vunpack.c.l.b16 %v5154
        %v5290 = vunpack.c.l.b16 %v5164
        %v5291 = vunpack.c.l.b16 %v5178
        %v5292 = vunpack.c.l.b16 %v5188
        %v5293 = vunpack.c.l.b16 %v5202
        %v5294 = vunpack.c.l.b16 %v5212
        %v5295 = vunpack.c.l.b16 %v5226
        %v5296 = vunpack.c.l.b16 %v5236
        %v5297 = vunpack.c.l.b16 %v5250
        %v5298 = vunpack.c.l.b16 %v5260
        %v5299 = vunpack.c.l.b16 %v5274
        %v5300 = vunpack.c.l.b16 %v5284
        %v5301 = vpack.c.b16 %v5286, %v5285
        %v5302 = vpack.c.b16 %v5288, %v5287
        %v5303 = vpack.c.b16 %v5290, %v5289
        %v5304 = vpack.c.b16 %v5292, %v5291
        %v5305 = vpack.c.b16 %v5294, %v5293
        %v5306 = vpack.c.b16 %v5296, %v5295
        %v5307 = vpack.c.b16 %v5298, %v5297
        %v5308 = vpack.c.b16 %v5300, %v5299
        %5317 = vmatprep.subr.bf16.mxu0 0
        %5318 = vmatpush1.bf16.msra.mxu0 %v1954
        %5319 = vmatprep.subr.bf16.mxu0 0
        %5320 = vmatpush1.bf16.msra.mxu0 %v1955
        %5321 = vmatprep.subr.bf16.mxu0 0
        %5322 = vmatpush1.bf16.msra.mxu0 %v1956
        %5323 = vmatprep.subr.bf16.mxu0 0
        %5324 = vmatpush1.bf16.msra.mxu0 %v1957
        %5325 = vmatprep.subr.bf16.mxu0 0
        %5326 = vmatpush1.bf16.msra.mxu0 %v1958
        %5327 = vmatprep.subr.bf16.mxu0 0
        %5328 = vmatpush1.bf16.msra.mxu0 %v1959
        %5329 = vmatprep.subr.bf16.mxu0 0
        %5330 = vmatpush1.bf16.msra.mxu0 %v1960
        %5331 = vmatprep.subr.bf16.mxu0 0
        %5332 = vmatpush1.bf16.msra.mxu0 %v1961
        %5333 = vmatprep.subr.bf16.mxu0 0
        %5334 = vmatpush1.bf16.msra.mxu0 0
        %5335 = vmatprep.subr.bf16.mxu0 0
        %5336 = vmatpush1.bf16.msra.mxu0 0
        %5337 = vmatprep.subr.bf16.mxu0 0
        %5338 = vmatpush1.bf16.msra.mxu0 0
        %5339 = vmatprep.subr.bf16.mxu0 0
        %5340 = vmatpush1.bf16.msra.mxu0 0
        %5341 = vmatprep.subr.bf16.mxu0 0
        %5342 = vmatpush1.bf16.msra.mxu0 0
        %5343 = vmatprep.subr.bf16.mxu0 0
        %5344 = vmatpush1.bf16.msra.mxu0 0
        %5345 = vmatprep.subr.bf16.mxu0 0
        %5346 = vmatpush1.bf16.msra.mxu0 0
        %5347 = vmatprep.subr.bf16.mxu0 0
        %5348 = vmatpush1.bf16.msra.mxu0 0
        %5349 = vmatprep.mubr.bf16.mxu0 0
        %5350 = vmatmul.mubr.bf16.gmra.mrb[0].mxu0 %v5301
        %v5351 = vpop.f32.mrb[0].mxu0
        %v5352 = vadd.f32 %v1888, %v5351
        %v5353 = vpop.f32.mrb[0].mxu0
        %v5354 = vpop.f32.mrb[0].mxu0
        %v5355 = vadd.f32 %v1888, %v5354
        %v5356 = vpop.f32.mrb[0].mxu0
        %5357 = vmatprep.mubr.bf16.mxu0 0
        %5358 = vmatmul.mubr.bf16.gmra.mrb[0].mxu0 %v5302
        %v5359 = vpop.f32.mrb[0].mxu0
        %v5360 = vadd.f32 %v1888, %v5359
        %v5361 = vpop.f32.mrb[0].mxu0
        %v5362 = vpop.f32.mrb[0].mxu0
        %v5363 = vadd.f32 %v1888, %v5362
        %v5364 = vpop.f32.mrb[0].mxu0
        %5365 = vmatprep.mubr.bf16.mxu0 0
        %5366 = vmatmul.mubr.bf16.gmra.mrb[0].mxu0 %v5303
        %v5367 = vpop.f32.mrb[0].mxu0
        %v5368 = vadd.f32 %v1888, %v5367
        %v5369 = vpop.f32.mrb[0].mxu0
        %v5370 = vpop.f32.mrb[0].mxu0
        %v5371 = vadd.f32 %v1888, %v5370
        %v5372 = vpop.f32.mrb[0].mxu0
        %5373 = vmatprep.mubr.bf16.mxu0 0
        %5374 = vmatmul.mubr.bf16.gmra.mrb[0].mxu0 %v5304
        %v5375 = vpop.f32.mrb[0].mxu0
        %v5376 = vadd.f32 %v1888, %v5375
        %v5377 = vpop.f32.mrb[0].mxu0
        %v5378 = vpop.f32.mrb[0].mxu0
        %v5379 = vadd.f32 %v1888, %v5378
        %v5380 = vpop.f32.mrb[0].mxu0
        %5381 = vmatprep.mubr.bf16.mxu0 0
        %5382 = vmatmul.mubr.bf16.gmra.mrb[0].mxu0 %v5305
        %v5383 = vpop.f32.mrb[0].mxu0
        %v5384 = vadd.f32 %v1888, %v5383
        %v5385 = vpop.f32.mrb[0].mxu0
        %v5386 = vpop.f32.mrb[0].mxu0
        %v5387 = vadd.f32 %v1888, %v5386
        %v5388 = vpop.f32.mrb[0].mxu0
        %5389 = vmatprep.mubr.bf16.mxu0 0
        %5390 = vmatmul.mubr.bf16.gmra.mrb[0].mxu0 %v5306
        %v5391 = vpop.f32.mrb[0].mxu0
        %v5392 = vadd.f32 %v1888, %v5391
        %v5393 = vpop.f32.mrb[0].mxu0
        %v5394 = vpop.f32.mrb[0].mxu0
        %v5395 = vadd.f32 %v1888, %v5394
        %v5396 = vpop.f32.mrb[0].mxu0
        %5397 = vmatprep.mubr.bf16.mxu0 0
        %5398 = vmatmul.mubr.bf16.gmra.mrb[0].mxu0 %v5307
        %v5399 = vpop.f32.mrb[0].mxu0
        %v5400 = vadd.f32 %v1888, %v5399
        %v5401 = vpop.f32.mrb[0].mxu0
        %v5402 = vpop.f32.mrb[0].mxu0
        %v5403 = vadd.f32 %v1888, %v5402
        %v5404 = vpop.f32.mrb[0].mxu0
        %5405 = vmatprep.mubr.bf16.mxu0 0
        %5406 = vmatmul.mubr.bf16.gmra.mrb[0].mxu0 %v5308
        %v5407 = vpop.f32.mrb[0].mxu0
        %v5408 = vadd.f32 %v1888, %v5407
        %v5409 = vpop.f32.mrb[0].mxu0
        %v5410 = vpop.f32.mrb[0].mxu0
        %v5411 = vadd.f32 %v1888, %v5410
        %v5412 = vpop.f32.mrb[0].mxu0
        %5413 = vdwg.mxu0
        %v5414 = vld [vmem:[%s1494] sm:$0xf]
        %v5415 = vld [vmem:[%s1494 + $0x4] sm:$0xf]
        %v5416 = vld [vmem:[%s1494 + $0xc] sm:$0xf]
        %v5417 = vld [vmem:[%s1494 + $0x10] sm:$0xf]
        %v5418 = vld [vmem:[%s1494 + $0x18] sm:$0xf]
        %v5419 = vld [vmem:[%s1494 + $0x1c] sm:$0xf]
        %v5420 = vld [vmem:[%s1494 + $0x24] sm:$0xf]
        %v5421 = vld [vmem:[%s1494 + $0x28] sm:$0xf]
        %v5422 = vld [vmem:[%s1494 + $0x30] sm:$0xf]
        %v5423 = vld [vmem:[%s1494 + $0x34] sm:$0xf]
        %v5424 = vld [vmem:[%s1494 + $0x3c] sm:$0xf]
        %v5425 = vld [vmem:[%s1494 + $0x40] sm:$0xf]
        %v5426 = vld [vmem:[%s1494 + $0x48] sm:$0xf]
        %v5427 = vld [vmem:[%s1494 + $0x4c] sm:$0xf]
        %v5428 = vld [vmem:[%s1494 + $0x54] sm:$0xf]
        %v5429 = vld [vmem:[%s1494 + $0x58] sm:$0xf]
        %v5430 = vld [vmem:[#allocation8] sm:$0xf]
        %v5431 = vld [vmem:[#allocation8 + $0x4] sm:$0xf]
        %v5432 = vld [vmem:[#allocation8 + $0x8] sm:$0xf]
        %v5433 = vld [vmem:[#allocation8 + $0xc] sm:$0xf]
        %v5434 = vld [vmem:[#allocation8 + $0x10] sm:$0xf]
        %v5435 = vld [vmem:[#allocation8 + $0x14] sm:$0xf]
        %v5436 = vld [vmem:[#allocation8 + $0x18] sm:$0xf]
        %v5437 = vld [vmem:[#allocation8 + $0x1c] sm:$0xf]
        %v5438 = vld [vmem:[#allocation8 + $0x20] sm:$0xf]
        %v5439 = vld [vmem:[#allocation8 + $0x24] sm:$0xf]
        %v5440 = vld [vmem:[#allocation8 + $0x28] sm:$0xf]
        %v5441 = vld [vmem:[#allocation8 + $0x2c] sm:$0xf]
        %v5442 = vld [vmem:[#allocation8 + $0x30] sm:$0xf]
        %v5443 = vld [vmem:[#allocation8 + $0x34] sm:$0xf]
        %v5444 = vld [vmem:[#allocation8 + $0x38] sm:$0xf]
        %v5445 = vld [vmem:[#allocation8 + $0x3c] sm:$0xf]
        %v5462 = vunpack.c.l.b16 %v5414
        %v5463 = vunpack.c.l.b16 %v5415
        %v5464 = vunpack.c.l.b16 %v5416
        %v5465 = vunpack.c.l.b16 %v5417
        %v5466 = vunpack.c.l.b16 %v5418
        %v5467 = vunpack.c.l.b16 %v5419
        %v5468 = vunpack.c.l.b16 %v5420
        %v5469 = vunpack.c.l.b16 %v5421
        %v5470 = vunpack.c.l.b16 %v5422
        %v5471 = vunpack.c.l.b16 %v5423
        %v5472 = vunpack.c.l.b16 %v5424
        %v5473 = vunpack.c.l.b16 %v5425
        %v5474 = vunpack.c.l.b16 %v5426
        %v5475 = vunpack.c.l.b16 %v5427
        %v5476 = vunpack.c.l.b16 %v5428
        %v5477 = vunpack.c.l.b16 %v5429
        %v5478 = vpack.c.b16 %v5463, %v5462
        %v5479 = vpack.c.b16 %v5465, %v5464
        %v5480 = vpack.c.b16 %v5467, %v5466
        %v5481 = vpack.c.b16 %v5469, %v5468
        %v5482 = vpack.c.b16 %v5471, %v5470
        %v5483 = vpack.c.b16 %v5473, %v5472
        %v5484 = vpack.c.b16 %v5475, %v5474
        %v5485 = vpack.c.b16 %v5477, %v5476
        %v5510 = vunpack.c.l.b16 %v5430
        %v5511 = vunpack.c.l.b16 %v5431
        %v5512 = vunpack.c.l.b16 %v5432
        %v5513 = vunpack.c.l.b16 %v5433
        %v5514 = vunpack.c.l.b16 %v5434
        %v5515 = vunpack.c.l.b16 %v5435
        %v5516 = vunpack.c.l.b16 %v5436
        %v5517 = vunpack.c.l.b16 %v5437
        %v5518 = vunpack.c.l.b16 %v5438
        %v5519 = vunpack.c.l.b16 %v5439
        %v5520 = vunpack.c.l.b16 %v5440
        %v5521 = vunpack.c.l.b16 %v5441
        %v5522 = vunpack.c.l.b16 %v5442
        %v5523 = vunpack.c.l.b16 %v5443
        %v5524 = vunpack.c.l.b16 %v5444
        %v5525 = vunpack.c.l.b16 %v5445
        %v5526 = vpack.c.b16 %v5511, %v5510
        %v5527 = vpack.c.b16 %v5513, %v5512
        %v5528 = vpack.c.b16 %v5515, %v5514
        %v5529 = vpack.c.b16 %v5517, %v5516
        %v5530 = vpack.c.b16 %v5519, %v5518
        %v5531 = vpack.c.b16 %v5521, %v5520
        %v5532 = vpack.c.b16 %v5523, %v5522
        %v5533 = vpack.c.b16 %v5525, %v5524
        %5542 = vmatprep.subr.bf16.mxu0 0
        %5543 = vmatpush1.bf16.msra.mxu0 %v5526
        %5544 = vmatprep.subr.bf16.mxu0 0
        %5545 = vmatpush1.bf16.msra.mxu0 %v5527
        %5546 = vmatprep.subr.bf16.mxu0 0
        %5547 = vmatpush1.bf16.msra.mxu0 %v5528
        %5548 = vmatprep.subr.bf16.mxu0 0
        %5549 = vmatpush1.bf16.msra.mxu0 %v5529
        %5550 = vmatprep.subr.bf16.mxu0 0
        %5551 = vmatpush1.bf16.msra.mxu0 %v5530
        %5552 = vmatprep.subr.bf16.mxu0 0
        %5553 = vmatpush1.bf16.msra.mxu0 %v5531
        %5554 = vmatprep.subr.bf16.mxu0 0
        %5555 = vmatpush1.bf16.msra.mxu0 %v5532
        %5556 = vmatprep.subr.bf16.mxu0 0
        %5557 = vmatpush1.bf16.msra.mxu0 %v5533
        %5558 = vmatprep.subr.bf16.mxu0 0
        %5559 = vmatpush1.bf16.msra.mxu0 0
        %5560 = vmatprep.subr.bf16.mxu0 0
        %5561 = vmatpush1.bf16.msra.mxu0 0
        %5562 = vmatprep.subr.bf16.mxu0 0
        %5563 = vmatpush1.bf16.msra.mxu0 0
        %5564 = vmatprep.subr.bf16.mxu0 0
        %5565 = vmatpush1.bf16.msra.mxu0 0
        %5566 = vmatprep.subr.bf16.mxu0 0
        %5567 = vmatpush1.bf16.msra.mxu0 0
        %5568 = vmatprep.subr.bf16.mxu0 0
        %5569 = vmatpush1.bf16.msra.mxu0 0
        %5570 = vmatprep.subr.bf16.mxu0 0
        %5571 = vmatpush1.bf16.msra.mxu0 0
        %5572 = vmatprep.subr.bf16.mxu0 0
        %5573 = vmatpush1.bf16.msra.mxu0 0
        %5574 = vmatprep.mubr.bf16.mxu0 0
        %5575 = vmatmul.mubr.bf16.gmra.mrb[0].mxu0 %v5478
        %v5576 = vpop.f32.mrb[0].mxu0
        %v5577 = vadd.f32 0.0, %v5576
        %v5578 = vpop.f32.mrb[0].mxu0
        %v5579 = vpop.f32.mrb[0].mxu0
        %v5580 = vadd.f32 0.0, %v5579
        %v5581 = vpop.f32.mrb[0].mxu0
        %5582 = vmatprep.mubr.bf16.mxu0 0
        %5583 = vmatmul.mubr.bf16.gmra.mrb[0].mxu0 %v5479
        %v5584 = vpop.f32.mrb[0].mxu0
        %v5585 = vadd.f32 0.0, %v5584
        %v5586 = vpop.f32.mrb[0].mxu0
        %v5587 = vpop.f32.mrb[0].mxu0
        %v5588 = vadd.f32 0.0, %v5587
        %v5589 = vpop.f32.mrb[0].mxu0
        %5590 = vmatprep.mubr.bf16.mxu0 0
        %5591 = vmatmul.mubr.bf16.gmra.mrb[0].mxu0 %v5480
        %v5592 = vpop.f32.mrb[0].mxu0
        %v5593 = vadd.f32 0.0, %v5592
        %v5594 = vpop.f32.mrb[0].mxu0
        %v5595 = vpop.f32.mrb[0].mxu0
        %v5596 = vadd.f32 0.0, %v5595
        %v5597 = vpop.f32.mrb[0].mxu0
        %5598 = vmatprep.mubr.bf16.mxu0 0
        %5599 = vmatmul.mubr.bf16.gmra.mrb[0].mxu0 %v5481
        %v5600 = vpop.f32.mrb[0].mxu0
        %v5601 = vadd.f32 0.0, %v5600
        %v5602 = vpop.f32.mrb[0].mxu0
        %v5603 = vpop.f32.mrb[0].mxu0
        %v5604 = vadd.f32 0.0, %v5603
        %v5605 = vpop.f32.mrb[0].mxu0
        %5606 = vmatprep.mubr.bf16.mxu0 0
        %5607 = vmatmul.mubr.bf16.gmra.mrb[0].mxu0 %v5482
        %v5608 = vpop.f32.mrb[0].mxu0
        %v5609 = vadd.f32 0.0, %v5608
        %v5610 = vpop.f32.mrb[0].mxu0
        %v5611 = vpop.f32.mrb[0].mxu0
        %v5612 = vadd.f32 0.0, %v5611
        %v5613 = vpop.f32.mrb[0].mxu0
        %5614 = vmatprep.mubr.bf16.mxu0 0
        %5615 = vmatmul.mubr.bf16.gmra.mrb[0].mxu0 %v5483
        %v5616 = vpop.f32.mrb[0].mxu0
        %v5617 = vadd.f32 0.0, %v5616
        %v5618 = vpop.f32.mrb[0].mxu0
        %v5619 = vpop.f32.mrb[0].mxu0
        %v5620 = vadd.f32 0.0, %v5619
        %v5621 = vpop.f32.mrb[0].mxu0
        %5622 = vmatprep.mubr.bf16.mxu0 0
        %5623 = vmatmul.mubr.bf16.gmra.mrb[0].mxu0 %v5484
        %v5624 = vpop.f32.mrb[0].mxu0
        %v5625 = vadd.f32 0.0, %v5624
        %v5626 = vpop.f32.mrb[0].mxu0
        %v5627 = vpop.f32.mrb[0].mxu0
        %v5628 = vadd.f32 0.0, %v5627
        %v5629 = vpop.f32.mrb[0].mxu0
        %5630 = vmatprep.mubr.bf16.mxu0 0
        %5631 = vmatmul.mubr.bf16.gmra.mrb[0].mxu0 %v5485
        %v5632 = vpop.f32.mrb[0].mxu0
        %v5633 = vadd.f32 0.0, %v5632
        %v5634 = vpop.f32.mrb[0].mxu0
        %v5635 = vpop.f32.mrb[0].mxu0
        %v5636 = vadd.f32 0.0, %v5635
        %v5637 = vpop.f32.mrb[0].mxu0
        %5638 = vdwg.mxu0
        %v5639 = vadd.f32 %v5352, %v5577
        %v5640 = vadd.f32 %v5355, %v5580
        %v5641 = vadd.f32 %v5360, %v5585
        %v5642 = vadd.f32 %v5363, %v5588
        %v5643 = vadd.f32 %v5368, %v5593
        %v5644 = vadd.f32 %v5371, %v5596
        %v5645 = vadd.f32 %v5376, %v5601
        %v5646 = vadd.f32 %v5379, %v5604
        %v5647 = vadd.f32 %v5384, %v5609
        %v5648 = vadd.f32 %v5387, %v5612
        %v5649 = vadd.f32 %v5392, %v5617
        %v5650 = vadd.f32 %v5395, %v5620
        %v5651 = vadd.f32 %v5400, %v5625
        %v5652 = vadd.f32 %v5403, %v5628
        %v5653 = vadd.f32 %v5408, %v5633
        %v5654 = vadd.f32 %v5411, %v5636
        %v5655 = vld [vmem:[%s1494] sm:$0xf]
        %v5656 = vld [vmem:[%s1494 + $0x4] sm:$0xf]
        %v5657 = vld [vmem:[%s1494 + $0x8] sm:$0x1]
        %v5658 = vld [vmem:[%s1494 + $0xc] sm:$0xf]
        %v5659 = vld [vmem:[%s1494 + $0x10] sm:$0xf]
        %v5660 = vld [vmem:[%s1494 + $0x14] sm:$0x1]
        %v5661 = vld [vmem:[%s1494 + $0x18] sm:$0xf]
        %v5662 = vld [vmem:[%s1494 + $0x1c] sm:$0xf]
        %v5663 = vld [vmem:[%s1494 + $0x20] sm:$0x1]
        %v5664 = vld [vmem:[%s1494 + $0x24] sm:$0xf]
        %v5665 = vld [vmem:[%s1494 + $0x28] sm:$0xf]
        %v5666 = vld [vmem:[%s1494 + $0x2c] sm:$0x1]
        %v5667 = vld [vmem:[%s1494 + $0x30] sm:$0xf]
        %v5668 = vld [vmem:[%s1494 + $0x34] sm:$0xf]
        %v5669 = vld [vmem:[%s1494 + $0x38] sm:$0x1]
        %v5670 = vld [vmem:[%s1494 + $0x3c] sm:$0xf]
        %v5671 = vld [vmem:[%s1494 + $0x40] sm:$0xf]
        %v5672 = vld [vmem:[%s1494 + $0x44] sm:$0x1]
        %v5673 = vld [vmem:[%s1494 + $0x48] sm:$0xf]
        %v5674 = vld [vmem:[%s1494 + $0x4c] sm:$0xf]
        %v5675 = vld [vmem:[%s1494 + $0x50] sm:$0x1]
        %v5676 = vld [vmem:[%s1494 + $0x54] sm:$0xf]
        %v5677 = vld [vmem:[%s1494 + $0x58] sm:$0xf]
        %v5678 = vld [vmem:[%s1494 + $0x5c] sm:$0x1]
        %v5680 = vshrl.u32 %v5655, 16
        %v5682 = vrot.slane %v5680, 4
        %v5683 = vshll.u32 %v5655, 16
        %v5685 = vrot.slane %v5683, 5
        %v5686 = vor.u32 %v5682, %v5685
        %v5687 = vrot.slane %v5686, 4
        %v5689 = vshll.u32 %v5656, 16
        %v5691 = vrot.slane %v5689, 5
        %v5692 = vsel %vm1691, %v5687, %v5691
        %v5693 = vshrl.u32 %v5656, 16
        %v5695 = vrot.slane %v5693, 4
        %v5696 = vor.u32 %v5695, %v5691
        %v5697 = vrot.slane %v5696, 4
        %v5699 = vshll.u32 %v5657, 16
        %v5701 = vrot.slane %v5699, 5
        %v5702 = vsel %vm1691, %v5697, %v5701
        %v5704 = vshrl.u32 %v5658, 16
        %v5706 = vrot.slane %v5704, 4
        %v5707 = vshll.u32 %v5658, 16
        %v5709 = vrot.slane %v5707, 5
        %v5710 = vor.u32 %v5706, %v5709
        %v5711 = vrot.slane %v5710, 4
        %v5713 = vshll.u32 %v5659, 16
        %v5715 = vrot.slane %v5713, 5
        %v5716 = vsel %vm1691, %v5711, %v5715
        %v5717 = vshrl.u32 %v5659, 16
        %v5719 = vrot.slane %v5717, 4
        %v5720 = vor.u32 %v5719, %v5715
        %v5721 = vrot.slane %v5720, 4
        %v5723 = vshll.u32 %v5660, 16
        %v5725 = vrot.slane %v5723, 5
        %v5726 = vsel %vm1691, %v5721, %v5725
        %v5728 = vshrl.u32 %v5661, 16
        %v5730 = vrot.slane %v5728, 4
        %v5731 = vshll.u32 %v5661, 16
        %v5733 = vrot.slane %v5731, 5
        %v5734 = vor.u32 %v5730, %v5733
        %v5735 = vrot.slane %v5734, 4
        %v5737 = vshll.u32 %v5662, 16
        %v5739 = vrot.slane %v5737, 5
        %v5740 = vsel %vm1691, %v5735, %v5739
        %v5741 = vshrl.u32 %v5662, 16
        %v5743 = vrot.slane %v5741, 4
        %v5744 = vor.u32 %v5743, %v5739
        %v5745 = vrot.slane %v5744, 4
        %v5747 = vshll.u32 %v5663, 16
        %v5749 = vrot.slane %v5747, 5
        %v5750 = vsel %vm1691, %v5745, %v5749
        %v5752 = vshrl.u32 %v5664, 16
        %v5754 = vrot.slane %v5752, 4
        %v5755 = vshll.u32 %v5664, 16
        %v5757 = vrot.slane %v5755, 5
        %v5758 = vor.u32 %v5754, %v5757
        %v5759 = vrot.slane %v5758, 4
        %v5761 = vshll.u32 %v5665, 16
        %v5763 = vrot.slane %v5761, 5
        %v5764 = vsel %vm1691, %v5759, %v5763
        %v5765 = vshrl.u32 %v5665, 16
        %v5767 = vrot.slane %v5765, 4
        %v5768 = vor.u32 %v5767, %v5763
        %v5769 = vrot.slane %v5768, 4
        %v5771 = vshll.u32 %v5666, 16
        %v5773 = vrot.slane %v5771, 5
        %v5774 = vsel %vm1691, %v5769, %v5773
        %v5776 = vshrl.u32 %v5667, 16
        %v5778 = vrot.slane %v5776, 4
        %v5779 = vshll.u32 %v5667, 16
        %v5781 = vrot.slane %v5779, 5
        %v5782 = vor.u32 %v5778, %v5781
        %v5783 = vrot.slane %v5782, 4
        %v5785 = vshll.u32 %v5668, 16
        %v5787 = vrot.slane %v5785, 5
        %v5788 = vsel %vm1691, %v5783, %v5787
        %v5789 = vshrl.u32 %v5668, 16
        %v5791 = vrot.slane %v5789, 4
        %v5792 = vor.u32 %v5791, %v5787
        %v5793 = vrot.slane %v5792, 4
        %v5795 = vshll.u32 %v5669, 16
        %v5797 = vrot.slane %v5795, 5
        %v5798 = vsel %vm1691, %v5793, %v5797
        %v5800 = vshrl.u32 %v5670, 16
        %v5802 = vrot.slane %v5800, 4
        %v5803 = vshll.u32 %v5670, 16
        %v5805 = vrot.slane %v5803, 5
        %v5806 = vor.u32 %v5802, %v5805
        %v5807 = vrot.slane %v5806, 4
        %v5809 = vshll.u32 %v5671, 16
        %v5811 = vrot.slane %v5809, 5
        %v5812 = vsel %vm1691, %v5807, %v5811
        %v5813 = vshrl.u32 %v5671, 16
        %v5815 = vrot.slane %v5813, 4
        %v5816 = vor.u32 %v5815, %v5811
        %v5817 = vrot.slane %v5816, 4
        %v5819 = vshll.u32 %v5672, 16
        %v5821 = vrot.slane %v5819, 5
        %v5822 = vsel %vm1691, %v5817, %v5821
        %v5824 = vshrl.u32 %v5673, 16
        %v5826 = vrot.slane %v5824, 4
        %v5827 = vshll.u32 %v5673, 16
        %v5829 = vrot.slane %v5827, 5
        %v5830 = vor.u32 %v5826, %v5829
        %v5831 = vrot.slane %v5830, 4
        %v5833 = vshll.u32 %v5674, 16
        %v5835 = vrot.slane %v5833, 5
        %v5836 = vsel %vm1691, %v5831, %v5835
        %v5837 = vshrl.u32 %v5674, 16
        %v5839 = vrot.slane %v5837, 4
        %v5840 = vor.u32 %v5839, %v5835
        %v5841 = vrot.slane %v5840, 4
        %v5843 = vshll.u32 %v5675, 16
        %v5845 = vrot.slane %v5843, 5
        %v5846 = vsel %vm1691, %v5841, %v5845
        %v5848 = vshrl.u32 %v5676, 16
        %v5850 = vrot.slane %v5848, 4
        %v5851 = vshll.u32 %v5676, 16
        %v5853 = vrot.slane %v5851, 5
        %v5854 = vor.u32 %v5850, %v5853
        %v5855 = vrot.slane %v5854, 4
        %v5857 = vshll.u32 %v5677, 16
        %v5859 = vrot.slane %v5857, 5
        %v5860 = vsel %vm1691, %v5855, %v5859
        %v5861 = vshrl.u32 %v5677, 16
        %v5863 = vrot.slane %v5861, 4
        %v5864 = vor.u32 %v5863, %v5859
        %v5865 = vrot.slane %v5864, 4
        %v5867 = vshll.u32 %v5678, 16
        %v5869 = vrot.slane %v5867, 5
        %v5870 = vsel %vm1691, %v5865, %v5869
        %v5871 = vld [vmem:[%s2524] sm:$0xf]
        %v5872 = vld [vmem:[%s2524 + $0x4] sm:$0xf]
        %v5873 = vld [vmem:[%s2524 + $0x8] sm:$0xf]
        %v5874 = vld [vmem:[%s2524 + $0xc] sm:$0xf]
        %v5875 = vld [vmem:[%s2524 + $0x10] sm:$0xf]
        %v5876 = vld [vmem:[%s2524 + $0x14] sm:$0xf]
        %v5877 = vld [vmem:[%s2524 + $0x18] sm:$0xf]
        %v5878 = vld [vmem:[%s2524 + $0x1c] sm:$0xf]
        %v5879 = vld [vmem:[%s2524 + $0x20] sm:$0xf]
        %v5880 = vld [vmem:[%s2524 + $0x24] sm:$0xf]
        %v5881 = vld [vmem:[%s2524 + $0x28] sm:$0xf]
        %v5882 = vld [vmem:[%s2524 + $0x2c] sm:$0xf]
        %v5883 = vld [vmem:[%s2524 + $0x30] sm:$0xf]
        %v5884 = vld [vmem:[%s2524 + $0x34] sm:$0xf]
        %v5885 = vld [vmem:[%s2524 + $0x38] sm:$0xf]
        %v5886 = vld [vmem:[%s2524 + $0x3c] sm:$0xf]
        %v5887 = vunpack.c.l.b16 %v5692
        %v5888 = vunpack.c.l.b16 %v5702
        %v5889 = vunpack.c.l.b16 %v5716
        %v5890 = vunpack.c.l.b16 %v5726
        %v5891 = vunpack.c.l.b16 %v5740
        %v5892 = vunpack.c.l.b16 %v5750
        %v5893 = vunpack.c.l.b16 %v5764
        %v5894 = vunpack.c.l.b16 %v5774
        %v5895 = vunpack.c.l.b16 %v5788
        %v5896 = vunpack.c.l.b16 %v5798
        %v5897 = vunpack.c.l.b16 %v5812
        %v5898 = vunpack.c.l.b16 %v5822
        %v5899 = vunpack.c.l.b16 %v5836
        %v5900 = vunpack.c.l.b16 %v5846
        %v5901 = vunpack.c.l.b16 %v5860
        %v5902 = vunpack.c.l.b16 %v5870
        %v5903 = vpack.c.b16 %v5888, %v5887
        %v5904 = vpack.c.b16 %v5890, %v5889
        %v5905 = vpack.c.b16 %v5892, %v5891
        %v5906 = vpack.c.b16 %v5894, %v5893
        %v5907 = vpack.c.b16 %v5896, %v5895
        %v5908 = vpack.c.b16 %v5898, %v5897
        %v5909 = vpack.c.b16 %v5900, %v5899
        %v5910 = vpack.c.b16 %v5902, %v5901
        %v5935 = vunpack.c.l.b16 %v5871
        %v5936 = vunpack.c.l.b16 %v5872
        %v5937 = vunpack.c.l.b16 %v5873
        %v5938 = vunpack.c.l.b16 %v5874
        %v5939 = vunpack.c.l.b16 %v5875
        %v5940 = vunpack.c.l.b16 %v5876
        %v5941 = vunpack.c.l.b16 %v5877
        %v5942 = vunpack.c.l.b16 %v5878
        %v5943 = vunpack.c.l.b16 %v5879
        %v5944 = vunpack.c.l.b16 %v5880
        %v5945 = vunpack.c.l.b16 %v5881
        %v5946 = vunpack.c.l.b16 %v5882
        %v5947 = vunpack.c.l.b16 %v5883
        %v5948 = vunpack.c.l.b16 %v5884
        %v5949 = vunpack.c.l.b16 %v5885
        %v5950 = vunpack.c.l.b16 %v5886
        %v5951 = vpack.c.b16 %v5936, %v5935
        %v5952 = vpack.c.b16 %v5938, %v5937
        %v5953 = vpack.c.b16 %v5940, %v5939
        %v5954 = vpack.c.b16 %v5942, %v5941
        %v5955 = vpack.c.b16 %v5944, %v5943
        %v5956 = vpack.c.b16 %v5946, %v5945
        %v5957 = vpack.c.b16 %v5948, %v5947
        %v5958 = vpack.c.b16 %v5950, %v5949
        %5967 = vmatprep.subr.bf16.mxu0 0
        %5968 = vmatpush1.bf16.msra.mxu0 %v5951
        %5969 = vmatprep.subr.bf16.mxu0 0
        %5970 = vmatpush1.bf16.msra.mxu0 %v5952
        %5971 = vmatprep.subr.bf16.mxu0 0
        %5972 = vmatpush1.bf16.msra.mxu0 %v5953
        %5973 = vmatprep.subr.bf16.mxu0 0
        %5974 = vmatpush1.bf16.msra.mxu0 %v5954
        %5975 = vmatprep.subr.bf16.mxu0 0
        %5976 = vmatpush1.bf16.msra.mxu0 %v5955
        %5977 = vmatprep.subr.bf16.mxu0 0
        %5978 = vmatpush1.bf16.msra.mxu0 %v5956
        %5979 = vmatprep.subr.bf16.mxu0 0
        %5980 = vmatpush1.bf16.msra.mxu0 %v5957
        %5981 = vmatprep.subr.bf16.mxu0 0
        %5982 = vmatpush1.bf16.msra.mxu0 %v5958
        %5983 = vmatprep.subr.bf16.mxu0 0
        %5984 = vmatpush1.bf16.msra.mxu0 0
        %5985 = vmatprep.subr.bf16.mxu0 0
        %5986 = vmatpush1.bf16.msra.mxu0 0
        %5987 = vmatprep.subr.bf16.mxu0 0
        %5988 = vmatpush1.bf16.msra.mxu0 0
        %5989 = vmatprep.subr.bf16.mxu0 0
        %5990 = vmatpush1.bf16.msra.mxu0 0
        %5991 = vmatprep.subr.bf16.mxu0 0
        %5992 = vmatpush1.bf16.msra.mxu0 0
        %5993 = vmatprep.subr.bf16.mxu0 0
        %5994 = vmatpush1.bf16.msra.mxu0 0
        %5995 = vmatprep.subr.bf16.mxu0 0
        %5996 = vmatpush1.bf16.msra.mxu0 0
        %5997 = vmatprep.subr.bf16.mxu0 0
        %5998 = vmatpush1.bf16.msra.mxu0 0
        %5999 = vmatprep.mubr.bf16.mxu0 0
        %6000 = vmatmul.mubr.bf16.gmra.mrb[0].mxu0 %v5903
        %v6001 = vpop.f32.mrb[0].mxu0
        %v6002 = vadd.f32 0.0, %v6001
        %v6003 = vpop.f32.mrb[0].mxu0
        %v6004 = vpop.f32.mrb[0].mxu0
        %v6005 = vadd.f32 0.0, %v6004
        %v6006 = vpop.f32.mrb[0].mxu0
        %6007 = vmatprep.mubr.bf16.mxu0 0
        %6008 = vmatmul.mubr.bf16.gmra.mrb[0].mxu0 %v5904
        %v6009 = vpop.f32.mrb[0].mxu0
        %v6010 = vadd.f32 0.0, %v6009
        %v6011 = vpop.f32.mrb[0].mxu0
        %v6012 = vpop.f32.mrb[0].mxu0
        %v6013 = vadd.f32 0.0, %v6012
        %v6014 = vpop.f32.mrb[0].mxu0
        %6015 = vmatprep.mubr.bf16.mxu0 0
        %6016 = vmatmul.mubr.bf16.gmra.mrb[0].mxu0 %v5905
        %v6017 = vpop.f32.mrb[0].mxu0
        %v6018 = vadd.f32 0.0, %v6017
        %v6019 = vpop.f32.mrb[0].mxu0
        %v6020 = vpop.f32.mrb[0].mxu0
        %v6021 = vadd.f32 0.0, %v6020
        %v6022 = vpop.f32.mrb[0].mxu0
        %6023 = vmatprep.mubr.bf16.mxu0 0
        %6024 = vmatmul.mubr.bf16.gmra.mrb[0].mxu0 %v5906
        %v6025 = vpop.f32.mrb[0].mxu0
        %v6026 = vadd.f32 0.0, %v6025
        %v6027 = vpop.f32.mrb[0].mxu0
        %v6028 = vpop.f32.mrb[0].mxu0
        %v6029 = vadd.f32 0.0, %v6028
        %v6030 = vpop.f32.mrb[0].mxu0
        %6031 = vmatprep.mubr.bf16.mxu0 0
        %6032 = vmatmul.mubr.bf16.gmra.mrb[0].mxu0 %v5907
        %v6033 = vpop.f32.mrb[0].mxu0
        %v6034 = vadd.f32 0.0, %v6033
        %v6035 = vpop.f32.mrb[0].mxu0
        %v6036 = vpop.f32.mrb[0].mxu0
        %v6037 = vadd.f32 0.0, %v6036
        %v6038 = vpop.f32.mrb[0].mxu0
        %6039 = vmatprep.mubr.bf16.mxu0 0
        %6040 = vmatmul.mubr.bf16.gmra.mrb[0].mxu0 %v5908
        %v6041 = vpop.f32.mrb[0].mxu0
        %v6042 = vadd.f32 0.0, %v6041
        %v6043 = vpop.f32.mrb[0].mxu0
        %v6044 = vpop.f32.mrb[0].mxu0
        %v6045 = vadd.f32 0.0, %v6044
        %v6046 = vpop.f32.mrb[0].mxu0
        %6047 = vmatprep.mubr.bf16.mxu0 0
        %6048 = vmatmul.mubr.bf16.gmra.mrb[0].mxu0 %v5909
        %v6049 = vpop.f32.mrb[0].mxu0
        %v6050 = vadd.f32 0.0, %v6049
        %v6051 = vpop.f32.mrb[0].mxu0
        %v6052 = vpop.f32.mrb[0].mxu0
        %v6053 = vadd.f32 0.0, %v6052
        %v6054 = vpop.f32.mrb[0].mxu0
        %6055 = vmatprep.mubr.bf16.mxu0 0
        %6056 = vmatmul.mubr.bf16.gmra.mrb[0].mxu0 %v5910
        %v6057 = vpop.f32.mrb[0].mxu0
        %v6058 = vadd.f32 0.0, %v6057
        %v6059 = vpop.f32.mrb[0].mxu0
        %v6060 = vpop.f32.mrb[0].mxu0
        %v6061 = vadd.f32 0.0, %v6060
        %v6062 = vpop.f32.mrb[0].mxu0
        %6063 = vdwg.mxu0
        %v6064 = vadd.f32 %v5639, %v6002
        %v6065 = vadd.f32 %v5640, %v6005
        %v6066 = vadd.f32 %v5641, %v6010
        %v6067 = vadd.f32 %v5642, %v6013
        %v6068 = vadd.f32 %v5643, %v6018
        %v6069 = vadd.f32 %v5644, %v6021
        %v6070 = vadd.f32 %v5645, %v6026
        %v6071 = vadd.f32 %v5646, %v6029
        %v6072 = vadd.f32 %v5647, %v6034
        %v6073 = vadd.f32 %v5648, %v6037
        %v6074 = vadd.f32 %v5649, %v6042
        %v6075 = vadd.f32 %v5650, %v6045
        %v6076 = vadd.f32 %v5651, %v6050
        %v6077 = vadd.f32 %v5652, %v6053
        %v6078 = vadd.f32 %v5653, %v6058
        %v6079 = vadd.f32 %v5654, %v6061
        %v6080 = vld [vmem:[%s1494] sm:$0xe]
        %v6081 = vld [vmem:[%s1494 + $0xc] sm:$0xe]
        %v6082 = vld [vmem:[%s1494 + $0x18] sm:$0xe]
        %v6083 = vld [vmem:[%s1494 + $0x24] sm:$0xe]
        %v6084 = vld [vmem:[%s1494 + $0x30] sm:$0xe]
        %v6085 = vld [vmem:[%s1494 + $0x3c] sm:$0xe]
        %v6086 = vld [vmem:[%s1494 + $0x48] sm:$0xe]
        %v6087 = vld [vmem:[%s1494 + $0x54] sm:$0xe]
        %v6112 = vrot.slane %v6080, 5
        %v6113 = vrot.slane %v6112, 4
        %v6114 = vrot.slane %v5656, 5
        %v6115 = vsel %vm2768, %v6113, %v6114
        %v6116 = vrot.slane %v6114, 4
        %v6117 = vrot.slane %v5657, 5
        %v6118 = vsel %vm2768, %v6116, %v6117
        %v6119 = vrot.slane %v6081, 5
        %v6120 = vrot.slane %v6119, 4
        %v6121 = vrot.slane %v5659, 5
        %v6122 = vsel %vm2768, %v6120, %v6121
        %v6123 = vrot.slane %v6121, 4
        %v6124 = vrot.slane %v5660, 5
        %v6125 = vsel %vm2768, %v6123, %v6124
        %v6126 = vrot.slane %v6082, 5
        %v6127 = vrot.slane %v6126, 4
        %v6128 = vrot.slane %v5662, 5
        %v6129 = vsel %vm2768, %v6127, %v6128
        %v6130 = vrot.slane %v6128, 4
        %v6131 = vrot.slane %v5663, 5
        %v6132 = vsel %vm2768, %v6130, %v6131
        %v6133 = vrot.slane %v6083, 5
        %v6134 = vrot.slane %v6133, 4
        %v6135 = vrot.slane %v5665, 5
        %v6136 = vsel %vm2768, %v6134, %v6135
        %v6137 = vrot.slane %v6135, 4
        %v6138 = vrot.slane %v5666, 5
        %v6139 = vsel %vm2768, %v6137, %v6138
        %v6140 = vrot.slane %v6084, 5
        %v6141 = vrot.slane %v6140, 4
        %v6142 = vrot.slane %v5668, 5
        %v6143 = vsel %vm2768, %v6141, %v6142
        %v6144 = vrot.slane %v6142, 4
        %v6145 = vrot.slane %v5669, 5
        %v6146 = vsel %vm2768, %v6144, %v6145
        %v6147 = vrot.slane %v6085, 5
        %v6148 = vrot.slane %v6147, 4
        %v6149 = vrot.slane %v5671, 5
        %v6150 = vsel %vm2768, %v6148, %v6149
        %v6151 = vrot.slane %v6149, 4
        %v6152 = vrot.slane %v5672, 5
        %v6153 = vsel %vm2768, %v6151, %v6152
        %v6154 = vrot.slane %v6086, 5
        %v6155 = vrot.slane %v6154, 4
        %v6156 = vrot.slane %v5674, 5
        %v6157 = vsel %vm2768, %v6155, %v6156
        %v6158 = vrot.slane %v6156, 4
        %v6159 = vrot.slane %v5675, 5
        %v6160 = vsel %vm2768, %v6158, %v6159
        %v6161 = vrot.slane %v6087, 5
        %v6162 = vrot.slane %v6161, 4
        %v6163 = vrot.slane %v5677, 5
        %v6164 = vsel %vm2768, %v6162, %v6163
        %v6165 = vrot.slane %v6163, 4
        %v6166 = vrot.slane %v5678, 5
        %v6167 = vsel %vm2768, %v6165, %v6166
        %v6168 = vld [vmem:[%s2825] sm:$0xf]
        %v6169 = vld [vmem:[%s2825 + $0x4] sm:$0xf]
        %v6170 = vld [vmem:[%s2825 + $0x8] sm:$0xf]
        %v6171 = vld [vmem:[%s2825 + $0xc] sm:$0xf]
        %v6172 = vld [vmem:[%s2825 + $0x10] sm:$0xf]
        %v6173 = vld [vmem:[%s2825 + $0x14] sm:$0xf]
        %v6174 = vld [vmem:[%s2825 + $0x18] sm:$0xf]
        %v6175 = vld [vmem:[%s2825 + $0x1c] sm:$0xf]
        %v6176 = vld [vmem:[%s2825 + $0x20] sm:$0xf]
        %v6177 = vld [vmem:[%s2825 + $0x24] sm:$0xf]
        %v6178 = vld [vmem:[%s2825 + $0x28] sm:$0xf]
        %v6179 = vld [vmem:[%s2825 + $0x2c] sm:$0xf]
        %v6180 = vld [vmem:[%s2825 + $0x30] sm:$0xf]
        %v6181 = vld [vmem:[%s2825 + $0x34] sm:$0xf]
        %v6182 = vld [vmem:[%s2825 + $0x38] sm:$0xf]
        %v6183 = vld [vmem:[%s2825 + $0x3c] sm:$0xf]
        %v6184 = vunpack.c.l.b16 %v6115
        %v6185 = vunpack.c.l.b16 %v6118
        %v6186 = vunpack.c.l.b16 %v6122
        %v6187 = vunpack.c.l.b16 %v6125
        %v6188 = vunpack.c.l.b16 %v6129
        %v6189 = vunpack.c.l.b16 %v6132
        %v6190 = vunpack.c.l.b16 %v6136
        %v6191 = vunpack.c.l.b16 %v6139
        %v6192 = vunpack.c.l.b16 %v6143
        %v6193 = vunpack.c.l.b16 %v6146
        %v6194 = vunpack.c.l.b16 %v6150
        %v6195 = vunpack.c.l.b16 %v6153
        %v6196 = vunpack.c.l.b16 %v6157
        %v6197 = vunpack.c.l.b16 %v6160
        %v6198 = vunpack.c.l.b16 %v6164
        %v6199 = vunpack.c.l.b16 %v6167
        %v6200 = vpack.c.b16 %v6185, %v6184
        %v6201 = vpack.c.b16 %v6187, %v6186
        %v6202 = vpack.c.b16 %v6189, %v6188
        %v6203 = vpack.c.b16 %v6191, %v6190
        %v6204 = vpack.c.b16 %v6193, %v6192
        %v6205 = vpack.c.b16 %v6195, %v6194
        %v6206 = vpack.c.b16 %v6197, %v6196
        %v6207 = vpack.c.b16 %v6199, %v6198
        %v6232 = vunpack.c.l.b16 %v6168
        %v6233 = vunpack.c.l.b16 %v6169
        %v6234 = vunpack.c.l.b16 %v6170
        %v6235 = vunpack.c.l.b16 %v6171
        %v6236 = vunpack.c.l.b16 %v6172
        %v6237 = vunpack.c.l.b16 %v6173
        %v6238 = vunpack.c.l.b16 %v6174
        %v6239 = vunpack.c.l.b16 %v6175
        %v6240 = vunpack.c.l.b16 %v6176
        %v6241 = vunpack.c.l.b16 %v6177
        %v6242 = vunpack.c.l.b16 %v6178
        %v6243 = vunpack.c.l.b16 %v6179
        %v6244 = vunpack.c.l.b16 %v6180
        %v6245 = vunpack.c.l.b16 %v6181
        %v6246 = vunpack.c.l.b16 %v6182
        %v6247 = vunpack.c.l.b16 %v6183
        %v6248 = vpack.c.b16 %v6233, %v6232
        %v6249 = vpack.c.b16 %v6235, %v6234
        %v6250 = vpack.c.b16 %v6237, %v6236
        %v6251 = vpack.c.b16 %v6239, %v6238
        %v6252 = vpack.c.b16 %v6241, %v6240
        %v6253 = vpack.c.b16 %v6243, %v6242
        %v6254 = vpack.c.b16 %v6245, %v6244
        %v6255 = vpack.c.b16 %v6247, %v6246
        %6264 = vmatprep.subr.bf16.mxu0 0
        %6265 = vmatpush1.bf16.msra.mxu0 %v6248
        %6266 = vmatprep.subr.bf16.mxu0 0
        %6267 = vmatpush1.bf16.msra.mxu0 %v6249
        %6268 = vmatprep.subr.bf16.mxu0 0
        %6269 = vmatpush1.bf16.msra.mxu0 %v6250
        %6270 = vmatprep.subr.bf16.mxu0 0
        %6271 = vmatpush1.bf16.msra.mxu0 %v6251
        %6272 = vmatprep.subr.bf16.mxu0 0
        %6273 = vmatpush1.bf16.msra.mxu0 %v6252
        %6274 = vmatprep.subr.bf16.mxu0 0
        %6275 = vmatpush1.bf16.msra.mxu0 %v6253
        %6276 = vmatprep.subr.bf16.mxu0 0
        %6277 = vmatpush1.bf16.msra.mxu0 %v6254
        %6278 = vmatprep.subr.bf16.mxu0 0
        %6279 = vmatpush1.bf16.msra.mxu0 %v6255
        %6280 = vmatprep.subr.bf16.mxu0 0
        %6281 = vmatpush1.bf16.msra.mxu0 0
        %6282 = vmatprep.subr.bf16.mxu0 0
        %6283 = vmatpush1.bf16.msra.mxu0 0
        %6284 = vmatprep.subr.bf16.mxu0 0
        %6285 = vmatpush1.bf16.msra.mxu0 0
        %6286 = vmatprep.subr.bf16.mxu0 0
        %6287 = vmatpush1.bf16.msra.mxu0 0
        %6288 = vmatprep.subr.bf16.mxu0 0
        %6289 = vmatpush1.bf16.msra.mxu0 0
        %6290 = vmatprep.subr.bf16.mxu0 0
        %6291 = vmatpush1.bf16.msra.mxu0 0
        %6292 = vmatprep.subr.bf16.mxu0 0
        %6293 = vmatpush1.bf16.msra.mxu0 0
        %6294 = vmatprep.subr.bf16.mxu0 0
        %6295 = vmatpush1.bf16.msra.mxu0 0
        %6296 = vmatprep.mubr.bf16.mxu0 0
        %6297 = vmatmul.mubr.bf16.gmra.mrb[0].mxu0 %v6200
        %v6298 = vpop.f32.mrb[0].mxu0
        %v6299 = vadd.f32 0.0, %v6298
        %v6300 = vpop.f32.mrb[0].mxu0
        %v6301 = vpop.f32.mrb[0].mxu0
        %v6302 = vadd.f32 0.0, %v6301
        %v6303 = vpop.f32.mrb[0].mxu0
        %6304 = vmatprep.mubr.bf16.mxu0 0
        %6305 = vmatmul.mubr.bf16.gmra.mrb[0].mxu0 %v6201
        %v6306 = vpop.f32.mrb[0].mxu0
        %v6307 = vadd.f32 0.0, %v6306
        %v6308 = vpop.f32.mrb[0].mxu0
        %v6309 = vpop.f32.mrb[0].mxu0
        %v6310 = vadd.f32 0.0, %v6309
        %v6311 = vpop.f32.mrb[0].mxu0
        %6312 = vmatprep.mubr.bf16.mxu0 0
        %6313 = vmatmul.mubr.bf16.gmra.mrb[0].mxu0 %v6202
        %v6314 = vpop.f32.mrb[0].mxu0
        %v6315 = vadd.f32 0.0, %v6314
        %v6316 = vpop.f32.mrb[0].mxu0
        %v6317 = vpop.f32.mrb[0].mxu0
        %v6318 = vadd.f32 0.0, %v6317
        %v6319 = vpop.f32.mrb[0].mxu0
        %6320 = vmatprep.mubr.bf16.mxu0 0
        %6321 = vmatmul.mubr.bf16.gmra.mrb[0].mxu0 %v6203
        %v6322 = vpop.f32.mrb[0].mxu0
        %v6323 = vadd.f32 0.0, %v6322
        %v6324 = vpop.f32.mrb[0].mxu0
        %v6325 = vpop.f32.mrb[0].mxu0
        %v6326 = vadd.f32 0.0, %v6325
        %v6327 = vpop.f32.mrb[0].mxu0
        %6328 = vmatprep.mubr.bf16.mxu0 0
        %6329 = vmatmul.mubr.bf16.gmra.mrb[0].mxu0 %v6204
        %v6330 = vpop.f32.mrb[0].mxu0
        %v6331 = vadd.f32 0.0, %v6330
        %v6332 = vpop.f32.mrb[0].mxu0
        %v6333 = vpop.f32.mrb[0].mxu0
        %v6334 = vadd.f32 0.0, %v6333
        %v6335 = vpop.f32.mrb[0].mxu0
        %6336 = vmatprep.mubr.bf16.mxu0 0
        %6337 = vmatmul.mubr.bf16.gmra.mrb[0].mxu0 %v6205
        %v6338 = vpop.f32.mrb[0].mxu0
        %v6339 = vadd.f32 0.0, %v6338
        %v6340 = vpop.f32.mrb[0].mxu0
        %v6341 = vpop.f32.mrb[0].mxu0
        %v6342 = vadd.f32 0.0, %v6341
        %v6343 = vpop.f32.mrb[0].mxu0
        %6344 = vmatprep.mubr.bf16.mxu0 0
        %6345 = vmatmul.mubr.bf16.gmra.mrb[0].mxu0 %v6206
        %v6346 = vpop.f32.mrb[0].mxu0
        %v6347 = vadd.f32 0.0, %v6346
        %v6348 = vpop.f32.mrb[0].mxu0
        %v6349 = vpop.f32.mrb[0].mxu0
        %v6350 = vadd.f32 0.0, %v6349
        %v6351 = vpop.f32.mrb[0].mxu0
        %6352 = vmatprep.mubr.bf16.mxu0 0
        %6353 = vmatmul.mubr.bf16.gmra.mrb[0].mxu0 %v6207
        %v6354 = vpop.f32.mrb[0].mxu0
        %v6355 = vadd.f32 0.0, %v6354
        %v6356 = vpop.f32.mrb[0].mxu0
        %v6357 = vpop.f32.mrb[0].mxu0
        %v6358 = vadd.f32 0.0, %v6357
        %v6359 = vpop.f32.mrb[0].mxu0
        %6360 = vdwg.mxu0
        %v6361 = vadd.f32 %v6064, %v6299
        %v6362 = vadd.f32 %v6065, %v6302
        %v6363 = vadd.f32 %v6066, %v6307
        %v6364 = vadd.f32 %v6067, %v6310
        %v6365 = vadd.f32 %v6068, %v6315
        %v6366 = vadd.f32 %v6069, %v6318
        %v6367 = vadd.f32 %v6070, %v6323
        %v6368 = vadd.f32 %v6071, %v6326
        %v6369 = vadd.f32 %v6072, %v6331
        %v6370 = vadd.f32 %v6073, %v6334
        %v6371 = vadd.f32 %v6074, %v6339
        %v6372 = vadd.f32 %v6075, %v6342
        %v6373 = vadd.f32 %v6076, %v6347
        %v6374 = vadd.f32 %v6077, %v6350
        %v6375 = vadd.f32 %v6078, %v6355
        %v6376 = vadd.f32 %v6079, %v6358
        %s6377 = scalar_lea.vmem [#allocation2], 108
        %v6378 = vld [vmem:[%s6377] sm:$0xf]
        %v6379 = vld [vmem:[%s6377 + $0x4] sm:$0xf]
        %v6380 = vld [vmem:[%s6377 + $0xc] sm:$0xf]
        %v6381 = vld [vmem:[%s6377 + $0x10] sm:$0xf]
        %v6382 = vld [vmem:[%s6377 + $0x18] sm:$0xf]
        %v6383 = vld [vmem:[%s6377 + $0x1c] sm:$0xf]
        %v6384 = vld [vmem:[%s6377 + $0x24] sm:$0xf]
        %v6385 = vld [vmem:[%s6377 + $0x28] sm:$0xf]
        %v6386 = vld [vmem:[%s6377 + $0x30] sm:$0xf]
        %v6387 = vld [vmem:[%s6377 + $0x34] sm:$0xf]
        %v6388 = vld [vmem:[%s6377 + $0x3c] sm:$0xf]
        %v6389 = vld [vmem:[%s6377 + $0x40] sm:$0xf]
        %v6390 = vld [vmem:[%s6377 + $0x48] sm:$0xf]
        %v6391 = vld [vmem:[%s6377 + $0x4c] sm:$0xf]
        %v6392 = vld [vmem:[%s6377 + $0x54] sm:$0xf]
        %v6393 = vld [vmem:[%s6377 + $0x58] sm:$0xf]
        %v6394 = vld [vmem:[%s3052] sm:$0xf]
        %v6395 = vld [vmem:[%s3052 + $0x4] sm:$0xf]
        %v6396 = vld [vmem:[%s3052 + $0x8] sm:$0xf]
        %v6397 = vld [vmem:[%s3052 + $0xc] sm:$0xf]
        %v6398 = vld [vmem:[%s3052 + $0x10] sm:$0xf]
        %v6399 = vld [vmem:[%s3052 + $0x14] sm:$0xf]
        %v6400 = vld [vmem:[%s3052 + $0x18] sm:$0xf]
        %v6401 = vld [vmem:[%s3052 + $0x1c] sm:$0xf]
        %v6402 = vld [vmem:[%s3052 + $0x20] sm:$0xf]
        %v6403 = vld [vmem:[%s3052 + $0x24] sm:$0xf]
        %v6404 = vld [vmem:[%s3052 + $0x28] sm:$0xf]
        %v6405 = vld [vmem:[%s3052 + $0x2c] sm:$0xf]
        %v6406 = vld [vmem:[%s3052 + $0x30] sm:$0xf]
        %v6407 = vld [vmem:[%s3052 + $0x34] sm:$0xf]
        %v6408 = vld [vmem:[%s3052 + $0x38] sm:$0xf]
        %v6409 = vld [vmem:[%s3052 + $0x3c] sm:$0xf]
        %v6426 = vunpack.c.l.b16 %v6378
        %v6427 = vunpack.c.l.b16 %v6379
        %v6428 = vunpack.c.l.b16 %v6380
        %v6429 = vunpack.c.l.b16 %v6381
        %v6430 = vunpack.c.l.b16 %v6382
        %v6431 = vunpack.c.l.b16 %v6383
        %v6432 = vunpack.c.l.b16 %v6384
        %v6433 = vunpack.c.l.b16 %v6385
        %v6434 = vunpack.c.l.b16 %v6386
        %v6435 = vunpack.c.l.b16 %v6387
        %v6436 = vunpack.c.l.b16 %v6388
        %v6437 = vunpack.c.l.b16 %v6389
        %v6438 = vunpack.c.l.b16 %v6390
        %v6439 = vunpack.c.l.b16 %v6391
        %v6440 = vunpack.c.l.b16 %v6392
        %v6441 = vunpack.c.l.b16 %v6393
        %v6442 = vpack.c.b16 %v6427, %v6426
        %v6443 = vpack.c.b16 %v6429, %v6428
        %v6444 = vpack.c.b16 %v6431, %v6430
        %v6445 = vpack.c.b16 %v6433, %v6432
        %v6446 = vpack.c.b16 %v6435, %v6434
        %v6447 = vpack.c.b16 %v6437, %v6436
        %v6448 = vpack.c.b16 %v6439, %v6438
        %v6449 = vpack.c.b16 %v6441, %v6440
        %v6474 = vunpack.c.l.b16 %v6394
        %v6475 = vunpack.c.l.b16 %v6395
        %v6476 = vunpack.c.l.b16 %v6396
        %v6477 = vunpack.c.l.b16 %v6397
        %v6478 = vunpack.c.l.b16 %v6398
        %v6479 = vunpack.c.l.b16 %v6399
        %v6480 = vunpack.c.l.b16 %v6400
        %v6481 = vunpack.c.l.b16 %v6401
        %v6482 = vunpack.c.l.b16 %v6402
        %v6483 = vunpack.c.l.b16 %v6403
        %v6484 = vunpack.c.l.b16 %v6404
        %v6485 = vunpack.c.l.b16 %v6405
        %v6486 = vunpack.c.l.b16 %v6406
        %v6487 = vunpack.c.l.b16 %v6407
        %v6488 = vunpack.c.l.b16 %v6408
        %v6489 = vunpack.c.l.b16 %v6409
        %v6490 = vpack.c.b16 %v6475, %v6474
        %v6491 = vpack.c.b16 %v6477, %v6476
        %v6492 = vpack.c.b16 %v6479, %v6478
        %v6493 = vpack.c.b16 %v6481, %v6480
        %v6494 = vpack.c.b16 %v6483, %v6482
        %v6495 = vpack.c.b16 %v6485, %v6484
        %v6496 = vpack.c.b16 %v6487, %v6486
        %v6497 = vpack.c.b16 %v6489, %v6488
        %6506 = vmatprep.subr.bf16.mxu0 0
        %6507 = vmatpush1.bf16.msra.mxu0 %v6490
        %6508 = vmatprep.subr.bf16.mxu0 0
        %6509 = vmatpush1.bf16.msra.mxu0 %v6491
        %6510 = vmatprep.subr.bf16.mxu0 0
        %6511 = vmatpush1.bf16.msra.mxu0 %v6492
        %6512 = vmatprep.subr.bf16.mxu0 0
        %6513 = vmatpush1.bf16.msra.mxu0 %v6493
        %6514 = vmatprep.subr.bf16.mxu0 0
        %6515 = vmatpush1.bf16.msra.mxu0 %v6494
        %6516 = vmatprep.subr.bf16.mxu0 0
        %6517 = vmatpush1.bf16.msra.mxu0 %v6495
        %6518 = vmatprep.subr.bf16.mxu0 0
        %6519 = vmatpush1.bf16.msra.mxu0 %v6496
        %6520 = vmatprep.subr.bf16.mxu0 0
        %6521 = vmatpush1.bf16.msra.mxu0 %v6497
        %6522 = vmatprep.subr.bf16.mxu0 0
        %6523 = vmatpush1.bf16.msra.mxu0 0
        %6524 = vmatprep.subr.bf16.mxu0 0
        %6525 = vmatpush1.bf16.msra.mxu0 0
        %6526 = vmatprep.subr.bf16.mxu0 0
        %6527 = vmatpush1.bf16.msra.mxu0 0
        %6528 = vmatprep.subr.bf16.mxu0 0
        %6529 = vmatpush1.bf16.msra.mxu0 0
        %6530 = vmatprep.subr.bf16.mxu0 0
        %6531 = vmatpush1.bf16.msra.mxu0 0
        %6532 = vmatprep.subr.bf16.mxu0 0
        %6533 = vmatpush1.bf16.msra.mxu0 0
        %6534 = vmatprep.subr.bf16.mxu0 0
        %6535 = vmatpush1.bf16.msra.mxu0 0
        %6536 = vmatprep.subr.bf16.mxu0 0
        %6537 = vmatpush1.bf16.msra.mxu0 0
        %6538 = vmatprep.mubr.bf16.mxu0 0
        %6539 = vmatmul.mubr.bf16.gmra.mrb[0].mxu0 %v6442
        %v6540 = vpop.f32.mrb[0].mxu0
        %v6541 = vadd.f32 0.0, %v6540
        %v6542 = vpop.f32.mrb[0].mxu0
        %v6543 = vpop.f32.mrb[0].mxu0
        %v6544 = vadd.f32 0.0, %v6543
        %v6545 = vpop.f32.mrb[0].mxu0
        %6546 = vmatprep.mubr.bf16.mxu0 0
        %6547 = vmatmul.mubr.bf16.gmra.mrb[0].mxu0 %v6443
        %v6548 = vpop.f32.mrb[0].mxu0
        %v6549 = vadd.f32 0.0, %v6548
        %v6550 = vpop.f32.mrb[0].mxu0
        %v6551 = vpop.f32.mrb[0].mxu0
        %v6552 = vadd.f32 0.0, %v6551
        %v6553 = vpop.f32.mrb[0].mxu0
        %6554 = vmatprep.mubr.bf16.mxu0 0
        %6555 = vmatmul.mubr.bf16.gmra.mrb[0].mxu0 %v6444
        %v6556 = vpop.f32.mrb[0].mxu0
        %v6557 = vadd.f32 0.0, %v6556
        %v6558 = vpop.f32.mrb[0].mxu0
        %v6559 = vpop.f32.mrb[0].mxu0
        %v6560 = vadd.f32 0.0, %v6559
        %v6561 = vpop.f32.mrb[0].mxu0
        %6562 = vmatprep.mubr.bf16.mxu0 0
        %6563 = vmatmul.mubr.bf16.gmra.mrb[0].mxu0 %v6445
        %v6564 = vpop.f32.mrb[0].mxu0
        %v6565 = vadd.f32 0.0, %v6564
        %v6566 = vpop.f32.mrb[0].mxu0
        %v6567 = vpop.f32.mrb[0].mxu0
        %v6568 = vadd.f32 0.0, %v6567
        %v6569 = vpop.f32.mrb[0].mxu0
        %6570 = vmatprep.mubr.bf16.mxu0 0
        %6571 = vmatmul.mubr.bf16.gmra.mrb[0].mxu0 %v6446
        %v6572 = vpop.f32.mrb[0].mxu0
        %v6573 = vadd.f32 0.0, %v6572
        %v6574 = vpop.f32.mrb[0].mxu0
        %v6575 = vpop.f32.mrb[0].mxu0
        %v6576 = vadd.f32 0.0, %v6575
        %v6577 = vpop.f32.mrb[0].mxu0
        %6578 = vmatprep.mubr.bf16.mxu0 0
        %6579 = vmatmul.mubr.bf16.gmra.mrb[0].mxu0 %v6447
        %v6580 = vpop.f32.mrb[0].mxu0
        %v6581 = vadd.f32 0.0, %v6580
        %v6582 = vpop.f32.mrb[0].mxu0
        %v6583 = vpop.f32.mrb[0].mxu0
        %v6584 = vadd.f32 0.0, %v6583
        %v6585 = vpop.f32.mrb[0].mxu0
        %6586 = vmatprep.mubr.bf16.mxu0 0
        %6587 = vmatmul.mubr.bf16.gmra.mrb[0].mxu0 %v6448
        %v6588 = vpop.f32.mrb[0].mxu0
        %v6589 = vadd.f32 0.0, %v6588
        %v6590 = vpop.f32.mrb[0].mxu0
        %v6591 = vpop.f32.mrb[0].mxu0
        %v6592 = vadd.f32 0.0, %v6591
        %v6593 = vpop.f32.mrb[0].mxu0
        %6594 = vmatprep.mubr.bf16.mxu0 0
        %6595 = vmatmul.mubr.bf16.gmra.mrb[0].mxu0 %v6449
        %v6596 = vpop.f32.mrb[0].mxu0
        %v6597 = vadd.f32 0.0, %v6596
        %v6598 = vpop.f32.mrb[0].mxu0
        %v6599 = vpop.f32.mrb[0].mxu0
        %v6600 = vadd.f32 0.0, %v6599
        %v6601 = vpop.f32.mrb[0].mxu0
        %6602 = vdwg.mxu0
        %v6603 = vadd.f32 %v6361, %v6541
        %v6604 = vadd.f32 %v6362, %v6544
        %v6605 = vadd.f32 %v6363, %v6549
        %v6606 = vadd.f32 %v6364, %v6552
        %v6607 = vadd.f32 %v6365, %v6557
        %v6608 = vadd.f32 %v6366, %v6560
        %v6609 = vadd.f32 %v6367, %v6565
        %v6610 = vadd.f32 %v6368, %v6568
        %v6611 = vadd.f32 %v6369, %v6573
        %v6612 = vadd.f32 %v6370, %v6576
        %v6613 = vadd.f32 %v6371, %v6581
        %v6614 = vadd.f32 %v6372, %v6584
        %v6615 = vadd.f32 %v6373, %v6589
        %v6616 = vadd.f32 %v6374, %v6592
        %v6617 = vadd.f32 %v6375, %v6597
        %v6618 = vadd.f32 %v6376, %v6600
        %v6619 = vld [vmem:[%s6377] sm:$0xf]
        %v6620 = vld [vmem:[%s6377 + $0x4] sm:$0xf]
        %v6621 = vld [vmem:[%s6377 + $0x8] sm:$0x1]
        %v6622 = vld [vmem:[%s6377 + $0xc] sm:$0xf]
        %v6623 = vld [vmem:[%s6377 + $0x10] sm:$0xf]
        %v6624 = vld [vmem:[%s6377 + $0x14] sm:$0x1]
        %v6625 = vld [vmem:[%s6377 + $0x18] sm:$0xf]
        %v6626 = vld [vmem:[%s6377 + $0x1c] sm:$0xf]
        %v6627 = vld [vmem:[%s6377 + $0x20] sm:$0x1]
        %v6628 = vld [vmem:[%s6377 + $0x24] sm:$0xf]
        %v6629 = vld [vmem:[%s6377 + $0x28] sm:$0xf]
        %v6630 = vld [vmem:[%s6377 + $0x2c] sm:$0x1]
        %v6631 = vld [vmem:[%s6377 + $0x30] sm:$0xf]
        %v6632 = vld [vmem:[%s6377 + $0x34] sm:$0xf]
        %v6633 = vld [vmem:[%s6377 + $0x38] sm:$0x1]
        %v6634 = vld [vmem:[%s6377 + $0x3c] sm:$0xf]
        %v6635 = vld [vmem:[%s6377 + $0x40] sm:$0xf]
        %v6636 = vld [vmem:[%s6377 + $0x44] sm:$0x1]
        %v6637 = vld [vmem:[%s6377 + $0x48] sm:$0xf]
        %v6638 = vld [vmem:[%s6377 + $0x4c] sm:$0xf]
        %v6639 = vld [vmem:[%s6377 + $0x50] sm:$0x1]
        %v6640 = vld [vmem:[%s6377 + $0x54] sm:$0xf]
        %v6641 = vld [vmem:[%s6377 + $0x58] sm:$0xf]
        %v6642 = vld [vmem:[%s6377 + $0x5c] sm:$0x1]
        %v6644 = vshrl.u32 %v6619, 16
        %v6646 = vrot.slane %v6644, 4
        %v6647 = vshll.u32 %v6619, 16
        %v6649 = vrot.slane %v6647, 5
        %v6650 = vor.u32 %v6646, %v6649
        %v6651 = vrot.slane %v6650, 4
        %v6653 = vshll.u32 %v6620, 16
        %v6655 = vrot.slane %v6653, 5
        %v6656 = vsel %vm1691, %v6651, %v6655
        %v6657 = vshrl.u32 %v6620, 16
        %v6659 = vrot.slane %v6657, 4
        %v6660 = vor.u32 %v6659, %v6655
        %v6661 = vrot.slane %v6660, 4
        %v6663 = vshll.u32 %v6621, 16
        %v6665 = vrot.slane %v6663, 5
        %v6666 = vsel %vm1691, %v6661, %v6665
        %v6668 = vshrl.u32 %v6622, 16
        %v6670 = vrot.slane %v6668, 4
        %v6671 = vshll.u32 %v6622, 16
        %v6673 = vrot.slane %v6671, 5
        %v6674 = vor.u32 %v6670, %v6673
        %v6675 = vrot.slane %v6674, 4
        %v6677 = vshll.u32 %v6623, 16
        %v6679 = vrot.slane %v6677, 5
        %v6680 = vsel %vm1691, %v6675, %v6679
        %v6681 = vshrl.u32 %v6623, 16
        %v6683 = vrot.slane %v6681, 4
        %v6684 = vor.u32 %v6683, %v6679
        %v6685 = vrot.slane %v6684, 4
        %v6687 = vshll.u32 %v6624, 16
        %v6689 = vrot.slane %v6687, 5
        %v6690 = vsel %vm1691, %v6685, %v6689
        %v6692 = vshrl.u32 %v6625, 16
        %v6694 = vrot.slane %v6692, 4
        %v6695 = vshll.u32 %v6625, 16
        %v6697 = vrot.slane %v6695, 5
        %v6698 = vor.u32 %v6694, %v6697
        %v6699 = vrot.slane %v6698, 4
        %v6701 = vshll.u32 %v6626, 16
        %v6703 = vrot.slane %v6701, 5
        %v6704 = vsel %vm1691, %v6699, %v6703
        %v6705 = vshrl.u32 %v6626, 16
        %v6707 = vrot.slane %v6705, 4
        %v6708 = vor.u32 %v6707, %v6703
        %v6709 = vrot.slane %v6708, 4
        %v6711 = vshll.u32 %v6627, 16
        %v6713 = vrot.slane %v6711, 5
        %v6714 = vsel %vm1691, %v6709, %v6713
        %v6716 = vshrl.u32 %v6628, 16
        %v6718 = vrot.slane %v6716, 4
        %v6719 = vshll.u32 %v6628, 16
        %v6721 = vrot.slane %v6719, 5
        %v6722 = vor.u32 %v6718, %v6721
        %v6723 = vrot.slane %v6722, 4
        %v6725 = vshll.u32 %v6629, 16
        %v6727 = vrot.slane %v6725, 5
        %v6728 = vsel %vm1691, %v6723, %v6727
        %v6729 = vshrl.u32 %v6629, 16
        %v6731 = vrot.slane %v6729, 4
        %v6732 = vor.u32 %v6731, %v6727
        %v6733 = vrot.slane %v6732, 4
        %v6735 = vshll.u32 %v6630, 16
        %v6737 = vrot.slane %v6735, 5
        %v6738 = vsel %vm1691, %v6733, %v6737
        %v6740 = vshrl.u32 %v6631, 16
        %v6742 = vrot.slane %v6740, 4
        %v6743 = vshll.u32 %v6631, 16
        %v6745 = vrot.slane %v6743, 5
        %v6746 = vor.u32 %v6742, %v6745
        %v6747 = vrot.slane %v6746, 4
        %v6749 = vshll.u32 %v6632, 16
        %v6751 = vrot.slane %v6749, 5
        %v6752 = vsel %vm1691, %v6747, %v6751
        %v6753 = vshrl.u32 %v6632, 16
        %v6755 = vrot.slane %v6753, 4
        %v6756 = vor.u32 %v6755, %v6751
        %v6757 = vrot.slane %v6756, 4
        %v6759 = vshll.u32 %v6633, 16
        %v6761 = vrot.slane %v6759, 5
        %v6762 = vsel %vm1691, %v6757, %v6761
        %v6764 = vshrl.u32 %v6634, 16
        %v6766 = vrot.slane %v6764, 4
        %v6767 = vshll.u32 %v6634, 16
        %v6769 = vrot.slane %v6767, 5
        %v6770 = vor.u32 %v6766, %v6769
        %v6771 = vrot.slane %v6770, 4
        %v6773 = vshll.u32 %v6635, 16
        %v6775 = vrot.slane %v6773, 5
        %v6776 = vsel %vm1691, %v6771, %v6775
        %v6777 = vshrl.u32 %v6635, 16
        %v6779 = vrot.slane %v6777, 4
        %v6780 = vor.u32 %v6779, %v6775
        %v6781 = vrot.slane %v6780, 4
        %v6783 = vshll.u32 %v6636, 16
        %v6785 = vrot.slane %v6783, 5
        %v6786 = vsel %vm1691, %v6781, %v6785
        %v6788 = vshrl.u32 %v6637, 16
        %v6790 = vrot.slane %v6788, 4
        %v6791 = vshll.u32 %v6637, 16
        %v6793 = vrot.slane %v6791, 5
        %v6794 = vor.u32 %v6790, %v6793
        %v6795 = vrot.slane %v6794, 4
        %v6797 = vshll.u32 %v6638, 16
        %v6799 = vrot.slane %v6797, 5
        %v6800 = vsel %vm1691, %v6795, %v6799
        %v6801 = vshrl.u32 %v6638, 16
        %v6803 = vrot.slane %v6801, 4
        %v6804 = vor.u32 %v6803, %v6799
        %v6805 = vrot.slane %v6804, 4
        %v6807 = vshll.u32 %v6639, 16
        %v6809 = vrot.slane %v6807, 5
        %v6810 = vsel %vm1691, %v6805, %v6809
        %v6812 = vshrl.u32 %v6640, 16
        %v6814 = vrot.slane %v6812, 4
        %v6815 = vshll.u32 %v6640, 16
        %v6817 = vrot.slane %v6815, 5
        %v6818 = vor.u32 %v6814, %v6817
        %v6819 = vrot.slane %v6818, 4
        %v6821 = vshll.u32 %v6641, 16
        %v6823 = vrot.slane %v6821, 5
        %v6824 = vsel %vm1691, %v6819, %v6823
        %v6825 = vshrl.u32 %v6641, 16
        %v6827 = vrot.slane %v6825, 4
        %v6828 = vor.u32 %v6827, %v6823
        %v6829 = vrot.slane %v6828, 4
        %v6831 = vshll.u32 %v6642, 16
        %v6833 = vrot.slane %v6831, 5
        %v6834 = vsel %vm1691, %v6829, %v6833
        %v6835 = vld [vmem:[%s3494] sm:$0xf]
        %v6836 = vld [vmem:[%s3494 + $0x4] sm:$0xf]
        %v6837 = vld [vmem:[%s3494 + $0x8] sm:$0xf]
        %v6838 = vld [vmem:[%s3494 + $0xc] sm:$0xf]
        %v6839 = vld [vmem:[%s3494 + $0x10] sm:$0xf]
        %v6840 = vld [vmem:[%s3494 + $0x14] sm:$0xf]
        %v6841 = vld [vmem:[%s3494 + $0x18] sm:$0xf]
        %v6842 = vld [vmem:[%s3494 + $0x1c] sm:$0xf]
        %v6843 = vld [vmem:[%s3494 + $0x20] sm:$0xf]
        %v6844 = vld [vmem:[%s3494 + $0x24] sm:$0xf]
        %v6845 = vld [vmem:[%s3494 + $0x28] sm:$0xf]
        %v6846 = vld [vmem:[%s3494 + $0x2c] sm:$0xf]
        %v6847 = vld [vmem:[%s3494 + $0x30] sm:$0xf]
        %v6848 = vld [vmem:[%s3494 + $0x34] sm:$0xf]
        %v6849 = vld [vmem:[%s3494 + $0x38] sm:$0xf]
        %v6850 = vld [vmem:[%s3494 + $0x3c] sm:$0xf]
        %v6851 = vunpack.c.l.b16 %v6656
        %v6852 = vunpack.c.l.b16 %v6666
        %v6853 = vunpack.c.l.b16 %v6680
        %v6854 = vunpack.c.l.b16 %v6690
        %v6855 = vunpack.c.l.b16 %v6704
        %v6856 = vunpack.c.l.b16 %v6714
        %v6857 = vunpack.c.l.b16 %v6728
        %v6858 = vunpack.c.l.b16 %v6738
        %v6859 = vunpack.c.l.b16 %v6752
        %v6860 = vunpack.c.l.b16 %v6762
        %v6861 = vunpack.c.l.b16 %v6776
        %v6862 = vunpack.c.l.b16 %v6786
        %v6863 = vunpack.c.l.b16 %v6800
        %v6864 = vunpack.c.l.b16 %v6810
        %v6865 = vunpack.c.l.b16 %v6824
        %v6866 = vunpack.c.l.b16 %v6834
        %v6867 = vpack.c.b16 %v6852, %v6851
        %v6868 = vpack.c.b16 %v6854, %v6853
        %v6869 = vpack.c.b16 %v6856, %v6855
        %v6870 = vpack.c.b16 %v6858, %v6857
        %v6871 = vpack.c.b16 %v6860, %v6859
        %v6872 = vpack.c.b16 %v6862, %v6861
        %v6873 = vpack.c.b16 %v6864, %v6863
        %v6874 = vpack.c.b16 %v6866, %v6865
        %v6899 = vunpack.c.l.b16 %v6835
        %v6900 = vunpack.c.l.b16 %v6836
        %v6901 = vunpack.c.l.b16 %v6837
        %v6902 = vunpack.c.l.b16 %v6838
        %v6903 = vunpack.c.l.b16 %v6839
        %v6904 = vunpack.c.l.b16 %v6840
        %v6905 = vunpack.c.l.b16 %v6841
        %v6906 = vunpack.c.l.b16 %v6842
        %v6907 = vunpack.c.l.b16 %v6843
        %v6908 = vunpack.c.l.b16 %v6844
        %v6909 = vunpack.c.l.b16 %v6845
        %v6910 = vunpack.c.l.b16 %v6846
        %v6911 = vunpack.c.l.b16 %v6847
        %v6912 = vunpack.c.l.b16 %v6848
        %v6913 = vunpack.c.l.b16 %v6849
        %v6914 = vunpack.c.l.b16 %v6850
        %v6915 = vpack.c.b16 %v6900, %v6899
        %v6916 = vpack.c.b16 %v6902, %v6901
        %v6917 = vpack.c.b16 %v6904, %v6903
        %v6918 = vpack.c.b16 %v6906, %v6905
        %v6919 = vpack.c.b16 %v6908, %v6907
        %v6920 = vpack.c.b16 %v6910, %v6909
        %v6921 = vpack.c.b16 %v6912, %v6911
        %v6922 = vpack.c.b16 %v6914, %v6913
        %6931 = vmatprep.subr.bf16.mxu0 0
        %6932 = vmatpush1.bf16.msra.mxu0 %v6915
        %6933 = vmatprep.subr.bf16.mxu0 0
        %6934 = vmatpush1.bf16.msra.mxu0 %v6916
        %6935 = vmatprep.subr.bf16.mxu0 0
        %6936 = vmatpush1.bf16.msra.mxu0 %v6917
        %6937 = vmatprep.subr.bf16.mxu0 0
        %6938 = vmatpush1.bf16.msra.mxu0 %v6918
        %6939 = vmatprep.subr.bf16.mxu0 0
        %6940 = vmatpush1.bf16.msra.mxu0 %v6919
        %6941 = vmatprep.subr.bf16.mxu0 0
        %6942 = vmatpush1.bf16.msra.mxu0 %v6920
        %6943 = vmatprep.subr.bf16.mxu0 0
        %6944 = vmatpush1.bf16.msra.mxu0 %v6921
        %6945 = vmatprep.subr.bf16.mxu0 0
        %6946 = vmatpush1.bf16.msra.mxu0 %v6922
        %6947 = vmatprep.subr.bf16.mxu0 0
        %6948 = vmatpush1.bf16.msra.mxu0 0
        %6949 = vmatprep.subr.bf16.mxu0 0
        %6950 = vmatpush1.bf16.msra.mxu0 0
        %6951 = vmatprep.subr.bf16.mxu0 0
        %6952 = vmatpush1.bf16.msra.mxu0 0
        %6953 = vmatprep.subr.bf16.mxu0 0
        %6954 = vmatpush1.bf16.msra.mxu0 0
        %6955 = vmatprep.subr.bf16.mxu0 0
        %6956 = vmatpush1.bf16.msra.mxu0 0
        %6957 = vmatprep.subr.bf16.mxu0 0
        %6958 = vmatpush1.bf16.msra.mxu0 0
        %6959 = vmatprep.subr.bf16.mxu0 0
        %6960 = vmatpush1.bf16.msra.mxu0 0
        %6961 = vmatprep.subr.bf16.mxu0 0
        %6962 = vmatpush1.bf16.msra.mxu0 0
        %6963 = vmatprep.mubr.bf16.mxu0 0
        %6964 = vmatmul.mubr.bf16.gmra.mrb[0].mxu0 %v6867
        %v6965 = vpop.f32.mrb[0].mxu0
        %v6966 = vadd.f32 0.0, %v6965
        %v6967 = vpop.f32.mrb[0].mxu0
        %v6968 = vpop.f32.mrb[0].mxu0
        %v6969 = vadd.f32 0.0, %v6968
        %v6970 = vpop.f32.mrb[0].mxu0
        %6971 = vmatprep.mubr.bf16.mxu0 0
        %6972 = vmatmul.mubr.bf16.gmra.mrb[0].mxu0 %v6868
        %v6973 = vpop.f32.mrb[0].mxu0
        %v6974 = vadd.f32 0.0, %v6973
        %v6975 = vpop.f32.mrb[0].mxu0
        %v6976 = vpop.f32.mrb[0].mxu0
        %v6977 = vadd.f32 0.0, %v6976
        %v6978 = vpop.f32.mrb[0].mxu0
        %6979 = vmatprep.mubr.bf16.mxu0 0
        %6980 = vmatmul.mubr.bf16.gmra.mrb[0].mxu0 %v6869
        %v6981 = vpop.f32.mrb[0].mxu0
        %v6982 = vadd.f32 0.0, %v6981
        %v6983 = vpop.f32.mrb[0].mxu0
        %v6984 = vpop.f32.mrb[0].mxu0
        %v6985 = vadd.f32 0.0, %v6984
        %v6986 = vpop.f32.mrb[0].mxu0
        %6987 = vmatprep.mubr.bf16.mxu0 0
        %6988 = vmatmul.mubr.bf16.gmra.mrb[0].mxu0 %v6870
        %v6989 = vpop.f32.mrb[0].mxu0
        %v6990 = vadd.f32 0.0, %v6989
        %v6991 = vpop.f32.mrb[0].mxu0
        %v6992 = vpop.f32.mrb[0].mxu0
        %v6993 = vadd.f32 0.0, %v6992
        %v6994 = vpop.f32.mrb[0].mxu0
        %6995 = vmatprep.mubr.bf16.mxu0 0
        %6996 = vmatmul.mubr.bf16.gmra.mrb[0].mxu0 %v6871
        %v6997 = vpop.f32.mrb[0].mxu0
        %v6998 = vadd.f32 0.0, %v6997
        %v6999 = vpop.f32.mrb[0].mxu0
        %v7000 = vpop.f32.mrb[0].mxu0
        %v7001 = vadd.f32 0.0, %v7000
        %v7002 = vpop.f32.mrb[0].mxu0
        %7003 = vmatprep.mubr.bf16.mxu0 0
        %7004 = vmatmul.mubr.bf16.gmra.mrb[0].mxu0 %v6872
        %v7005 = vpop.f32.mrb[0].mxu0
        %v7006 = vadd.f32 0.0, %v7005
        %v7007 = vpop.f32.mrb[0].mxu0
        %v7008 = vpop.f32.mrb[0].mxu0
        %v7009 = vadd.f32 0.0, %v7008
        %v7010 = vpop.f32.mrb[0].mxu0
        %7011 = vmatprep.mubr.bf16.mxu0 0
        %7012 = vmatmul.mubr.bf16.gmra.mrb[0].mxu0 %v6873
        %v7013 = vpop.f32.mrb[0].mxu0
        %v7014 = vadd.f32 0.0, %v7013
        %v7015 = vpop.f32.mrb[0].mxu0
        %v7016 = vpop.f32.mrb[0].mxu0
        %v7017 = vadd.f32 0.0, %v7016
        %v7018 = vpop.f32.mrb[0].mxu0
        %7019 = vmatprep.mubr.bf16.mxu0 0
        %7020 = vmatmul.mubr.bf16.gmra.mrb[0].mxu0 %v6874
        %v7021 = vpop.f32.mrb[0].mxu0
        %v7022 = vadd.f32 0.0, %v7021
        %v7023 = vpop.f32.mrb[0].mxu0
        %v7024 = vpop.f32.mrb[0].mxu0
        %v7025 = vadd.f32 0.0, %v7024
        %v7026 = vpop.f32.mrb[0].mxu0
        %7027 = vdwg.mxu0
        %v7028 = vadd.f32 %v6603, %v6966
        %v7029 = vadd.f32 %v6604, %v6969
        %v7030 = vadd.f32 %v6605, %v6974
        %v7031 = vadd.f32 %v6606, %v6977
        %v7032 = vadd.f32 %v6607, %v6982
        %v7033 = vadd.f32 %v6608, %v6985
        %v7034 = vadd.f32 %v6609, %v6990
        %v7035 = vadd.f32 %v6610, %v6993
        %v7036 = vadd.f32 %v6611, %v6998
        %v7037 = vadd.f32 %v6612, %v7001
        %v7038 = vadd.f32 %v6613, %v7006
        %v7039 = vadd.f32 %v6614, %v7009
        %v7040 = vadd.f32 %v6615, %v7014
        %v7041 = vadd.f32 %v6616, %v7017
        %v7042 = vadd.f32 %v6617, %v7022
        %v7043 = vadd.f32 %v6618, %v7025
        %v7044 = vld [vmem:[%s6377] sm:$0xe]
        %v7045 = vld [vmem:[%s6377 + $0xc] sm:$0xe]
        %v7046 = vld [vmem:[%s6377 + $0x18] sm:$0xe]
        %v7047 = vld [vmem:[%s6377 + $0x24] sm:$0xe]
        %v7048 = vld [vmem:[%s6377 + $0x30] sm:$0xe]
        %v7049 = vld [vmem:[%s6377 + $0x3c] sm:$0xe]
        %v7050 = vld [vmem:[%s6377 + $0x48] sm:$0xe]
        %v7051 = vld [vmem:[%s6377 + $0x54] sm:$0xe]
        %v7076 = vrot.slane %v7044, 5
        %v7077 = vrot.slane %v7076, 4
        %v7078 = vrot.slane %v6620, 5
        %v7079 = vsel %vm2768, %v7077, %v7078
        %v7080 = vrot.slane %v7078, 4
        %v7081 = vrot.slane %v6621, 5
        %v7082 = vsel %vm2768, %v7080, %v7081
        %v7083 = vrot.slane %v7045, 5
        %v7084 = vrot.slane %v7083, 4
        %v7085 = vrot.slane %v6623, 5
        %v7086 = vsel %vm2768, %v7084, %v7085
        %v7087 = vrot.slane %v7085, 4
        %v7088 = vrot.slane %v6624, 5
        %v7089 = vsel %vm2768, %v7087, %v7088
        %v7090 = vrot.slane %v7046, 5
        %v7091 = vrot.slane %v7090, 4
        %v7092 = vrot.slane %v6626, 5
        %v7093 = vsel %vm2768, %v7091, %v7092
        %v7094 = vrot.slane %v7092, 4
        %v7095 = vrot.slane %v6627, 5
        %v7096 = vsel %vm2768, %v7094, %v7095
        %v7097 = vrot.slane %v7047, 5
        %v7098 = vrot.slane %v7097, 4
        %v7099 = vrot.slane %v6629, 5
        %v7100 = vsel %vm2768, %v7098, %v7099
        %v7101 = vrot.slane %v7099, 4
        %v7102 = vrot.slane %v6630, 5
        %v7103 = vsel %vm2768, %v7101, %v7102
        %v7104 = vrot.slane %v7048, 5
        %v7105 = vrot.slane %v7104, 4
        %v7106 = vrot.slane %v6632, 5
        %v7107 = vsel %vm2768, %v7105, %v7106
        %v7108 = vrot.slane %v7106, 4
        %v7109 = vrot.slane %v6633, 5
        %v7110 = vsel %vm2768, %v7108, %v7109
        %v7111 = vrot.slane %v7049, 5
        %v7112 = vrot.slane %v7111, 4
        %v7113 = vrot.slane %v6635, 5
        %v7114 = vsel %vm2768, %v7112, %v7113
        %v7115 = vrot.slane %v7113, 4
        %v7116 = vrot.slane %v6636, 5
        %v7117 = vsel %vm2768, %v7115, %v7116
        %v7118 = vrot.slane %v7050, 5
        %v7119 = vrot.slane %v7118, 4
        %v7120 = vrot.slane %v6638, 5
        %v7121 = vsel %vm2768, %v7119, %v7120
        %v7122 = vrot.slane %v7120, 4
        %v7123 = vrot.slane %v6639, 5
        %v7124 = vsel %vm2768, %v7122, %v7123
        %v7125 = vrot.slane %v7051, 5
        %v7126 = vrot.slane %v7125, 4
        %v7127 = vrot.slane %v6641, 5
        %v7128 = vsel %vm2768, %v7126, %v7127
        %v7129 = vrot.slane %v7127, 4
        %v7130 = vrot.slane %v6642, 5
        %v7131 = vsel %vm2768, %v7129, %v7130
        %v7132 = vld [vmem:[%s3792] sm:$0xf]
        %v7133 = vld [vmem:[%s3792 + $0x4] sm:$0xf]
        %v7134 = vld [vmem:[%s3792 + $0x8] sm:$0xf]
        %v7135 = vld [vmem:[%s3792 + $0xc] sm:$0xf]
        %v7136 = vld [vmem:[%s3792 + $0x10] sm:$0xf]
        %v7137 = vld [vmem:[%s3792 + $0x14] sm:$0xf]
        %v7138 = vld [vmem:[%s3792 + $0x18] sm:$0xf]
        %v7139 = vld [vmem:[%s3792 + $0x1c] sm:$0xf]
        %v7140 = vld [vmem:[%s3792 + $0x20] sm:$0xf]
        %v7141 = vld [vmem:[%s3792 + $0x24] sm:$0xf]
        %v7142 = vld [vmem:[%s3792 + $0x28] sm:$0xf]
        %v7143 = vld [vmem:[%s3792 + $0x2c] sm:$0xf]
        %v7144 = vld [vmem:[%s3792 + $0x30] sm:$0xf]
        %v7145 = vld [vmem:[%s3792 + $0x34] sm:$0xf]
        %v7146 = vld [vmem:[%s3792 + $0x38] sm:$0xf]
        %v7147 = vld [vmem:[%s3792 + $0x3c] sm:$0xf]
        %v7148 = vunpack.c.l.b16 %v7079
        %v7149 = vunpack.c.l.b16 %v7082
        %v7150 = vunpack.c.l.b16 %v7086
        %v7151 = vunpack.c.l.b16 %v7089
        %v7152 = vunpack.c.l.b16 %v7093
        %v7153 = vunpack.c.l.b16 %v7096
        %v7154 = vunpack.c.l.b16 %v7100
        %v7155 = vunpack.c.l.b16 %v7103
        %v7156 = vunpack.c.l.b16 %v7107
        %v7157 = vunpack.c.l.b16 %v7110
        %v7158 = vunpack.c.l.b16 %v7114
        %v7159 = vunpack.c.l.b16 %v7117
        %v7160 = vunpack.c.l.b16 %v7121
        %v7161 = vunpack.c.l.b16 %v7124
        %v7162 = vunpack.c.l.b16 %v7128
        %v7163 = vunpack.c.l.b16 %v7131
        %v7164 = vpack.c.b16 %v7149, %v7148
        %v7165 = vpack.c.b16 %v7151, %v7150
        %v7166 = vpack.c.b16 %v7153, %v7152
        %v7167 = vpack.c.b16 %v7155, %v7154
        %v7168 = vpack.c.b16 %v7157, %v7156
        %v7169 = vpack.c.b16 %v7159, %v7158
        %v7170 = vpack.c.b16 %v7161, %v7160
        %v7171 = vpack.c.b16 %v7163, %v7162
        %v7196 = vunpack.c.l.b16 %v7132
        %v7197 = vunpack.c.l.b16 %v7133
        %v7198 = vunpack.c.l.b16 %v7134
        %v7199 = vunpack.c.l.b16 %v7135
        %v7200 = vunpack.c.l.b16 %v7136
        %v7201 = vunpack.c.l.b16 %v7137
        %v7202 = vunpack.c.l.b16 %v7138
        %v7203 = vunpack.c.l.b16 %v7139
        %v7204 = vunpack.c.l.b16 %v7140
        %v7205 = vunpack.c.l.b16 %v7141
        %v7206 = vunpack.c.l.b16 %v7142
        %v7207 = vunpack.c.l.b16 %v7143
        %v7208 = vunpack.c.l.b16 %v7144
        %v7209 = vunpack.c.l.b16 %v7145
        %v7210 = vunpack.c.l.b16 %v7146
        %v7211 = vunpack.c.l.b16 %v7147
        %v7212 = vpack.c.b16 %v7197, %v7196
        %v7213 = vpack.c.b16 %v7199, %v7198
        %v7214 = vpack.c.b16 %v7201, %v7200
        %v7215 = vpack.c.b16 %v7203, %v7202
        %v7216 = vpack.c.b16 %v7205, %v7204
        %v7217 = vpack.c.b16 %v7207, %v7206
        %v7218 = vpack.c.b16 %v7209, %v7208
        %v7219 = vpack.c.b16 %v7211, %v7210
        %7228 = vmatprep.subr.bf16.mxu0 0
        %7229 = vmatpush1.bf16.msra.mxu0 %v7212
        %7230 = vmatprep.subr.bf16.mxu0 0
        %7231 = vmatpush1.bf16.msra.mxu0 %v7213
        %7232 = vmatprep.subr.bf16.mxu0 0
        %7233 = vmatpush1.bf16.msra.mxu0 %v7214
        %7234 = vmatprep.subr.bf16.mxu0 0
        %7235 = vmatpush1.bf16.msra.mxu0 %v7215
        %7236 = vmatprep.subr.bf16.mxu0 0
        %7237 = vmatpush1.bf16.msra.mxu0 %v7216
        %7238 = vmatprep.subr.bf16.mxu0 0
        %7239 = vmatpush1.bf16.msra.mxu0 %v7217
        %7240 = vmatprep.subr.bf16.mxu0 0
        %7241 = vmatpush1.bf16.msra.mxu0 %v7218
        %7242 = vmatprep.subr.bf16.mxu0 0
        %7243 = vmatpush1.bf16.msra.mxu0 %v7219
        %7244 = vmatprep.subr.bf16.mxu0 0
        %7245 = vmatpush1.bf16.msra.mxu0 0
        %7246 = vmatprep.subr.bf16.mxu0 0
        %7247 = vmatpush1.bf16.msra.mxu0 0
        %7248 = vmatprep.subr.bf16.mxu0 0
        %7249 = vmatpush1.bf16.msra.mxu0 0
        %7250 = vmatprep.subr.bf16.mxu0 0
        %7251 = vmatpush1.bf16.msra.mxu0 0
        %7252 = vmatprep.subr.bf16.mxu0 0
        %7253 = vmatpush1.bf16.msra.mxu0 0
        %7254 = vmatprep.subr.bf16.mxu0 0
        %7255 = vmatpush1.bf16.msra.mxu0 0
        %7256 = vmatprep.subr.bf16.mxu0 0
        %7257 = vmatpush1.bf16.msra.mxu0 0
        %7258 = vmatprep.subr.bf16.mxu0 0
        %7259 = vmatpush1.bf16.msra.mxu0 0
        %7260 = vmatprep.mubr.bf16.mxu0 0
        %7261 = vmatmul.mubr.bf16.gmra.mrb[0].mxu0 %v7164
        %v7262 = vpop.f32.mrb[0].mxu0
        %v7263 = vadd.f32 0.0, %v7262
        %v7264 = vpop.f32.mrb[0].mxu0
        %v7265 = vpop.f32.mrb[0].mxu0
        %v7266 = vadd.f32 0.0, %v7265
        %v7267 = vpop.f32.mrb[0].mxu0
        %7268 = vmatprep.mubr.bf16.mxu0 0
        %7269 = vmatmul.mubr.bf16.gmra.mrb[0].mxu0 %v7165
        %v7270 = vpop.f32.mrb[0].mxu0
        %v7271 = vadd.f32 0.0, %v7270
        %v7272 = vpop.f32.mrb[0].mxu0
        %v7273 = vpop.f32.mrb[0].mxu0
        %v7274 = vadd.f32 0.0, %v7273
        %v7275 = vpop.f32.mrb[0].mxu0
        %7276 = vmatprep.mubr.bf16.mxu0 0
        %7277 = vmatmul.mubr.bf16.gmra.mrb[0].mxu0 %v7166
        %v7278 = vpop.f32.mrb[0].mxu0
        %v7279 = vadd.f32 0.0, %v7278
        %v7280 = vpop.f32.mrb[0].mxu0
        %v7281 = vpop.f32.mrb[0].mxu0
        %v7282 = vadd.f32 0.0, %v7281
        %v7283 = vpop.f32.mrb[0].mxu0
        %7284 = vmatprep.mubr.bf16.mxu0 0
        %7285 = vmatmul.mubr.bf16.gmra.mrb[0].mxu0 %v7167
        %v7286 = vpop.f32.mrb[0].mxu0
        %v7287 = vadd.f32 0.0, %v7286
        %v7288 = vpop.f32.mrb[0].mxu0
        %v7289 = vpop.f32.mrb[0].mxu0
        %v7290 = vadd.f32 0.0, %v7289
        %v7291 = vpop.f32.mrb[0].mxu0
        %7292 = vmatprep.mubr.bf16.mxu0 0
        %7293 = vmatmul.mubr.bf16.gmra.mrb[0].mxu0 %v7168
        %v7294 = vpop.f32.mrb[0].mxu0
        %v7295 = vadd.f32 0.0, %v7294
        %v7296 = vpop.f32.mrb[0].mxu0
        %v7297 = vpop.f32.mrb[0].mxu0
        %v7298 = vadd.f32 0.0, %v7297
        %v7299 = vpop.f32.mrb[0].mxu0
        %7300 = vmatprep.mubr.bf16.mxu0 0
        %7301 = vmatmul.mubr.bf16.gmra.mrb[0].mxu0 %v7169
        %v7302 = vpop.f32.mrb[0].mxu0
        %v7303 = vadd.f32 0.0, %v7302
        %v7304 = vpop.f32.mrb[0].mxu0
        %v7305 = vpop.f32.mrb[0].mxu0
        %v7306 = vadd.f32 0.0, %v7305
        %v7307 = vpop.f32.mrb[0].mxu0
        %7308 = vmatprep.mubr.bf16.mxu0 0
        %7309 = vmatmul.mubr.bf16.gmra.mrb[0].mxu0 %v7170
        %v7310 = vpop.f32.mrb[0].mxu0
        %v7311 = vadd.f32 0.0, %v7310
        %v7312 = vpop.f32.mrb[0].mxu0
        %v7313 = vpop.f32.mrb[0].mxu0
        %v7314 = vadd.f32 0.0, %v7313
        %v7315 = vpop.f32.mrb[0].mxu0
        %7316 = vmatprep.mubr.bf16.mxu0 0
        %7317 = vmatmul.mubr.bf16.gmra.mrb[0].mxu0 %v7171
        %v7318 = vpop.f32.mrb[0].mxu0
        %v7319 = vadd.f32 0.0, %v7318
        %v7320 = vpop.f32.mrb[0].mxu0
        %v7321 = vpop.f32.mrb[0].mxu0
        %v7322 = vadd.f32 0.0, %v7321
        %v7323 = vpop.f32.mrb[0].mxu0
        %7324 = vdwg.mxu0
        %v7325 = vadd.f32 %v7028, %v7263
        %v7326 = vadd.f32 %v7029, %v7266
        %v7327 = vadd.f32 %v7030, %v7271
        %v7328 = vadd.f32 %v7031, %v7274
        %v7329 = vadd.f32 %v7032, %v7279
        %v7330 = vadd.f32 %v7033, %v7282
        %v7331 = vadd.f32 %v7034, %v7287
        %v7332 = vadd.f32 %v7035, %v7290
        %v7333 = vadd.f32 %v7036, %v7295
        %v7334 = vadd.f32 %v7037, %v7298
        %v7335 = vadd.f32 %v7038, %v7303
        %v7336 = vadd.f32 %v7039, %v7306
        %v7337 = vadd.f32 %v7040, %v7311
        %v7338 = vadd.f32 %v7041, %v7314
        %v7339 = vadd.f32 %v7042, %v7319
        %v7340 = vadd.f32 %v7043, %v7322
        %s7341 = scalar_lea.vmem [#allocation2], 120
        %v7342 = vld [vmem:[%s7341] sm:$0xf]
        %v7343 = vld [vmem:[%s7341 + $0x4] sm:$0xf]
        %v7344 = vld [vmem:[%s7341 + $0xc] sm:$0xf]
        %v7345 = vld [vmem:[%s7341 + $0x10] sm:$0xf]
        %v7346 = vld [vmem:[%s7341 + $0x18] sm:$0xf]
        %v7347 = vld [vmem:[%s7341 + $0x1c] sm:$0xf]
        %v7348 = vld [vmem:[%s7341 + $0x24] sm:$0xf]
        %v7349 = vld [vmem:[%s7341 + $0x28] sm:$0xf]
        %v7350 = vld [vmem:[%s7341 + $0x30] sm:$0xf]
        %v7351 = vld [vmem:[%s7341 + $0x34] sm:$0xf]
        %v7352 = vld [vmem:[%s7341 + $0x3c] sm:$0xf]
        %v7353 = vld [vmem:[%s7341 + $0x40] sm:$0xf]
        %v7354 = vld [vmem:[%s7341 + $0x48] sm:$0xf]
        %v7355 = vld [vmem:[%s7341 + $0x4c] sm:$0xf]
        %v7356 = vld [vmem:[%s7341 + $0x54] sm:$0xf]
        %v7357 = vld [vmem:[%s7341 + $0x58] sm:$0xf]
        %v7358 = vld [vmem:[%s4019] sm:$0xf]
        %v7359 = vld [vmem:[%s4019 + $0x4] sm:$0xf]
        %v7360 = vld [vmem:[%s4019 + $0x8] sm:$0xf]
        %v7361 = vld [vmem:[%s4019 + $0xc] sm:$0xf]
        %v7362 = vld [vmem:[%s4019 + $0x10] sm:$0xf]
        %v7363 = vld [vmem:[%s4019 + $0x14] sm:$0xf]
        %v7364 = vld [vmem:[%s4019 + $0x18] sm:$0xf]
        %v7365 = vld [vmem:[%s4019 + $0x1c] sm:$0xf]
        %v7366 = vld [vmem:[%s4019 + $0x20] sm:$0xf]
        %v7367 = vld [vmem:[%s4019 + $0x24] sm:$0xf]
        %v7368 = vld [vmem:[%s4019 + $0x28] sm:$0xf]
        %v7369 = vld [vmem:[%s4019 + $0x2c] sm:$0xf]
        %v7370 = vld [vmem:[%s4019 + $0x30] sm:$0xf]
        %v7371 = vld [vmem:[%s4019 + $0x34] sm:$0xf]
        %v7372 = vld [vmem:[%s4019 + $0x38] sm:$0xf]
        %v7373 = vld [vmem:[%s4019 + $0x3c] sm:$0xf]
        %v7390 = vunpack.c.l.b16 %v7342
        %v7391 = vunpack.c.l.b16 %v7343
        %v7392 = vunpack.c.l.b16 %v7344
        %v7393 = vunpack.c.l.b16 %v7345
        %v7394 = vunpack.c.l.b16 %v7346
        %v7395 = vunpack.c.l.b16 %v7347
        %v7396 = vunpack.c.l.b16 %v7348
        %v7397 = vunpack.c.l.b16 %v7349
        %v7398 = vunpack.c.l.b16 %v7350
        %v7399 = vunpack.c.l.b16 %v7351
        %v7400 = vunpack.c.l.b16 %v7352
        %v7401 = vunpack.c.l.b16 %v7353
        %v7402 = vunpack.c.l.b16 %v7354
        %v7403 = vunpack.c.l.b16 %v7355
        %v7404 = vunpack.c.l.b16 %v7356
        %v7405 = vunpack.c.l.b16 %v7357
        %v7406 = vpack.c.b16 %v7391, %v7390
        %v7407 = vpack.c.b16 %v7393, %v7392
        %v7408 = vpack.c.b16 %v7395, %v7394
        %v7409 = vpack.c.b16 %v7397, %v7396
        %v7410 = vpack.c.b16 %v7399, %v7398
        %v7411 = vpack.c.b16 %v7401, %v7400
        %v7412 = vpack.c.b16 %v7403, %v7402
        %v7413 = vpack.c.b16 %v7405, %v7404
        %v7438 = vunpack.c.l.b16 %v7358
        %v7439 = vunpack.c.l.b16 %v7359
        %v7440 = vunpack.c.l.b16 %v7360
        %v7441 = vunpack.c.l.b16 %v7361
        %v7442 = vunpack.c.l.b16 %v7362
        %v7443 = vunpack.c.l.b16 %v7363
        %v7444 = vunpack.c.l.b16 %v7364
        %v7445 = vunpack.c.l.b16 %v7365
        %v7446 = vunpack.c.l.b16 %v7366
        %v7447 = vunpack.c.l.b16 %v7367
        %v7448 = vunpack.c.l.b16 %v7368
        %v7449 = vunpack.c.l.b16 %v7369
        %v7450 = vunpack.c.l.b16 %v7370
        %v7451 = vunpack.c.l.b16 %v7371
        %v7452 = vunpack.c.l.b16 %v7372
        %v7453 = vunpack.c.l.b16 %v7373
        %v7454 = vpack.c.b16 %v7439, %v7438
        %v7455 = vpack.c.b16 %v7441, %v7440
        %v7456 = vpack.c.b16 %v7443, %v7442
        %v7457 = vpack.c.b16 %v7445, %v7444
        %v7458 = vpack.c.b16 %v7447, %v7446
        %v7459 = vpack.c.b16 %v7449, %v7448
        %v7460 = vpack.c.b16 %v7451, %v7450
        %v7461 = vpack.c.b16 %v7453, %v7452
        %7470 = vmatprep.subr.bf16.mxu0 0
        %7471 = vmatpush1.bf16.msra.mxu0 %v7454
        %7472 = vmatprep.subr.bf16.mxu0 0
        %7473 = vmatpush1.bf16.msra.mxu0 %v7455
        %7474 = vmatprep.subr.bf16.mxu0 0
        %7475 = vmatpush1.bf16.msra.mxu0 %v7456
        %7476 = vmatprep.subr.bf16.mxu0 0
        %7477 = vmatpush1.bf16.msra.mxu0 %v7457
        %7478 = vmatprep.subr.bf16.mxu0 0
        %7479 = vmatpush1.bf16.msra.mxu0 %v7458
        %7480 = vmatprep.subr.bf16.mxu0 0
        %7481 = vmatpush1.bf16.msra.mxu0 %v7459
        %7482 = vmatprep.subr.bf16.mxu0 0
        %7483 = vmatpush1.bf16.msra.mxu0 %v7460
        %7484 = vmatprep.subr.bf16.mxu0 0
        %7485 = vmatpush1.bf16.msra.mxu0 %v7461
        %7486 = vmatprep.subr.bf16.mxu0 0
        %7487 = vmatpush1.bf16.msra.mxu0 0
        %7488 = vmatprep.subr.bf16.mxu0 0
        %7489 = vmatpush1.bf16.msra.mxu0 0
        %7490 = vmatprep.subr.bf16.mxu0 0
        %7491 = vmatpush1.bf16.msra.mxu0 0
        %7492 = vmatprep.subr.bf16.mxu0 0
        %7493 = vmatpush1.bf16.msra.mxu0 0
        %7494 = vmatprep.subr.bf16.mxu0 0
        %7495 = vmatpush1.bf16.msra.mxu0 0
        %7496 = vmatprep.subr.bf16.mxu0 0
        %7497 = vmatpush1.bf16.msra.mxu0 0
        %7498 = vmatprep.subr.bf16.mxu0 0
        %7499 = vmatpush1.bf16.msra.mxu0 0
        %7500 = vmatprep.subr.bf16.mxu0 0
        %7501 = vmatpush1.bf16.msra.mxu0 0
        %7502 = vmatprep.mubr.bf16.mxu0 0
        %7503 = vmatmul.mubr.bf16.gmra.mrb[0].mxu0 %v7406
        %v7504 = vpop.f32.mrb[0].mxu0
        %v7505 = vadd.f32 0.0, %v7504
        %v7506 = vpop.f32.mrb[0].mxu0
        %v7507 = vpop.f32.mrb[0].mxu0
        %v7508 = vadd.f32 0.0, %v7507
        %v7509 = vpop.f32.mrb[0].mxu0
        %7510 = vmatprep.mubr.bf16.mxu0 0
        %7511 = vmatmul.mubr.bf16.gmra.mrb[0].mxu0 %v7407
        %v7512 = vpop.f32.mrb[0].mxu0
        %v7513 = vadd.f32 0.0, %v7512
        %v7514 = vpop.f32.mrb[0].mxu0
        %v7515 = vpop.f32.mrb[0].mxu0
        %v7516 = vadd.f32 0.0, %v7515
        %v7517 = vpop.f32.mrb[0].mxu0
        %7518 = vmatprep.mubr.bf16.mxu0 0
        %7519 = vmatmul.mubr.bf16.gmra.mrb[0].mxu0 %v7408
        %v7520 = vpop.f32.mrb[0].mxu0
        %v7521 = vadd.f32 0.0, %v7520
        %v7522 = vpop.f32.mrb[0].mxu0
        %v7523 = vpop.f32.mrb[0].mxu0
        %v7524 = vadd.f32 0.0, %v7523
        %v7525 = vpop.f32.mrb[0].mxu0
        %7526 = vmatprep.mubr.bf16.mxu0 0
        %7527 = vmatmul.mubr.bf16.gmra.mrb[0].mxu0 %v7409
        %v7528 = vpop.f32.mrb[0].mxu0
        %v7529 = vadd.f32 0.0, %v7528
        %v7530 = vpop.f32.mrb[0].mxu0
        %v7531 = vpop.f32.mrb[0].mxu0
        %v7532 = vadd.f32 0.0, %v7531
        %v7533 = vpop.f32.mrb[0].mxu0
        %7534 = vmatprep.mubr.bf16.mxu0 0
        %7535 = vmatmul.mubr.bf16.gmra.mrb[0].mxu0 %v7410
        %v7536 = vpop.f32.mrb[0].mxu0
        %v7537 = vadd.f32 0.0, %v7536
        %v7538 = vpop.f32.mrb[0].mxu0
        %v7539 = vpop.f32.mrb[0].mxu0
        %v7540 = vadd.f32 0.0, %v7539
        %v7541 = vpop.f32.mrb[0].mxu0
        %7542 = vmatprep.mubr.bf16.mxu0 0
        %7543 = vmatmul.mubr.bf16.gmra.mrb[0].mxu0 %v7411
        %v7544 = vpop.f32.mrb[0].mxu0
        %v7545 = vadd.f32 0.0, %v7544
        %v7546 = vpop.f32.mrb[0].mxu0
        %v7547 = vpop.f32.mrb[0].mxu0
        %v7548 = vadd.f32 0.0, %v7547
        %v7549 = vpop.f32.mrb[0].mxu0
        %7550 = vmatprep.mubr.bf16.mxu0 0
        %7551 = vmatmul.mubr.bf16.gmra.mrb[0].mxu0 %v7412
        %v7552 = vpop.f32.mrb[0].mxu0
        %v7553 = vadd.f32 0.0, %v7552
        %v7554 = vpop.f32.mrb[0].mxu0
        %v7555 = vpop.f32.mrb[0].mxu0
        %v7556 = vadd.f32 0.0, %v7555
        %v7557 = vpop.f32.mrb[0].mxu0
        %7558 = vmatprep.mubr.bf16.mxu0 0
        %7559 = vmatmul.mubr.bf16.gmra.mrb[0].mxu0 %v7413
        %v7560 = vpop.f32.mrb[0].mxu0
        %v7561 = vadd.f32 0.0, %v7560
        %v7562 = vpop.f32.mrb[0].mxu0
        %v7563 = vpop.f32.mrb[0].mxu0
        %v7564 = vadd.f32 0.0, %v7563
        %v7565 = vpop.f32.mrb[0].mxu0
        %7566 = vdwg.mxu0
        %v7567 = vadd.f32 %v7325, %v7505
        %v7568 = vadd.f32 %v7326, %v7508
        %v7569 = vadd.f32 %v7327, %v7513
        %v7570 = vadd.f32 %v7328, %v7516
        %v7571 = vadd.f32 %v7329, %v7521
        %v7572 = vadd.f32 %v7330, %v7524
        %v7573 = vadd.f32 %v7331, %v7529
        %v7574 = vadd.f32 %v7332, %v7532
        %v7575 = vadd.f32 %v7333, %v7537
        %v7576 = vadd.f32 %v7334, %v7540
        %v7577 = vadd.f32 %v7335, %v7545
        %v7578 = vadd.f32 %v7336, %v7548
        %v7579 = vadd.f32 %v7337, %v7553
        %v7580 = vadd.f32 %v7338, %v7556
        %v7581 = vadd.f32 %v7339, %v7561
        %v7582 = vadd.f32 %v7340, %v7564
        %v7583 = vld [vmem:[%s7341] sm:$0xf]
        %v7584 = vld [vmem:[%s7341 + $0x4] sm:$0xf]
        %v7585 = vld [vmem:[%s7341 + $0x8] sm:$0x1]
        %v7586 = vld [vmem:[%s7341 + $0xc] sm:$0xf]
        %v7587 = vld [vmem:[%s7341 + $0x10] sm:$0xf]
        %v7588 = vld [vmem:[%s7341 + $0x14] sm:$0x1]
        %v7589 = vld [vmem:[%s7341 + $0x18] sm:$0xf]
        %v7590 = vld [vmem:[%s7341 + $0x1c] sm:$0xf]
        %v7591 = vld [vmem:[%s7341 + $0x20] sm:$0x1]
        %v7592 = vld [vmem:[%s7341 + $0x24] sm:$0xf]
        %v7593 = vld [vmem:[%s7341 + $0x28] sm:$0xf]
        %v7594 = vld [vmem:[%s7341 + $0x2c] sm:$0x1]
        %v7595 = vld [vmem:[%s7341 + $0x30] sm:$0xf]
        %v7596 = vld [vmem:[%s7341 + $0x34] sm:$0xf]
        %v7597 = vld [vmem:[%s7341 + $0x38] sm:$0x1]
        %v7598 = vld [vmem:[%s7341 + $0x3c] sm:$0xf]
        %v7599 = vld [vmem:[%s7341 + $0x40] sm:$0xf]
        %v7600 = vld [vmem:[%s7341 + $0x44] sm:$0x1]
        %v7601 = vld [vmem:[%s7341 + $0x48] sm:$0xf]
        %v7602 = vld [vmem:[%s7341 + $0x4c] sm:$0xf]
        %v7603 = vld [vmem:[%s7341 + $0x50] sm:$0x1]
        %v7604 = vld [vmem:[%s7341 + $0x54] sm:$0xf]
        %v7605 = vld [vmem:[%s7341 + $0x58] sm:$0xf]
        %v7606 = vld [vmem:[%s7341 + $0x5c] sm:$0x1]
        %v7608 = vshrl.u32 %v7583, 16
        %v7610 = vrot.slane %v7608, 4
        %v7611 = vshll.u32 %v7583, 16
        %v7613 = vrot.slane %v7611, 5
        %v7614 = vor.u32 %v7610, %v7613
        %v7615 = vrot.slane %v7614, 4
        %v7617 = vshll.u32 %v7584, 16
        %v7619 = vrot.slane %v7617, 5
        %v7620 = vsel %vm1691, %v7615, %v7619
        %v7621 = vshrl.u32 %v7584, 16
        %v7623 = vrot.slane %v7621, 4
        %v7624 = vor.u32 %v7623, %v7619
        %v7625 = vrot.slane %v7624, 4
        %v7627 = vshll.u32 %v7585, 16
        %v7629 = vrot.slane %v7627, 5
        %v7630 = vsel %vm1691, %v7625, %v7629
        %v7632 = vshrl.u32 %v7586, 16
        %v7634 = vrot.slane %v7632, 4
        %v7635 = vshll.u32 %v7586, 16
        %v7637 = vrot.slane %v7635, 5
        %v7638 = vor.u32 %v7634, %v7637
        %v7639 = vrot.slane %v7638, 4
        %v7641 = vshll.u32 %v7587, 16
        %v7643 = vrot.slane %v7641, 5
        %v7644 = vsel %vm1691, %v7639, %v7643
        %v7645 = vshrl.u32 %v7587, 16
        %v7647 = vrot.slane %v7645, 4
        %v7648 = vor.u32 %v7647, %v7643
        %v7649 = vrot.slane %v7648, 4
        %v7651 = vshll.u32 %v7588, 16
        %v7653 = vrot.slane %v7651, 5
        %v7654 = vsel %vm1691, %v7649, %v7653
        %v7656 = vshrl.u32 %v7589, 16
        %v7658 = vrot.slane %v7656, 4
        %v7659 = vshll.u32 %v7589, 16
        %v7661 = vrot.slane %v7659, 5
        %v7662 = vor.u32 %v7658, %v7661
        %v7663 = vrot.slane %v7662, 4
        %v7665 = vshll.u32 %v7590, 16
        %v7667 = vrot.slane %v7665, 5
        %v7668 = vsel %vm1691, %v7663, %v7667
        %v7669 = vshrl.u32 %v7590, 16
        %v7671 = vrot.slane %v7669, 4
        %v7672 = vor.u32 %v7671, %v7667
        %v7673 = vrot.slane %v7672, 4
        %v7675 = vshll.u32 %v7591, 16
        %v7677 = vrot.slane %v7675, 5
        %v7678 = vsel %vm1691, %v7673, %v7677
        %v7680 = vshrl.u32 %v7592, 16
        %v7682 = vrot.slane %v7680, 4
        %v7683 = vshll.u32 %v7592, 16
        %v7685 = vrot.slane %v7683, 5
        %v7686 = vor.u32 %v7682, %v7685
        %v7687 = vrot.slane %v7686, 4
        %v7689 = vshll.u32 %v7593, 16
        %v7691 = vrot.slane %v7689, 5
        %v7692 = vsel %vm1691, %v7687, %v7691
        %v7693 = vshrl.u32 %v7593, 16
        %v7695 = vrot.slane %v7693, 4
        %v7696 = vor.u32 %v7695, %v7691
        %v7697 = vrot.slane %v7696, 4
        %v7699 = vshll.u32 %v7594, 16
        %v7701 = vrot.slane %v7699, 5
        %v7702 = vsel %vm1691, %v7697, %v7701
        %v7704 = vshrl.u32 %v7595, 16
        %v7706 = vrot.slane %v7704, 4
        %v7707 = vshll.u32 %v7595, 16
        %v7709 = vrot.slane %v7707, 5
        %v7710 = vor.u32 %v7706, %v7709
        %v7711 = vrot.slane %v7710, 4
        %v7713 = vshll.u32 %v7596, 16
        %v7715 = vrot.slane %v7713, 5
        %v7716 = vsel %vm1691, %v7711, %v7715
        %v7717 = vshrl.u32 %v7596, 16
        %v7719 = vrot.slane %v7717, 4
        %v7720 = vor.u32 %v7719, %v7715
        %v7721 = vrot.slane %v7720, 4
        %v7723 = vshll.u32 %v7597, 16
        %v7725 = vrot.slane %v7723, 5
        %v7726 = vsel %vm1691, %v7721, %v7725
        %v7728 = vshrl.u32 %v7598, 16
        %v7730 = vrot.slane %v7728, 4
        %v7731 = vshll.u32 %v7598, 16
        %v7733 = vrot.slane %v7731, 5
        %v7734 = vor.u32 %v7730, %v7733
        %v7735 = vrot.slane %v7734, 4
        %v7737 = vshll.u32 %v7599, 16
        %v7739 = vrot.slane %v7737, 5
        %v7740 = vsel %vm1691, %v7735, %v7739
        %v7741 = vshrl.u32 %v7599, 16
        %v7743 = vrot.slane %v7741, 4
        %v7744 = vor.u32 %v7743, %v7739
        %v7745 = vrot.slane %v7744, 4
        %v7747 = vshll.u32 %v7600, 16
        %v7749 = vrot.slane %v7747, 5
        %v7750 = vsel %vm1691, %v7745, %v7749
        %v7752 = vshrl.u32 %v7601, 16
        %v7754 = vrot.slane %v7752, 4
        %v7755 = vshll.u32 %v7601, 16
        %v7757 = vrot.slane %v7755, 5
        %v7758 = vor.u32 %v7754, %v7757
        %v7759 = vrot.slane %v7758, 4
        %v7761 = vshll.u32 %v7602, 16
        %v7763 = vrot.slane %v7761, 5
        %v7764 = vsel %vm1691, %v7759, %v7763
        %v7765 = vshrl.u32 %v7602, 16
        %v7767 = vrot.slane %v7765, 4
        %v7768 = vor.u32 %v7767, %v7763
        %v7769 = vrot.slane %v7768, 4
        %v7771 = vshll.u32 %v7603, 16
        %v7773 = vrot.slane %v7771, 5
        %v7774 = vsel %vm1691, %v7769, %v7773
        %v7776 = vshrl.u32 %v7604, 16
        %v7778 = vrot.slane %v7776, 4
        %v7779 = vshll.u32 %v7604, 16
        %v7781 = vrot.slane %v7779, 5
        %v7782 = vor.u32 %v7778, %v7781
        %v7783 = vrot.slane %v7782, 4
        %v7785 = vshll.u32 %v7605, 16
        %v7787 = vrot.slane %v7785, 5
        %v7788 = vsel %vm1691, %v7783, %v7787
        %v7789 = vshrl.u32 %v7605, 16
        %v7791 = vrot.slane %v7789, 4
        %v7792 = vor.u32 %v7791, %v7787
        %v7793 = vrot.slane %v7792, 4
        %v7795 = vshll.u32 %v7606, 16
        %v7797 = vrot.slane %v7795, 5
        %v7798 = vsel %vm1691, %v7793, %v7797
        %v7799 = vld [vmem:[%s4461] sm:$0xf]
        %v7800 = vld [vmem:[%s4461 + $0x4] sm:$0xf]
        %v7801 = vld [vmem:[%s4461 + $0x8] sm:$0xf]
        %v7802 = vld [vmem:[%s4461 + $0xc] sm:$0xf]
        %v7803 = vld [vmem:[%s4461 + $0x10] sm:$0xf]
        %v7804 = vld [vmem:[%s4461 + $0x14] sm:$0xf]
        %v7805 = vld [vmem:[%s4461 + $0x18] sm:$0xf]
        %v7806 = vld [vmem:[%s4461 + $0x1c] sm:$0xf]
        %v7807 = vld [vmem:[%s4461 + $0x20] sm:$0xf]
        %v7808 = vld [vmem:[%s4461 + $0x24] sm:$0xf]
        %v7809 = vld [vmem:[%s4461 + $0x28] sm:$0xf]
        %v7810 = vld [vmem:[%s4461 + $0x2c] sm:$0xf]
        %v7811 = vld [vmem:[%s4461 + $0x30] sm:$0xf]
        %v7812 = vld [vmem:[%s4461 + $0x34] sm:$0xf]
        %v7813 = vld [vmem:[%s4461 + $0x38] sm:$0xf]
        %v7814 = vld [vmem:[%s4461 + $0x3c] sm:$0xf]
        %v7815 = vunpack.c.l.b16 %v7620
        %v7816 = vunpack.c.l.b16 %v7630
        %v7817 = vunpack.c.l.b16 %v7644
        %v7818 = vunpack.c.l.b16 %v7654
        %v7819 = vunpack.c.l.b16 %v7668
        %v7820 = vunpack.c.l.b16 %v7678
        %v7821 = vunpack.c.l.b16 %v7692
        %v7822 = vunpack.c.l.b16 %v7702
        %v7823 = vunpack.c.l.b16 %v7716
        %v7824 = vunpack.c.l.b16 %v7726
        %v7825 = vunpack.c.l.b16 %v7740
        %v7826 = vunpack.c.l.b16 %v7750
        %v7827 = vunpack.c.l.b16 %v7764
        %v7828 = vunpack.c.l.b16 %v7774
        %v7829 = vunpack.c.l.b16 %v7788
        %v7830 = vunpack.c.l.b16 %v7798
        %v7831 = vpack.c.b16 %v7816, %v7815
        %v7832 = vpack.c.b16 %v7818, %v7817
        %v7833 = vpack.c.b16 %v7820, %v7819
        %v7834 = vpack.c.b16 %v7822, %v7821
        %v7835 = vpack.c.b16 %v7824, %v7823
        %v7836 = vpack.c.b16 %v7826, %v7825
        %v7837 = vpack.c.b16 %v7828, %v7827
        %v7838 = vpack.c.b16 %v7830, %v7829
        %v7863 = vunpack.c.l.b16 %v7799
        %v7864 = vunpack.c.l.b16 %v7800
        %v7865 = vunpack.c.l.b16 %v7801
        %v7866 = vunpack.c.l.b16 %v7802
        %v7867 = vunpack.c.l.b16 %v7803
        %v7868 = vunpack.c.l.b16 %v7804
        %v7869 = vunpack.c.l.b16 %v7805
        %v7870 = vunpack.c.l.b16 %v7806
        %v7871 = vunpack.c.l.b16 %v7807
        %v7872 = vunpack.c.l.b16 %v7808
        %v7873 = vunpack.c.l.b16 %v7809
        %v7874 = vunpack.c.l.b16 %v7810
        %v7875 = vunpack.c.l.b16 %v7811
        %v7876 = vunpack.c.l.b16 %v7812
        %v7877 = vunpack.c.l.b16 %v7813
        %v7878 = vunpack.c.l.b16 %v7814
        %v7879 = vpack.c.b16 %v7864, %v7863
        %v7880 = vpack.c.b16 %v7866, %v7865
        %v7881 = vpack.c.b16 %v7868, %v7867
        %v7882 = vpack.c.b16 %v7870, %v7869
        %v7883 = vpack.c.b16 %v7872, %v7871
        %v7884 = vpack.c.b16 %v7874, %v7873
        %v7885 = vpack.c.b16 %v7876, %v7875
        %v7886 = vpack.c.b16 %v7878, %v7877
        %7895 = vmatprep.subr.bf16.mxu0 0
        %7896 = vmatpush1.bf16.msra.mxu0 %v7879
        %7897 = vmatprep.subr.bf16.mxu0 0
        %7898 = vmatpush1.bf16.msra.mxu0 %v7880
        %7899 = vmatprep.subr.bf16.mxu0 0
        %7900 = vmatpush1.bf16.msra.mxu0 %v7881
        %7901 = vmatprep.subr.bf16.mxu0 0
        %7902 = vmatpush1.bf16.msra.mxu0 %v7882
        %7903 = vmatprep.subr.bf16.mxu0 0
        %7904 = vmatpush1.bf16.msra.mxu0 %v7883
        %7905 = vmatprep.subr.bf16.mxu0 0
        %7906 = vmatpush1.bf16.msra.mxu0 %v7884
        %7907 = vmatprep.subr.bf16.mxu0 0
        %7908 = vmatpush1.bf16.msra.mxu0 %v7885
        %7909 = vmatprep.subr.bf16.mxu0 0
        %7910 = vmatpush1.bf16.msra.mxu0 %v7886
        %7911 = vmatprep.subr.bf16.mxu0 0
        %7912 = vmatpush1.bf16.msra.mxu0 0
        %7913 = vmatprep.subr.bf16.mxu0 0
        %7914 = vmatpush1.bf16.msra.mxu0 0
        %7915 = vmatprep.subr.bf16.mxu0 0
        %7916 = vmatpush1.bf16.msra.mxu0 0
        %7917 = vmatprep.subr.bf16.mxu0 0
        %7918 = vmatpush1.bf16.msra.mxu0 0
        %7919 = vmatprep.subr.bf16.mxu0 0
        %7920 = vmatpush1.bf16.msra.mxu0 0
        %7921 = vmatprep.subr.bf16.mxu0 0
        %7922 = vmatpush1.bf16.msra.mxu0 0
        %7923 = vmatprep.subr.bf16.mxu0 0
        %7924 = vmatpush1.bf16.msra.mxu0 0
        %7925 = vmatprep.subr.bf16.mxu0 0
        %7926 = vmatpush1.bf16.msra.mxu0 0
        %7927 = vmatprep.mubr.bf16.mxu0 0
        %7928 = vmatmul.mubr.bf16.gmra.mrb[0].mxu0 %v7831
        %v7929 = vpop.f32.mrb[0].mxu0
        %v7930 = vadd.f32 0.0, %v7929
        %v7931 = vpop.f32.mrb[0].mxu0
        %v7932 = vpop.f32.mrb[0].mxu0
        %v7933 = vadd.f32 0.0, %v7932
        %v7934 = vpop.f32.mrb[0].mxu0
        %7935 = vmatprep.mubr.bf16.mxu0 0
        %7936 = vmatmul.mubr.bf16.gmra.mrb[0].mxu0 %v7832
        %v7937 = vpop.f32.mrb[0].mxu0
        %v7938 = vadd.f32 0.0, %v7937
        %v7939 = vpop.f32.mrb[0].mxu0
        %v7940 = vpop.f32.mrb[0].mxu0
        %v7941 = vadd.f32 0.0, %v7940
        %v7942 = vpop.f32.mrb[0].mxu0
        %7943 = vmatprep.mubr.bf16.mxu0 0
        %7944 = vmatmul.mubr.bf16.gmra.mrb[0].mxu0 %v7833
        %v7945 = vpop.f32.mrb[0].mxu0
        %v7946 = vadd.f32 0.0, %v7945
        %v7947 = vpop.f32.mrb[0].mxu0
        %v7948 = vpop.f32.mrb[0].mxu0
        %v7949 = vadd.f32 0.0, %v7948
        %v7950 = vpop.f32.mrb[0].mxu0
        %7951 = vmatprep.mubr.bf16.mxu0 0
        %7952 = vmatmul.mubr.bf16.gmra.mrb[0].mxu0 %v7834
        %v7953 = vpop.f32.mrb[0].mxu0
        %v7954 = vadd.f32 0.0, %v7953
        %v7955 = vpop.f32.mrb[0].mxu0
        %v7956 = vpop.f32.mrb[0].mxu0
        %v7957 = vadd.f32 0.0, %v7956
        %v7958 = vpop.f32.mrb[0].mxu0
        %7959 = vmatprep.mubr.bf16.mxu0 0
        %7960 = vmatmul.mubr.bf16.gmra.mrb[0].mxu0 %v7835
        %v7961 = vpop.f32.mrb[0].mxu0
        %v7962 = vadd.f32 0.0, %v7961
        %v7963 = vpop.f32.mrb[0].mxu0
        %v7964 = vpop.f32.mrb[0].mxu0
        %v7965 = vadd.f32 0.0, %v7964
        %v7966 = vpop.f32.mrb[0].mxu0
        %7967 = vmatprep.mubr.bf16.mxu0 0
        %7968 = vmatmul.mubr.bf16.gmra.mrb[0].mxu0 %v7836
        %v7969 = vpop.f32.mrb[0].mxu0
        %v7970 = vadd.f32 0.0, %v7969
        %v7971 = vpop.f32.mrb[0].mxu0
        %v7972 = vpop.f32.mrb[0].mxu0
        %v7973 = vadd.f32 0.0, %v7972
        %v7974 = vpop.f32.mrb[0].mxu0
        %7975 = vmatprep.mubr.bf16.mxu0 0
        %7976 = vmatmul.mubr.bf16.gmra.mrb[0].mxu0 %v7837
        %v7977 = vpop.f32.mrb[0].mxu0
        %v7978 = vadd.f32 0.0, %v7977
        %v7979 = vpop.f32.mrb[0].mxu0
        %v7980 = vpop.f32.mrb[0].mxu0
        %v7981 = vadd.f32 0.0, %v7980
        %v7982 = vpop.f32.mrb[0].mxu0
        %7983 = vmatprep.mubr.bf16.mxu0 0
        %7984 = vmatmul.mubr.bf16.gmra.mrb[0].mxu0 %v7838
        %v7985 = vpop.f32.mrb[0].mxu0
        %v7986 = vadd.f32 0.0, %v7985
        %v7987 = vpop.f32.mrb[0].mxu0
        %v7988 = vpop.f32.mrb[0].mxu0
        %v7989 = vadd.f32 0.0, %v7988
        %v7990 = vpop.f32.mrb[0].mxu0
        %7991 = vdwg.mxu0
        %v7992 = vadd.f32 %v7567, %v7930
        %v7993 = vadd.f32 %v7568, %v7933
        %v7994 = vadd.f32 %v7569, %v7938
        %v7995 = vadd.f32 %v7570, %v7941
        %v7996 = vadd.f32 %v7571, %v7946
        %v7997 = vadd.f32 %v7572, %v7949
        %v7998 = vadd.f32 %v7573, %v7954
        %v7999 = vadd.f32 %v7574, %v7957
        %v8000 = vadd.f32 %v7575, %v7962
        %v8001 = vadd.f32 %v7576, %v7965
        %v8002 = vadd.f32 %v7577, %v7970
        %v8003 = vadd.f32 %v7578, %v7973
        %v8004 = vadd.f32 %v7579, %v7978
        %v8005 = vadd.f32 %v7580, %v7981
        %v8006 = vadd.f32 %v7581, %v7986
        %v8007 = vadd.f32 %v7582, %v7989
        %v8008 = vld [vmem:[%s7341] sm:$0xe]
        %v8009 = vld [vmem:[%s7341 + $0xc] sm:$0xe]
        %v8010 = vld [vmem:[%s7341 + $0x18] sm:$0xe]
        %v8011 = vld [vmem:[%s7341 + $0x24] sm:$0xe]
        %v8012 = vld [vmem:[%s7341 + $0x30] sm:$0xe]
        %v8013 = vld [vmem:[%s7341 + $0x3c] sm:$0xe]
        %v8014 = vld [vmem:[%s7341 + $0x48] sm:$0xe]
        %v8015 = vld [vmem:[%s7341 + $0x54] sm:$0xe]
        %v8040 = vrot.slane %v8008, 5
        %v8041 = vrot.slane %v8040, 4
        %v8042 = vrot.slane %v7584, 5
        %v8043 = vsel %vm2768, %v8041, %v8042
        %v8044 = vrot.slane %v8042, 4
        %v8045 = vrot.slane %v7585, 5
        %v8046 = vsel %vm2768, %v8044, %v8045
        %v8047 = vrot.slane %v8009, 5
        %v8048 = vrot.slane %v8047, 4
        %v8049 = vrot.slane %v7587, 5
        %v8050 = vsel %vm2768, %v8048, %v8049
        %v8051 = vrot.slane %v8049, 4
        %v8052 = vrot.slane %v7588, 5
        %v8053 = vsel %vm2768, %v8051, %v8052
        %v8054 = vrot.slane %v8010, 5
        %v8055 = vrot.slane %v8054, 4
        %v8056 = vrot.slane %v7590, 5
        %v8057 = vsel %vm2768, %v8055, %v8056
        %v8058 = vrot.slane %v8056, 4
        %v8059 = vrot.slane %v7591, 5
        %v8060 = vsel %vm2768, %v8058, %v8059
        %v8061 = vrot.slane %v8011, 5
        %v8062 = vrot.slane %v8061, 4
        %v8063 = vrot.slane %v7593, 5
        %v8064 = vsel %vm2768, %v8062, %v8063
        %v8065 = vrot.slane %v8063, 4
        %v8066 = vrot.slane %v7594, 5
        %v8067 = vsel %vm2768, %v8065, %v8066
        %v8068 = vrot.slane %v8012, 5
        %v8069 = vrot.slane %v8068, 4
        %v8070 = vrot.slane %v7596, 5
        %v8071 = vsel %vm2768, %v8069, %v8070
        %v8072 = vrot.slane %v8070, 4
        %v8073 = vrot.slane %v7597, 5
        %v8074 = vsel %vm2768, %v8072, %v8073
        %v8075 = vrot.slane %v8013, 5
        %v8076 = vrot.slane %v8075, 4
        %v8077 = vrot.slane %v7599, 5
        %v8078 = vsel %vm2768, %v8076, %v8077
        %v8079 = vrot.slane %v8077, 4
        %v8080 = vrot.slane %v7600, 5
        %v8081 = vsel %vm2768, %v8079, %v8080
        %v8082 = vrot.slane %v8014, 5
        %v8083 = vrot.slane %v8082, 4
        %v8084 = vrot.slane %v7602, 5
        %v8085 = vsel %vm2768, %v8083, %v8084
        %v8086 = vrot.slane %v8084, 4
        %v8087 = vrot.slane %v7603, 5
        %v8088 = vsel %vm2768, %v8086, %v8087
        %v8089 = vrot.slane %v8015, 5
        %v8090 = vrot.slane %v8089, 4
        %v8091 = vrot.slane %v7605, 5
        %v8092 = vsel %vm2768, %v8090, %v8091
        %v8093 = vrot.slane %v8091, 4
        %v8094 = vrot.slane %v7606, 5
        %v8095 = vsel %vm2768, %v8093, %v8094
        %v8096 = vld [vmem:[%s4759] sm:$0xf]
        %v8097 = vld [vmem:[%s4759 + $0x4] sm:$0xf]
        %v8098 = vld [vmem:[%s4759 + $0x8] sm:$0xf]
        %v8099 = vld [vmem:[%s4759 + $0xc] sm:$0xf]
        %v8100 = vld [vmem:[%s4759 + $0x10] sm:$0xf]
        %v8101 = vld [vmem:[%s4759 + $0x14] sm:$0xf]
        %v8102 = vld [vmem:[%s4759 + $0x18] sm:$0xf]
        %v8103 = vld [vmem:[%s4759 + $0x1c] sm:$0xf]
        %v8104 = vld [vmem:[%s4759 + $0x20] sm:$0xf]
        %v8105 = vld [vmem:[%s4759 + $0x24] sm:$0xf]
        %v8106 = vld [vmem:[%s4759 + $0x28] sm:$0xf]
        %v8107 = vld [vmem:[%s4759 + $0x2c] sm:$0xf]
        %v8108 = vld [vmem:[%s4759 + $0x30] sm:$0xf]
        %v8109 = vld [vmem:[%s4759 + $0x34] sm:$0xf]
        %v8110 = vld [vmem:[%s4759 + $0x38] sm:$0xf]
        %v8111 = vld [vmem:[%s4759 + $0x3c] sm:$0xf]
        %v8112 = vunpack.c.l.b16 %v8043
        %v8113 = vunpack.c.l.b16 %v8046
        %v8114 = vunpack.c.l.b16 %v8050
        %v8115 = vunpack.c.l.b16 %v8053
        %v8116 = vunpack.c.l.b16 %v8057
        %v8117 = vunpack.c.l.b16 %v8060
        %v8118 = vunpack.c.l.b16 %v8064
        %v8119 = vunpack.c.l.b16 %v8067
        %v8120 = vunpack.c.l.b16 %v8071
        %v8121 = vunpack.c.l.b16 %v8074
        %v8122 = vunpack.c.l.b16 %v8078
        %v8123 = vunpack.c.l.b16 %v8081
        %v8124 = vunpack.c.l.b16 %v8085
        %v8125 = vunpack.c.l.b16 %v8088
        %v8126 = vunpack.c.l.b16 %v8092
        %v8127 = vunpack.c.l.b16 %v8095
        %v8128 = vpack.c.b16 %v8113, %v8112
        %v8129 = vpack.c.b16 %v8115, %v8114
        %v8130 = vpack.c.b16 %v8117, %v8116
        %v8131 = vpack.c.b16 %v8119, %v8118
        %v8132 = vpack.c.b16 %v8121, %v8120
        %v8133 = vpack.c.b16 %v8123, %v8122
        %v8134 = vpack.c.b16 %v8125, %v8124
        %v8135 = vpack.c.b16 %v8127, %v8126
        %v8160 = vunpack.c.l.b16 %v8096
        %v8161 = vunpack.c.l.b16 %v8097
        %v8162 = vunpack.c.l.b16 %v8098
        %v8163 = vunpack.c.l.b16 %v8099
        %v8164 = vunpack.c.l.b16 %v8100
        %v8165 = vunpack.c.l.b16 %v8101
        %v8166 = vunpack.c.l.b16 %v8102
        %v8167 = vunpack.c.l.b16 %v8103
        %v8168 = vunpack.c.l.b16 %v8104
        %v8169 = vunpack.c.l.b16 %v8105
        %v8170 = vunpack.c.l.b16 %v8106
        %v8171 = vunpack.c.l.b16 %v8107
        %v8172 = vunpack.c.l.b16 %v8108
        %v8173 = vunpack.c.l.b16 %v8109
        %v8174 = vunpack.c.l.b16 %v8110
        %v8175 = vunpack.c.l.b16 %v8111
        %v8176 = vpack.c.b16 %v8161, %v8160
        %v8177 = vpack.c.b16 %v8163, %v8162
        %v8178 = vpack.c.b16 %v8165, %v8164
        %v8179 = vpack.c.b16 %v8167, %v8166
        %v8180 = vpack.c.b16 %v8169, %v8168
        %v8181 = vpack.c.b16 %v8171, %v8170
        %v8182 = vpack.c.b16 %v8173, %v8172
        %v8183 = vpack.c.b16 %v8175, %v8174
        %8192 = vmatprep.subr.bf16.mxu0 0
        %8193 = vmatpush1.bf16.msra.mxu0 %v8176
        %8194 = vmatprep.subr.bf16.mxu0 0
        %8195 = vmatpush1.bf16.msra.mxu0 %v8177
        %8196 = vmatprep.subr.bf16.mxu0 0
        %8197 = vmatpush1.bf16.msra.mxu0 %v8178
        %8198 = vmatprep.subr.bf16.mxu0 0
        %8199 = vmatpush1.bf16.msra.mxu0 %v8179
        %8200 = vmatprep.subr.bf16.mxu0 0
        %8201 = vmatpush1.bf16.msra.mxu0 %v8180
        %8202 = vmatprep.subr.bf16.mxu0 0
        %8203 = vmatpush1.bf16.msra.mxu0 %v8181
        %8204 = vmatprep.subr.bf16.mxu0 0
        %8205 = vmatpush1.bf16.msra.mxu0 %v8182
        %8206 = vmatprep.subr.bf16.mxu0 0
        %8207 = vmatpush1.bf16.msra.mxu0 %v8183
        %8208 = vmatprep.subr.bf16.mxu0 0
        %8209 = vmatpush1.bf16.msra.mxu0 0
        %8210 = vmatprep.subr.bf16.mxu0 0
        %8211 = vmatpush1.bf16.msra.mxu0 0
        %8212 = vmatprep.subr.bf16.mxu0 0
        %8213 = vmatpush1.bf16.msra.mxu0 0
        %8214 = vmatprep.subr.bf16.mxu0 0
        %8215 = vmatpush1.bf16.msra.mxu0 0
        %8216 = vmatprep.subr.bf16.mxu0 0
        %8217 = vmatpush1.bf16.msra.mxu0 0
        %8218 = vmatprep.subr.bf16.mxu0 0
        %8219 = vmatpush1.bf16.msra.mxu0 0
        %8220 = vmatprep.subr.bf16.mxu0 0
        %8221 = vmatpush1.bf16.msra.mxu0 0
        %8222 = vmatprep.subr.bf16.mxu0 0
        %8223 = vmatpush1.bf16.msra.mxu0 0
        %8224 = vmatprep.mubr.bf16.mxu0 0
        %8225 = vmatmul.mubr.bf16.gmra.mrb[0].mxu0 %v8128
        %v8226 = vpop.f32.mrb[0].mxu0
        %v8227 = vadd.f32 0.0, %v8226
        %v8228 = vpop.f32.mrb[0].mxu0
        %v8229 = vpop.f32.mrb[0].mxu0
        %v8230 = vadd.f32 0.0, %v8229
        %v8231 = vpop.f32.mrb[0].mxu0
        %8232 = vmatprep.mubr.bf16.mxu0 0
        %8233 = vmatmul.mubr.bf16.gmra.mrb[0].mxu0 %v8129
        %v8234 = vpop.f32.mrb[0].mxu0
        %v8235 = vadd.f32 0.0, %v8234
        %v8236 = vpop.f32.mrb[0].mxu0
        %v8237 = vpop.f32.mrb[0].mxu0
        %v8238 = vadd.f32 0.0, %v8237
        %v8239 = vpop.f32.mrb[0].mxu0
        %8240 = vmatprep.mubr.bf16.mxu0 0
        %8241 = vmatmul.mubr.bf16.gmra.mrb[0].mxu0 %v8130
        %v8242 = vpop.f32.mrb[0].mxu0
        %v8243 = vadd.f32 0.0, %v8242
        %v8244 = vpop.f32.mrb[0].mxu0
        %v8245 = vpop.f32.mrb[0].mxu0
        %v8246 = vadd.f32 0.0, %v8245
        %v8247 = vpop.f32.mrb[0].mxu0
        %8248 = vmatprep.mubr.bf16.mxu0 0
        %8249 = vmatmul.mubr.bf16.gmra.mrb[0].mxu0 %v8131
        %v8250 = vpop.f32.mrb[0].mxu0
        %v8251 = vadd.f32 0.0, %v8250
        %v8252 = vpop.f32.mrb[0].mxu0
        %v8253 = vpop.f32.mrb[0].mxu0
        %v8254 = vadd.f32 0.0, %v8253
        %v8255 = vpop.f32.mrb[0].mxu0
        %8256 = vmatprep.mubr.bf16.mxu0 0
        %8257 = vmatmul.mubr.bf16.gmra.mrb[0].mxu0 %v8132
        %v8258 = vpop.f32.mrb[0].mxu0
        %v8259 = vadd.f32 0.0, %v8258
        %v8260 = vpop.f32.mrb[0].mxu0
        %v8261 = vpop.f32.mrb[0].mxu0
        %v8262 = vadd.f32 0.0, %v8261
        %v8263 = vpop.f32.mrb[0].mxu0
        %8264 = vmatprep.mubr.bf16.mxu0 0
        %8265 = vmatmul.mubr.bf16.gmra.mrb[0].mxu0 %v8133
        %v8266 = vpop.f32.mrb[0].mxu0
        %v8267 = vadd.f32 0.0, %v8266
        %v8268 = vpop.f32.mrb[0].mxu0
        %v8269 = vpop.f32.mrb[0].mxu0
        %v8270 = vadd.f32 0.0, %v8269
        %v8271 = vpop.f32.mrb[0].mxu0
        %8272 = vmatprep.mubr.bf16.mxu0 0
        %8273 = vmatmul.mubr.bf16.gmra.mrb[0].mxu0 %v8134
        %v8274 = vpop.f32.mrb[0].mxu0
        %v8275 = vadd.f32 0.0, %v8274
        %v8276 = vpop.f32.mrb[0].mxu0
        %v8277 = vpop.f32.mrb[0].mxu0
        %v8278 = vadd.f32 0.0, %v8277
        %v8279 = vpop.f32.mrb[0].mxu0
        %8280 = vmatprep.mubr.bf16.mxu0 0
        %8281 = vmatmul.mubr.bf16.gmra.mrb[0].mxu0 %v8135
        %v8282 = vpop.f32.mrb[0].mxu0
        %v8283 = vadd.f32 0.0, %v8282
        %v8284 = vpop.f32.mrb[0].mxu0
        %v8285 = vpop.f32.mrb[0].mxu0
        %v8286 = vadd.f32 0.0, %v8285
        %v8287 = vpop.f32.mrb[0].mxu0
        %8288 = vdwg.mxu0
        %v8289 = vadd.f32 %v7992, %v8227
        %v8290 = vadd.f32 %v7993, %v8230
        %v8291 = vadd.f32 %v7994, %v8235
        %v8292 = vadd.f32 %v7995, %v8238
        %v8293 = vadd.f32 %v7996, %v8243
        %v8294 = vadd.f32 %v7997, %v8246
        %v8295 = vadd.f32 %v7998, %v8251
        %v8296 = vadd.f32 %v7999, %v8254
        %v8297 = vadd.f32 %v8000, %v8259
        %v8298 = vadd.f32 %v8001, %v8262
        %v8299 = vadd.f32 %v8002, %v8267
        %v8300 = vadd.f32 %v8003, %v8270
        %v8301 = vadd.f32 %v8004, %v8275
        %v8302 = vadd.f32 %v8005, %v8278
        %v8303 = vadd.f32 %v8006, %v8283
        %v8304 = vadd.f32 %v8007, %v8286
        %v8305 = vmax.f32 %v8289, 0.0
        %v8306 = vmax.f32 %v8290, 0.0
        %v8307 = vmax.f32 %v8291, 0.0
        %v8308 = vmax.f32 %v8292, 0.0
        %v8309 = vmax.f32 %v8293, 0.0
        %v8310 = vmax.f32 %v8294, 0.0
        %v8311 = vmax.f32 %v8295, 0.0
        %v8312 = vmax.f32 %v8296, 0.0
        %v8313 = vmax.f32 %v8297, 0.0
        %v8314 = vmax.f32 %v8298, 0.0
        %v8315 = vmax.f32 %v8299, 0.0
        %v8316 = vmax.f32 %v8300, 0.0
        %v8317 = vmax.f32 %v8301, 0.0
        %v8318 = vmax.f32 %v8302, 0.0
        %v8319 = vmax.f32 %v8303, 0.0
        %v8320 = vmax.f32 %v8304, 0.0
        %v8321 = vpack.c.bf16 %v8306, %v8305
        %v8322 = vpack.c.bf16 %v8308, %v8307
        %v8323 = vpack.c.bf16 %v8310, %v8309
        %v8324 = vpack.c.bf16 %v8312, %v8311
        %v8325 = vpack.c.bf16 %v8314, %v8313
        %v8326 = vpack.c.bf16 %v8316, %v8315
        %v8327 = vpack.c.bf16 %v8318, %v8317
        %v8328 = vpack.c.bf16 %v8320, %v8319
        %v8337 = vunpack.c.l.b16 %v8321
        %v8338 = vunpack.c.h.b16 %v8321
        %v8339 = vunpack.c.l.b16 %v8322
        %v8340 = vunpack.c.h.b16 %v8322
        %v8341 = vunpack.c.l.b16 %v8323
        %v8342 = vunpack.c.h.b16 %v8323
        %v8343 = vunpack.c.l.b16 %v8324
        %v8344 = vunpack.c.h.b16 %v8324
        %v8345 = vunpack.c.l.b16 %v8325
        %v8346 = vunpack.c.h.b16 %v8325
        %v8347 = vunpack.c.l.b16 %v8326
        %v8348 = vunpack.c.h.b16 %v8326
        %v8349 = vunpack.c.l.b16 %v8327
        %v8350 = vunpack.c.h.b16 %v8327
        %v8351 = vunpack.c.l.b16 %v8328
        %v8352 = vunpack.c.h.b16 %v8328
        %v8353 = vpack.c.b16 %v8337, %v8337
        %v8354 = vpack.c.b16 %v8338, %v8338
        %v8355 = vpack.c.b16 %v8339, %v8339
        %v8356 = vpack.c.b16 %v8340, %v8340
        %v8357 = vpack.c.b16 %v8341, %v8341
        %v8358 = vpack.c.b16 %v8342, %v8342
        %v8359 = vpack.c.b16 %v8343, %v8343
        %v8360 = vpack.c.b16 %v8344, %v8344
        %v8361 = vpack.c.b16 %v8345, %v8345
        %v8362 = vpack.c.b16 %v8346, %v8346
        %v8363 = vpack.c.b16 %v8347, %v8347
        %v8364 = vpack.c.b16 %v8348, %v8348
        %v8365 = vpack.c.b16 %v8349, %v8349
        %v8366 = vpack.c.b16 %v8350, %v8350
        %v8367 = vpack.c.b16 %v8351, %v8351
        %v8368 = vpack.c.b16 %v8352, %v8352
        %s8385 = scalar_lea.vmem %s327, 64 [#allocation11]
        %8386 = vst [vmem:[%s8385] sm:$0xf] %v8353
        %8387 = vst [vmem:[%s8385 + $0x4] sm:$0xf] %v8354
        %8388 = vst [vmem:[%s8385 + $0x8] sm:$0xf] %v8355
        %8389 = vst [vmem:[%s8385 + $0xc] sm:$0xf] %v8356
        %8390 = vst [vmem:[%s8385 + $0x10] sm:$0xf] %v8357
        %8391 = vst [vmem:[%s8385 + $0x14] sm:$0xf] %v8358
        %8392 = vst [vmem:[%s8385 + $0x18] sm:$0xf] %v8359
        %8393 = vst [vmem:[%s8385 + $0x1c] sm:$0xf] %v8360
        %8394 = vst [vmem:[%s8385 + $0x20] sm:$0xf] %v8361
        %8395 = vst [vmem:[%s8385 + $0x24] sm:$0xf] %v8362
        %8396 = vst [vmem:[%s8385 + $0x28] sm:$0xf] %v8363
        %8397 = vst [vmem:[%s8385 + $0x2c] sm:$0xf] %v8364
        %8398 = vst [vmem:[%s8385 + $0x30] sm:$0xf] %v8365
        %8399 = vst [vmem:[%s8385 + $0x34] sm:$0xf] %v8366
        %8400 = vst [vmem:[%s8385 + $0x38] sm:$0xf] %v8367
        %8401 = vst [vmem:[%s8385 + $0x3c] sm:$0xf] %v8368
        %s8402 = sand.u32 %s178, 1
        %s8403 = scalar_lea.sflag [#allocation5], %s8402
        %s8404 = sand.u32 %s178, 1
        %s8405 = smul.addr %s8404, 128
        %s8406 = scalar_lea.vmem [#allocation11], %s8405
        // Predicated region
        $region61: #{tpu_custom_call.1} parent=43 // pred_check
          %p8407 = pneg %p188
        $region62: #{tpu_custom_call.1} parent=43 // pred_check_branch
          %8409 = sbr.rel (%p8407) target = $region64
        $region63: #{tpu_custom_call.1} parent=43 // pred_region
          %s8410 = smul.u32 16, %s30
          %s8412 = ssub.s32 2048, 2048
          %8413 = vsyncadd %s8403, %s8412
          %s8414 = smul.addr %s8410, 2
          %s8415 = smul.addr %s29, 32
          %s8416 = sadd.s32 %s8414, %s8415
          %s8417 = smul.addr %s8416, 64
          %s8418 = scalar_lea.hbm %s6, %s8417
          %s8419 = sshll.u32 %s8406, 4
          %s8420 = int_to_ptr.vmem [resolvable:$true] %s8419
          %8425 = dma.vmem_to_hbm [thread:$0]  %s8420, 2048, %s8418, %s8403, 64, 64, 4
        $region64: #{tpu_custom_call.1} parent=43 // pred_fallthru
          _
      $region44: #{tpu_custom_call.1} parent=5 // pred_fallthru
        _
      %p8426 = scmp.le.s32.totalorder 2, %s20
      // Predicated region
      $region65: #{tpu_custom_call.1} parent=5 // pred_check
        %p8427 = pneg %p8426
      $region66: #{tpu_custom_call.1} parent=5 // pred_check_branch
        %8429 = sbr.rel (%p8427) target = $region68
      $region67: #{tpu_custom_call.1} parent=5 // pred_region
        %s8430 = ssub.s32 %s20, 2
        // Predicated region
        $region69: #{tpu_custom_call.1} parent=67 // pred_check
          %p8431 = pneg %p194
        $region70: #{tpu_custom_call.1} parent=67 // pred_check_branch
          %8433 = sbr.rel (%p8431) target = $region72
        $region71: #{tpu_custom_call.1} parent=67 // pred_region
          %s8434 = sand.u32 %s179, 1
          %s8435 = scalar_lea.sflag [#allocation5], %s8434
          %s8436 = sand.u32 %s179, 1
          %s8437 = smul.addr %s8436, 128
          %s8438 = scalar_lea.vmem [#allocation11], %s8437
          %8439 = dma.done %s8435, 2048
        $region72: #{tpu_custom_call.1} parent=67 // pred_fallthru
          _
      $region68: #{tpu_custom_call.1} parent=5 // pred_fallthru
        _
    $region6: #{tpu_custom_call.1} parent=1 // loop_footer
      %s24 = sadd.s32 1, %s20
    $region7: #{tpu_custom_call.1} parent=1 // loop_footer_branch
      %19 = sbr.rel target = $region3
    $region8: #{tpu_custom_call.1} parent=1 // loop_exit
      _
    %8440 = vsyncpa [#allocation4], 1
    %s8441 = scalar_lea.sflag [#allocation4], 1
    %8442 = vsyncpa %s8441, 1
    %8443 = vsyncpa [#allocation7], 1
    %8444 = vsyncpa [#allocation10], 1
    %8445 = vsyncpa [#allocation5], 1
    %s8446 = scalar_lea.sflag [#allocation5], 1
    %8447 = vsyncpa %s8446, 1

</llo_original>
